<compile_context>
chip_gen: v6e
topology: v6e:2x2x1
jax: 0.10.0
libtpu: 0.0.40
codegen_flags: <defaults>
</compile_context>

<pallas_src>
import functools

import jax
import jax.numpy as jnp
from jax import lax
from jax.experimental import pallas as pl
from jax.experimental.pallas import tpu as pltpu


CPAD = 128  # lane-dense channel padding


# --------------------------------------------------------------------------
# Pallas kernels
# --------------------------------------------------------------------------

def _conv_im2col_kernel(x_ref, w_ref, b_ref, o_ref, scr_ref, *, pool):
    # x_ref: (1, H+2, W+2, C) bf16 -- spatially padded input, one batch element
    # w_ref: (9*C, C) bf16        -- conv weight, rows ordered (kh, kw, cin)
    # b_ref: (1, C) f32
    # o_ref: (1, Ho, Wo, C) bf16  -- Ho=H//2 if pool else H
    # scr_ref: (H*W, C) f32 VMEM scratch (used only when pool)
    _, Hp, Wp, C = x_ref.shape
    H, W = Hp - 2, Wp - 2

    # In-VMEM im2col: 9 shifted views concatenated along lanes -> ONE MXU matmul
    # with contraction K = 9*C (instead of 9 tiny matmuls).
    taps = [x_ref[0, kh:kh + H, kw:kw + W, :].reshape(H * W, C)
            for kh in range(3) for kw in range(3)]
    slab = jnp.concatenate(taps, axis=-1)                      # (H*W, 9C) bf16

    acc = jnp.dot(slab, w_ref[...], preferred_element_type=jnp.float32)
    acc = jnp.maximum(acc + b_ref[...], 0.0)                   # bias + ReLU, f32

    if not pool:
        o_ref[0] = acc.reshape(H, W, C).astype(o_ref.dtype)
    else:
        Ho, Wo = H // 2, W // 2
        # Fused 2x2 maxpool epilogue.
        scr_ref[...] = acc
        # pool along W: the two window columns are adjacent rows of (H*W, C)
        pw = jnp.maximum(scr_ref[pl.ds(0, H * Wo, stride=2), :],
                         scr_ref[pl.ds(1, H * Wo, stride=2), :])   # (H*Wo, C)
        # pool along H: clean reshape (second-minor = W, multiple of 8) + halves
        pw = pw.reshape(Ho, 2 * Wo, C)
        out = jnp.maximum(pw[:, :Wo, :], pw[:, Wo:, :])            # (Ho, Wo, C)
        o_ref[0] = out.astype(o_ref.dtype)


def _conv_slab_kernel(x_ref, w_ref, b_ref, o_ref):
    # Tiny tail stages: slab already im2col'd in glue (it is only a few KB).
    # x_ref: (1, H*W, 9C) bf16; w_ref: (9C, C) bf16; b_ref: (1, C) f32
    acc = jnp.dot(x_ref[0], w_ref[...], preferred_element_type=jnp.float32)
    o_ref[0] = jnp.maximum(acc + b_ref[...], 0.0).astype(o_ref.dtype)


def _linear_kernel(x_ref, w_ref, b_ref, o_ref):
    # x_ref: (N, F) bf16; w_ref: (F, O) bf16 (pre-transposed); b_ref: (1, O) f32
    o_ref[...] = (jnp.dot(x_ref[...], w_ref[...],
                          preferred_element_type=jnp.float32)
                  + b_ref[...]).astype(o_ref.dtype)


# --------------------------------------------------------------------------
# Wrappers (JAX glue + pallas_call)
# --------------------------------------------------------------------------

def conv3x3_relu(x_nhwc, w9, b2, pool):
    """x_nhwc: (N,H,W,CPAD) bf16; w9: (9*CPAD, CPAD) bf16; b2: (1,CPAD) f32."""
    N, H, W, C = x_nhwc.shape
    xpad = jnp.pad(x_nhwc, ((0, 0), (1, 1), (1, 1), (0, 0)))

    if W >= 8 and W % 8 == 0:
        # Main path: in-kernel im2col + fused pool, grid over batch (parallel
        # across the two v7x TensorCores).
        Ho, Wo = (H // 2, W // 2) if pool else (H, W)
        kernel = functools.partial(_conv_im2col_kernel, pool=pool)
        return pl.pallas_call(
            kernel,
            out_shape=jax.ShapeDtypeStruct((N, Ho, Wo, C), jnp.bfloat16),
            grid=(N,),
            in_specs=[
                pl.BlockSpec((1, H + 2, W + 2, C), lambda n: (n, 0, 0, 0)),
                pl.BlockSpec((9 * C, C), lambda n: (0, 0)),
                pl.BlockSpec((1, C), lambda n: (0, 0)),
            ],
            out_specs=pl.BlockSpec((1, Ho, Wo, C), lambda n: (n, 0, 0, 0)),
            scratch_shapes=[pltpu.VMEM((H * W, C), jnp.float32)],
            compiler_params=pltpu.CompilerParams(
                dimension_semantics=("parallel",)),
        )(xpad, w9, b2)

    # Tiny tail stages (spatial < 8): glue im2col (<= a few tens of KB), same
    # single-matmul kernel, pool done in XLA glue.
    taps = [xpad[:, kh:kh + H, kw:kw + W, :].reshape(N, H * W, C)
            for kh in range(3) for kw in range(3)]
    slab = jnp.concatenate(taps, axis=-1)                      # (N, H*W, 9C)
    y = pl.pallas_call(
        _conv_slab_kernel,
        out_shape=jax.ShapeDtypeStruct((N, H * W, C), jnp.bfloat16),
        grid=(N,),
        in_specs=[
            pl.BlockSpec((1, H * W, 9 * C), lambda n: (n, 0, 0)),
            pl.BlockSpec((9 * C, C), lambda n: (0, 0)),
            pl.BlockSpec((1, C), lambda n: (0, 0)),
        ],
        out_specs=pl.BlockSpec((1, H * W, C), lambda n: (n, 0, 0)),
        compiler_params=pltpu.CompilerParams(
            dimension_semantics=("parallel",)),
    )(slab, w9, b2)
    y = y.reshape(N, H, W, C)
    if pool:
        y = jnp.max(y.reshape(N, H // 2, 2, W // 2, 2, C), axis=(2, 4))
    return y


def linear(x, w_fo, b2):
    """x: (N,F) bf16; w_fo: (F,O) bf16 (pre-transposed in __init__); b2: (1,O) f32."""
    # TODO(synk): at real VGG classifier sizes (F=25088) the F axis would be
    # grid-tiled with a VMEM f32 accumulator; unnecessary at F=64.
    N, F = x.shape
    O = w_fo.shape[1]
    return pl.pallas_call(
        _linear_kernel,
        out_shape=jax.ShapeDtypeStruct((N, O), jnp.float32),
        grid=(1,),
        in_specs=[
            pl.BlockSpec((N, F), lambda i: (0, 0)),
            pl.BlockSpec((F, O), lambda i: (0, 0)),
            pl.BlockSpec((1, O), lambda i: (0, 0)),
        ],
        out_specs=pl.BlockSpec((N, O), lambda i: (0, 0)),
    )(x, w_fo, b2)


# --------------------------------------------------------------------------
# Featurizer module (synthetic, deterministic parameters)
# --------------------------------------------------------------------------

# torchvision VGG configs with channel counts scaled by 1/8 (synthetic weights).
_VGG_CFGS = {
    "vgg11": [8, "M", 16, "M", 32, 32, "M", 64, 64, "M", 64, 64, "M"],
    "vgg13": [8, 8, "M", 16, 16, "M", 32, 32, "M", 64, 64, "M", 64, 64, "M"],
    "vgg16": [8, 8, "M", 16, 16, "M", 32, 32, 32, "M", 64, 64, 64, "M",
              64, 64, 64, "M"],
    "vgg19": [8, 8, "M", 16, 16, "M", 32, 32, 32, 32, "M", 64, 64, 64, 64, "M",
              64, 64, 64, 64, "M"],
}


class Featurizer:
    """VGG `features` stack + flatten + `classifier[0]` Linear, Pallas-backed."""

    def __init__(self, model_type="vgg11", in_channels=3, input_hw=32,
                 classifier_out=128, key=jax.random.PRNGKey(0)):
        if model_type not in _VGG_CFGS:
            print("Please provide a proper model type.")
            model_type = "vgg11"
        self.cfg = _VGG_CFGS[model_type]
        n_conv = sum(1 for v in self.cfg if v != "M")
        keys = jax.random.split(key, 2 * n_conv + 2)

        ki = 0
        self.conv_params = []     # reference layout: (w (Cout,Cin,3,3) f32, b f32)
        self.kernel_conv = []     # kernel layout:    (w9 (9*CPAD,CPAD) bf16, b (1,CPAD) f32)
        c = in_channels
        for v in self.cfg:
            if v == "M":
                continue
            fan_in = 9 * c
            w = (jax.random.normal(keys[ki], (v, c, 3, 3), jnp.float32)
                 / jnp.sqrt(float(fan_in)))
            b = 0.01 * jax.random.normal(keys[ki + 1], (v,), jnp.float32)
            ki += 2
            # canonical weights are bf16-rounded (kernel and reference agree)
            w = w.astype(jnp.bfloat16).astype(jnp.float32)
            self.conv_params.append((w, b))

            # precomputed kernel layout: (kh, kw, cin, cout) zero-padded to CPAD,
            # flattened so slab column t*CPAD + ci matches weight row t*CPAD + ci.
            wt = jnp.transpose(w, (2, 3, 1, 0))                # (3,3,Cin,Cout)
            wp = jnp.zeros((3, 3, CPAD, CPAD), jnp.float32)
            wp = wp.at[:, :, :c, :v].set(wt)
            w9 = wp.reshape(9 * CPAD, CPAD).astype(jnp.bfloat16)
            bp = jnp.zeros((1, CPAD), jnp.float32).at[0, :v].set(b)
            self.kernel_conv.append((w9, bp))
            c = v

        self.out_channels = c
        n_pools = self.cfg.count("M")
        final_hw = input_hw // (2 ** n_pools)
        flat = c * final_hw * final_hw                          # analogue of 512*7*7

        cw = (jax.random.normal(keys[-2], (classifier_out, flat), jnp.float32)
              / jnp.sqrt(float(flat)))
        cw = cw.astype(jnp.bfloat16).astype(jnp.float32)
        self.cls_w = cw                                         # (O, F) f32, reference
        self.cls_w_t = jnp.transpose(cw).astype(jnp.bfloat16)   # (F, O) bf16, pre-transposed
        self.cls_b = 0.01 * jax.random.normal(keys[-1], (classifier_out,),
                                              jnp.float32)
        self.cls_b2 = self.cls_b.reshape(1, classifier_out)

    def forward(self, x_nchw):
        # Accept NCHW (PyTorch convention); compute in channel-padded NHWC bf16.
        N = x_nchw.shape[0]
        x = jnp.transpose(x_nchw, (0, 2, 3, 1)).astype(jnp.bfloat16)
        x = jnp.pad(x, ((0, 0), (0, 0), (0, 0), (0, CPAD - x.shape[-1])))

        cfg = self.cfg
        pi = 0
        i = 0
        while i < len(cfg):
            v = cfg[i]
            if v == "M":
                # stand-alone pool (never hit for these cfgs; kept for safety)
                Nb, H, W, C = x.shape
                x = jnp.max(x.reshape(Nb, H // 2, 2, W // 2, 2, C), axis=(2, 4))
                i += 1
            else:
                w9, b2 = self.kernel_conv[pi]
                pi += 1
                pool = (i + 1 < len(cfg)) and (cfg[i + 1] == "M")
                x = conv3x3_relu(x, w9, b2, pool)   # fused conv+ReLU(+pool)
                i += 2 if pool else 1

        # drop channel padding, flatten exactly like torch's NCHW x.view(N, -1)
        x = x[..., :self.out_channels]
        x = jnp.transpose(x, (0, 3, 1, 2)).reshape(N, -1)
        return linear(x, self.cls_w_t, self.cls_b2)  # classifier[0]: Linear, no ReLU

    __call__ = forward


# --------------------------------------------------------------------------
# Pure-JAX reference (for a correctness sanity check)
# --------------------------------------------------------------------------

def reference_forward(model, x_nchw):
    x = x_nchw
    pi = 0
    for v in model.cfg:
        if v == "M":
            x = lax.reduce_window(x, -jnp.inf, lax.max,
                                  (1, 1, 2, 2), (1, 1, 2, 2), "VALID")
        else:
            w, b = model.conv_params[pi]
            pi += 1
            x = lax.conv_general_dilated(
                x, w, window_strides=(1, 1), padding=((1, 1), (1, 1)),
                dimension_numbers=("NCHW", "OIHW", "NCHW"),
                precision=lax.Precision.HIGHEST)
            x = jnp.maximum(x + b[None, :, None, None], 0.0)
    x = x.reshape(x.shape[0], -1)
    return jnp.dot(x, model.cls_w.T,
                   precision=lax.Precision.HIGHEST) + model.cls_b[None, :]


# --------------------------------------------------------------------------

if __name__ == "__main__":
    root = jax.random.PRNGKey(0)
    k_in, k_par = jax.random.split(root)

    # NCHW input, 3 channels, 32x32 (small shapes consistent with the module).
    x = jax.random.normal(k_in, (2, 3, 32, 32), jnp.float32)

    model = Featurizer("vgg11", in_channels=3, input_hw=32,
                       classifier_out=128, key=k_par)

    out = model(x)
    out = jax.block_until_ready(out)

    ref = reference_forward(model, x)
    assert out.shape == ref.shape == (2, 128), (out.shape, ref.shape)
    denom = jnp.maximum(jnp.max(jnp.abs(ref)), 1e-3)
    rel_err = float(jnp.max(jnp.abs(out - ref)) / denom)
    assert rel_err < 0.1, f"relative error too large: {rel_err}"

    print("KERNEL_OK")
</pallas_src>

<mosaic_0001>
module attributes {stable_mosaic.version = 11 : i64} {
  func.func @_conv_im2col_kernel(%arg0: i32, %arg1: memref<1x34x34x128xbf16, #tpu.memory_space<vmem>>, %arg2: memref<1152x128xbf16, #tpu.memory_space<vmem>>, %arg3: memref<1x128xf32, #tpu.memory_space<vmem>>, %arg4: memref<1x16x16x128xbf16, #tpu.memory_space<vmem>>, %arg5: memref<1024x128xf32, #tpu.memory_space<vmem>>) attributes {dimension_semantics = [#tpu.dimension_semantics<parallel>], iteration_bounds = array<i64: 2>, scalar_prefetch = 0 : i64, scratch_operands = 1 : i64, tpu.core_type = #tpu.core_type<tc>, window_params = [{transform_indices = @transform_0, window_bounds = array<i64: 1, 34, 34, 128>}, {pipeline_mode = #tpu.pipeline_mode<synchronous>, transform_indices = @transform_1, window_bounds = array<i64: 1152, 128>}, {pipeline_mode = #tpu.pipeline_mode<synchronous>, transform_indices = @transform_2, window_bounds = array<i64: 1, 128>}, {transform_indices = @transform_3, window_bounds = array<i64: 1, 16, 16, 128>}]} {
    %c0 = arith.constant 0 : index
    %c0_0 = arith.constant 0 : index
    %c0_1 = arith.constant 0 : index
    %c0_2 = arith.constant 0 : index
    %0 = vector.load %arg1[%c0, %c0_0, %c0_1, %c0_2] : memref<1x34x34x128xbf16, #tpu.memory_space<vmem>>, vector<1x32x32x128xbf16>
    %1 = vector.shape_cast %0 : vector<1x32x32x128xbf16> to vector<32x32x128xbf16>
    %2 = vector.shape_cast %1 : vector<32x32x128xbf16> to vector<1024x128xbf16>
    %c0_3 = arith.constant 0 : index
    %c0_4 = arith.constant 0 : index
    %c1 = arith.constant 1 : index
    %c0_5 = arith.constant 0 : index
    %3 = vector.load %arg1[%c0_3, %c0_4, %c1, %c0_5] : memref<1x34x34x128xbf16, #tpu.memory_space<vmem>>, vector<1x32x32x128xbf16>
    %4 = vector.shape_cast %3 : vector<1x32x32x128xbf16> to vector<32x32x128xbf16>
    %5 = vector.shape_cast %4 : vector<32x32x128xbf16> to vector<1024x128xbf16>
    %c0_6 = arith.constant 0 : index
    %c0_7 = arith.constant 0 : index
    %c2 = arith.constant 2 : index
    %c0_8 = arith.constant 0 : index
    %6 = vector.load %arg1[%c0_6, %c0_7, %c2, %c0_8] : memref<1x34x34x128xbf16, #tpu.memory_space<vmem>>, vector<1x32x32x128xbf16>
    %7 = vector.shape_cast %6 : vector<1x32x32x128xbf16> to vector<32x32x128xbf16>
    %8 = vector.shape_cast %7 : vector<32x32x128xbf16> to vector<1024x128xbf16>
    %c0_9 = arith.constant 0 : index
    %c1_10 = arith.constant 1 : index
    %c0_11 = arith.constant 0 : index
    %c0_12 = arith.constant 0 : index
    %9 = vector.load %arg1[%c0_9, %c1_10, %c0_11, %c0_12] : memref<1x34x34x128xbf16, #tpu.memory_space<vmem>>, vector<1x32x32x128xbf16>
    %10 = vector.shape_cast %9 : vector<1x32x32x128xbf16> to vector<32x32x128xbf16>
    %11 = vector.shape_cast %10 : vector<32x32x128xbf16> to vector<1024x128xbf16>
    %c0_13 = arith.constant 0 : index
    %c1_14 = arith.constant 1 : index
    %c1_15 = arith.constant 1 : index
    %c0_16 = arith.constant 0 : index
    %12 = vector.load %arg1[%c0_13, %c1_14, %c1_15, %c0_16] : memref<1x34x34x128xbf16, #tpu.memory_space<vmem>>, vector<1x32x32x128xbf16>
    %13 = vector.shape_cast %12 : vector<1x32x32x128xbf16> to vector<32x32x128xbf16>
    %14 = vector.shape_cast %13 : vector<32x32x128xbf16> to vector<1024x128xbf16>
    %c0_17 = arith.constant 0 : index
    %c1_18 = arith.constant 1 : index
    %c2_19 = arith.constant 2 : index
    %c0_20 = arith.constant 0 : index
    %15 = vector.load %arg1[%c0_17, %c1_18, %c2_19, %c0_20] : memref<1x34x34x128xbf16, #tpu.memory_space<vmem>>, vector<1x32x32x128xbf16>
    %16 = vector.shape_cast %15 : vector<1x32x32x128xbf16> to vector<32x32x128xbf16>
    %17 = vector.shape_cast %16 : vector<32x32x128xbf16> to vector<1024x128xbf16>
    %c0_21 = arith.constant 0 : index
    %c2_22 = arith.constant 2 : index
    %c0_23 = arith.constant 0 : index
    %c0_24 = arith.constant 0 : index
    %18 = vector.load %arg1[%c0_21, %c2_22, %c0_23, %c0_24] : memref<1x34x34x128xbf16, #tpu.memory_space<vmem>>, vector<1x32x32x128xbf16>
    %19 = vector.shape_cast %18 : vector<1x32x32x128xbf16> to vector<32x32x128xbf16>
    %20 = vector.shape_cast %19 : vector<32x32x128xbf16> to vector<1024x128xbf16>
    %c0_25 = arith.constant 0 : index
    %c2_26 = arith.constant 2 : index
    %c1_27 = arith.constant 1 : index
    %c0_28 = arith.constant 0 : index
    %21 = vector.load %arg1[%c0_25, %c2_26, %c1_27, %c0_28] : memref<1x34x34x128xbf16, #tpu.memory_space<vmem>>, vector<1x32x32x128xbf16>
    %22 = vector.shape_cast %21 : vector<1x32x32x128xbf16> to vector<32x32x128xbf16>
    %23 = vector.shape_cast %22 : vector<32x32x128xbf16> to vector<1024x128xbf16>
    %c0_29 = arith.constant 0 : index
    %c2_30 = arith.constant 2 : index
    %c2_31 = arith.constant 2 : index
    %c0_32 = arith.constant 0 : index
    %24 = vector.load %arg1[%c0_29, %c2_30, %c2_31, %c0_32] : memref<1x34x34x128xbf16, #tpu.memory_space<vmem>>, vector<1x32x32x128xbf16>
    %25 = vector.shape_cast %24 : vector<1x32x32x128xbf16> to vector<32x32x128xbf16>
    %26 = vector.shape_cast %25 : vector<32x32x128xbf16> to vector<1024x128xbf16>
    %27 = tpu.concatenate %2, %5, %8, %11, %14, %17, %20, %23, %26 in 1 : vector<1024x128xbf16>, vector<1024x128xbf16>, vector<1024x128xbf16>, vector<1024x128xbf16>, vector<1024x128xbf16>, vector<1024x128xbf16>, vector<1024x128xbf16>, vector<1024x128xbf16>, vector<1024x128xbf16> -> vector<1024x1152xbf16>
    %c0_33 = arith.constant 0 : index
    %c0_34 = arith.constant 0 : index
    %28 = vector.load %arg2[%c0_33, %c0_34] : memref<1152x128xbf16, #tpu.memory_space<vmem>>, vector<1152x128xbf16>
    %cst = arith.constant dense<0.000000e+00> : vector<1024x128xf32>
    %29 = tpu.matmul %27, %28, %cst {dimension_numbers = #tpu.dot_dimension_numbers<[1], [0], [0], [1], [0, 0, 1, 1], [], []>} : vector<1024x1152xbf16>, vector<1152x128xbf16>, vector<1024x128xf32> -> vector<1024x128xf32>
    %c0_35 = arith.constant 0 : index
    %c0_36 = arith.constant 0 : index
    %30 = vector.load %arg3[%c0_35, %c0_36] : memref<1x128xf32, #tpu.memory_space<vmem>>, vector<1x128xf32>
    %31 = vector.broadcast %30 : vector<1x128xf32> to vector<1024x128xf32>
    %32 = arith.addf %29, %31 : vector<1024x128xf32>
    %cst_37 = arith.constant 0.000000e+00 : f32
    %33 = vector.broadcast %cst_37 : f32 to vector<1024x128xf32>
    %34 = arith.maximumf %32, %33 : vector<1024x128xf32>
    %c0_38 = arith.constant 0 : index
    %c0_39 = arith.constant 0 : index
    %35 = vector.load %arg5[%c0_38, %c0_39] : memref<1024x128xf32, #tpu.memory_space<vmem>>, vector<1024x128xf32>
    tpu.vector_store %arg5[%c0_38, %c0_39], %34 {strides = array<i32>} : memref<1024x128xf32, #tpu.memory_space<vmem>>, vector<1024x128xf32>,
    %c0_40 = arith.constant 0 : index
    %c0_41 = arith.constant 0 : index
    %36 = tpu.strided_load %arg5[%c0_40, %c0_41] {strides = array<i32: 2, 1>} : memref<1024x128xf32, #tpu.memory_space<vmem>>, vector<512x128xf32>
    %c1_42 = arith.constant 1 : index
    %c0_43 = arith.constant 0 : index
    %37 = tpu.strided_load %arg5[%c1_42, %c0_43] {strides = array<i32: 2, 1>} : memref<1024x128xf32, #tpu.memory_space<vmem>>, vector<512x128xf32>
    %38 = arith.maximumf %36, %37 : vector<512x128xf32>
    %39 = vector.shape_cast %38 : vector<512x128xf32> to vector<16x32x128xf32>
    %40 = vector.extract_strided_slice %39 {offsets = [0, 0, 0], sizes = [16, 16, 128], strides = [1, 1, 1]} : vector<16x32x128xf32> to vector<16x16x128xf32>
    %41 = vector.extract_strided_slice %39 {offsets = [0, 16, 0], sizes = [16, 16, 128], strides = [1, 1, 1]} : vector<16x32x128xf32> to vector<16x16x128xf32>
    %42 = arith.maximumf %40, %41 : vector<16x16x128xf32>
    %43 = arith.truncf %42 : vector<16x16x128xf32> to vector<16x16x128xbf16>
    %c0_44 = arith.constant 0 : index
    %c0_45 = arith.constant 0 : index
    %c0_46 = arith.constant 0 : index
    %c0_47 = arith.constant 0 : index
    %44 = vector.load %arg4[%c0_44, %c0_45, %c0_46, %c0_47] : memref<1x16x16x128xbf16, #tpu.memory_space<vmem>>, vector<1x16x16x128xbf16>
    %45 = vector.shape_cast %44 : vector<1x16x16x128xbf16> to vector<16x16x128xbf16>
    %46 = vector.shape_cast %43 : vector<16x16x128xbf16> to vector<1x16x16x128xbf16>
    tpu.vector_store %arg4[%c0_44, %c0_45, %c0_46, %c0_47], %46 {strides = array<i32>} : memref<1x16x16x128xbf16, #tpu.memory_space<vmem>>, vector<1x16x16x128xbf16>,
    return
  }
  func.func @transform_0(%arg0: i32) -> (i32, i32, i32, i32) {
    %c0_i32 = arith.constant 0 : i32
    %c0_i32_0 = arith.constant 0 : i32
    %c0_i32_1 = arith.constant 0 : i32
    %c0_i32_2 = arith.constant 0 : i32
    return %arg0, %c0_i32, %c0_i32_0, %c0_i32_1 : i32, i32, i32, i32
  }
  func.func @transform_1(%arg0: i32) -> (i32, i32) {
    %c0_i32 = arith.constant 0 : i32
    %c0_i32_0 = arith.constant 0 : i32
    %c0_i32_1 = arith.constant 0 : i32
    return %c0_i32, %c0_i32_0 : i32, i32
  }
  func.func @transform_2(%arg0: i32) -> (i32, i32) {
    %c0_i32 = arith.constant 0 : i32
    %c0_i32_0 = arith.constant 0 : i32
    %c0_i32_1 = arith.constant 0 : i32
    return %c0_i32, %c0_i32_0 : i32, i32
  }
  func.func @transform_3(%arg0: i32) -> (i32, i32, i32, i32) {
    %c0_i32 = arith.constant 0 : i32
    %c0_i32_0 = arith.constant 0 : i32
    %c0_i32_1 = arith.constant 0 : i32
    %c0_i32_2 = arith.constant 0 : i32
    return %arg0, %c0_i32, %c0_i32_0, %c0_i32_1 : i32, i32, i32, i32
  }
}

</mosaic_0001>

<llo_original>
// kernel: tpu_custom_call.1
$region0: #{tpu_custom_call.1}
  #allocation0 [shape = 'u32[]', space=smem, size = 0x4, offset = 0x4, fixed_abs, tag = 'smem constant byte address 0x4 - core index']
  #allocation1 [shape = 'u32[144,128]{1,0:T(1,128)}', space=vmem, size = 0x12000, scoped, tag = 'internal scratch']
  #allocation2 [shape = 'f32[1024,128]{1,0:T(8,128)}', space=vmem, size = 0x80000, scoped, tag = 'scratch operand']
  %s0 = inlined_call_operand.vmem [shape: bf16[2,34,34,128], index: 0, kind: input, shape index: {}]
  %s1 = inlined_call_operand.vmem [shape: bf16[1152,128], index: 1, kind: input, shape index: {}]
  %s2 = inlined_call_operand.vmem [shape: f32[1,128], index: 2, kind: input, shape index: {}]
  %s3 = inlined_call_operand.hbm [shape: bf16[2,16,16,128], index: 3, kind: output, shape index: {}]
  %s4 = sld [smem:[#allocation0]]
  $region45: #{tpu_custom_call.1} parent=0
    _
  %s6 = ssub.s32 1, %s4
  %s7 = scalar_select 0, %s6, %s4
  $region1: #{tpu_custom_call.1} parent=0
    #allocation3 [shape = 'u8[131072]{0}', space=vmem, size = 0x20000, scoped, tag = 'output window, operand 0']
    #allocation4 [shape = 's32[2]{0}', space=sflag, size = 0x8, scoped, tag = 'scoped memory for tpu_custom_call.1']
    %8 = vsyncpa [#allocation4], 0
    %s9 = scalar_lea.sflag [#allocation4], 1
    %10 = vsyncpa %s9, 0
    loop: start=0, step=1, limit=4
    $region2: #{tpu_custom_call.1} parent=1 // loop_pre_header
      _
    $region3: #{tpu_custom_call.1} parent=1 // loop_header
      %s12 = sphi 0, %s16
      %p13 = scmp.ge.s32.totalorder %s12, 4
      %s22 = sphi 0, %s24
      %s25 = sphi 0, %s22
      %s26 = sphi 0, %s25
      %s42 = sphi 0, %s26
      %s46 = sphi 0, %s46
      %s48 = sphi 0, %s46
      %s49 = sphi 0, %s48
      %s63 = sphi 0, %s49
      %s67 = sphi 0, %s67
      %s69 = sphi 0, %s67
      %s70 = sphi 0, %s69
      %s84 = sphi 0, %s70
      %s90 = sphi 0, %s92
      %s93 = sphi 0, %s90
      %s94 = sphi 0, %s93
      %s110 = sphi 0, %s94
    $region4: #{tpu_custom_call.1} parent=1 // loop_header_branch
      %15 = sbr.rel (%p13) target = $region8
    $region5: #{tpu_custom_call.1} parent=1 // loop_body
      %s17 = ssub.s32 %s12, 1
      %s18 = ssub.s32 %s12, 2
      %s19 = sadd.s32 %s12, 1
      %s20 = ssub.s32 %s12, %s19
      %p21 = scmp.eq.s32.totalorder %s20, 0
      %s23 = sadd.s32 %s22, 1
      %s24 = scalar_select %p21, %s22, %s23
      %p27 = pneg %p21
      %p28 = scmp.eq.s32.totalorder %s12, 1
      %p29 = por %p27, %p28
      %p30 = scmp.ne.s32.totalorder %s22, %s25
      %p31 = scmp.eq.s32.totalorder %s12, 0
      %p32 = por %p30, %p31
      %p33 = scmp.ne.s32.totalorder %s22, %s25
      %p34 = scmp.eq.s32.totalorder %s17, 1
      %p35 = por %p33, %p34
      %p36 = scmp.ne.s32.totalorder %s25, %s26
      %p37 = scmp.eq.s32.totalorder %s17, 0
      %p38 = por %p36, %p37
      %p39 = scmp.ne.s32.totalorder %s25, %s26
      %p40 = scmp.eq.s32.totalorder %s18, 1
      %p41 = por %p39, %p40
      %p43 = scmp.ne.s32.totalorder %s26, %s42
      %p44 = scmp.eq.s32.totalorder %s18, 0
      %p45 = por %p43, %p44
      %s47 = sadd.s32 %s46, 1
      %p50 = scmp.eq.s32.totalorder %s12, 1
      %p51 = scmp.ne.s32.totalorder %s46, %s48
      %p52 = scmp.eq.s32.totalorder %s12, 0
      %p53 = por %p51, %p52
      %p54 = scmp.ne.s32.totalorder %s46, %s48
      %p55 = scmp.eq.s32.totalorder %s17, 1
      %p56 = por %p54, %p55
      %p57 = scmp.ne.s32.totalorder %s48, %s49
      %p58 = scmp.eq.s32.totalorder %s17, 0
      %p59 = por %p57, %p58
      %p60 = scmp.ne.s32.totalorder %s48, %s49
      %p61 = scmp.eq.s32.totalorder %s18, 1
      %p62 = por %p60, %p61
      %p64 = scmp.ne.s32.totalorder %s49, %s63
      %p65 = scmp.eq.s32.totalorder %s18, 0
      %p66 = por %p64, %p65
      %s68 = sadd.s32 %s67, 1
      %p71 = scmp.eq.s32.totalorder %s12, 1
      %p72 = scmp.ne.s32.totalorder %s67, %s69
      %p73 = scmp.eq.s32.totalorder %s12, 0
      %p74 = por %p72, %p73
      %p75 = scmp.ne.s32.totalorder %s67, %s69
      %p76 = scmp.eq.s32.totalorder %s17, 1
      %p77 = por %p75, %p76
      %p78 = scmp.ne.s32.totalorder %s69, %s70
      %p79 = scmp.eq.s32.totalorder %s17, 0
      %p80 = por %p78, %p79
      %p81 = scmp.ne.s32.totalorder %s69, %s70
      %p82 = scmp.eq.s32.totalorder %s18, 1
      %p83 = por %p81, %p82
      %p85 = scmp.ne.s32.totalorder %s70, %s84
      %p86 = scmp.eq.s32.totalorder %s18, 0
      %p87 = por %p85, %p86
      %s88 = ssub.s32 %s12, %s19
      %p89 = scmp.eq.s32.totalorder %s88, 0
      %s91 = sadd.s32 %s90, 1
      %s92 = scalar_select %p89, %s90, %s91
      %p95 = pneg %p89
      %p96 = scmp.eq.s32.totalorder %s12, 1
      %p97 = por %p95, %p96
      %p98 = scmp.ne.s32.totalorder %s90, %s93
      %p99 = scmp.eq.s32.totalorder %s12, 0
      %p100 = por %p98, %p99
      %p101 = scmp.ne.s32.totalorder %s90, %s93
      %p102 = scmp.eq.s32.totalorder %s17, 1
      %p103 = por %p101, %p102
      %p104 = scmp.ne.s32.totalorder %s93, %s94
      %p105 = scmp.eq.s32.totalorder %s17, 0
      %p106 = por %p104, %p105
      %p107 = scmp.ne.s32.totalorder %s93, %s94
      %p108 = scmp.eq.s32.totalorder %s18, 1
      %p109 = por %p107, %p108
      %p111 = scmp.ne.s32.totalorder %s94, %s110
      %p112 = scmp.eq.s32.totalorder %s18, 0
      %p113 = por %p111, %p112
      %p114 = scmp.le.s32.totalorder 1, %s12
      %p115 = scmp.lt.s32.totalorder %s12, 3
      %p116 = pnand %p114, %p115
      %p117 = pneg %p116
      // Predicated region
      $region9: #{tpu_custom_call.1} parent=5 // pred_check
        _
      $region10: #{tpu_custom_call.1} parent=5 // pred_check_branch
        %119 = sbr.rel (%p116) target = $region12
      $region11: #{tpu_custom_call.1} parent=5 // pred_region
        %s120 = ssub.s32 %s12, 1
        // Predicated region
        $region13: #{tpu_custom_call.1} parent=11 // pred_check
          %p121 = pneg %p59
        $region14: #{tpu_custom_call.1} parent=11 // pred_check_branch
          %123 = sbr.rel (%p121) target = $region16
        $region15: #{tpu_custom_call.1} parent=11 // pred_region
          _
        $region16: #{tpu_custom_call.1} parent=11 // pred_fallthru
          _
        // Predicated region
        $region17: #{tpu_custom_call.1} parent=11 // pred_check
          %p124 = pneg %p80
        $region18: #{tpu_custom_call.1} parent=11 // pred_check_branch
          %126 = sbr.rel (%p124) target = $region20
        $region19: #{tpu_custom_call.1} parent=11 // pred_region
          _
        $region20: #{tpu_custom_call.1} parent=11 // pred_fallthru
          _
      $region12: #{tpu_custom_call.1} parent=5 // pred_fallthru
        _
      %p127 = scmp.lt.s32.totalorder %s12, 2
      // Predicated region
      $region21: #{tpu_custom_call.1} parent=5 // pred_check
        %p128 = pneg %p127
      $region22: #{tpu_custom_call.1} parent=5 // pred_check_branch
        %130 = sbr.rel (%p128) target = $region24
      $region23: #{tpu_custom_call.1} parent=5 // pred_region
        // Predicated region
        $region25: #{tpu_custom_call.1} parent=23 // pred_check
          %p131 = pneg %p32
        $region26: #{tpu_custom_call.1} parent=23 // pred_check_branch
          %133 = sbr.rel (%p131) target = $region28
        $region27: #{tpu_custom_call.1} parent=23 // pred_region
          %p134 = scmp.lt.s32.totalorder %s12, 1
          %s135 = scalar_select %p134, %s12, 1
          %s136 = smul.addr %s135, 170
          %s137 = smul.addr %s136, 4
          %s138 = scalar_lea.vmem %s0, %s137
        $region28: #{tpu_custom_call.1} parent=23 // pred_fallthru
          _
      $region24: #{tpu_custom_call.1} parent=5 // pred_fallthru
        _
      %p139 = scmp.le.s32.totalorder 1, %s12
      %p140 = scmp.lt.s32.totalorder %s12, 3
      %p141 = pnand %p139, %p140
      %p142 = pneg %p141
      // Predicated region
      $region29: #{tpu_custom_call.1} parent=5 // pred_check
        _
      $region30: #{tpu_custom_call.1} parent=5 // pred_check_branch
        %144 = sbr.rel (%p141) target = $region32
      $region31: #{tpu_custom_call.1} parent=5 // pred_region
        %s145 = ssub.s32 %s12, 1
        %p146 = scmp.lt.s32.totalorder %s17, 1
        %s147 = scalar_select %p146, %s17, 1
        %s148 = smul.addr %s147, 170
        %s149 = smul.addr %s148, 4
        %s150 = scalar_lea.vmem %s0, %s149
        %p151 = pneg %p38
        %p152 = pneg %p35
        %p153 = pneg %p59
        %p154 = pneg %p56
        %p155 = pneg %p80
        %p156 = pneg %p77
        %p157 = pneg %p106
        %p158 = pneg %p103
        %s159 = sand.u32 %s93, 1
        %s160 = scalar_lea.sflag [#allocation4], %s159
        %s161 = sand.u32 %s93, 1
        %s162 = smul.addr %s161, 128
        %s163 = scalar_lea.vmem [#allocation3], %s162
        %p164 = scmp.lt.s32.totalorder %s17, 1
        %s165 = scalar_select %p164, %s17, 1
        %s166 = smul.addr %s165, 170
        %s167 = smul.addr %s166, 4
        %s168 = scalar_lea.vmem %s0, %s167
        %v170 = vld [vmem:[%s168] sm:$0xf]
        %v171 = vld [vmem:[%s168 + $0x4] sm:$0xf]
        %v172 = vld [vmem:[%s168 + $0x8] sm:$0xf]
        %v173 = vld [vmem:[%s168 + $0xc] sm:$0xf]
        %v174 = vld [vmem:[%s168 + $0x14] sm:$0xf]
        %v175 = vld [vmem:[%s168 + $0x18] sm:$0xf]
        %v176 = vld [vmem:[%s168 + $0x1c] sm:$0xf]
        %v177 = vld [vmem:[%s168 + $0x20] sm:$0xf]
        %v178 = vld [vmem:[%s168 + $0x28] sm:$0xf]
        %v179 = vld [vmem:[%s168 + $0x2c] sm:$0xf]
        %v180 = vld [vmem:[%s168 + $0x30] sm:$0xf]
        %v181 = vld [vmem:[%s168 + $0x34] sm:$0xf]
        %v182 = vld [vmem:[%s168 + $0x3c] sm:$0xf]
        %v183 = vld [vmem:[%s168 + $0x40] sm:$0xf]
        %v184 = vld [vmem:[%s168 + $0x44] sm:$0xf]
        %v185 = vld [vmem:[%s168 + $0x48] sm:$0xf]
        %v186 = vld [vmem:[%s168 + $0x50] sm:$0xf]
        %v187 = vld [vmem:[%s168 + $0x54] sm:$0xf]
        %v188 = vld [vmem:[%s168 + $0x58] sm:$0xf]
        %v189 = vld [vmem:[%s168 + $0x5c] sm:$0xf]
        %v190 = vld [vmem:[%s168 + $0x64] sm:$0xf]
        %v191 = vld [vmem:[%s168 + $0x68] sm:$0xf]
        %v192 = vld [vmem:[%s168 + $0x6c] sm:$0xf]
        %v193 = vld [vmem:[%s168 + $0x70] sm:$0xf]
        %v194 = vld [vmem:[%s168 + $0x78] sm:$0xf]
        %v195 = vld [vmem:[%s168 + $0x7c] sm:$0xf]
        %v196 = vld [vmem:[%s168 + $0x80] sm:$0xf]
        %v197 = vld [vmem:[%s168 + $0x84] sm:$0xf]
        %v198 = vld [vmem:[%s168 + $0x8c] sm:$0xf]
        %v199 = vld [vmem:[%s168 + $0x90] sm:$0xf]
        %v200 = vld [vmem:[%s168 + $0x94] sm:$0xf]
        %v201 = vld [vmem:[%s168 + $0x98] sm:$0xf]
        %v202 = vld [vmem:[%s168 + $0xa0] sm:$0xf]
        %v203 = vld [vmem:[%s168 + $0xa4] sm:$0xf]
        %v204 = vld [vmem:[%s168 + $0xa8] sm:$0xf]
        %v205 = vld [vmem:[%s168 + $0xac] sm:$0xf]
        %v206 = vld [vmem:[%s168 + $0xb4] sm:$0xf]
        %v207 = vld [vmem:[%s168 + $0xb8] sm:$0xf]
        %v208 = vld [vmem:[%s168 + $0xbc] sm:$0xf]
        %v209 = vld [vmem:[%s168 + $0xc0] sm:$0xf]
        %v210 = vld [vmem:[%s168 + $0xc8] sm:$0xf]
        %v211 = vld [vmem:[%s168 + $0xcc] sm:$0xf]
        %v212 = vld [vmem:[%s168 + $0xd0] sm:$0xf]
        %v213 = vld [vmem:[%s168 + $0xd4] sm:$0xf]
        %v214 = vld [vmem:[%s168 + $0xdc] sm:$0xf]
        %v215 = vld [vmem:[%s168 + $0xe0] sm:$0xf]
        %v216 = vld [vmem:[%s168 + $0xe4] sm:$0xf]
        %v217 = vld [vmem:[%s168 + $0xe8] sm:$0xf]
        %v218 = vld [vmem:[%s168 + $0xf0] sm:$0xf]
        %v219 = vld [vmem:[%s168 + $0xf4] sm:$0xf]
        %v220 = vld [vmem:[%s168 + $0xf8] sm:$0xf]
        %v221 = vld [vmem:[%s168 + $0xfc] sm:$0xf]
        %v222 = vld [vmem:[%s168 + $0x104] sm:$0xf]
        %v223 = vld [vmem:[%s168 + $0x108] sm:$0xf]
        %v224 = vld [vmem:[%s168 + $0x10c] sm:$0xf]
        %v225 = vld [vmem:[%s168 + $0x110] sm:$0xf]
        %v226 = vld [vmem:[%s168 + $0x118] sm:$0xf]
        %v227 = vld [vmem:[%s168 + $0x11c] sm:$0xf]
        %v228 = vld [vmem:[%s168 + $0x120] sm:$0xf]
        %v229 = vld [vmem:[%s168 + $0x124] sm:$0xf]
        %v230 = vld [vmem:[%s168 + $0x12c] sm:$0xf]
        %v231 = vld [vmem:[%s168 + $0x130] sm:$0xf]
        %v232 = vld [vmem:[%s168 + $0x134] sm:$0xf]
        %v233 = vld [vmem:[%s168 + $0x138] sm:$0xf]
        %v234 = vld [vmem:[%s168 + $0x140] sm:$0xf]
        %v235 = vld [vmem:[%s168 + $0x144] sm:$0xf]
        %v236 = vld [vmem:[%s168 + $0x148] sm:$0xf]
        %v237 = vld [vmem:[%s168 + $0x14c] sm:$0xf]
        %v238 = vld [vmem:[%s168 + $0x154] sm:$0xf]
        %v239 = vld [vmem:[%s168 + $0x158] sm:$0xf]
        %v240 = vld [vmem:[%s168 + $0x15c] sm:$0xf]
        %v241 = vld [vmem:[%s168 + $0x160] sm:$0xf]
        %v242 = vld [vmem:[%s168 + $0x168] sm:$0xf]
        %v243 = vld [vmem:[%s168 + $0x16c] sm:$0xf]
        %v244 = vld [vmem:[%s168 + $0x170] sm:$0xf]
        %v245 = vld [vmem:[%s168 + $0x174] sm:$0xf]
        %v246 = vld [vmem:[%s168 + $0x17c] sm:$0xf]
        %v247 = vld [vmem:[%s168 + $0x180] sm:$0xf]
        %v248 = vld [vmem:[%s168 + $0x184] sm:$0xf]
        %v249 = vld [vmem:[%s168 + $0x188] sm:$0xf]
        %v250 = vld [vmem:[%s168 + $0x190] sm:$0xf]
        %v251 = vld [vmem:[%s168 + $0x194] sm:$0xf]
        %v252 = vld [vmem:[%s168 + $0x198] sm:$0xf]
        %v253 = vld [vmem:[%s168 + $0x19c] sm:$0xf]
        %v254 = vld [vmem:[%s168 + $0x1a4] sm:$0xf]
        %v255 = vld [vmem:[%s168 + $0x1a8] sm:$0xf]
        %v256 = vld [vmem:[%s168 + $0x1ac] sm:$0xf]
        %v257 = vld [vmem:[%s168 + $0x1b0] sm:$0xf]
        %v258 = vld [vmem:[%s168 + $0x1b8] sm:$0xf]
        %v259 = vld [vmem:[%s168 + $0x1bc] sm:$0xf]
        %v260 = vld [vmem:[%s168 + $0x1c0] sm:$0xf]
        %v261 = vld [vmem:[%s168 + $0x1c4] sm:$0xf]
        %v262 = vld [vmem:[%s168 + $0x1cc] sm:$0xf]
        %v263 = vld [vmem:[%s168 + $0x1d0] sm:$0xf]
        %v264 = vld [vmem:[%s168 + $0x1d4] sm:$0xf]
        %v265 = vld [vmem:[%s168 + $0x1d8] sm:$0xf]
        %v266 = vld [vmem:[%s168 + $0x1e0] sm:$0xf]
        %v267 = vld [vmem:[%s168 + $0x1e4] sm:$0xf]
        %v268 = vld [vmem:[%s168 + $0x1e8] sm:$0xf]
        %v269 = vld [vmem:[%s168 + $0x1ec] sm:$0xf]
        %v270 = vld [vmem:[%s168 + $0x1f4] sm:$0xf]
        %v271 = vld [vmem:[%s168 + $0x1f8] sm:$0xf]
        %v272 = vld [vmem:[%s168 + $0x1fc] sm:$0xf]
        %v273 = vld [vmem:[%s168 + $0x200] sm:$0xf]
        %v274 = vld [vmem:[%s168 + $0x208] sm:$0xf]
        %v275 = vld [vmem:[%s168 + $0x20c] sm:$0xf]
        %v276 = vld [vmem:[%s168 + $0x210] sm:$0xf]
        %v277 = vld [vmem:[%s168 + $0x214] sm:$0xf]
        %v278 = vld [vmem:[%s168 + $0x21c] sm:$0xf]
        %v279 = vld [vmem:[%s168 + $0x220] sm:$0xf]
        %v280 = vld [vmem:[%s168 + $0x224] sm:$0xf]
        %v281 = vld [vmem:[%s168 + $0x228] sm:$0xf]
        %v282 = vld [vmem:[%s168 + $0x230] sm:$0xf]
        %v283 = vld [vmem:[%s168 + $0x234] sm:$0xf]
        %v284 = vld [vmem:[%s168 + $0x238] sm:$0xf]
        %v285 = vld [vmem:[%s168 + $0x23c] sm:$0xf]
        %v286 = vld [vmem:[%s168 + $0x244] sm:$0xf]
        %v287 = vld [vmem:[%s168 + $0x248] sm:$0xf]
        %v288 = vld [vmem:[%s168 + $0x24c] sm:$0xf]
        %v289 = vld [vmem:[%s168 + $0x250] sm:$0xf]
        %v290 = vld [vmem:[%s168 + $0x258] sm:$0xf]
        %v291 = vld [vmem:[%s168 + $0x25c] sm:$0xf]
        %v292 = vld [vmem:[%s168 + $0x260] sm:$0xf]
        %v293 = vld [vmem:[%s168 + $0x264] sm:$0xf]
        %v294 = vld [vmem:[%s168 + $0x26c] sm:$0xf]
        %v295 = vld [vmem:[%s168 + $0x270] sm:$0xf]
        %v296 = vld [vmem:[%s168 + $0x274] sm:$0xf]
        %v297 = vld [vmem:[%s168 + $0x278] sm:$0xf]
        %v298 = vld [vmem:[%s168 + $0x10] sm:$0x1]
        %v299 = vld [vmem:[%s168 + $0x24] sm:$0x1]
        %v300 = vld [vmem:[%s168 + $0x38] sm:$0x1]
        %v301 = vld [vmem:[%s168 + $0x4c] sm:$0x1]
        %v302 = vld [vmem:[%s168 + $0x60] sm:$0x1]
        %v303 = vld [vmem:[%s168 + $0x74] sm:$0x1]
        %v304 = vld [vmem:[%s168 + $0x88] sm:$0x1]
        %v305 = vld [vmem:[%s168 + $0x9c] sm:$0x1]
        %v306 = vld [vmem:[%s168 + $0xb0] sm:$0x1]
        %v307 = vld [vmem:[%s168 + $0xc4] sm:$0x1]
        %v308 = vld [vmem:[%s168 + $0xd8] sm:$0x1]
        %v309 = vld [vmem:[%s168 + $0xec] sm:$0x1]
        %v310 = vld [vmem:[%s168 + $0x100] sm:$0x1]
        %v311 = vld [vmem:[%s168 + $0x114] sm:$0x1]
        %v312 = vld [vmem:[%s168 + $0x128] sm:$0x1]
        %v313 = vld [vmem:[%s168 + $0x13c] sm:$0x1]
        %v314 = vld [vmem:[%s168 + $0x150] sm:$0x1]
        %v315 = vld [vmem:[%s168 + $0x164] sm:$0x1]
        %v316 = vld [vmem:[%s168 + $0x178] sm:$0x1]
        %v317 = vld [vmem:[%s168 + $0x18c] sm:$0x1]
        %v318 = vld [vmem:[%s168 + $0x1a0] sm:$0x1]
        %v319 = vld [vmem:[%s168 + $0x1b4] sm:$0x1]
        %v320 = vld [vmem:[%s168 + $0x1c8] sm:$0x1]
        %v321 = vld [vmem:[%s168 + $0x1dc] sm:$0x1]
        %v322 = vld [vmem:[%s168 + $0x1f0] sm:$0x1]
        %v323 = vld [vmem:[%s168 + $0x204] sm:$0x1]
        %v324 = vld [vmem:[%s168 + $0x218] sm:$0x1]
        %v325 = vld [vmem:[%s168 + $0x22c] sm:$0x1]
        %v326 = vld [vmem:[%s168 + $0x240] sm:$0x1]
        %v327 = vld [vmem:[%s168 + $0x254] sm:$0x1]
        %v328 = vld [vmem:[%s168 + $0x268] sm:$0x1]
        %v329 = vld [vmem:[%s168 + $0x27c] sm:$0x1]
        %vm330 = vsmask.f32 3328
        %vm331 = vsmask.f32 7440
        %vm332 = vmor %vm330, %vm331
        %v334 = vshrl.u32 %v170, 16
        %v336 = vrot.slane %v334, 4
        %v337 = vshll.u32 %v170, 16
        %v339 = vrot.slane %v337, 5
        %v340 = vor.u32 %v336, %v339
        %v341 = vrot.slane %v340, 4
        %v343 = vshll.u32 %v171, 16
        %v345 = vrot.slane %v343, 5
        %v346 = vsel %vm332, %v341, %v345
        %v347 = vshrl.u32 %v171, 16
        %v349 = vrot.slane %v347, 4
        %v350 = vor.u32 %v349, %v345
        %v351 = vrot.slane %v350, 4
        %v353 = vshll.u32 %v172, 16
        %v355 = vrot.slane %v353, 5
        %v356 = vsel %vm332, %v351, %v355
        %v357 = vshrl.u32 %v172, 16
        %v359 = vrot.slane %v357, 4
        %v360 = vor.u32 %v359, %v355
        %v361 = vrot.slane %v360, 4
        %v363 = vshll.u32 %v173, 16
        %v365 = vrot.slane %v363, 5
        %v366 = vsel %vm332, %v361, %v365
        %v367 = vshrl.u32 %v173, 16
        %v369 = vrot.slane %v367, 4
        %v370 = vor.u32 %v369, %v365
        %v371 = vrot.slane %v370, 4
        %v373 = vshll.u32 %v298, 16
        %v375 = vrot.slane %v373, 5
        %v376 = vsel %vm332, %v371, %v375
        %v378 = vshrl.u32 %v174, 16
        %v380 = vrot.slane %v378, 4
        %v381 = vshll.u32 %v174, 16
        %v383 = vrot.slane %v381, 5
        %v384 = vor.u32 %v380, %v383
        %v385 = vrot.slane %v384, 4
        %v387 = vshll.u32 %v175, 16
        %v389 = vrot.slane %v387, 5
        %v390 = vsel %vm332, %v385, %v389
        %v391 = vshrl.u32 %v175, 16
        %v393 = vrot.slane %v391, 4
        %v394 = vor.u32 %v393, %v389
        %v395 = vrot.slane %v394, 4
        %v397 = vshll.u32 %v176, 16
        %v399 = vrot.slane %v397, 5
        %v400 = vsel %vm332, %v395, %v399
        %v401 = vshrl.u32 %v176, 16
        %v403 = vrot.slane %v401, 4
        %v404 = vor.u32 %v403, %v399
        %v405 = vrot.slane %v404, 4
        %v407 = vshll.u32 %v177, 16
        %v409 = vrot.slane %v407, 5
        %v410 = vsel %vm332, %v405, %v409
        %v411 = vshrl.u32 %v177, 16
        %v413 = vrot.slane %v411, 4
        %v414 = vor.u32 %v413, %v409
        %v415 = vrot.slane %v414, 4
        %v417 = vshll.u32 %v299, 16
        %v419 = vrot.slane %v417, 5
        %v420 = vsel %vm332, %v415, %v419
        %v422 = vshrl.u32 %v178, 16
        %v424 = vrot.slane %v422, 4
        %v425 = vshll.u32 %v178, 16
        %v427 = vrot.slane %v425, 5
        %v428 = vor.u32 %v424, %v427
        %v429 = vrot.slane %v428, 4
        %v431 = vshll.u32 %v179, 16
        %v433 = vrot.slane %v431, 5
        %v434 = vsel %vm332, %v429, %v433
        %v435 = vshrl.u32 %v179, 16
        %v437 = vrot.slane %v435, 4
        %v438 = vor.u32 %v437, %v433
        %v439 = vrot.slane %v438, 4
        %v441 = vshll.u32 %v180, 16
        %v443 = vrot.slane %v441, 5
        %v444 = vsel %vm332, %v439, %v443
        %v445 = vshrl.u32 %v180, 16
        %v447 = vrot.slane %v445, 4
        %v448 = vor.u32 %v447, %v443
        %v449 = vrot.slane %v448, 4
        %v451 = vshll.u32 %v181, 16
        %v453 = vrot.slane %v451, 5
        %v454 = vsel %vm332, %v449, %v453
        %v455 = vshrl.u32 %v181, 16
        %v457 = vrot.slane %v455, 4
        %v458 = vor.u32 %v457, %v453
        %v459 = vrot.slane %v458, 4
        %v461 = vshll.u32 %v300, 16
        %v463 = vrot.slane %v461, 5
        %v464 = vsel %vm332, %v459, %v463
        %v466 = vshrl.u32 %v182, 16
        %v468 = vrot.slane %v466, 4
        %v469 = vshll.u32 %v182, 16
        %v471 = vrot.slane %v469, 5
        %v472 = vor.u32 %v468, %v471
        %v473 = vrot.slane %v472, 4
        %v475 = vshll.u32 %v183, 16
        %v477 = vrot.slane %v475, 5
        %v478 = vsel %vm332, %v473, %v477
        %v479 = vshrl.u32 %v183, 16
        %v481 = vrot.slane %v479, 4
        %v482 = vor.u32 %v481, %v477
        %v483 = vrot.slane %v482, 4
        %v485 = vshll.u32 %v184, 16
        %v487 = vrot.slane %v485, 5
        %v488 = vsel %vm332, %v483, %v487
        %v489 = vshrl.u32 %v184, 16
        %v491 = vrot.slane %v489, 4
        %v492 = vor.u32 %v491, %v487
        %v493 = vrot.slane %v492, 4
        %v495 = vshll.u32 %v185, 16
        %v497 = vrot.slane %v495, 5
        %v498 = vsel %vm332, %v493, %v497
        %v499 = vshrl.u32 %v185, 16
        %v501 = vrot.slane %v499, 4
        %v502 = vor.u32 %v501, %v497
        %v503 = vrot.slane %v502, 4
        %v505 = vshll.u32 %v301, 16
        %v507 = vrot.slane %v505, 5
        %v508 = vsel %vm332, %v503, %v507
        %v510 = vshrl.u32 %v186, 16
        %v512 = vrot.slane %v510, 4
        %v513 = vshll.u32 %v186, 16
        %v515 = vrot.slane %v513, 5
        %v516 = vor.u32 %v512, %v515
        %v517 = vrot.slane %v516, 4
        %v519 = vshll.u32 %v187, 16
        %v521 = vrot.slane %v519, 5
        %v522 = vsel %vm332, %v517, %v521
        %v523 = vshrl.u32 %v187, 16
        %v525 = vrot.slane %v523, 4
        %v526 = vor.u32 %v525, %v521
        %v527 = vrot.slane %v526, 4
        %v529 = vshll.u32 %v188, 16
        %v531 = vrot.slane %v529, 5
        %v532 = vsel %vm332, %v527, %v531
        %v533 = vshrl.u32 %v188, 16
        %v535 = vrot.slane %v533, 4
        %v536 = vor.u32 %v535, %v531
        %v537 = vrot.slane %v536, 4
        %v539 = vshll.u32 %v189, 16
        %v541 = vrot.slane %v539, 5
        %v542 = vsel %vm332, %v537, %v541
        %v543 = vshrl.u32 %v189, 16
        %v545 = vrot.slane %v543, 4
        %v546 = vor.u32 %v545, %v541
        %v547 = vrot.slane %v546, 4
        %v549 = vshll.u32 %v302, 16
        %v551 = vrot.slane %v549, 5
        %v552 = vsel %vm332, %v547, %v551
        %v554 = vshrl.u32 %v190, 16
        %v556 = vrot.slane %v554, 4
        %v557 = vshll.u32 %v190, 16
        %v559 = vrot.slane %v557, 5
        %v560 = vor.u32 %v556, %v559
        %v561 = vrot.slane %v560, 4
        %v563 = vshll.u32 %v191, 16
        %v565 = vrot.slane %v563, 5
        %v566 = vsel %vm332, %v561, %v565
        %v567 = vshrl.u32 %v191, 16
        %v569 = vrot.slane %v567, 4
        %v570 = vor.u32 %v569, %v565
        %v571 = vrot.slane %v570, 4
        %v573 = vshll.u32 %v192, 16
        %v575 = vrot.slane %v573, 5
        %v576 = vsel %vm332, %v571, %v575
        %v577 = vshrl.u32 %v192, 16
        %v579 = vrot.slane %v577, 4
        %v580 = vor.u32 %v579, %v575
        %v581 = vrot.slane %v580, 4
        %v583 = vshll.u32 %v193, 16
        %v585 = vrot.slane %v583, 5
        %v586 = vsel %vm332, %v581, %v585
        %v587 = vshrl.u32 %v193, 16
        %v589 = vrot.slane %v587, 4
        %v590 = vor.u32 %v589, %v585
        %v591 = vrot.slane %v590, 4
        %v593 = vshll.u32 %v303, 16
        %v595 = vrot.slane %v593, 5
        %v596 = vsel %vm332, %v591, %v595
        %v598 = vshrl.u32 %v194, 16
        %v600 = vrot.slane %v598, 4
        %v601 = vshll.u32 %v194, 16
        %v603 = vrot.slane %v601, 5
        %v604 = vor.u32 %v600, %v603
        %v605 = vrot.slane %v604, 4
        %v607 = vshll.u32 %v195, 16
        %v609 = vrot.slane %v607, 5
        %v610 = vsel %vm332, %v605, %v609
        %v611 = vshrl.u32 %v195, 16
        %v613 = vrot.slane %v611, 4
        %v614 = vor.u32 %v613, %v609
        %v615 = vrot.slane %v614, 4
        %v617 = vshll.u32 %v196, 16
        %v619 = vrot.slane %v617, 5
        %v620 = vsel %vm332, %v615, %v619
        %v621 = vshrl.u32 %v196, 16
        %v623 = vrot.slane %v621, 4
        %v624 = vor.u32 %v623, %v619
        %v625 = vrot.slane %v624, 4
        %v627 = vshll.u32 %v197, 16
        %v629 = vrot.slane %v627, 5
        %v630 = vsel %vm332, %v625, %v629
        %v631 = vshrl.u32 %v197, 16
        %v633 = vrot.slane %v631, 4
        %v634 = vor.u32 %v633, %v629
        %v635 = vrot.slane %v634, 4
        %v637 = vshll.u32 %v304, 16
        %v639 = vrot.slane %v637, 5
        %v640 = vsel %vm332, %v635, %v639
        %v642 = vshrl.u32 %v198, 16
        %v644 = vrot.slane %v642, 4
        %v645 = vshll.u32 %v198, 16
        %v647 = vrot.slane %v645, 5
        %v648 = vor.u32 %v644, %v647
        %v649 = vrot.slane %v648, 4
        %v651 = vshll.u32 %v199, 16
        %v653 = vrot.slane %v651, 5
        %v654 = vsel %vm332, %v649, %v653
        %v655 = vshrl.u32 %v199, 16
        %v657 = vrot.slane %v655, 4
        %v658 = vor.u32 %v657, %v653
        %v659 = vrot.slane %v658, 4
        %v661 = vshll.u32 %v200, 16
        %v663 = vrot.slane %v661, 5
        %v664 = vsel %vm332, %v659, %v663
        %v665 = vshrl.u32 %v200, 16
        %v667 = vrot.slane %v665, 4
        %v668 = vor.u32 %v667, %v663
        %v669 = vrot.slane %v668, 4
        %v671 = vshll.u32 %v201, 16
        %v673 = vrot.slane %v671, 5
        %v674 = vsel %vm332, %v669, %v673
        %v675 = vshrl.u32 %v201, 16
        %v677 = vrot.slane %v675, 4
        %v678 = vor.u32 %v677, %v673
        %v679 = vrot.slane %v678, 4
        %v681 = vshll.u32 %v305, 16
        %v683 = vrot.slane %v681, 5
        %v684 = vsel %vm332, %v679, %v683
        %v686 = vshrl.u32 %v202, 16
        %v688 = vrot.slane %v686, 4
        %v689 = vshll.u32 %v202, 16
        %v691 = vrot.slane %v689, 5
        %v692 = vor.u32 %v688, %v691
        %v693 = vrot.slane %v692, 4
        %v695 = vshll.u32 %v203, 16
        %v697 = vrot.slane %v695, 5
        %v698 = vsel %vm332, %v693, %v697
        %v699 = vshrl.u32 %v203, 16
        %v701 = vrot.slane %v699, 4
        %v702 = vor.u32 %v701, %v697
        %v703 = vrot.slane %v702, 4
        %v705 = vshll.u32 %v204, 16
        %v707 = vrot.slane %v705, 5
        %v708 = vsel %vm332, %v703, %v707
        %v709 = vshrl.u32 %v204, 16
        %v711 = vrot.slane %v709, 4
        %v712 = vor.u32 %v711, %v707
        %v713 = vrot.slane %v712, 4
        %v715 = vshll.u32 %v205, 16
        %v717 = vrot.slane %v715, 5
        %v718 = vsel %vm332, %v713, %v717
        %v719 = vshrl.u32 %v205, 16
        %v721 = vrot.slane %v719, 4
        %v722 = vor.u32 %v721, %v717
        %v723 = vrot.slane %v722, 4
        %v725 = vshll.u32 %v306, 16
        %v727 = vrot.slane %v725, 5
        %v728 = vsel %vm332, %v723, %v727
        %v730 = vshrl.u32 %v206, 16
        %v732 = vrot.slane %v730, 4
        %v733 = vshll.u32 %v206, 16
        %v735 = vrot.slane %v733, 5
        %v736 = vor.u32 %v732, %v735
        %v737 = vrot.slane %v736, 4
        %v739 = vshll.u32 %v207, 16
        %v741 = vrot.slane %v739, 5
        %v742 = vsel %vm332, %v737, %v741
        %v743 = vshrl.u32 %v207, 16
        %v745 = vrot.slane %v743, 4
        %v746 = vor.u32 %v745, %v741
        %v747 = vrot.slane %v746, 4
        %v749 = vshll.u32 %v208, 16
        %v751 = vrot.slane %v749, 5
        %v752 = vsel %vm332, %v747, %v751
        %v753 = vshrl.u32 %v208, 16
        %v755 = vrot.slane %v753, 4
        %v756 = vor.u32 %v755, %v751
        %v757 = vrot.slane %v756, 4
        %v759 = vshll.u32 %v209, 16
        %v761 = vrot.slane %v759, 5
        %v762 = vsel %vm332, %v757, %v761
        %v763 = vshrl.u32 %v209, 16
        %v765 = vrot.slane %v763, 4
        %v766 = vor.u32 %v765, %v761
        %v767 = vrot.slane %v766, 4
        %v769 = vshll.u32 %v307, 16
        %v771 = vrot.slane %v769, 5
        %v772 = vsel %vm332, %v767, %v771
        %v774 = vshrl.u32 %v210, 16
        %v776 = vrot.slane %v774, 4
        %v777 = vshll.u32 %v210, 16
        %v779 = vrot.slane %v777, 5
        %v780 = vor.u32 %v776, %v779
        %v781 = vrot.slane %v780, 4
        %v783 = vshll.u32 %v211, 16
        %v785 = vrot.slane %v783, 5
        %v786 = vsel %vm332, %v781, %v785
        %v787 = vshrl.u32 %v211, 16
        %v789 = vrot.slane %v787, 4
        %v790 = vor.u32 %v789, %v785
        %v791 = vrot.slane %v790, 4
        %v793 = vshll.u32 %v212, 16
        %v795 = vrot.slane %v793, 5
        %v796 = vsel %vm332, %v791, %v795
        %v797 = vshrl.u32 %v212, 16
        %v799 = vrot.slane %v797, 4
        %v800 = vor.u32 %v799, %v795
        %v801 = vrot.slane %v800, 4
        %v803 = vshll.u32 %v213, 16
        %v805 = vrot.slane %v803, 5
        %v806 = vsel %vm332, %v801, %v805
        %v807 = vshrl.u32 %v213, 16
        %v809 = vrot.slane %v807, 4
        %v810 = vor.u32 %v809, %v805
        %v811 = vrot.slane %v810, 4
        %v813 = vshll.u32 %v308, 16
        %v815 = vrot.slane %v813, 5
        %v816 = vsel %vm332, %v811, %v815
        %v818 = vshrl.u32 %v214, 16
        %v820 = vrot.slane %v818, 4
        %v821 = vshll.u32 %v214, 16
        %v823 = vrot.slane %v821, 5
        %v824 = vor.u32 %v820, %v823
        %v825 = vrot.slane %v824, 4
        %v827 = vshll.u32 %v215, 16
        %v829 = vrot.slane %v827, 5
        %v830 = vsel %vm332, %v825, %v829
        %v831 = vshrl.u32 %v215, 16
        %v833 = vrot.slane %v831, 4
        %v834 = vor.u32 %v833, %v829
        %v835 = vrot.slane %v834, 4
        %v837 = vshll.u32 %v216, 16
        %v839 = vrot.slane %v837, 5
        %v840 = vsel %vm332, %v835, %v839
        %v841 = vshrl.u32 %v216, 16
        %v843 = vrot.slane %v841, 4
        %v844 = vor.u32 %v843, %v839
        %v845 = vrot.slane %v844, 4
        %v847 = vshll.u32 %v217, 16
        %v849 = vrot.slane %v847, 5
        %v850 = vsel %vm332, %v845, %v849
        %v851 = vshrl.u32 %v217, 16
        %v853 = vrot.slane %v851, 4
        %v854 = vor.u32 %v853, %v849
        %v855 = vrot.slane %v854, 4
        %v857 = vshll.u32 %v309, 16
        %v859 = vrot.slane %v857, 5
        %v860 = vsel %vm332, %v855, %v859
        %v862 = vshrl.u32 %v218, 16
        %v864 = vrot.slane %v862, 4
        %v865 = vshll.u32 %v218, 16
        %v867 = vrot.slane %v865, 5
        %v868 = vor.u32 %v864, %v867
        %v869 = vrot.slane %v868, 4
        %v871 = vshll.u32 %v219, 16
        %v873 = vrot.slane %v871, 5
        %v874 = vsel %vm332, %v869, %v873
        %v875 = vshrl.u32 %v219, 16
        %v877 = vrot.slane %v875, 4
        %v878 = vor.u32 %v877, %v873
        %v879 = vrot.slane %v878, 4
        %v881 = vshll.u32 %v220, 16
        %v883 = vrot.slane %v881, 5
        %v884 = vsel %vm332, %v879, %v883
        %v885 = vshrl.u32 %v220, 16
        %v887 = vrot.slane %v885, 4
        %v888 = vor.u32 %v887, %v883
        %v889 = vrot.slane %v888, 4
        %v891 = vshll.u32 %v221, 16
        %v893 = vrot.slane %v891, 5
        %v894 = vsel %vm332, %v889, %v893
        %v895 = vshrl.u32 %v221, 16
        %v897 = vrot.slane %v895, 4
        %v898 = vor.u32 %v897, %v893
        %v899 = vrot.slane %v898, 4
        %v901 = vshll.u32 %v310, 16
        %v903 = vrot.slane %v901, 5
        %v904 = vsel %vm332, %v899, %v903
        %v906 = vshrl.u32 %v222, 16
        %v908 = vrot.slane %v906, 4
        %v909 = vshll.u32 %v222, 16
        %v911 = vrot.slane %v909, 5
        %v912 = vor.u32 %v908, %v911
        %v913 = vrot.slane %v912, 4
        %v915 = vshll.u32 %v223, 16
        %v917 = vrot.slane %v915, 5
        %v918 = vsel %vm332, %v913, %v917
        %v919 = vshrl.u32 %v223, 16
        %v921 = vrot.slane %v919, 4
        %v922 = vor.u32 %v921, %v917
        %v923 = vrot.slane %v922, 4
        %v925 = vshll.u32 %v224, 16
        %v927 = vrot.slane %v925, 5
        %v928 = vsel %vm332, %v923, %v927
        %v929 = vshrl.u32 %v224, 16
        %v931 = vrot.slane %v929, 4
        %v932 = vor.u32 %v931, %v927
        %v933 = vrot.slane %v932, 4
        %v935 = vshll.u32 %v225, 16
        %v937 = vrot.slane %v935, 5
        %v938 = vsel %vm332, %v933, %v937
        %v939 = vshrl.u32 %v225, 16
        %v941 = vrot.slane %v939, 4
        %v942 = vor.u32 %v941, %v937
        %v943 = vrot.slane %v942, 4
        %v945 = vshll.u32 %v311, 16
        %v947 = vrot.slane %v945, 5
        %v948 = vsel %vm332, %v943, %v947
        %v950 = vshrl.u32 %v226, 16
        %v952 = vrot.slane %v950, 4
        %v953 = vshll.u32 %v226, 16
        %v955 = vrot.slane %v953, 5
        %v956 = vor.u32 %v952, %v955
        %v957 = vrot.slane %v956, 4
        %v959 = vshll.u32 %v227, 16
        %v961 = vrot.slane %v959, 5
        %v962 = vsel %vm332, %v957, %v961
        %v963 = vshrl.u32 %v227, 16
        %v965 = vrot.slane %v963, 4
        %v966 = vor.u32 %v965, %v961
        %v967 = vrot.slane %v966, 4
        %v969 = vshll.u32 %v228, 16
        %v971 = vrot.slane %v969, 5
        %v972 = vsel %vm332, %v967, %v971
        %v973 = vshrl.u32 %v228, 16
        %v975 = vrot.slane %v973, 4
        %v976 = vor.u32 %v975, %v971
        %v977 = vrot.slane %v976, 4
        %v979 = vshll.u32 %v229, 16
        %v981 = vrot.slane %v979, 5
        %v982 = vsel %vm332, %v977, %v981
        %v983 = vshrl.u32 %v229, 16
        %v985 = vrot.slane %v983, 4
        %v986 = vor.u32 %v985, %v981
        %v987 = vrot.slane %v986, 4
        %v989 = vshll.u32 %v312, 16
        %v991 = vrot.slane %v989, 5
        %v992 = vsel %vm332, %v987, %v991
        %v994 = vshrl.u32 %v230, 16
        %v996 = vrot.slane %v994, 4
        %v997 = vshll.u32 %v230, 16
        %v999 = vrot.slane %v997, 5
        %v1000 = vor.u32 %v996, %v999
        %v1001 = vrot.slane %v1000, 4
        %v1003 = vshll.u32 %v231, 16
        %v1005 = vrot.slane %v1003, 5
        %v1006 = vsel %vm332, %v1001, %v1005
        %v1007 = vshrl.u32 %v231, 16
        %v1009 = vrot.slane %v1007, 4
        %v1010 = vor.u32 %v1009, %v1005
        %v1011 = vrot.slane %v1010, 4
        %v1013 = vshll.u32 %v232, 16
        %v1015 = vrot.slane %v1013, 5
        %v1016 = vsel %vm332, %v1011, %v1015
        %v1017 = vshrl.u32 %v232, 16
        %v1019 = vrot.slane %v1017, 4
        %v1020 = vor.u32 %v1019, %v1015
        %v1021 = vrot.slane %v1020, 4
        %v1023 = vshll.u32 %v233, 16
        %v1025 = vrot.slane %v1023, 5
        %v1026 = vsel %vm332, %v1021, %v1025
        %v1027 = vshrl.u32 %v233, 16
        %v1029 = vrot.slane %v1027, 4
        %v1030 = vor.u32 %v1029, %v1025
        %v1031 = vrot.slane %v1030, 4
        %v1033 = vshll.u32 %v313, 16
        %v1035 = vrot.slane %v1033, 5
        %v1036 = vsel %vm332, %v1031, %v1035
        %v1038 = vshrl.u32 %v234, 16
        %v1040 = vrot.slane %v1038, 4
        %v1041 = vshll.u32 %v234, 16
        %v1043 = vrot.slane %v1041, 5
        %v1044 = vor.u32 %v1040, %v1043
        %v1045 = vrot.slane %v1044, 4
        %v1047 = vshll.u32 %v235, 16
        %v1049 = vrot.slane %v1047, 5
        %v1050 = vsel %vm332, %v1045, %v1049
        %v1051 = vshrl.u32 %v235, 16
        %v1053 = vrot.slane %v1051, 4
        %v1054 = vor.u32 %v1053, %v1049
        %v1055 = vrot.slane %v1054, 4
        %v1057 = vshll.u32 %v236, 16
        %v1059 = vrot.slane %v1057, 5
        %v1060 = vsel %vm332, %v1055, %v1059
        %v1061 = vshrl.u32 %v236, 16
        %v1063 = vrot.slane %v1061, 4
        %v1064 = vor.u32 %v1063, %v1059
        %v1065 = vrot.slane %v1064, 4
        %v1067 = vshll.u32 %v237, 16
        %v1069 = vrot.slane %v1067, 5
        %v1070 = vsel %vm332, %v1065, %v1069
        %v1071 = vshrl.u32 %v237, 16
        %v1073 = vrot.slane %v1071, 4
        %v1074 = vor.u32 %v1073, %v1069
        %v1075 = vrot.slane %v1074, 4
        %v1077 = vshll.u32 %v314, 16
        %v1079 = vrot.slane %v1077, 5
        %v1080 = vsel %vm332, %v1075, %v1079
        %v1082 = vshrl.u32 %v238, 16
        %v1084 = vrot.slane %v1082, 4
        %v1085 = vshll.u32 %v238, 16
        %v1087 = vrot.slane %v1085, 5
        %v1088 = vor.u32 %v1084, %v1087
        %v1089 = vrot.slane %v1088, 4
        %v1091 = vshll.u32 %v239, 16
        %v1093 = vrot.slane %v1091, 5
        %v1094 = vsel %vm332, %v1089, %v1093
        %v1095 = vshrl.u32 %v239, 16
        %v1097 = vrot.slane %v1095, 4
        %v1098 = vor.u32 %v1097, %v1093
        %v1099 = vrot.slane %v1098, 4
        %v1101 = vshll.u32 %v240, 16
        %v1103 = vrot.slane %v1101, 5
        %v1104 = vsel %vm332, %v1099, %v1103
        %v1105 = vshrl.u32 %v240, 16
        %v1107 = vrot.slane %v1105, 4
        %v1108 = vor.u32 %v1107, %v1103
        %v1109 = vrot.slane %v1108, 4
        %v1111 = vshll.u32 %v241, 16
        %v1113 = vrot.slane %v1111, 5
        %v1114 = vsel %vm332, %v1109, %v1113
        %v1115 = vshrl.u32 %v241, 16
        %v1117 = vrot.slane %v1115, 4
        %v1118 = vor.u32 %v1117, %v1113
        %v1119 = vrot.slane %v1118, 4
        %v1121 = vshll.u32 %v315, 16
        %v1123 = vrot.slane %v1121, 5
        %v1124 = vsel %vm332, %v1119, %v1123
        %v1126 = vshrl.u32 %v242, 16
        %v1128 = vrot.slane %v1126, 4
        %v1129 = vshll.u32 %v242, 16
        %v1131 = vrot.slane %v1129, 5
        %v1132 = vor.u32 %v1128, %v1131
        %v1133 = vrot.slane %v1132, 4
        %v1135 = vshll.u32 %v243, 16
        %v1137 = vrot.slane %v1135, 5
        %v1138 = vsel %vm332, %v1133, %v1137
        %v1139 = vshrl.u32 %v243, 16
        %v1141 = vrot.slane %v1139, 4
        %v1142 = vor.u32 %v1141, %v1137
        %v1143 = vrot.slane %v1142, 4
        %v1145 = vshll.u32 %v244, 16
        %v1147 = vrot.slane %v1145, 5
        %v1148 = vsel %vm332, %v1143, %v1147
        %v1149 = vshrl.u32 %v244, 16
        %v1151 = vrot.slane %v1149, 4
        %v1152 = vor.u32 %v1151, %v1147
        %v1153 = vrot.slane %v1152, 4
        %v1155 = vshll.u32 %v245, 16
        %v1157 = vrot.slane %v1155, 5
        %v1158 = vsel %vm332, %v1153, %v1157
        %v1159 = vshrl.u32 %v245, 16
        %v1161 = vrot.slane %v1159, 4
        %v1162 = vor.u32 %v1161, %v1157
        %v1163 = vrot.slane %v1162, 4
        %v1165 = vshll.u32 %v316, 16
        %v1167 = vrot.slane %v1165, 5
        %v1168 = vsel %vm332, %v1163, %v1167
        %v1170 = vshrl.u32 %v246, 16
        %v1172 = vrot.slane %v1170, 4
        %v1173 = vshll.u32 %v246, 16
        %v1175 = vrot.slane %v1173, 5
        %v1176 = vor.u32 %v1172, %v1175
        %v1177 = vrot.slane %v1176, 4
        %v1179 = vshll.u32 %v247, 16
        %v1181 = vrot.slane %v1179, 5
        %v1182 = vsel %vm332, %v1177, %v1181
        %v1183 = vshrl.u32 %v247, 16
        %v1185 = vrot.slane %v1183, 4
        %v1186 = vor.u32 %v1185, %v1181
        %v1187 = vrot.slane %v1186, 4
        %v1189 = vshll.u32 %v248, 16
        %v1191 = vrot.slane %v1189, 5
        %v1192 = vsel %vm332, %v1187, %v1191
        %v1193 = vshrl.u32 %v248, 16
        %v1195 = vrot.slane %v1193, 4
        %v1196 = vor.u32 %v1195, %v1191
        %v1197 = vrot.slane %v1196, 4
        %v1199 = vshll.u32 %v249, 16
        %v1201 = vrot.slane %v1199, 5
        %v1202 = vsel %vm332, %v1197, %v1201
        %v1203 = vshrl.u32 %v249, 16
        %v1205 = vrot.slane %v1203, 4
        %v1206 = vor.u32 %v1205, %v1201
        %v1207 = vrot.slane %v1206, 4
        %v1209 = vshll.u32 %v317, 16
        %v1211 = vrot.slane %v1209, 5
        %v1212 = vsel %vm332, %v1207, %v1211
        %v1214 = vshrl.u32 %v250, 16
        %v1216 = vrot.slane %v1214, 4
        %v1217 = vshll.u32 %v250, 16
        %v1219 = vrot.slane %v1217, 5
        %v1220 = vor.u32 %v1216, %v1219
        %v1221 = vrot.slane %v1220, 4
        %v1223 = vshll.u32 %v251, 16
        %v1225 = vrot.slane %v1223, 5
        %v1226 = vsel %vm332, %v1221, %v1225
        %v1227 = vshrl.u32 %v251, 16
        %v1229 = vrot.slane %v1227, 4
        %v1230 = vor.u32 %v1229, %v1225
        %v1231 = vrot.slane %v1230, 4
        %v1233 = vshll.u32 %v252, 16
        %v1235 = vrot.slane %v1233, 5
        %v1236 = vsel %vm332, %v1231, %v1235
        %v1237 = vshrl.u32 %v252, 16
        %v1239 = vrot.slane %v1237, 4
        %v1240 = vor.u32 %v1239, %v1235
        %v1241 = vrot.slane %v1240, 4
        %v1243 = vshll.u32 %v253, 16
        %v1245 = vrot.slane %v1243, 5
        %v1246 = vsel %vm332, %v1241, %v1245
        %v1247 = vshrl.u32 %v253, 16
        %v1249 = vrot.slane %v1247, 4
        %v1250 = vor.u32 %v1249, %v1245
        %v1251 = vrot.slane %v1250, 4
        %v1253 = vshll.u32 %v318, 16
        %v1255 = vrot.slane %v1253, 5
        %v1256 = vsel %vm332, %v1251, %v1255
        %v1258 = vshrl.u32 %v254, 16
        %v1260 = vrot.slane %v1258, 4
        %v1261 = vshll.u32 %v254, 16
        %v1263 = vrot.slane %v1261, 5
        %v1264 = vor.u32 %v1260, %v1263
        %v1265 = vrot.slane %v1264, 4
        %v1267 = vshll.u32 %v255, 16
        %v1269 = vrot.slane %v1267, 5
        %v1270 = vsel %vm332, %v1265, %v1269
        %v1271 = vshrl.u32 %v255, 16
        %v1273 = vrot.slane %v1271, 4
        %v1274 = vor.u32 %v1273, %v1269
        %v1275 = vrot.slane %v1274, 4
        %v1277 = vshll.u32 %v256, 16
        %v1279 = vrot.slane %v1277, 5
        %v1280 = vsel %vm332, %v1275, %v1279
        %v1281 = vshrl.u32 %v256, 16
        %v1283 = vrot.slane %v1281, 4
        %v1284 = vor.u32 %v1283, %v1279
        %v1285 = vrot.slane %v1284, 4
        %v1287 = vshll.u32 %v257, 16
        %v1289 = vrot.slane %v1287, 5
        %v1290 = vsel %vm332, %v1285, %v1289
        %v1291 = vshrl.u32 %v257, 16
        %v1293 = vrot.slane %v1291, 4
        %v1294 = vor.u32 %v1293, %v1289
        %v1295 = vrot.slane %v1294, 4
        %v1297 = vshll.u32 %v319, 16
        %v1299 = vrot.slane %v1297, 5
        %v1300 = vsel %vm332, %v1295, %v1299
        %v1302 = vshrl.u32 %v258, 16
        %v1304 = vrot.slane %v1302, 4
        %v1305 = vshll.u32 %v258, 16
        %v1307 = vrot.slane %v1305, 5
        %v1308 = vor.u32 %v1304, %v1307
        %v1309 = vrot.slane %v1308, 4
        %v1311 = vshll.u32 %v259, 16
        %v1313 = vrot.slane %v1311, 5
        %v1314 = vsel %vm332, %v1309, %v1313
        %v1315 = vshrl.u32 %v259, 16
        %v1317 = vrot.slane %v1315, 4
        %v1318 = vor.u32 %v1317, %v1313
        %v1319 = vrot.slane %v1318, 4
        %v1321 = vshll.u32 %v260, 16
        %v1323 = vrot.slane %v1321, 5
        %v1324 = vsel %vm332, %v1319, %v1323
        %v1325 = vshrl.u32 %v260, 16
        %v1327 = vrot.slane %v1325, 4
        %v1328 = vor.u32 %v1327, %v1323
        %v1329 = vrot.slane %v1328, 4
        %v1331 = vshll.u32 %v261, 16
        %v1333 = vrot.slane %v1331, 5
        %v1334 = vsel %vm332, %v1329, %v1333
        %v1335 = vshrl.u32 %v261, 16
        %v1337 = vrot.slane %v1335, 4
        %v1338 = vor.u32 %v1337, %v1333
        %v1339 = vrot.slane %v1338, 4
        %v1341 = vshll.u32 %v320, 16
        %v1343 = vrot.slane %v1341, 5
        %v1344 = vsel %vm332, %v1339, %v1343
        %v1346 = vshrl.u32 %v262, 16
        %v1348 = vrot.slane %v1346, 4
        %v1349 = vshll.u32 %v262, 16
        %v1351 = vrot.slane %v1349, 5
        %v1352 = vor.u32 %v1348, %v1351
        %v1353 = vrot.slane %v1352, 4
        %v1355 = vshll.u32 %v263, 16
        %v1357 = vrot.slane %v1355, 5
        %v1358 = vsel %vm332, %v1353, %v1357
        %v1359 = vshrl.u32 %v263, 16
        %v1361 = vrot.slane %v1359, 4
        %v1362 = vor.u32 %v1361, %v1357
        %v1363 = vrot.slane %v1362, 4
        %v1365 = vshll.u32 %v264, 16
        %v1367 = vrot.slane %v1365, 5
        %v1368 = vsel %vm332, %v1363, %v1367
        %v1369 = vshrl.u32 %v264, 16
        %v1371 = vrot.slane %v1369, 4
        %v1372 = vor.u32 %v1371, %v1367
        %v1373 = vrot.slane %v1372, 4
        %v1375 = vshll.u32 %v265, 16
        %v1377 = vrot.slane %v1375, 5
        %v1378 = vsel %vm332, %v1373, %v1377
        %v1379 = vshrl.u32 %v265, 16
        %v1381 = vrot.slane %v1379, 4
        %v1382 = vor.u32 %v1381, %v1377
        %v1383 = vrot.slane %v1382, 4
        %v1385 = vshll.u32 %v321, 16
        %v1387 = vrot.slane %v1385, 5
        %v1388 = vsel %vm332, %v1383, %v1387
        %v1390 = vshrl.u32 %v266, 16
        %v1392 = vrot.slane %v1390, 4
        %v1393 = vshll.u32 %v266, 16
        %v1395 = vrot.slane %v1393, 5
        %v1396 = vor.u32 %v1392, %v1395
        %v1397 = vrot.slane %v1396, 4
        %v1399 = vshll.u32 %v267, 16
        %v1401 = vrot.slane %v1399, 5
        %v1402 = vsel %vm332, %v1397, %v1401
        %v1403 = vshrl.u32 %v267, 16
        %v1405 = vrot.slane %v1403, 4
        %v1406 = vor.u32 %v1405, %v1401
        %v1407 = vrot.slane %v1406, 4
        %v1409 = vshll.u32 %v268, 16
        %v1411 = vrot.slane %v1409, 5
        %v1412 = vsel %vm332, %v1407, %v1411
        %v1413 = vshrl.u32 %v268, 16
        %v1415 = vrot.slane %v1413, 4
        %v1416 = vor.u32 %v1415, %v1411
        %v1417 = vrot.slane %v1416, 4
        %v1419 = vshll.u32 %v269, 16
        %v1421 = vrot.slane %v1419, 5
        %v1422 = vsel %vm332, %v1417, %v1421
        %v1423 = vshrl.u32 %v269, 16
        %v1425 = vrot.slane %v1423, 4
        %v1426 = vor.u32 %v1425, %v1421
        %v1427 = vrot.slane %v1426, 4
        %v1429 = vshll.u32 %v322, 16
        %v1431 = vrot.slane %v1429, 5
        %v1432 = vsel %vm332, %v1427, %v1431
        %v1434 = vshrl.u32 %v270, 16
        %v1436 = vrot.slane %v1434, 4
        %v1437 = vshll.u32 %v270, 16
        %v1439 = vrot.slane %v1437, 5
        %v1440 = vor.u32 %v1436, %v1439
        %v1441 = vrot.slane %v1440, 4
        %v1443 = vshll.u32 %v271, 16
        %v1445 = vrot.slane %v1443, 5
        %v1446 = vsel %vm332, %v1441, %v1445
        %v1447 = vshrl.u32 %v271, 16
        %v1449 = vrot.slane %v1447, 4
        %v1450 = vor.u32 %v1449, %v1445
        %v1451 = vrot.slane %v1450, 4
        %v1453 = vshll.u32 %v272, 16
        %v1455 = vrot.slane %v1453, 5
        %v1456 = vsel %vm332, %v1451, %v1455
        %v1457 = vshrl.u32 %v272, 16
        %v1459 = vrot.slane %v1457, 4
        %v1460 = vor.u32 %v1459, %v1455
        %v1461 = vrot.slane %v1460, 4
        %v1463 = vshll.u32 %v273, 16
        %v1465 = vrot.slane %v1463, 5
        %v1466 = vsel %vm332, %v1461, %v1465
        %v1467 = vshrl.u32 %v273, 16
        %v1469 = vrot.slane %v1467, 4
        %v1470 = vor.u32 %v1469, %v1465
        %v1471 = vrot.slane %v1470, 4
        %v1473 = vshll.u32 %v323, 16
        %v1475 = vrot.slane %v1473, 5
        %v1476 = vsel %vm332, %v1471, %v1475
        %v1478 = vshrl.u32 %v274, 16
        %v1480 = vrot.slane %v1478, 4
        %v1481 = vshll.u32 %v274, 16
        %v1483 = vrot.slane %v1481, 5
        %v1484 = vor.u32 %v1480, %v1483
        %v1485 = vrot.slane %v1484, 4
        %v1487 = vshll.u32 %v275, 16
        %v1489 = vrot.slane %v1487, 5
        %v1490 = vsel %vm332, %v1485, %v1489
        %v1491 = vshrl.u32 %v275, 16
        %v1493 = vrot.slane %v1491, 4
        %v1494 = vor.u32 %v1493, %v1489
        %v1495 = vrot.slane %v1494, 4
        %v1497 = vshll.u32 %v276, 16
        %v1499 = vrot.slane %v1497, 5
        %v1500 = vsel %vm332, %v1495, %v1499
        %v1501 = vshrl.u32 %v276, 16
        %v1503 = vrot.slane %v1501, 4
        %v1504 = vor.u32 %v1503, %v1499
        %v1505 = vrot.slane %v1504, 4
        %v1507 = vshll.u32 %v277, 16
        %v1509 = vrot.slane %v1507, 5
        %v1510 = vsel %vm332, %v1505, %v1509
        %v1511 = vshrl.u32 %v277, 16
        %v1513 = vrot.slane %v1511, 4
        %v1514 = vor.u32 %v1513, %v1509
        %v1515 = vrot.slane %v1514, 4
        %v1517 = vshll.u32 %v324, 16
        %v1519 = vrot.slane %v1517, 5
        %v1520 = vsel %vm332, %v1515, %v1519
        %v1522 = vshrl.u32 %v278, 16
        %v1524 = vrot.slane %v1522, 4
        %v1525 = vshll.u32 %v278, 16
        %v1527 = vrot.slane %v1525, 5
        %v1528 = vor.u32 %v1524, %v1527
        %v1529 = vrot.slane %v1528, 4
        %v1531 = vshll.u32 %v279, 16
        %v1533 = vrot.slane %v1531, 5
        %v1534 = vsel %vm332, %v1529, %v1533
        %v1535 = vshrl.u32 %v279, 16
        %v1537 = vrot.slane %v1535, 4
        %v1538 = vor.u32 %v1537, %v1533
        %v1539 = vrot.slane %v1538, 4
        %v1541 = vshll.u32 %v280, 16
        %v1543 = vrot.slane %v1541, 5
        %v1544 = vsel %vm332, %v1539, %v1543
        %v1545 = vshrl.u32 %v280, 16
        %v1547 = vrot.slane %v1545, 4
        %v1548 = vor.u32 %v1547, %v1543
        %v1549 = vrot.slane %v1548, 4
        %v1551 = vshll.u32 %v281, 16
        %v1553 = vrot.slane %v1551, 5
        %v1554 = vsel %vm332, %v1549, %v1553
        %v1555 = vshrl.u32 %v281, 16
        %v1557 = vrot.slane %v1555, 4
        %v1558 = vor.u32 %v1557, %v1553
        %v1559 = vrot.slane %v1558, 4
        %v1561 = vshll.u32 %v325, 16
        %v1563 = vrot.slane %v1561, 5
        %v1564 = vsel %vm332, %v1559, %v1563
        %v1566 = vshrl.u32 %v282, 16
        %v1568 = vrot.slane %v1566, 4
        %v1569 = vshll.u32 %v282, 16
        %v1571 = vrot.slane %v1569, 5
        %v1572 = vor.u32 %v1568, %v1571
        %v1573 = vrot.slane %v1572, 4
        %v1575 = vshll.u32 %v283, 16
        %v1577 = vrot.slane %v1575, 5
        %v1578 = vsel %vm332, %v1573, %v1577
        %v1579 = vshrl.u32 %v283, 16
        %v1581 = vrot.slane %v1579, 4
        %v1582 = vor.u32 %v1581, %v1577
        %v1583 = vrot.slane %v1582, 4
        %v1585 = vshll.u32 %v284, 16
        %v1587 = vrot.slane %v1585, 5
        %v1588 = vsel %vm332, %v1583, %v1587
        %v1589 = vshrl.u32 %v284, 16
        %v1591 = vrot.slane %v1589, 4
        %v1592 = vor.u32 %v1591, %v1587
        %v1593 = vrot.slane %v1592, 4
        %v1595 = vshll.u32 %v285, 16
        %v1597 = vrot.slane %v1595, 5
        %v1598 = vsel %vm332, %v1593, %v1597
        %v1599 = vshrl.u32 %v285, 16
        %v1601 = vrot.slane %v1599, 4
        %v1602 = vor.u32 %v1601, %v1597
        %v1603 = vrot.slane %v1602, 4
        %v1605 = vshll.u32 %v326, 16
        %v1607 = vrot.slane %v1605, 5
        %v1608 = vsel %vm332, %v1603, %v1607
        %v1610 = vshrl.u32 %v286, 16
        %v1612 = vrot.slane %v1610, 4
        %v1613 = vshll.u32 %v286, 16
        %v1615 = vrot.slane %v1613, 5
        %v1616 = vor.u32 %v1612, %v1615
        %v1617 = vrot.slane %v1616, 4
        %v1619 = vshll.u32 %v287, 16
        %v1621 = vrot.slane %v1619, 5
        %v1622 = vsel %vm332, %v1617, %v1621
        %v1623 = vshrl.u32 %v287, 16
        %v1625 = vrot.slane %v1623, 4
        %v1626 = vor.u32 %v1625, %v1621
        %v1627 = vrot.slane %v1626, 4
        %v1629 = vshll.u32 %v288, 16
        %v1631 = vrot.slane %v1629, 5
        %v1632 = vsel %vm332, %v1627, %v1631
        %v1633 = vshrl.u32 %v288, 16
        %v1635 = vrot.slane %v1633, 4
        %v1636 = vor.u32 %v1635, %v1631
        %v1637 = vrot.slane %v1636, 4
        %v1639 = vshll.u32 %v289, 16
        %v1641 = vrot.slane %v1639, 5
        %v1642 = vsel %vm332, %v1637, %v1641
        %v1643 = vshrl.u32 %v289, 16
        %v1645 = vrot.slane %v1643, 4
        %v1646 = vor.u32 %v1645, %v1641
        %v1647 = vrot.slane %v1646, 4
        %v1649 = vshll.u32 %v327, 16
        %v1651 = vrot.slane %v1649, 5
        %v1652 = vsel %vm332, %v1647, %v1651
        %v1654 = vshrl.u32 %v290, 16
        %v1656 = vrot.slane %v1654, 4
        %v1657 = vshll.u32 %v290, 16
        %v1659 = vrot.slane %v1657, 5
        %v1660 = vor.u32 %v1656, %v1659
        %v1661 = vrot.slane %v1660, 4
        %v1663 = vshll.u32 %v291, 16
        %v1665 = vrot.slane %v1663, 5
        %v1666 = vsel %vm332, %v1661, %v1665
        %v1667 = vshrl.u32 %v291, 16
        %v1669 = vrot.slane %v1667, 4
        %v1670 = vor.u32 %v1669, %v1665
        %v1671 = vrot.slane %v1670, 4
        %v1673 = vshll.u32 %v292, 16
        %v1675 = vrot.slane %v1673, 5
        %v1676 = vsel %vm332, %v1671, %v1675
        %v1677 = vshrl.u32 %v292, 16
        %v1679 = vrot.slane %v1677, 4
        %v1680 = vor.u32 %v1679, %v1675
        %v1681 = vrot.slane %v1680, 4
        %v1683 = vshll.u32 %v293, 16
        %v1685 = vrot.slane %v1683, 5
        %v1686 = vsel %vm332, %v1681, %v1685
        %v1687 = vshrl.u32 %v293, 16
        %v1689 = vrot.slane %v1687, 4
        %v1690 = vor.u32 %v1689, %v1685
        %v1691 = vrot.slane %v1690, 4
        %v1693 = vshll.u32 %v328, 16
        %v1695 = vrot.slane %v1693, 5
        %v1696 = vsel %vm332, %v1691, %v1695
        %v1698 = vshrl.u32 %v294, 16
        %v1700 = vrot.slane %v1698, 4
        %v1701 = vshll.u32 %v294, 16
        %v1703 = vrot.slane %v1701, 5
        %v1704 = vor.u32 %v1700, %v1703
        %v1705 = vrot.slane %v1704, 4
        %v1707 = vshll.u32 %v295, 16
        %v1709 = vrot.slane %v1707, 5
        %v1710 = vsel %vm332, %v1705, %v1709
        %v1711 = vshrl.u32 %v295, 16
        %v1713 = vrot.slane %v1711, 4
        %v1714 = vor.u32 %v1713, %v1709
        %v1715 = vrot.slane %v1714, 4
        %v1717 = vshll.u32 %v296, 16
        %v1719 = vrot.slane %v1717, 5
        %v1720 = vsel %vm332, %v1715, %v1719
        %v1721 = vshrl.u32 %v296, 16
        %v1723 = vrot.slane %v1721, 4
        %v1724 = vor.u32 %v1723, %v1719
        %v1725 = vrot.slane %v1724, 4
        %v1727 = vshll.u32 %v297, 16
        %v1729 = vrot.slane %v1727, 5
        %v1730 = vsel %vm332, %v1725, %v1729
        %v1731 = vshrl.u32 %v297, 16
        %v1733 = vrot.slane %v1731, 4
        %v1734 = vor.u32 %v1733, %v1729
        %v1735 = vrot.slane %v1734, 4
        %v1737 = vshll.u32 %v329, 16
        %v1739 = vrot.slane %v1737, 5
        %v1740 = vsel %vm332, %v1735, %v1739
        %v1741 = vld [vmem:[%s168] sm:$0xe]
        %v1742 = vld [vmem:[%s168 + $0x14] sm:$0xe]
        %v1743 = vld [vmem:[%s168 + $0x28] sm:$0xe]
        %v1744 = vld [vmem:[%s168 + $0x3c] sm:$0xe]
        %v1745 = vld [vmem:[%s168 + $0x50] sm:$0xe]
        %v1746 = vld [vmem:[%s168 + $0x64] sm:$0xe]
        %v1747 = vld [vmem:[%s168 + $0x78] sm:$0xe]
        %v1748 = vld [vmem:[%s168 + $0x8c] sm:$0xe]
        %v1749 = vld [vmem:[%s168 + $0xa0] sm:$0xe]
        %v1750 = vld [vmem:[%s168 + $0xb4] sm:$0xe]
        %v1751 = vld [vmem:[%s168 + $0xc8] sm:$0xe]
        %v1752 = vld [vmem:[%s168 + $0xdc] sm:$0xe]
        %v1753 = vld [vmem:[%s168 + $0xf0] sm:$0xe]
        %v1754 = vld [vmem:[%s168 + $0x104] sm:$0xe]
        %v1755 = vld [vmem:[%s168 + $0x118] sm:$0xe]
        %v1756 = vld [vmem:[%s168 + $0x12c] sm:$0xe]
        %v1757 = vld [vmem:[%s168 + $0x140] sm:$0xe]
        %v1758 = vld [vmem:[%s168 + $0x154] sm:$0xe]
        %v1759 = vld [vmem:[%s168 + $0x168] sm:$0xe]
        %v1760 = vld [vmem:[%s168 + $0x17c] sm:$0xe]
        %v1761 = vld [vmem:[%s168 + $0x190] sm:$0xe]
        %v1762 = vld [vmem:[%s168 + $0x1a4] sm:$0xe]
        %v1763 = vld [vmem:[%s168 + $0x1b8] sm:$0xe]
        %v1764 = vld [vmem:[%s168 + $0x1cc] sm:$0xe]
        %v1765 = vld [vmem:[%s168 + $0x1e0] sm:$0xe]
        %v1766 = vld [vmem:[%s168 + $0x1f4] sm:$0xe]
        %v1767 = vld [vmem:[%s168 + $0x208] sm:$0xe]
        %v1768 = vld [vmem:[%s168 + $0x21c] sm:$0xe]
        %v1769 = vld [vmem:[%s168 + $0x230] sm:$0xe]
        %v1770 = vld [vmem:[%s168 + $0x244] sm:$0xe]
        %v1771 = vld [vmem:[%s168 + $0x258] sm:$0xe]
        %v1772 = vld [vmem:[%s168 + $0x26c] sm:$0xe]
        %vm1933 = vcmask 1042432
        %vm1934 = vcmask 1046532
        %vm1935 = vmor %vm1933, %vm1934
        %v1936 = vrot.slane %v1741, 5
        %v1937 = vrot.slane %v1936, 4
        %v1938 = vrot.slane %v171, 5
        %v1939 = vsel %vm1935, %v1937, %v1938
        %v1940 = vrot.slane %v1938, 4
        %v1941 = vrot.slane %v172, 5
        %v1942 = vsel %vm1935, %v1940, %v1941
        %v1943 = vrot.slane %v1941, 4
        %v1944 = vrot.slane %v173, 5
        %v1945 = vsel %vm1935, %v1943, %v1944
        %v1946 = vrot.slane %v1944, 4
        %v1947 = vrot.slane %v298, 5
        %v1948 = vsel %vm1935, %v1946, %v1947
        %v1949 = vrot.slane %v1742, 5
        %v1950 = vrot.slane %v1949, 4
        %v1951 = vrot.slane %v175, 5
        %v1952 = vsel %vm1935, %v1950, %v1951
        %v1953 = vrot.slane %v1951, 4
        %v1954 = vrot.slane %v176, 5
        %v1955 = vsel %vm1935, %v1953, %v1954
        %v1956 = vrot.slane %v1954, 4
        %v1957 = vrot.slane %v177, 5
        %v1958 = vsel %vm1935, %v1956, %v1957
        %v1959 = vrot.slane %v1957, 4
        %v1960 = vrot.slane %v299, 5
        %v1961 = vsel %vm1935, %v1959, %v1960
        %v1962 = vrot.slane %v1743, 5
        %v1963 = vrot.slane %v1962, 4
        %v1964 = vrot.slane %v179, 5
        %v1965 = vsel %vm1935, %v1963, %v1964
        %v1966 = vrot.slane %v1964, 4
        %v1967 = vrot.slane %v180, 5
        %v1968 = vsel %vm1935, %v1966, %v1967
        %v1969 = vrot.slane %v1967, 4
        %v1970 = vrot.slane %v181, 5
        %v1971 = vsel %vm1935, %v1969, %v1970
        %v1972 = vrot.slane %v1970, 4
        %v1973 = vrot.slane %v300, 5
        %v1974 = vsel %vm1935, %v1972, %v1973
        %v1975 = vrot.slane %v1744, 5
        %v1976 = vrot.slane %v1975, 4
        %v1977 = vrot.slane %v183, 5
        %v1978 = vsel %vm1935, %v1976, %v1977
        %v1979 = vrot.slane %v1977, 4
        %v1980 = vrot.slane %v184, 5
        %v1981 = vsel %vm1935, %v1979, %v1980
        %v1982 = vrot.slane %v1980, 4
        %v1983 = vrot.slane %v185, 5
        %v1984 = vsel %vm1935, %v1982, %v1983
        %v1985 = vrot.slane %v1983, 4
        %v1986 = vrot.slane %v301, 5
        %v1987 = vsel %vm1935, %v1985, %v1986
        %v1988 = vrot.slane %v1745, 5
        %v1989 = vrot.slane %v1988, 4
        %v1990 = vrot.slane %v187, 5
        %v1991 = vsel %vm1935, %v1989, %v1990
        %v1992 = vrot.slane %v1990, 4
        %v1993 = vrot.slane %v188, 5
        %v1994 = vsel %vm1935, %v1992, %v1993
        %v1995 = vrot.slane %v1993, 4
        %v1996 = vrot.slane %v189, 5
        %v1997 = vsel %vm1935, %v1995, %v1996
        %v1998 = vrot.slane %v1996, 4
        %v1999 = vrot.slane %v302, 5
        %v2000 = vsel %vm1935, %v1998, %v1999
        %v2001 = vrot.slane %v1746, 5
        %v2002 = vrot.slane %v2001, 4
        %v2003 = vrot.slane %v191, 5
        %v2004 = vsel %vm1935, %v2002, %v2003
        %v2005 = vrot.slane %v2003, 4
        %v2006 = vrot.slane %v192, 5
        %v2007 = vsel %vm1935, %v2005, %v2006
        %v2008 = vrot.slane %v2006, 4
        %v2009 = vrot.slane %v193, 5
        %v2010 = vsel %vm1935, %v2008, %v2009
        %v2011 = vrot.slane %v2009, 4
        %v2012 = vrot.slane %v303, 5
        %v2013 = vsel %vm1935, %v2011, %v2012
        %v2014 = vrot.slane %v1747, 5
        %v2015 = vrot.slane %v2014, 4
        %v2016 = vrot.slane %v195, 5
        %v2017 = vsel %vm1935, %v2015, %v2016
        %v2018 = vrot.slane %v2016, 4
        %v2019 = vrot.slane %v196, 5
        %v2020 = vsel %vm1935, %v2018, %v2019
        %v2021 = vrot.slane %v2019, 4
        %v2022 = vrot.slane %v197, 5
        %v2023 = vsel %vm1935, %v2021, %v2022
        %v2024 = vrot.slane %v2022, 4
        %v2025 = vrot.slane %v304, 5
        %v2026 = vsel %vm1935, %v2024, %v2025
        %v2027 = vrot.slane %v1748, 5
        %v2028 = vrot.slane %v2027, 4
        %v2029 = vrot.slane %v199, 5
        %v2030 = vsel %vm1935, %v2028, %v2029
        %v2031 = vrot.slane %v2029, 4
        %v2032 = vrot.slane %v200, 5
        %v2033 = vsel %vm1935, %v2031, %v2032
        %v2034 = vrot.slane %v2032, 4
        %v2035 = vrot.slane %v201, 5
        %v2036 = vsel %vm1935, %v2034, %v2035
        %v2037 = vrot.slane %v2035, 4
        %v2038 = vrot.slane %v305, 5
        %v2039 = vsel %vm1935, %v2037, %v2038
        %v2040 = vrot.slane %v1749, 5
        %v2041 = vrot.slane %v2040, 4
        %v2042 = vrot.slane %v203, 5
        %v2043 = vsel %vm1935, %v2041, %v2042
        %v2044 = vrot.slane %v2042, 4
        %v2045 = vrot.slane %v204, 5
        %v2046 = vsel %vm1935, %v2044, %v2045
        %v2047 = vrot.slane %v2045, 4
        %v2048 = vrot.slane %v205, 5
        %v2049 = vsel %vm1935, %v2047, %v2048
        %v2050 = vrot.slane %v2048, 4
        %v2051 = vrot.slane %v306, 5
        %v2052 = vsel %vm1935, %v2050, %v2051
        %v2053 = vrot.slane %v1750, 5
        %v2054 = vrot.slane %v2053, 4
        %v2055 = vrot.slane %v207, 5
        %v2056 = vsel %vm1935, %v2054, %v2055
        %v2057 = vrot.slane %v2055, 4
        %v2058 = vrot.slane %v208, 5
        %v2059 = vsel %vm1935, %v2057, %v2058
        %v2060 = vrot.slane %v2058, 4
        %v2061 = vrot.slane %v209, 5
        %v2062 = vsel %vm1935, %v2060, %v2061
        %v2063 = vrot.slane %v2061, 4
        %v2064 = vrot.slane %v307, 5
        %v2065 = vsel %vm1935, %v2063, %v2064
        %v2066 = vrot.slane %v1751, 5
        %v2067 = vrot.slane %v2066, 4
        %v2068 = vrot.slane %v211, 5
        %v2069 = vsel %vm1935, %v2067, %v2068
        %v2070 = vrot.slane %v2068, 4
        %v2071 = vrot.slane %v212, 5
        %v2072 = vsel %vm1935, %v2070, %v2071
        %v2073 = vrot.slane %v2071, 4
        %v2074 = vrot.slane %v213, 5
        %v2075 = vsel %vm1935, %v2073, %v2074
        %v2076 = vrot.slane %v2074, 4
        %v2077 = vrot.slane %v308, 5
        %v2078 = vsel %vm1935, %v2076, %v2077
        %v2079 = vrot.slane %v1752, 5
        %v2080 = vrot.slane %v2079, 4
        %v2081 = vrot.slane %v215, 5
        %v2082 = vsel %vm1935, %v2080, %v2081
        %v2083 = vrot.slane %v2081, 4
        %v2084 = vrot.slane %v216, 5
        %v2085 = vsel %vm1935, %v2083, %v2084
        %v2086 = vrot.slane %v2084, 4
        %v2087 = vrot.slane %v217, 5
        %v2088 = vsel %vm1935, %v2086, %v2087
        %v2089 = vrot.slane %v2087, 4
        %v2090 = vrot.slane %v309, 5
        %v2091 = vsel %vm1935, %v2089, %v2090
        %v2092 = vrot.slane %v1753, 5
        %v2093 = vrot.slane %v2092, 4
        %v2094 = vrot.slane %v219, 5
        %v2095 = vsel %vm1935, %v2093, %v2094
        %v2096 = vrot.slane %v2094, 4
        %v2097 = vrot.slane %v220, 5
        %v2098 = vsel %vm1935, %v2096, %v2097
        %v2099 = vrot.slane %v2097, 4
        %v2100 = vrot.slane %v221, 5
        %v2101 = vsel %vm1935, %v2099, %v2100
        %v2102 = vrot.slane %v2100, 4
        %v2103 = vrot.slane %v310, 5
        %v2104 = vsel %vm1935, %v2102, %v2103
        %v2105 = vrot.slane %v1754, 5
        %v2106 = vrot.slane %v2105, 4
        %v2107 = vrot.slane %v223, 5
        %v2108 = vsel %vm1935, %v2106, %v2107
        %v2109 = vrot.slane %v2107, 4
        %v2110 = vrot.slane %v224, 5
        %v2111 = vsel %vm1935, %v2109, %v2110
        %v2112 = vrot.slane %v2110, 4
        %v2113 = vrot.slane %v225, 5
        %v2114 = vsel %vm1935, %v2112, %v2113
        %v2115 = vrot.slane %v2113, 4
        %v2116 = vrot.slane %v311, 5
        %v2117 = vsel %vm1935, %v2115, %v2116
        %v2118 = vrot.slane %v1755, 5
        %v2119 = vrot.slane %v2118, 4
        %v2120 = vrot.slane %v227, 5
        %v2121 = vsel %vm1935, %v2119, %v2120
        %v2122 = vrot.slane %v2120, 4
        %v2123 = vrot.slane %v228, 5
        %v2124 = vsel %vm1935, %v2122, %v2123
        %v2125 = vrot.slane %v2123, 4
        %v2126 = vrot.slane %v229, 5
        %v2127 = vsel %vm1935, %v2125, %v2126
        %v2128 = vrot.slane %v2126, 4
        %v2129 = vrot.slane %v312, 5
        %v2130 = vsel %vm1935, %v2128, %v2129
        %v2131 = vrot.slane %v1756, 5
        %v2132 = vrot.slane %v2131, 4
        %v2133 = vrot.slane %v231, 5
        %v2134 = vsel %vm1935, %v2132, %v2133
        %v2135 = vrot.slane %v2133, 4
        %v2136 = vrot.slane %v232, 5
        %v2137 = vsel %vm1935, %v2135, %v2136
        %v2138 = vrot.slane %v2136, 4
        %v2139 = vrot.slane %v233, 5
        %v2140 = vsel %vm1935, %v2138, %v2139
        %v2141 = vrot.slane %v2139, 4
        %v2142 = vrot.slane %v313, 5
        %v2143 = vsel %vm1935, %v2141, %v2142
        %v2144 = vrot.slane %v1757, 5
        %v2145 = vrot.slane %v2144, 4
        %v2146 = vrot.slane %v235, 5
        %v2147 = vsel %vm1935, %v2145, %v2146
        %v2148 = vrot.slane %v2146, 4
        %v2149 = vrot.slane %v236, 5
        %v2150 = vsel %vm1935, %v2148, %v2149
        %v2151 = vrot.slane %v2149, 4
        %v2152 = vrot.slane %v237, 5
        %v2153 = vsel %vm1935, %v2151, %v2152
        %v2154 = vrot.slane %v2152, 4
        %v2155 = vrot.slane %v314, 5
        %v2156 = vsel %vm1935, %v2154, %v2155
        %v2157 = vrot.slane %v1758, 5
        %v2158 = vrot.slane %v2157, 4
        %v2159 = vrot.slane %v239, 5
        %v2160 = vsel %vm1935, %v2158, %v2159
        %v2161 = vrot.slane %v2159, 4
        %v2162 = vrot.slane %v240, 5
        %v2163 = vsel %vm1935, %v2161, %v2162
        %v2164 = vrot.slane %v2162, 4
        %v2165 = vrot.slane %v241, 5
        %v2166 = vsel %vm1935, %v2164, %v2165
        %v2167 = vrot.slane %v2165, 4
        %v2168 = vrot.slane %v315, 5
        %v2169 = vsel %vm1935, %v2167, %v2168
        %v2170 = vrot.slane %v1759, 5
        %v2171 = vrot.slane %v2170, 4
        %v2172 = vrot.slane %v243, 5
        %v2173 = vsel %vm1935, %v2171, %v2172
        %v2174 = vrot.slane %v2172, 4
        %v2175 = vrot.slane %v244, 5
        %v2176 = vsel %vm1935, %v2174, %v2175
        %v2177 = vrot.slane %v2175, 4
        %v2178 = vrot.slane %v245, 5
        %v2179 = vsel %vm1935, %v2177, %v2178
        %v2180 = vrot.slane %v2178, 4
        %v2181 = vrot.slane %v316, 5
        %v2182 = vsel %vm1935, %v2180, %v2181
        %v2183 = vrot.slane %v1760, 5
        %v2184 = vrot.slane %v2183, 4
        %v2185 = vrot.slane %v247, 5
        %v2186 = vsel %vm1935, %v2184, %v2185
        %v2187 = vrot.slane %v2185, 4
        %v2188 = vrot.slane %v248, 5
        %v2189 = vsel %vm1935, %v2187, %v2188
        %v2190 = vrot.slane %v2188, 4
        %v2191 = vrot.slane %v249, 5
        %v2192 = vsel %vm1935, %v2190, %v2191
        %v2193 = vrot.slane %v2191, 4
        %v2194 = vrot.slane %v317, 5
        %v2195 = vsel %vm1935, %v2193, %v2194
        %v2196 = vrot.slane %v1761, 5
        %v2197 = vrot.slane %v2196, 4
        %v2198 = vrot.slane %v251, 5
        %v2199 = vsel %vm1935, %v2197, %v2198
        %v2200 = vrot.slane %v2198, 4
        %v2201 = vrot.slane %v252, 5
        %v2202 = vsel %vm1935, %v2200, %v2201
        %v2203 = vrot.slane %v2201, 4
        %v2204 = vrot.slane %v253, 5
        %v2205 = vsel %vm1935, %v2203, %v2204
        %v2206 = vrot.slane %v2204, 4
        %v2207 = vrot.slane %v318, 5
        %v2208 = vsel %vm1935, %v2206, %v2207
        %v2209 = vrot.slane %v1762, 5
        %v2210 = vrot.slane %v2209, 4
        %v2211 = vrot.slane %v255, 5
        %v2212 = vsel %vm1935, %v2210, %v2211
        %v2213 = vrot.slane %v2211, 4
        %v2214 = vrot.slane %v256, 5
        %v2215 = vsel %vm1935, %v2213, %v2214
        %v2216 = vrot.slane %v2214, 4
        %v2217 = vrot.slane %v257, 5
        %v2218 = vsel %vm1935, %v2216, %v2217
        %v2219 = vrot.slane %v2217, 4
        %v2220 = vrot.slane %v319, 5
        %v2221 = vsel %vm1935, %v2219, %v2220
        %v2222 = vrot.slane %v1763, 5
        %v2223 = vrot.slane %v2222, 4
        %v2224 = vrot.slane %v259, 5
        %v2225 = vsel %vm1935, %v2223, %v2224
        %v2226 = vrot.slane %v2224, 4
        %v2227 = vrot.slane %v260, 5
        %v2228 = vsel %vm1935, %v2226, %v2227
        %v2229 = vrot.slane %v2227, 4
        %v2230 = vrot.slane %v261, 5
        %v2231 = vsel %vm1935, %v2229, %v2230
        %v2232 = vrot.slane %v2230, 4
        %v2233 = vrot.slane %v320, 5
        %v2234 = vsel %vm1935, %v2232, %v2233
        %v2235 = vrot.slane %v1764, 5
        %v2236 = vrot.slane %v2235, 4
        %v2237 = vrot.slane %v263, 5
        %v2238 = vsel %vm1935, %v2236, %v2237
        %v2239 = vrot.slane %v2237, 4
        %v2240 = vrot.slane %v264, 5
        %v2241 = vsel %vm1935, %v2239, %v2240
        %v2242 = vrot.slane %v2240, 4
        %v2243 = vrot.slane %v265, 5
        %v2244 = vsel %vm1935, %v2242, %v2243
        %v2245 = vrot.slane %v2243, 4
        %v2246 = vrot.slane %v321, 5
        %v2247 = vsel %vm1935, %v2245, %v2246
        %v2248 = vrot.slane %v1765, 5
        %v2249 = vrot.slane %v2248, 4
        %v2250 = vrot.slane %v267, 5
        %v2251 = vsel %vm1935, %v2249, %v2250
        %v2252 = vrot.slane %v2250, 4
        %v2253 = vrot.slane %v268, 5
        %v2254 = vsel %vm1935, %v2252, %v2253
        %v2255 = vrot.slane %v2253, 4
        %v2256 = vrot.slane %v269, 5
        %v2257 = vsel %vm1935, %v2255, %v2256
        %v2258 = vrot.slane %v2256, 4
        %v2259 = vrot.slane %v322, 5
        %v2260 = vsel %vm1935, %v2258, %v2259
        %v2261 = vrot.slane %v1766, 5
        %v2262 = vrot.slane %v2261, 4
        %v2263 = vrot.slane %v271, 5
        %v2264 = vsel %vm1935, %v2262, %v2263
        %v2265 = vrot.slane %v2263, 4
        %v2266 = vrot.slane %v272, 5
        %v2267 = vsel %vm1935, %v2265, %v2266
        %v2268 = vrot.slane %v2266, 4
        %v2269 = vrot.slane %v273, 5
        %v2270 = vsel %vm1935, %v2268, %v2269
        %v2271 = vrot.slane %v2269, 4
        %v2272 = vrot.slane %v323, 5
        %v2273 = vsel %vm1935, %v2271, %v2272
        %v2274 = vrot.slane %v1767, 5
        %v2275 = vrot.slane %v2274, 4
        %v2276 = vrot.slane %v275, 5
        %v2277 = vsel %vm1935, %v2275, %v2276
        %v2278 = vrot.slane %v2276, 4
        %v2279 = vrot.slane %v276, 5
        %v2280 = vsel %vm1935, %v2278, %v2279
        %v2281 = vrot.slane %v2279, 4
        %v2282 = vrot.slane %v277, 5
        %v2283 = vsel %vm1935, %v2281, %v2282
        %v2284 = vrot.slane %v2282, 4
        %v2285 = vrot.slane %v324, 5
        %v2286 = vsel %vm1935, %v2284, %v2285
        %v2287 = vrot.slane %v1768, 5
        %v2288 = vrot.slane %v2287, 4
        %v2289 = vrot.slane %v279, 5
        %v2290 = vsel %vm1935, %v2288, %v2289
        %v2291 = vrot.slane %v2289, 4
        %v2292 = vrot.slane %v280, 5
        %v2293 = vsel %vm1935, %v2291, %v2292
        %v2294 = vrot.slane %v2292, 4
        %v2295 = vrot.slane %v281, 5
        %v2296 = vsel %vm1935, %v2294, %v2295
        %v2297 = vrot.slane %v2295, 4
        %v2298 = vrot.slane %v325, 5
        %v2299 = vsel %vm1935, %v2297, %v2298
        %v2300 = vrot.slane %v1769, 5
        %v2301 = vrot.slane %v2300, 4
        %v2302 = vrot.slane %v283, 5
        %v2303 = vsel %vm1935, %v2301, %v2302
        %v2304 = vrot.slane %v2302, 4
        %v2305 = vrot.slane %v284, 5
        %v2306 = vsel %vm1935, %v2304, %v2305
        %v2307 = vrot.slane %v2305, 4
        %v2308 = vrot.slane %v285, 5
        %v2309 = vsel %vm1935, %v2307, %v2308
        %v2310 = vrot.slane %v2308, 4
        %v2311 = vrot.slane %v326, 5
        %v2312 = vsel %vm1935, %v2310, %v2311
        %v2313 = vrot.slane %v1770, 5
        %v2314 = vrot.slane %v2313, 4
        %v2315 = vrot.slane %v287, 5
        %v2316 = vsel %vm1935, %v2314, %v2315
        %v2317 = vrot.slane %v2315, 4
        %v2318 = vrot.slane %v288, 5
        %v2319 = vsel %vm1935, %v2317, %v2318
        %v2320 = vrot.slane %v2318, 4
        %v2321 = vrot.slane %v289, 5
        %v2322 = vsel %vm1935, %v2320, %v2321
        %v2323 = vrot.slane %v2321, 4
        %v2324 = vrot.slane %v327, 5
        %v2325 = vsel %vm1935, %v2323, %v2324
        %v2326 = vrot.slane %v1771, 5
        %v2327 = vrot.slane %v2326, 4
        %v2328 = vrot.slane %v291, 5
        %v2329 = vsel %vm1935, %v2327, %v2328
        %v2330 = vrot.slane %v2328, 4
        %v2331 = vrot.slane %v292, 5
        %v2332 = vsel %vm1935, %v2330, %v2331
        %v2333 = vrot.slane %v2331, 4
        %v2334 = vrot.slane %v293, 5
        %v2335 = vsel %vm1935, %v2333, %v2334
        %v2336 = vrot.slane %v2334, 4
        %v2337 = vrot.slane %v328, 5
        %v2338 = vsel %vm1935, %v2336, %v2337
        %v2339 = vrot.slane %v1772, 5
        %v2340 = vrot.slane %v2339, 4
        %v2341 = vrot.slane %v295, 5
        %v2342 = vsel %vm1935, %v2340, %v2341
        %v2343 = vrot.slane %v2341, 4
        %v2344 = vrot.slane %v296, 5
        %v2345 = vsel %vm1935, %v2343, %v2344
        %v2346 = vrot.slane %v2344, 4
        %v2347 = vrot.slane %v297, 5
        %v2348 = vsel %vm1935, %v2346, %v2347
        %v2349 = vrot.slane %v2347, 4
        %v2350 = vrot.slane %v329, 5
        %v2351 = vsel %vm1935, %v2349, %v2350
        %s2352 = scalar_lea.vmem %s168, 20
        %v2353 = vld [vmem:[%s2352] sm:$0xf]
        %v2354 = vld [vmem:[%s2352 + $0x4] sm:$0xf]
        %v2355 = vld [vmem:[%s2352 + $0x8] sm:$0xf]
        %v2356 = vld [vmem:[%s2352 + $0xc] sm:$0xf]
        %v2357 = vld [vmem:[%s2352 + $0x14] sm:$0xf]
        %v2358 = vld [vmem:[%s2352 + $0x18] sm:$0xf]
        %v2359 = vld [vmem:[%s2352 + $0x1c] sm:$0xf]
        %v2360 = vld [vmem:[%s2352 + $0x20] sm:$0xf]
        %v2361 = vld [vmem:[%s2352 + $0x28] sm:$0xf]
        %v2362 = vld [vmem:[%s2352 + $0x2c] sm:$0xf]
        %v2363 = vld [vmem:[%s2352 + $0x30] sm:$0xf]
        %v2364 = vld [vmem:[%s2352 + $0x34] sm:$0xf]
        %v2365 = vld [vmem:[%s2352 + $0x3c] sm:$0xf]
        %v2366 = vld [vmem:[%s2352 + $0x40] sm:$0xf]
        %v2367 = vld [vmem:[%s2352 + $0x44] sm:$0xf]
        %v2368 = vld [vmem:[%s2352 + $0x48] sm:$0xf]
        %v2369 = vld [vmem:[%s2352 + $0x50] sm:$0xf]
        %v2370 = vld [vmem:[%s2352 + $0x54] sm:$0xf]
        %v2371 = vld [vmem:[%s2352 + $0x58] sm:$0xf]
        %v2372 = vld [vmem:[%s2352 + $0x5c] sm:$0xf]
        %v2373 = vld [vmem:[%s2352 + $0x64] sm:$0xf]
        %v2374 = vld [vmem:[%s2352 + $0x68] sm:$0xf]
        %v2375 = vld [vmem:[%s2352 + $0x6c] sm:$0xf]
        %v2376 = vld [vmem:[%s2352 + $0x70] sm:$0xf]
        %v2377 = vld [vmem:[%s2352 + $0x78] sm:$0xf]
        %v2378 = vld [vmem:[%s2352 + $0x7c] sm:$0xf]
        %v2379 = vld [vmem:[%s2352 + $0x80] sm:$0xf]
        %v2380 = vld [vmem:[%s2352 + $0x84] sm:$0xf]
        %v2381 = vld [vmem:[%s2352 + $0x8c] sm:$0xf]
        %v2382 = vld [vmem:[%s2352 + $0x90] sm:$0xf]
        %v2383 = vld [vmem:[%s2352 + $0x94] sm:$0xf]
        %v2384 = vld [vmem:[%s2352 + $0x98] sm:$0xf]
        %v2385 = vld [vmem:[%s2352 + $0xa0] sm:$0xf]
        %v2386 = vld [vmem:[%s2352 + $0xa4] sm:$0xf]
        %v2387 = vld [vmem:[%s2352 + $0xa8] sm:$0xf]
        %v2388 = vld [vmem:[%s2352 + $0xac] sm:$0xf]
        %v2389 = vld [vmem:[%s2352 + $0xb4] sm:$0xf]
        %v2390 = vld [vmem:[%s2352 + $0xb8] sm:$0xf]
        %v2391 = vld [vmem:[%s2352 + $0xbc] sm:$0xf]
        %v2392 = vld [vmem:[%s2352 + $0xc0] sm:$0xf]
        %v2393 = vld [vmem:[%s2352 + $0xc8] sm:$0xf]
        %v2394 = vld [vmem:[%s2352 + $0xcc] sm:$0xf]
        %v2395 = vld [vmem:[%s2352 + $0xd0] sm:$0xf]
        %v2396 = vld [vmem:[%s2352 + $0xd4] sm:$0xf]
        %v2397 = vld [vmem:[%s2352 + $0xdc] sm:$0xf]
        %v2398 = vld [vmem:[%s2352 + $0xe0] sm:$0xf]
        %v2399 = vld [vmem:[%s2352 + $0xe4] sm:$0xf]
        %v2400 = vld [vmem:[%s2352 + $0xe8] sm:$0xf]
        %v2401 = vld [vmem:[%s2352 + $0xf0] sm:$0xf]
        %v2402 = vld [vmem:[%s2352 + $0xf4] sm:$0xf]
        %v2403 = vld [vmem:[%s2352 + $0xf8] sm:$0xf]
        %v2404 = vld [vmem:[%s2352 + $0xfc] sm:$0xf]
        %v2405 = vld [vmem:[%s2352 + $0x104] sm:$0xf]
        %v2406 = vld [vmem:[%s2352 + $0x108] sm:$0xf]
        %v2407 = vld [vmem:[%s2352 + $0x10c] sm:$0xf]
        %v2408 = vld [vmem:[%s2352 + $0x110] sm:$0xf]
        %v2409 = vld [vmem:[%s2352 + $0x118] sm:$0xf]
        %v2410 = vld [vmem:[%s2352 + $0x11c] sm:$0xf]
        %v2411 = vld [vmem:[%s2352 + $0x120] sm:$0xf]
        %v2412 = vld [vmem:[%s2352 + $0x124] sm:$0xf]
        %v2413 = vld [vmem:[%s2352 + $0x12c] sm:$0xf]
        %v2414 = vld [vmem:[%s2352 + $0x130] sm:$0xf]
        %v2415 = vld [vmem:[%s2352 + $0x134] sm:$0xf]
        %v2416 = vld [vmem:[%s2352 + $0x138] sm:$0xf]
        %v2417 = vld [vmem:[%s2352 + $0x140] sm:$0xf]
        %v2418 = vld [vmem:[%s2352 + $0x144] sm:$0xf]
        %v2419 = vld [vmem:[%s2352 + $0x148] sm:$0xf]
        %v2420 = vld [vmem:[%s2352 + $0x14c] sm:$0xf]
        %v2421 = vld [vmem:[%s2352 + $0x154] sm:$0xf]
        %v2422 = vld [vmem:[%s2352 + $0x158] sm:$0xf]
        %v2423 = vld [vmem:[%s2352 + $0x15c] sm:$0xf]
        %v2424 = vld [vmem:[%s2352 + $0x160] sm:$0xf]
        %v2425 = vld [vmem:[%s2352 + $0x168] sm:$0xf]
        %v2426 = vld [vmem:[%s2352 + $0x16c] sm:$0xf]
        %v2427 = vld [vmem:[%s2352 + $0x170] sm:$0xf]
        %v2428 = vld [vmem:[%s2352 + $0x174] sm:$0xf]
        %v2429 = vld [vmem:[%s2352 + $0x17c] sm:$0xf]
        %v2430 = vld [vmem:[%s2352 + $0x180] sm:$0xf]
        %v2431 = vld [vmem:[%s2352 + $0x184] sm:$0xf]
        %v2432 = vld [vmem:[%s2352 + $0x188] sm:$0xf]
        %v2433 = vld [vmem:[%s2352 + $0x190] sm:$0xf]
        %v2434 = vld [vmem:[%s2352 + $0x194] sm:$0xf]
        %v2435 = vld [vmem:[%s2352 + $0x198] sm:$0xf]
        %v2436 = vld [vmem:[%s2352 + $0x19c] sm:$0xf]
        %v2437 = vld [vmem:[%s2352 + $0x1a4] sm:$0xf]
        %v2438 = vld [vmem:[%s2352 + $0x1a8] sm:$0xf]
        %v2439 = vld [vmem:[%s2352 + $0x1ac] sm:$0xf]
        %v2440 = vld [vmem:[%s2352 + $0x1b0] sm:$0xf]
        %v2441 = vld [vmem:[%s2352 + $0x1b8] sm:$0xf]
        %v2442 = vld [vmem:[%s2352 + $0x1bc] sm:$0xf]
        %v2443 = vld [vmem:[%s2352 + $0x1c0] sm:$0xf]
        %v2444 = vld [vmem:[%s2352 + $0x1c4] sm:$0xf]
        %v2445 = vld [vmem:[%s2352 + $0x1cc] sm:$0xf]
        %v2446 = vld [vmem:[%s2352 + $0x1d0] sm:$0xf]
        %v2447 = vld [vmem:[%s2352 + $0x1d4] sm:$0xf]
        %v2448 = vld [vmem:[%s2352 + $0x1d8] sm:$0xf]
        %v2449 = vld [vmem:[%s2352 + $0x1e0] sm:$0xf]
        %v2450 = vld [vmem:[%s2352 + $0x1e4] sm:$0xf]
        %v2451 = vld [vmem:[%s2352 + $0x1e8] sm:$0xf]
        %v2452 = vld [vmem:[%s2352 + $0x1ec] sm:$0xf]
        %v2453 = vld [vmem:[%s2352 + $0x1f4] sm:$0xf]
        %v2454 = vld [vmem:[%s2352 + $0x1f8] sm:$0xf]
        %v2455 = vld [vmem:[%s2352 + $0x1fc] sm:$0xf]
        %v2456 = vld [vmem:[%s2352 + $0x200] sm:$0xf]
        %v2457 = vld [vmem:[%s2352 + $0x208] sm:$0xf]
        %v2458 = vld [vmem:[%s2352 + $0x20c] sm:$0xf]
        %v2459 = vld [vmem:[%s2352 + $0x210] sm:$0xf]
        %v2460 = vld [vmem:[%s2352 + $0x214] sm:$0xf]
        %v2461 = vld [vmem:[%s2352 + $0x21c] sm:$0xf]
        %v2462 = vld [vmem:[%s2352 + $0x220] sm:$0xf]
        %v2463 = vld [vmem:[%s2352 + $0x224] sm:$0xf]
        %v2464 = vld [vmem:[%s2352 + $0x228] sm:$0xf]
        %v2465 = vld [vmem:[%s2352 + $0x230] sm:$0xf]
        %v2466 = vld [vmem:[%s2352 + $0x234] sm:$0xf]
        %v2467 = vld [vmem:[%s2352 + $0x238] sm:$0xf]
        %v2468 = vld [vmem:[%s2352 + $0x23c] sm:$0xf]
        %v2469 = vld [vmem:[%s2352 + $0x244] sm:$0xf]
        %v2470 = vld [vmem:[%s2352 + $0x248] sm:$0xf]
        %v2471 = vld [vmem:[%s2352 + $0x24c] sm:$0xf]
        %v2472 = vld [vmem:[%s2352 + $0x250] sm:$0xf]
        %v2473 = vld [vmem:[%s2352 + $0x258] sm:$0xf]
        %v2474 = vld [vmem:[%s2352 + $0x25c] sm:$0xf]
        %v2475 = vld [vmem:[%s2352 + $0x260] sm:$0xf]
        %v2476 = vld [vmem:[%s2352 + $0x264] sm:$0xf]
        %v2477 = vld [vmem:[%s2352 + $0x26c] sm:$0xf]
        %v2478 = vld [vmem:[%s2352 + $0x270] sm:$0xf]
        %v2479 = vld [vmem:[%s2352 + $0x274] sm:$0xf]
        %v2480 = vld [vmem:[%s2352 + $0x278] sm:$0xf]
        %v2481 = vld [vmem:[%s2352 + $0x10] sm:$0x1]
        %v2482 = vld [vmem:[%s2352 + $0x24] sm:$0x1]
        %v2483 = vld [vmem:[%s2352 + $0x38] sm:$0x1]
        %v2484 = vld [vmem:[%s2352 + $0x4c] sm:$0x1]
        %v2485 = vld [vmem:[%s2352 + $0x60] sm:$0x1]
        %v2486 = vld [vmem:[%s2352 + $0x74] sm:$0x1]
        %v2487 = vld [vmem:[%s2352 + $0x88] sm:$0x1]
        %v2488 = vld [vmem:[%s2352 + $0x9c] sm:$0x1]
        %v2489 = vld [vmem:[%s2352 + $0xb0] sm:$0x1]
        %v2490 = vld [vmem:[%s2352 + $0xc4] sm:$0x1]
        %v2491 = vld [vmem:[%s2352 + $0xd8] sm:$0x1]
        %v2492 = vld [vmem:[%s2352 + $0xec] sm:$0x1]
        %v2493 = vld [vmem:[%s2352 + $0x100] sm:$0x1]
        %v2494 = vld [vmem:[%s2352 + $0x114] sm:$0x1]
        %v2495 = vld [vmem:[%s2352 + $0x128] sm:$0x1]
        %v2496 = vld [vmem:[%s2352 + $0x13c] sm:$0x1]
        %v2497 = vld [vmem:[%s2352 + $0x150] sm:$0x1]
        %v2498 = vld [vmem:[%s2352 + $0x164] sm:$0x1]
        %v2499 = vld [vmem:[%s2352 + $0x178] sm:$0x1]
        %v2500 = vld [vmem:[%s2352 + $0x18c] sm:$0x1]
        %v2501 = vld [vmem:[%s2352 + $0x1a0] sm:$0x1]
        %v2502 = vld [vmem:[%s2352 + $0x1b4] sm:$0x1]
        %v2503 = vld [vmem:[%s2352 + $0x1c8] sm:$0x1]
        %v2504 = vld [vmem:[%s2352 + $0x1dc] sm:$0x1]
        %v2505 = vld [vmem:[%s2352 + $0x1f0] sm:$0x1]
        %v2506 = vld [vmem:[%s2352 + $0x204] sm:$0x1]
        %v2507 = vld [vmem:[%s2352 + $0x218] sm:$0x1]
        %v2508 = vld [vmem:[%s2352 + $0x22c] sm:$0x1]
        %v2509 = vld [vmem:[%s2352 + $0x240] sm:$0x1]
        %v2510 = vld [vmem:[%s2352 + $0x254] sm:$0x1]
        %v2511 = vld [vmem:[%s2352 + $0x268] sm:$0x1]
        %v2512 = vld [vmem:[%s2352 + $0x27c] sm:$0x1]
        %v2514 = vshrl.u32 %v2353, 16
        %v2516 = vrot.slane %v2514, 4
        %v2517 = vshll.u32 %v2353, 16
        %v2519 = vrot.slane %v2517, 5
        %v2520 = vor.u32 %v2516, %v2519
        %v2521 = vrot.slane %v2520, 4
        %v2523 = vshll.u32 %v2354, 16
        %v2525 = vrot.slane %v2523, 5
        %v2526 = vsel %vm332, %v2521, %v2525
        %v2527 = vshrl.u32 %v2354, 16
        %v2529 = vrot.slane %v2527, 4
        %v2530 = vor.u32 %v2529, %v2525
        %v2531 = vrot.slane %v2530, 4
        %v2533 = vshll.u32 %v2355, 16
        %v2535 = vrot.slane %v2533, 5
        %v2536 = vsel %vm332, %v2531, %v2535
        %v2537 = vshrl.u32 %v2355, 16
        %v2539 = vrot.slane %v2537, 4
        %v2540 = vor.u32 %v2539, %v2535
        %v2541 = vrot.slane %v2540, 4
        %v2543 = vshll.u32 %v2356, 16
        %v2545 = vrot.slane %v2543, 5
        %v2546 = vsel %vm332, %v2541, %v2545
        %v2547 = vshrl.u32 %v2356, 16
        %v2549 = vrot.slane %v2547, 4
        %v2550 = vor.u32 %v2549, %v2545
        %v2551 = vrot.slane %v2550, 4
        %v2553 = vshll.u32 %v2481, 16
        %v2555 = vrot.slane %v2553, 5
        %v2556 = vsel %vm332, %v2551, %v2555
        %v2558 = vshrl.u32 %v2357, 16
        %v2560 = vrot.slane %v2558, 4
        %v2561 = vshll.u32 %v2357, 16
        %v2563 = vrot.slane %v2561, 5
        %v2564 = vor.u32 %v2560, %v2563
        %v2565 = vrot.slane %v2564, 4
        %v2567 = vshll.u32 %v2358, 16
        %v2569 = vrot.slane %v2567, 5
        %v2570 = vsel %vm332, %v2565, %v2569
        %v2571 = vshrl.u32 %v2358, 16
        %v2573 = vrot.slane %v2571, 4
        %v2574 = vor.u32 %v2573, %v2569
        %v2575 = vrot.slane %v2574, 4
        %v2577 = vshll.u32 %v2359, 16
        %v2579 = vrot.slane %v2577, 5
        %v2580 = vsel %vm332, %v2575, %v2579
        %v2581 = vshrl.u32 %v2359, 16
        %v2583 = vrot.slane %v2581, 4
        %v2584 = vor.u32 %v2583, %v2579
        %v2585 = vrot.slane %v2584, 4
        %v2587 = vshll.u32 %v2360, 16
        %v2589 = vrot.slane %v2587, 5
        %v2590 = vsel %vm332, %v2585, %v2589
        %v2591 = vshrl.u32 %v2360, 16
        %v2593 = vrot.slane %v2591, 4
        %v2594 = vor.u32 %v2593, %v2589
        %v2595 = vrot.slane %v2594, 4
        %v2597 = vshll.u32 %v2482, 16
        %v2599 = vrot.slane %v2597, 5
        %v2600 = vsel %vm332, %v2595, %v2599
        %v2602 = vshrl.u32 %v2361, 16
        %v2604 = vrot.slane %v2602, 4
        %v2605 = vshll.u32 %v2361, 16
        %v2607 = vrot.slane %v2605, 5
        %v2608 = vor.u32 %v2604, %v2607
        %v2609 = vrot.slane %v2608, 4
        %v2611 = vshll.u32 %v2362, 16
        %v2613 = vrot.slane %v2611, 5
        %v2614 = vsel %vm332, %v2609, %v2613
        %v2615 = vshrl.u32 %v2362, 16
        %v2617 = vrot.slane %v2615, 4
        %v2618 = vor.u32 %v2617, %v2613
        %v2619 = vrot.slane %v2618, 4
        %v2621 = vshll.u32 %v2363, 16
        %v2623 = vrot.slane %v2621, 5
        %v2624 = vsel %vm332, %v2619, %v2623
        %v2625 = vshrl.u32 %v2363, 16
        %v2627 = vrot.slane %v2625, 4
        %v2628 = vor.u32 %v2627, %v2623
        %v2629 = vrot.slane %v2628, 4
        %v2631 = vshll.u32 %v2364, 16
        %v2633 = vrot.slane %v2631, 5
        %v2634 = vsel %vm332, %v2629, %v2633
        %v2635 = vshrl.u32 %v2364, 16
        %v2637 = vrot.slane %v2635, 4
        %v2638 = vor.u32 %v2637, %v2633
        %v2639 = vrot.slane %v2638, 4
        %v2641 = vshll.u32 %v2483, 16
        %v2643 = vrot.slane %v2641, 5
        %v2644 = vsel %vm332, %v2639, %v2643
        %v2646 = vshrl.u32 %v2365, 16
        %v2648 = vrot.slane %v2646, 4
        %v2649 = vshll.u32 %v2365, 16
        %v2651 = vrot.slane %v2649, 5
        %v2652 = vor.u32 %v2648, %v2651
        %v2653 = vrot.slane %v2652, 4
        %v2655 = vshll.u32 %v2366, 16
        %v2657 = vrot.slane %v2655, 5
        %v2658 = vsel %vm332, %v2653, %v2657
        %v2659 = vshrl.u32 %v2366, 16
        %v2661 = vrot.slane %v2659, 4
        %v2662 = vor.u32 %v2661, %v2657
        %v2663 = vrot.slane %v2662, 4
        %v2665 = vshll.u32 %v2367, 16
        %v2667 = vrot.slane %v2665, 5
        %v2668 = vsel %vm332, %v2663, %v2667
        %v2669 = vshrl.u32 %v2367, 16
        %v2671 = vrot.slane %v2669, 4
        %v2672 = vor.u32 %v2671, %v2667
        %v2673 = vrot.slane %v2672, 4
        %v2675 = vshll.u32 %v2368, 16
        %v2677 = vrot.slane %v2675, 5
        %v2678 = vsel %vm332, %v2673, %v2677
        %v2679 = vshrl.u32 %v2368, 16
        %v2681 = vrot.slane %v2679, 4
        %v2682 = vor.u32 %v2681, %v2677
        %v2683 = vrot.slane %v2682, 4
        %v2685 = vshll.u32 %v2484, 16
        %v2687 = vrot.slane %v2685, 5
        %v2688 = vsel %vm332, %v2683, %v2687
        %v2690 = vshrl.u32 %v2369, 16
        %v2692 = vrot.slane %v2690, 4
        %v2693 = vshll.u32 %v2369, 16
        %v2695 = vrot.slane %v2693, 5
        %v2696 = vor.u32 %v2692, %v2695
        %v2697 = vrot.slane %v2696, 4
        %v2699 = vshll.u32 %v2370, 16
        %v2701 = vrot.slane %v2699, 5
        %v2702 = vsel %vm332, %v2697, %v2701
        %v2703 = vshrl.u32 %v2370, 16
        %v2705 = vrot.slane %v2703, 4
        %v2706 = vor.u32 %v2705, %v2701
        %v2707 = vrot.slane %v2706, 4
        %v2709 = vshll.u32 %v2371, 16
        %v2711 = vrot.slane %v2709, 5
        %v2712 = vsel %vm332, %v2707, %v2711
        %v2713 = vshrl.u32 %v2371, 16
        %v2715 = vrot.slane %v2713, 4
        %v2716 = vor.u32 %v2715, %v2711
        %v2717 = vrot.slane %v2716, 4
        %v2719 = vshll.u32 %v2372, 16
        %v2721 = vrot.slane %v2719, 5
        %v2722 = vsel %vm332, %v2717, %v2721
        %v2723 = vshrl.u32 %v2372, 16
        %v2725 = vrot.slane %v2723, 4
        %v2726 = vor.u32 %v2725, %v2721
        %v2727 = vrot.slane %v2726, 4
        %v2729 = vshll.u32 %v2485, 16
        %v2731 = vrot.slane %v2729, 5
        %v2732 = vsel %vm332, %v2727, %v2731
        %v2734 = vshrl.u32 %v2373, 16
        %v2736 = vrot.slane %v2734, 4
        %v2737 = vshll.u32 %v2373, 16
        %v2739 = vrot.slane %v2737, 5
        %v2740 = vor.u32 %v2736, %v2739
        %v2741 = vrot.slane %v2740, 4
        %v2743 = vshll.u32 %v2374, 16
        %v2745 = vrot.slane %v2743, 5
        %v2746 = vsel %vm332, %v2741, %v2745
        %v2747 = vshrl.u32 %v2374, 16
        %v2749 = vrot.slane %v2747, 4
        %v2750 = vor.u32 %v2749, %v2745
        %v2751 = vrot.slane %v2750, 4
        %v2753 = vshll.u32 %v2375, 16
        %v2755 = vrot.slane %v2753, 5
        %v2756 = vsel %vm332, %v2751, %v2755
        %v2757 = vshrl.u32 %v2375, 16
        %v2759 = vrot.slane %v2757, 4
        %v2760 = vor.u32 %v2759, %v2755
        %v2761 = vrot.slane %v2760, 4
        %v2763 = vshll.u32 %v2376, 16
        %v2765 = vrot.slane %v2763, 5
        %v2766 = vsel %vm332, %v2761, %v2765
        %v2767 = vshrl.u32 %v2376, 16
        %v2769 = vrot.slane %v2767, 4
        %v2770 = vor.u32 %v2769, %v2765
        %v2771 = vrot.slane %v2770, 4
        %v2773 = vshll.u32 %v2486, 16
        %v2775 = vrot.slane %v2773, 5
        %v2776 = vsel %vm332, %v2771, %v2775
        %v2778 = vshrl.u32 %v2377, 16
        %v2780 = vrot.slane %v2778, 4
        %v2781 = vshll.u32 %v2377, 16
        %v2783 = vrot.slane %v2781, 5
        %v2784 = vor.u32 %v2780, %v2783
        %v2785 = vrot.slane %v2784, 4
        %v2787 = vshll.u32 %v2378, 16
        %v2789 = vrot.slane %v2787, 5
        %v2790 = vsel %vm332, %v2785, %v2789
        %v2791 = vshrl.u32 %v2378, 16
        %v2793 = vrot.slane %v2791, 4
        %v2794 = vor.u32 %v2793, %v2789
        %v2795 = vrot.slane %v2794, 4
        %v2797 = vshll.u32 %v2379, 16
        %v2799 = vrot.slane %v2797, 5
        %v2800 = vsel %vm332, %v2795, %v2799
        %v2801 = vshrl.u32 %v2379, 16
        %v2803 = vrot.slane %v2801, 4
        %v2804 = vor.u32 %v2803, %v2799
        %v2805 = vrot.slane %v2804, 4
        %v2807 = vshll.u32 %v2380, 16
        %v2809 = vrot.slane %v2807, 5
        %v2810 = vsel %vm332, %v2805, %v2809
        %v2811 = vshrl.u32 %v2380, 16
        %v2813 = vrot.slane %v2811, 4
        %v2814 = vor.u32 %v2813, %v2809
        %v2815 = vrot.slane %v2814, 4
        %v2817 = vshll.u32 %v2487, 16
        %v2819 = vrot.slane %v2817, 5
        %v2820 = vsel %vm332, %v2815, %v2819
        %v2822 = vshrl.u32 %v2381, 16
        %v2824 = vrot.slane %v2822, 4
        %v2825 = vshll.u32 %v2381, 16
        %v2827 = vrot.slane %v2825, 5
        %v2828 = vor.u32 %v2824, %v2827
        %v2829 = vrot.slane %v2828, 4
        %v2831 = vshll.u32 %v2382, 16
        %v2833 = vrot.slane %v2831, 5
        %v2834 = vsel %vm332, %v2829, %v2833
        %v2835 = vshrl.u32 %v2382, 16
        %v2837 = vrot.slane %v2835, 4
        %v2838 = vor.u32 %v2837, %v2833
        %v2839 = vrot.slane %v2838, 4
        %v2841 = vshll.u32 %v2383, 16
        %v2843 = vrot.slane %v2841, 5
        %v2844 = vsel %vm332, %v2839, %v2843
        %v2845 = vshrl.u32 %v2383, 16
        %v2847 = vrot.slane %v2845, 4
        %v2848 = vor.u32 %v2847, %v2843
        %v2849 = vrot.slane %v2848, 4
        %v2851 = vshll.u32 %v2384, 16
        %v2853 = vrot.slane %v2851, 5
        %v2854 = vsel %vm332, %v2849, %v2853
        %v2855 = vshrl.u32 %v2384, 16
        %v2857 = vrot.slane %v2855, 4
        %v2858 = vor.u32 %v2857, %v2853
        %v2859 = vrot.slane %v2858, 4
        %v2861 = vshll.u32 %v2488, 16
        %v2863 = vrot.slane %v2861, 5
        %v2864 = vsel %vm332, %v2859, %v2863
        %v2866 = vshrl.u32 %v2385, 16
        %v2868 = vrot.slane %v2866, 4
        %v2869 = vshll.u32 %v2385, 16
        %v2871 = vrot.slane %v2869, 5
        %v2872 = vor.u32 %v2868, %v2871
        %v2873 = vrot.slane %v2872, 4
        %v2875 = vshll.u32 %v2386, 16
        %v2877 = vrot.slane %v2875, 5
        %v2878 = vsel %vm332, %v2873, %v2877
        %v2879 = vshrl.u32 %v2386, 16
        %v2881 = vrot.slane %v2879, 4
        %v2882 = vor.u32 %v2881, %v2877
        %v2883 = vrot.slane %v2882, 4
        %v2885 = vshll.u32 %v2387, 16
        %v2887 = vrot.slane %v2885, 5
        %v2888 = vsel %vm332, %v2883, %v2887
        %v2889 = vshrl.u32 %v2387, 16
        %v2891 = vrot.slane %v2889, 4
        %v2892 = vor.u32 %v2891, %v2887
        %v2893 = vrot.slane %v2892, 4
        %v2895 = vshll.u32 %v2388, 16
        %v2897 = vrot.slane %v2895, 5
        %v2898 = vsel %vm332, %v2893, %v2897
        %v2899 = vshrl.u32 %v2388, 16
        %v2901 = vrot.slane %v2899, 4
        %v2902 = vor.u32 %v2901, %v2897
        %v2903 = vrot.slane %v2902, 4
        %v2905 = vshll.u32 %v2489, 16
        %v2907 = vrot.slane %v2905, 5
        %v2908 = vsel %vm332, %v2903, %v2907
        %v2910 = vshrl.u32 %v2389, 16
        %v2912 = vrot.slane %v2910, 4
        %v2913 = vshll.u32 %v2389, 16
        %v2915 = vrot.slane %v2913, 5
        %v2916 = vor.u32 %v2912, %v2915
        %v2917 = vrot.slane %v2916, 4
        %v2919 = vshll.u32 %v2390, 16
        %v2921 = vrot.slane %v2919, 5
        %v2922 = vsel %vm332, %v2917, %v2921
        %v2923 = vshrl.u32 %v2390, 16
        %v2925 = vrot.slane %v2923, 4
        %v2926 = vor.u32 %v2925, %v2921
        %v2927 = vrot.slane %v2926, 4
        %v2929 = vshll.u32 %v2391, 16
        %v2931 = vrot.slane %v2929, 5
        %v2932 = vsel %vm332, %v2927, %v2931
        %v2933 = vshrl.u32 %v2391, 16
        %v2935 = vrot.slane %v2933, 4
        %v2936 = vor.u32 %v2935, %v2931
        %v2937 = vrot.slane %v2936, 4
        %v2939 = vshll.u32 %v2392, 16
        %v2941 = vrot.slane %v2939, 5
        %v2942 = vsel %vm332, %v2937, %v2941
        %v2943 = vshrl.u32 %v2392, 16
        %v2945 = vrot.slane %v2943, 4
        %v2946 = vor.u32 %v2945, %v2941
        %v2947 = vrot.slane %v2946, 4
        %v2949 = vshll.u32 %v2490, 16
        %v2951 = vrot.slane %v2949, 5
        %v2952 = vsel %vm332, %v2947, %v2951
        %v2954 = vshrl.u32 %v2393, 16
        %v2956 = vrot.slane %v2954, 4
        %v2957 = vshll.u32 %v2393, 16
        %v2959 = vrot.slane %v2957, 5
        %v2960 = vor.u32 %v2956, %v2959
        %v2961 = vrot.slane %v2960, 4
        %v2963 = vshll.u32 %v2394, 16
        %v2965 = vrot.slane %v2963, 5
        %v2966 = vsel %vm332, %v2961, %v2965
        %v2967 = vshrl.u32 %v2394, 16
        %v2969 = vrot.slane %v2967, 4
        %v2970 = vor.u32 %v2969, %v2965
        %v2971 = vrot.slane %v2970, 4
        %v2973 = vshll.u32 %v2395, 16
        %v2975 = vrot.slane %v2973, 5
        %v2976 = vsel %vm332, %v2971, %v2975
        %v2977 = vshrl.u32 %v2395, 16
        %v2979 = vrot.slane %v2977, 4
        %v2980 = vor.u32 %v2979, %v2975
        %v2981 = vrot.slane %v2980, 4
        %v2983 = vshll.u32 %v2396, 16
        %v2985 = vrot.slane %v2983, 5
        %v2986 = vsel %vm332, %v2981, %v2985
        %v2987 = vshrl.u32 %v2396, 16
        %v2989 = vrot.slane %v2987, 4
        %v2990 = vor.u32 %v2989, %v2985
        %v2991 = vrot.slane %v2990, 4
        %v2993 = vshll.u32 %v2491, 16
        %v2995 = vrot.slane %v2993, 5
        %v2996 = vsel %vm332, %v2991, %v2995
        %v2998 = vshrl.u32 %v2397, 16
        %v3000 = vrot.slane %v2998, 4
        %v3001 = vshll.u32 %v2397, 16
        %v3003 = vrot.slane %v3001, 5
        %v3004 = vor.u32 %v3000, %v3003
        %v3005 = vrot.slane %v3004, 4
        %v3007 = vshll.u32 %v2398, 16
        %v3009 = vrot.slane %v3007, 5
        %v3010 = vsel %vm332, %v3005, %v3009
        %v3011 = vshrl.u32 %v2398, 16
        %v3013 = vrot.slane %v3011, 4
        %v3014 = vor.u32 %v3013, %v3009
        %v3015 = vrot.slane %v3014, 4
        %v3017 = vshll.u32 %v2399, 16
        %v3019 = vrot.slane %v3017, 5
        %v3020 = vsel %vm332, %v3015, %v3019
        %v3021 = vshrl.u32 %v2399, 16
        %v3023 = vrot.slane %v3021, 4
        %v3024 = vor.u32 %v3023, %v3019
        %v3025 = vrot.slane %v3024, 4
        %v3027 = vshll.u32 %v2400, 16
        %v3029 = vrot.slane %v3027, 5
        %v3030 = vsel %vm332, %v3025, %v3029
        %v3031 = vshrl.u32 %v2400, 16
        %v3033 = vrot.slane %v3031, 4
        %v3034 = vor.u32 %v3033, %v3029
        %v3035 = vrot.slane %v3034, 4
        %v3037 = vshll.u32 %v2492, 16
        %v3039 = vrot.slane %v3037, 5
        %v3040 = vsel %vm332, %v3035, %v3039
        %v3042 = vshrl.u32 %v2401, 16
        %v3044 = vrot.slane %v3042, 4
        %v3045 = vshll.u32 %v2401, 16
        %v3047 = vrot.slane %v3045, 5
        %v3048 = vor.u32 %v3044, %v3047
        %v3049 = vrot.slane %v3048, 4
        %v3051 = vshll.u32 %v2402, 16
        %v3053 = vrot.slane %v3051, 5
        %v3054 = vsel %vm332, %v3049, %v3053
        %v3055 = vshrl.u32 %v2402, 16
        %v3057 = vrot.slane %v3055, 4
        %v3058 = vor.u32 %v3057, %v3053
        %v3059 = vrot.slane %v3058, 4
        %v3061 = vshll.u32 %v2403, 16
        %v3063 = vrot.slane %v3061, 5
        %v3064 = vsel %vm332, %v3059, %v3063
        %v3065 = vshrl.u32 %v2403, 16
        %v3067 = vrot.slane %v3065, 4
        %v3068 = vor.u32 %v3067, %v3063
        %v3069 = vrot.slane %v3068, 4
        %v3071 = vshll.u32 %v2404, 16
        %v3073 = vrot.slane %v3071, 5
        %v3074 = vsel %vm332, %v3069, %v3073
        %v3075 = vshrl.u32 %v2404, 16
        %v3077 = vrot.slane %v3075, 4
        %v3078 = vor.u32 %v3077, %v3073
        %v3079 = vrot.slane %v3078, 4
        %v3081 = vshll.u32 %v2493, 16
        %v3083 = vrot.slane %v3081, 5
        %v3084 = vsel %vm332, %v3079, %v3083
        %v3086 = vshrl.u32 %v2405, 16
        %v3088 = vrot.slane %v3086, 4
        %v3089 = vshll.u32 %v2405, 16
        %v3091 = vrot.slane %v3089, 5
        %v3092 = vor.u32 %v3088, %v3091
        %v3093 = vrot.slane %v3092, 4
        %v3095 = vshll.u32 %v2406, 16
        %v3097 = vrot.slane %v3095, 5
        %v3098 = vsel %vm332, %v3093, %v3097
        %v3099 = vshrl.u32 %v2406, 16
        %v3101 = vrot.slane %v3099, 4
        %v3102 = vor.u32 %v3101, %v3097
        %v3103 = vrot.slane %v3102, 4
        %v3105 = vshll.u32 %v2407, 16
        %v3107 = vrot.slane %v3105, 5
        %v3108 = vsel %vm332, %v3103, %v3107
        %v3109 = vshrl.u32 %v2407, 16
        %v3111 = vrot.slane %v3109, 4
        %v3112 = vor.u32 %v3111, %v3107
        %v3113 = vrot.slane %v3112, 4
        %v3115 = vshll.u32 %v2408, 16
        %v3117 = vrot.slane %v3115, 5
        %v3118 = vsel %vm332, %v3113, %v3117
        %v3119 = vshrl.u32 %v2408, 16
        %v3121 = vrot.slane %v3119, 4
        %v3122 = vor.u32 %v3121, %v3117
        %v3123 = vrot.slane %v3122, 4
        %v3125 = vshll.u32 %v2494, 16
        %v3127 = vrot.slane %v3125, 5
        %v3128 = vsel %vm332, %v3123, %v3127
        %v3130 = vshrl.u32 %v2409, 16
        %v3132 = vrot.slane %v3130, 4
        %v3133 = vshll.u32 %v2409, 16
        %v3135 = vrot.slane %v3133, 5
        %v3136 = vor.u32 %v3132, %v3135
        %v3137 = vrot.slane %v3136, 4
        %v3139 = vshll.u32 %v2410, 16
        %v3141 = vrot.slane %v3139, 5
        %v3142 = vsel %vm332, %v3137, %v3141
        %v3143 = vshrl.u32 %v2410, 16
        %v3145 = vrot.slane %v3143, 4
        %v3146 = vor.u32 %v3145, %v3141
        %v3147 = vrot.slane %v3146, 4
        %v3149 = vshll.u32 %v2411, 16
        %v3151 = vrot.slane %v3149, 5
        %v3152 = vsel %vm332, %v3147, %v3151
        %v3153 = vshrl.u32 %v2411, 16
        %v3155 = vrot.slane %v3153, 4
        %v3156 = vor.u32 %v3155, %v3151
        %v3157 = vrot.slane %v3156, 4
        %v3159 = vshll.u32 %v2412, 16
        %v3161 = vrot.slane %v3159, 5
        %v3162 = vsel %vm332, %v3157, %v3161
        %v3163 = vshrl.u32 %v2412, 16
        %v3165 = vrot.slane %v3163, 4
        %v3166 = vor.u32 %v3165, %v3161
        %v3167 = vrot.slane %v3166, 4
        %v3169 = vshll.u32 %v2495, 16
        %v3171 = vrot.slane %v3169, 5
        %v3172 = vsel %vm332, %v3167, %v3171
        %v3174 = vshrl.u32 %v2413, 16
        %v3176 = vrot.slane %v3174, 4
        %v3177 = vshll.u32 %v2413, 16
        %v3179 = vrot.slane %v3177, 5
        %v3180 = vor.u32 %v3176, %v3179
        %v3181 = vrot.slane %v3180, 4
        %v3183 = vshll.u32 %v2414, 16
        %v3185 = vrot.slane %v3183, 5
        %v3186 = vsel %vm332, %v3181, %v3185
        %v3187 = vshrl.u32 %v2414, 16
        %v3189 = vrot.slane %v3187, 4
        %v3190 = vor.u32 %v3189, %v3185
        %v3191 = vrot.slane %v3190, 4
        %v3193 = vshll.u32 %v2415, 16
        %v3195 = vrot.slane %v3193, 5
        %v3196 = vsel %vm332, %v3191, %v3195
        %v3197 = vshrl.u32 %v2415, 16
        %v3199 = vrot.slane %v3197, 4
        %v3200 = vor.u32 %v3199, %v3195
        %v3201 = vrot.slane %v3200, 4
        %v3203 = vshll.u32 %v2416, 16
        %v3205 = vrot.slane %v3203, 5
        %v3206 = vsel %vm332, %v3201, %v3205
        %v3207 = vshrl.u32 %v2416, 16
        %v3209 = vrot.slane %v3207, 4
        %v3210 = vor.u32 %v3209, %v3205
        %v3211 = vrot.slane %v3210, 4
        %v3213 = vshll.u32 %v2496, 16
        %v3215 = vrot.slane %v3213, 5
        %v3216 = vsel %vm332, %v3211, %v3215
        %v3218 = vshrl.u32 %v2417, 16
        %v3220 = vrot.slane %v3218, 4
        %v3221 = vshll.u32 %v2417, 16
        %v3223 = vrot.slane %v3221, 5
        %v3224 = vor.u32 %v3220, %v3223
        %v3225 = vrot.slane %v3224, 4
        %v3227 = vshll.u32 %v2418, 16
        %v3229 = vrot.slane %v3227, 5
        %v3230 = vsel %vm332, %v3225, %v3229
        %v3231 = vshrl.u32 %v2418, 16
        %v3233 = vrot.slane %v3231, 4
        %v3234 = vor.u32 %v3233, %v3229
        %v3235 = vrot.slane %v3234, 4
        %v3237 = vshll.u32 %v2419, 16
        %v3239 = vrot.slane %v3237, 5
        %v3240 = vsel %vm332, %v3235, %v3239
        %v3241 = vshrl.u32 %v2419, 16
        %v3243 = vrot.slane %v3241, 4
        %v3244 = vor.u32 %v3243, %v3239
        %v3245 = vrot.slane %v3244, 4
        %v3247 = vshll.u32 %v2420, 16
        %v3249 = vrot.slane %v3247, 5
        %v3250 = vsel %vm332, %v3245, %v3249
        %v3251 = vshrl.u32 %v2420, 16
        %v3253 = vrot.slane %v3251, 4
        %v3254 = vor.u32 %v3253, %v3249
        %v3255 = vrot.slane %v3254, 4
        %v3257 = vshll.u32 %v2497, 16
        %v3259 = vrot.slane %v3257, 5
        %v3260 = vsel %vm332, %v3255, %v3259
        %v3262 = vshrl.u32 %v2421, 16
        %v3264 = vrot.slane %v3262, 4
        %v3265 = vshll.u32 %v2421, 16
        %v3267 = vrot.slane %v3265, 5
        %v3268 = vor.u32 %v3264, %v3267
        %v3269 = vrot.slane %v3268, 4
        %v3271 = vshll.u32 %v2422, 16
        %v3273 = vrot.slane %v3271, 5
        %v3274 = vsel %vm332, %v3269, %v3273
        %v3275 = vshrl.u32 %v2422, 16
        %v3277 = vrot.slane %v3275, 4
        %v3278 = vor.u32 %v3277, %v3273
        %v3279 = vrot.slane %v3278, 4
        %v3281 = vshll.u32 %v2423, 16
        %v3283 = vrot.slane %v3281, 5
        %v3284 = vsel %vm332, %v3279, %v3283
        %v3285 = vshrl.u32 %v2423, 16
        %v3287 = vrot.slane %v3285, 4
        %v3288 = vor.u32 %v3287, %v3283
        %v3289 = vrot.slane %v3288, 4
        %v3291 = vshll.u32 %v2424, 16
        %v3293 = vrot.slane %v3291, 5
        %v3294 = vsel %vm332, %v3289, %v3293
        %v3295 = vshrl.u32 %v2424, 16
        %v3297 = vrot.slane %v3295, 4
        %v3298 = vor.u32 %v3297, %v3293
        %v3299 = vrot.slane %v3298, 4
        %v3301 = vshll.u32 %v2498, 16
        %v3303 = vrot.slane %v3301, 5
        %v3304 = vsel %vm332, %v3299, %v3303
        %v3306 = vshrl.u32 %v2425, 16
        %v3308 = vrot.slane %v3306, 4
        %v3309 = vshll.u32 %v2425, 16
        %v3311 = vrot.slane %v3309, 5
        %v3312 = vor.u32 %v3308, %v3311
        %v3313 = vrot.slane %v3312, 4
        %v3315 = vshll.u32 %v2426, 16
        %v3317 = vrot.slane %v3315, 5
        %v3318 = vsel %vm332, %v3313, %v3317
        %v3319 = vshrl.u32 %v2426, 16
        %v3321 = vrot.slane %v3319, 4
        %v3322 = vor.u32 %v3321, %v3317
        %v3323 = vrot.slane %v3322, 4
        %v3325 = vshll.u32 %v2427, 16
        %v3327 = vrot.slane %v3325, 5
        %v3328 = vsel %vm332, %v3323, %v3327
        %v3329 = vshrl.u32 %v2427, 16
        %v3331 = vrot.slane %v3329, 4
        %v3332 = vor.u32 %v3331, %v3327
        %v3333 = vrot.slane %v3332, 4
        %v3335 = vshll.u32 %v2428, 16
        %v3337 = vrot.slane %v3335, 5
        %v3338 = vsel %vm332, %v3333, %v3337
        %v3339 = vshrl.u32 %v2428, 16
        %v3341 = vrot.slane %v3339, 4
        %v3342 = vor.u32 %v3341, %v3337
        %v3343 = vrot.slane %v3342, 4
        %v3345 = vshll.u32 %v2499, 16
        %v3347 = vrot.slane %v3345, 5
        %v3348 = vsel %vm332, %v3343, %v3347
        %v3350 = vshrl.u32 %v2429, 16
        %v3352 = vrot.slane %v3350, 4
        %v3353 = vshll.u32 %v2429, 16
        %v3355 = vrot.slane %v3353, 5
        %v3356 = vor.u32 %v3352, %v3355
        %v3357 = vrot.slane %v3356, 4
        %v3359 = vshll.u32 %v2430, 16
        %v3361 = vrot.slane %v3359, 5
        %v3362 = vsel %vm332, %v3357, %v3361
        %v3363 = vshrl.u32 %v2430, 16
        %v3365 = vrot.slane %v3363, 4
        %v3366 = vor.u32 %v3365, %v3361
        %v3367 = vrot.slane %v3366, 4
        %v3369 = vshll.u32 %v2431, 16
        %v3371 = vrot.slane %v3369, 5
        %v3372 = vsel %vm332, %v3367, %v3371
        %v3373 = vshrl.u32 %v2431, 16
        %v3375 = vrot.slane %v3373, 4
        %v3376 = vor.u32 %v3375, %v3371
        %v3377 = vrot.slane %v3376, 4
        %v3379 = vshll.u32 %v2432, 16
        %v3381 = vrot.slane %v3379, 5
        %v3382 = vsel %vm332, %v3377, %v3381
        %v3383 = vshrl.u32 %v2432, 16
        %v3385 = vrot.slane %v3383, 4
        %v3386 = vor.u32 %v3385, %v3381
        %v3387 = vrot.slane %v3386, 4
        %v3389 = vshll.u32 %v2500, 16
        %v3391 = vrot.slane %v3389, 5
        %v3392 = vsel %vm332, %v3387, %v3391
        %v3394 = vshrl.u32 %v2433, 16
        %v3396 = vrot.slane %v3394, 4
        %v3397 = vshll.u32 %v2433, 16
        %v3399 = vrot.slane %v3397, 5
        %v3400 = vor.u32 %v3396, %v3399
        %v3401 = vrot.slane %v3400, 4
        %v3403 = vshll.u32 %v2434, 16
        %v3405 = vrot.slane %v3403, 5
        %v3406 = vsel %vm332, %v3401, %v3405
        %v3407 = vshrl.u32 %v2434, 16
        %v3409 = vrot.slane %v3407, 4
        %v3410 = vor.u32 %v3409, %v3405
        %v3411 = vrot.slane %v3410, 4
        %v3413 = vshll.u32 %v2435, 16
        %v3415 = vrot.slane %v3413, 5
        %v3416 = vsel %vm332, %v3411, %v3415
        %v3417 = vshrl.u32 %v2435, 16
        %v3419 = vrot.slane %v3417, 4
        %v3420 = vor.u32 %v3419, %v3415
        %v3421 = vrot.slane %v3420, 4
        %v3423 = vshll.u32 %v2436, 16
        %v3425 = vrot.slane %v3423, 5
        %v3426 = vsel %vm332, %v3421, %v3425
        %v3427 = vshrl.u32 %v2436, 16
        %v3429 = vrot.slane %v3427, 4
        %v3430 = vor.u32 %v3429, %v3425
        %v3431 = vrot.slane %v3430, 4
        %v3433 = vshll.u32 %v2501, 16
        %v3435 = vrot.slane %v3433, 5
        %v3436 = vsel %vm332, %v3431, %v3435
        %v3438 = vshrl.u32 %v2437, 16
        %v3440 = vrot.slane %v3438, 4
        %v3441 = vshll.u32 %v2437, 16
        %v3443 = vrot.slane %v3441, 5
        %v3444 = vor.u32 %v3440, %v3443
        %v3445 = vrot.slane %v3444, 4
        %v3447 = vshll.u32 %v2438, 16
        %v3449 = vrot.slane %v3447, 5
        %v3450 = vsel %vm332, %v3445, %v3449
        %v3451 = vshrl.u32 %v2438, 16
        %v3453 = vrot.slane %v3451, 4
        %v3454 = vor.u32 %v3453, %v3449
        %v3455 = vrot.slane %v3454, 4
        %v3457 = vshll.u32 %v2439, 16
        %v3459 = vrot.slane %v3457, 5
        %v3460 = vsel %vm332, %v3455, %v3459
        %v3461 = vshrl.u32 %v2439, 16
        %v3463 = vrot.slane %v3461, 4
        %v3464 = vor.u32 %v3463, %v3459
        %v3465 = vrot.slane %v3464, 4
        %v3467 = vshll.u32 %v2440, 16
        %v3469 = vrot.slane %v3467, 5
        %v3470 = vsel %vm332, %v3465, %v3469
        %v3471 = vshrl.u32 %v2440, 16
        %v3473 = vrot.slane %v3471, 4
        %v3474 = vor.u32 %v3473, %v3469
        %v3475 = vrot.slane %v3474, 4
        %v3477 = vshll.u32 %v2502, 16
        %v3479 = vrot.slane %v3477, 5
        %v3480 = vsel %vm332, %v3475, %v3479
        %v3482 = vshrl.u32 %v2441, 16
        %v3484 = vrot.slane %v3482, 4
        %v3485 = vshll.u32 %v2441, 16
        %v3487 = vrot.slane %v3485, 5
        %v3488 = vor.u32 %v3484, %v3487
        %v3489 = vrot.slane %v3488, 4
        %v3491 = vshll.u32 %v2442, 16
        %v3493 = vrot.slane %v3491, 5
        %v3494 = vsel %vm332, %v3489, %v3493
        %v3495 = vshrl.u32 %v2442, 16
        %v3497 = vrot.slane %v3495, 4
        %v3498 = vor.u32 %v3497, %v3493
        %v3499 = vrot.slane %v3498, 4
        %v3501 = vshll.u32 %v2443, 16
        %v3503 = vrot.slane %v3501, 5
        %v3504 = vsel %vm332, %v3499, %v3503
        %v3505 = vshrl.u32 %v2443, 16
        %v3507 = vrot.slane %v3505, 4
        %v3508 = vor.u32 %v3507, %v3503
        %v3509 = vrot.slane %v3508, 4
        %v3511 = vshll.u32 %v2444, 16
        %v3513 = vrot.slane %v3511, 5
        %v3514 = vsel %vm332, %v3509, %v3513
        %v3515 = vshrl.u32 %v2444, 16
        %v3517 = vrot.slane %v3515, 4
        %v3518 = vor.u32 %v3517, %v3513
        %v3519 = vrot.slane %v3518, 4
        %v3521 = vshll.u32 %v2503, 16
        %v3523 = vrot.slane %v3521, 5
        %v3524 = vsel %vm332, %v3519, %v3523
        %v3526 = vshrl.u32 %v2445, 16
        %v3528 = vrot.slane %v3526, 4
        %v3529 = vshll.u32 %v2445, 16
        %v3531 = vrot.slane %v3529, 5
        %v3532 = vor.u32 %v3528, %v3531
        %v3533 = vrot.slane %v3532, 4
        %v3535 = vshll.u32 %v2446, 16
        %v3537 = vrot.slane %v3535, 5
        %v3538 = vsel %vm332, %v3533, %v3537
        %v3539 = vshrl.u32 %v2446, 16
        %v3541 = vrot.slane %v3539, 4
        %v3542 = vor.u32 %v3541, %v3537
        %v3543 = vrot.slane %v3542, 4
        %v3545 = vshll.u32 %v2447, 16
        %v3547 = vrot.slane %v3545, 5
        %v3548 = vsel %vm332, %v3543, %v3547
        %v3549 = vshrl.u32 %v2447, 16
        %v3551 = vrot.slane %v3549, 4
        %v3552 = vor.u32 %v3551, %v3547
        %v3553 = vrot.slane %v3552, 4
        %v3555 = vshll.u32 %v2448, 16
        %v3557 = vrot.slane %v3555, 5
        %v3558 = vsel %vm332, %v3553, %v3557
        %v3559 = vshrl.u32 %v2448, 16
        %v3561 = vrot.slane %v3559, 4
        %v3562 = vor.u32 %v3561, %v3557
        %v3563 = vrot.slane %v3562, 4
        %v3565 = vshll.u32 %v2504, 16
        %v3567 = vrot.slane %v3565, 5
        %v3568 = vsel %vm332, %v3563, %v3567
        %v3570 = vshrl.u32 %v2449, 16
        %v3572 = vrot.slane %v3570, 4
        %v3573 = vshll.u32 %v2449, 16
        %v3575 = vrot.slane %v3573, 5
        %v3576 = vor.u32 %v3572, %v3575
        %v3577 = vrot.slane %v3576, 4
        %v3579 = vshll.u32 %v2450, 16
        %v3581 = vrot.slane %v3579, 5
        %v3582 = vsel %vm332, %v3577, %v3581
        %v3583 = vshrl.u32 %v2450, 16
        %v3585 = vrot.slane %v3583, 4
        %v3586 = vor.u32 %v3585, %v3581
        %v3587 = vrot.slane %v3586, 4
        %v3589 = vshll.u32 %v2451, 16
        %v3591 = vrot.slane %v3589, 5
        %v3592 = vsel %vm332, %v3587, %v3591
        %v3593 = vshrl.u32 %v2451, 16
        %v3595 = vrot.slane %v3593, 4
        %v3596 = vor.u32 %v3595, %v3591
        %v3597 = vrot.slane %v3596, 4
        %v3599 = vshll.u32 %v2452, 16
        %v3601 = vrot.slane %v3599, 5
        %v3602 = vsel %vm332, %v3597, %v3601
        %v3603 = vshrl.u32 %v2452, 16
        %v3605 = vrot.slane %v3603, 4
        %v3606 = vor.u32 %v3605, %v3601
        %v3607 = vrot.slane %v3606, 4
        %v3609 = vshll.u32 %v2505, 16
        %v3611 = vrot.slane %v3609, 5
        %v3612 = vsel %vm332, %v3607, %v3611
        %v3614 = vshrl.u32 %v2453, 16
        %v3616 = vrot.slane %v3614, 4
        %v3617 = vshll.u32 %v2453, 16
        %v3619 = vrot.slane %v3617, 5
        %v3620 = vor.u32 %v3616, %v3619
        %v3621 = vrot.slane %v3620, 4
        %v3623 = vshll.u32 %v2454, 16
        %v3625 = vrot.slane %v3623, 5
        %v3626 = vsel %vm332, %v3621, %v3625
        %v3627 = vshrl.u32 %v2454, 16
        %v3629 = vrot.slane %v3627, 4
        %v3630 = vor.u32 %v3629, %v3625
        %v3631 = vrot.slane %v3630, 4
        %v3633 = vshll.u32 %v2455, 16
        %v3635 = vrot.slane %v3633, 5
        %v3636 = vsel %vm332, %v3631, %v3635
        %v3637 = vshrl.u32 %v2455, 16
        %v3639 = vrot.slane %v3637, 4
        %v3640 = vor.u32 %v3639, %v3635
        %v3641 = vrot.slane %v3640, 4
        %v3643 = vshll.u32 %v2456, 16
        %v3645 = vrot.slane %v3643, 5
        %v3646 = vsel %vm332, %v3641, %v3645
        %v3647 = vshrl.u32 %v2456, 16
        %v3649 = vrot.slane %v3647, 4
        %v3650 = vor.u32 %v3649, %v3645
        %v3651 = vrot.slane %v3650, 4
        %v3653 = vshll.u32 %v2506, 16
        %v3655 = vrot.slane %v3653, 5
        %v3656 = vsel %vm332, %v3651, %v3655
        %v3658 = vshrl.u32 %v2457, 16
        %v3660 = vrot.slane %v3658, 4
        %v3661 = vshll.u32 %v2457, 16
        %v3663 = vrot.slane %v3661, 5
        %v3664 = vor.u32 %v3660, %v3663
        %v3665 = vrot.slane %v3664, 4
        %v3667 = vshll.u32 %v2458, 16
        %v3669 = vrot.slane %v3667, 5
        %v3670 = vsel %vm332, %v3665, %v3669
        %v3671 = vshrl.u32 %v2458, 16
        %v3673 = vrot.slane %v3671, 4
        %v3674 = vor.u32 %v3673, %v3669
        %v3675 = vrot.slane %v3674, 4
        %v3677 = vshll.u32 %v2459, 16
        %v3679 = vrot.slane %v3677, 5
        %v3680 = vsel %vm332, %v3675, %v3679
        %v3681 = vshrl.u32 %v2459, 16
        %v3683 = vrot.slane %v3681, 4
        %v3684 = vor.u32 %v3683, %v3679
        %v3685 = vrot.slane %v3684, 4
        %v3687 = vshll.u32 %v2460, 16
        %v3689 = vrot.slane %v3687, 5
        %v3690 = vsel %vm332, %v3685, %v3689
        %v3691 = vshrl.u32 %v2460, 16
        %v3693 = vrot.slane %v3691, 4
        %v3694 = vor.u32 %v3693, %v3689
        %v3695 = vrot.slane %v3694, 4
        %v3697 = vshll.u32 %v2507, 16
        %v3699 = vrot.slane %v3697, 5
        %v3700 = vsel %vm332, %v3695, %v3699
        %v3702 = vshrl.u32 %v2461, 16
        %v3704 = vrot.slane %v3702, 4
        %v3705 = vshll.u32 %v2461, 16
        %v3707 = vrot.slane %v3705, 5
        %v3708 = vor.u32 %v3704, %v3707
        %v3709 = vrot.slane %v3708, 4
        %v3711 = vshll.u32 %v2462, 16
        %v3713 = vrot.slane %v3711, 5
        %v3714 = vsel %vm332, %v3709, %v3713
        %v3715 = vshrl.u32 %v2462, 16
        %v3717 = vrot.slane %v3715, 4
        %v3718 = vor.u32 %v3717, %v3713
        %v3719 = vrot.slane %v3718, 4
        %v3721 = vshll.u32 %v2463, 16
        %v3723 = vrot.slane %v3721, 5
        %v3724 = vsel %vm332, %v3719, %v3723
        %v3725 = vshrl.u32 %v2463, 16
        %v3727 = vrot.slane %v3725, 4
        %v3728 = vor.u32 %v3727, %v3723
        %v3729 = vrot.slane %v3728, 4
        %v3731 = vshll.u32 %v2464, 16
        %v3733 = vrot.slane %v3731, 5
        %v3734 = vsel %vm332, %v3729, %v3733
        %v3735 = vshrl.u32 %v2464, 16
        %v3737 = vrot.slane %v3735, 4
        %v3738 = vor.u32 %v3737, %v3733
        %v3739 = vrot.slane %v3738, 4
        %v3741 = vshll.u32 %v2508, 16
        %v3743 = vrot.slane %v3741, 5
        %v3744 = vsel %vm332, %v3739, %v3743
        %v3746 = vshrl.u32 %v2465, 16
        %v3748 = vrot.slane %v3746, 4
        %v3749 = vshll.u32 %v2465, 16
        %v3751 = vrot.slane %v3749, 5
        %v3752 = vor.u32 %v3748, %v3751
        %v3753 = vrot.slane %v3752, 4
        %v3755 = vshll.u32 %v2466, 16
        %v3757 = vrot.slane %v3755, 5
        %v3758 = vsel %vm332, %v3753, %v3757
        %v3759 = vshrl.u32 %v2466, 16
        %v3761 = vrot.slane %v3759, 4
        %v3762 = vor.u32 %v3761, %v3757
        %v3763 = vrot.slane %v3762, 4
        %v3765 = vshll.u32 %v2467, 16
        %v3767 = vrot.slane %v3765, 5
        %v3768 = vsel %vm332, %v3763, %v3767
        %v3769 = vshrl.u32 %v2467, 16
        %v3771 = vrot.slane %v3769, 4
        %v3772 = vor.u32 %v3771, %v3767
        %v3773 = vrot.slane %v3772, 4
        %v3775 = vshll.u32 %v2468, 16
        %v3777 = vrot.slane %v3775, 5
        %v3778 = vsel %vm332, %v3773, %v3777
        %v3779 = vshrl.u32 %v2468, 16
        %v3781 = vrot.slane %v3779, 4
        %v3782 = vor.u32 %v3781, %v3777
        %v3783 = vrot.slane %v3782, 4
        %v3785 = vshll.u32 %v2509, 16
        %v3787 = vrot.slane %v3785, 5
        %v3788 = vsel %vm332, %v3783, %v3787
        %v3790 = vshrl.u32 %v2469, 16
        %v3792 = vrot.slane %v3790, 4
        %v3793 = vshll.u32 %v2469, 16
        %v3795 = vrot.slane %v3793, 5
        %v3796 = vor.u32 %v3792, %v3795
        %v3797 = vrot.slane %v3796, 4
        %v3799 = vshll.u32 %v2470, 16
        %v3801 = vrot.slane %v3799, 5
        %v3802 = vsel %vm332, %v3797, %v3801
        %v3803 = vshrl.u32 %v2470, 16
        %v3805 = vrot.slane %v3803, 4
        %v3806 = vor.u32 %v3805, %v3801
        %v3807 = vrot.slane %v3806, 4
        %v3809 = vshll.u32 %v2471, 16
        %v3811 = vrot.slane %v3809, 5
        %v3812 = vsel %vm332, %v3807, %v3811
        %v3813 = vshrl.u32 %v2471, 16
        %v3815 = vrot.slane %v3813, 4
        %v3816 = vor.u32 %v3815, %v3811
        %v3817 = vrot.slane %v3816, 4
        %v3819 = vshll.u32 %v2472, 16
        %v3821 = vrot.slane %v3819, 5
        %v3822 = vsel %vm332, %v3817, %v3821
        %v3823 = vshrl.u32 %v2472, 16
        %v3825 = vrot.slane %v3823, 4
        %v3826 = vor.u32 %v3825, %v3821
        %v3827 = vrot.slane %v3826, 4
        %v3829 = vshll.u32 %v2510, 16
        %v3831 = vrot.slane %v3829, 5
        %v3832 = vsel %vm332, %v3827, %v3831
        %v3834 = vshrl.u32 %v2473, 16
        %v3836 = vrot.slane %v3834, 4
        %v3837 = vshll.u32 %v2473, 16
        %v3839 = vrot.slane %v3837, 5
        %v3840 = vor.u32 %v3836, %v3839
        %v3841 = vrot.slane %v3840, 4
        %v3843 = vshll.u32 %v2474, 16
        %v3845 = vrot.slane %v3843, 5
        %v3846 = vsel %vm332, %v3841, %v3845
        %v3847 = vshrl.u32 %v2474, 16
        %v3849 = vrot.slane %v3847, 4
        %v3850 = vor.u32 %v3849, %v3845
        %v3851 = vrot.slane %v3850, 4
        %v3853 = vshll.u32 %v2475, 16
        %v3855 = vrot.slane %v3853, 5
        %v3856 = vsel %vm332, %v3851, %v3855
        %v3857 = vshrl.u32 %v2475, 16
        %v3859 = vrot.slane %v3857, 4
        %v3860 = vor.u32 %v3859, %v3855
        %v3861 = vrot.slane %v3860, 4
        %v3863 = vshll.u32 %v2476, 16
        %v3865 = vrot.slane %v3863, 5
        %v3866 = vsel %vm332, %v3861, %v3865
        %v3867 = vshrl.u32 %v2476, 16
        %v3869 = vrot.slane %v3867, 4
        %v3870 = vor.u32 %v3869, %v3865
        %v3871 = vrot.slane %v3870, 4
        %v3873 = vshll.u32 %v2511, 16
        %v3875 = vrot.slane %v3873, 5
        %v3876 = vsel %vm332, %v3871, %v3875
        %v3878 = vshrl.u32 %v2477, 16
        %v3880 = vrot.slane %v3878, 4
        %v3881 = vshll.u32 %v2477, 16
        %v3883 = vrot.slane %v3881, 5
        %v3884 = vor.u32 %v3880, %v3883
        %v3885 = vrot.slane %v3884, 4
        %v3887 = vshll.u32 %v2478, 16
        %v3889 = vrot.slane %v3887, 5
        %v3890 = vsel %vm332, %v3885, %v3889
        %v3891 = vshrl.u32 %v2478, 16
        %v3893 = vrot.slane %v3891, 4
        %v3894 = vor.u32 %v3893, %v3889
        %v3895 = vrot.slane %v3894, 4
        %v3897 = vshll.u32 %v2479, 16
        %v3899 = vrot.slane %v3897, 5
        %v3900 = vsel %vm332, %v3895, %v3899
        %v3901 = vshrl.u32 %v2479, 16
        %v3903 = vrot.slane %v3901, 4
        %v3904 = vor.u32 %v3903, %v3899
        %v3905 = vrot.slane %v3904, 4
        %v3907 = vshll.u32 %v2480, 16
        %v3909 = vrot.slane %v3907, 5
        %v3910 = vsel %vm332, %v3905, %v3909
        %v3911 = vshrl.u32 %v2480, 16
        %v3913 = vrot.slane %v3911, 4
        %v3914 = vor.u32 %v3913, %v3909
        %v3915 = vrot.slane %v3914, 4
        %v3917 = vshll.u32 %v2512, 16
        %v3919 = vrot.slane %v3917, 5
        %v3920 = vsel %vm332, %v3915, %v3919
        %v3921 = vld [vmem:[%s2352] sm:$0xe]
        %v3922 = vld [vmem:[%s2352 + $0x14] sm:$0xe]
        %v3923 = vld [vmem:[%s2352 + $0x28] sm:$0xe]
        %v3924 = vld [vmem:[%s2352 + $0x3c] sm:$0xe]
        %v3925 = vld [vmem:[%s2352 + $0x50] sm:$0xe]
        %v3926 = vld [vmem:[%s2352 + $0x64] sm:$0xe]
        %v3927 = vld [vmem:[%s2352 + $0x78] sm:$0xe]
        %v3928 = vld [vmem:[%s2352 + $0x8c] sm:$0xe]
        %v3929 = vld [vmem:[%s2352 + $0xa0] sm:$0xe]
        %v3930 = vld [vmem:[%s2352 + $0xb4] sm:$0xe]
        %v3931 = vld [vmem:[%s2352 + $0xc8] sm:$0xe]
        %v3932 = vld [vmem:[%s2352 + $0xdc] sm:$0xe]
        %v3933 = vld [vmem:[%s2352 + $0xf0] sm:$0xe]
        %v3934 = vld [vmem:[%s2352 + $0x104] sm:$0xe]
        %v3935 = vld [vmem:[%s2352 + $0x118] sm:$0xe]
        %v3936 = vld [vmem:[%s2352 + $0x12c] sm:$0xe]
        %v3937 = vld [vmem:[%s2352 + $0x140] sm:$0xe]
        %v3938 = vld [vmem:[%s2352 + $0x154] sm:$0xe]
        %v3939 = vld [vmem:[%s2352 + $0x168] sm:$0xe]
        %v3940 = vld [vmem:[%s2352 + $0x17c] sm:$0xe]
        %v3941 = vld [vmem:[%s2352 + $0x190] sm:$0xe]
        %v3942 = vld [vmem:[%s2352 + $0x1a4] sm:$0xe]
        %v3943 = vld [vmem:[%s2352 + $0x1b8] sm:$0xe]
        %v3944 = vld [vmem:[%s2352 + $0x1cc] sm:$0xe]
        %v3945 = vld [vmem:[%s2352 + $0x1e0] sm:$0xe]
        %v3946 = vld [vmem:[%s2352 + $0x1f4] sm:$0xe]
        %v3947 = vld [vmem:[%s2352 + $0x208] sm:$0xe]
        %v3948 = vld [vmem:[%s2352 + $0x21c] sm:$0xe]
        %v3949 = vld [vmem:[%s2352 + $0x230] sm:$0xe]
        %v3950 = vld [vmem:[%s2352 + $0x244] sm:$0xe]
        %v3951 = vld [vmem:[%s2352 + $0x258] sm:$0xe]
        %v3952 = vld [vmem:[%s2352 + $0x26c] sm:$0xe]
        %v4113 = vrot.slane %v3921, 5
        %v4114 = vrot.slane %v4113, 4
        %v4115 = vrot.slane %v2354, 5
        %v4116 = vsel %vm1935, %v4114, %v4115
        %v4117 = vrot.slane %v4115, 4
        %v4118 = vrot.slane %v2355, 5
        %v4119 = vsel %vm1935, %v4117, %v4118
        %v4120 = vrot.slane %v4118, 4
        %v4121 = vrot.slane %v2356, 5
        %v4122 = vsel %vm1935, %v4120, %v4121
        %v4123 = vrot.slane %v4121, 4
        %v4124 = vrot.slane %v2481, 5
        %v4125 = vsel %vm1935, %v4123, %v4124
        %v4126 = vrot.slane %v3922, 5
        %v4127 = vrot.slane %v4126, 4
        %v4128 = vrot.slane %v2358, 5
        %v4129 = vsel %vm1935, %v4127, %v4128
        %v4130 = vrot.slane %v4128, 4
        %v4131 = vrot.slane %v2359, 5
        %v4132 = vsel %vm1935, %v4130, %v4131
        %v4133 = vrot.slane %v4131, 4
        %v4134 = vrot.slane %v2360, 5
        %v4135 = vsel %vm1935, %v4133, %v4134
        %v4136 = vrot.slane %v4134, 4
        %v4137 = vrot.slane %v2482, 5
        %v4138 = vsel %vm1935, %v4136, %v4137
        %v4139 = vrot.slane %v3923, 5
        %v4140 = vrot.slane %v4139, 4
        %v4141 = vrot.slane %v2362, 5
        %v4142 = vsel %vm1935, %v4140, %v4141
        %v4143 = vrot.slane %v4141, 4
        %v4144 = vrot.slane %v2363, 5
        %v4145 = vsel %vm1935, %v4143, %v4144
        %v4146 = vrot.slane %v4144, 4
        %v4147 = vrot.slane %v2364, 5
        %v4148 = vsel %vm1935, %v4146, %v4147
        %v4149 = vrot.slane %v4147, 4
        %v4150 = vrot.slane %v2483, 5
        %v4151 = vsel %vm1935, %v4149, %v4150
        %v4152 = vrot.slane %v3924, 5
        %v4153 = vrot.slane %v4152, 4
        %v4154 = vrot.slane %v2366, 5
        %v4155 = vsel %vm1935, %v4153, %v4154
        %v4156 = vrot.slane %v4154, 4
        %v4157 = vrot.slane %v2367, 5
        %v4158 = vsel %vm1935, %v4156, %v4157
        %v4159 = vrot.slane %v4157, 4
        %v4160 = vrot.slane %v2368, 5
        %v4161 = vsel %vm1935, %v4159, %v4160
        %v4162 = vrot.slane %v4160, 4
        %v4163 = vrot.slane %v2484, 5
        %v4164 = vsel %vm1935, %v4162, %v4163
        %v4165 = vrot.slane %v3925, 5
        %v4166 = vrot.slane %v4165, 4
        %v4167 = vrot.slane %v2370, 5
        %v4168 = vsel %vm1935, %v4166, %v4167
        %v4169 = vrot.slane %v4167, 4
        %v4170 = vrot.slane %v2371, 5
        %v4171 = vsel %vm1935, %v4169, %v4170
        %v4172 = vrot.slane %v4170, 4
        %v4173 = vrot.slane %v2372, 5
        %v4174 = vsel %vm1935, %v4172, %v4173
        %v4175 = vrot.slane %v4173, 4
        %v4176 = vrot.slane %v2485, 5
        %v4177 = vsel %vm1935, %v4175, %v4176
        %v4178 = vrot.slane %v3926, 5
        %v4179 = vrot.slane %v4178, 4
        %v4180 = vrot.slane %v2374, 5
        %v4181 = vsel %vm1935, %v4179, %v4180
        %v4182 = vrot.slane %v4180, 4
        %v4183 = vrot.slane %v2375, 5
        %v4184 = vsel %vm1935, %v4182, %v4183
        %v4185 = vrot.slane %v4183, 4
        %v4186 = vrot.slane %v2376, 5
        %v4187 = vsel %vm1935, %v4185, %v4186
        %v4188 = vrot.slane %v4186, 4
        %v4189 = vrot.slane %v2486, 5
        %v4190 = vsel %vm1935, %v4188, %v4189
        %v4191 = vrot.slane %v3927, 5
        %v4192 = vrot.slane %v4191, 4
        %v4193 = vrot.slane %v2378, 5
        %v4194 = vsel %vm1935, %v4192, %v4193
        %v4195 = vrot.slane %v4193, 4
        %v4196 = vrot.slane %v2379, 5
        %v4197 = vsel %vm1935, %v4195, %v4196
        %v4198 = vrot.slane %v4196, 4
        %v4199 = vrot.slane %v2380, 5
        %v4200 = vsel %vm1935, %v4198, %v4199
        %v4201 = vrot.slane %v4199, 4
        %v4202 = vrot.slane %v2487, 5
        %v4203 = vsel %vm1935, %v4201, %v4202
        %v4204 = vrot.slane %v3928, 5
        %v4205 = vrot.slane %v4204, 4
        %v4206 = vrot.slane %v2382, 5
        %v4207 = vsel %vm1935, %v4205, %v4206
        %v4208 = vrot.slane %v4206, 4
        %v4209 = vrot.slane %v2383, 5
        %v4210 = vsel %vm1935, %v4208, %v4209
        %v4211 = vrot.slane %v4209, 4
        %v4212 = vrot.slane %v2384, 5
        %v4213 = vsel %vm1935, %v4211, %v4212
        %v4214 = vrot.slane %v4212, 4
        %v4215 = vrot.slane %v2488, 5
        %v4216 = vsel %vm1935, %v4214, %v4215
        %v4217 = vrot.slane %v3929, 5
        %v4218 = vrot.slane %v4217, 4
        %v4219 = vrot.slane %v2386, 5
        %v4220 = vsel %vm1935, %v4218, %v4219
        %v4221 = vrot.slane %v4219, 4
        %v4222 = vrot.slane %v2387, 5
        %v4223 = vsel %vm1935, %v4221, %v4222
        %v4224 = vrot.slane %v4222, 4
        %v4225 = vrot.slane %v2388, 5
        %v4226 = vsel %vm1935, %v4224, %v4225
        %v4227 = vrot.slane %v4225, 4
        %v4228 = vrot.slane %v2489, 5
        %v4229 = vsel %vm1935, %v4227, %v4228
        %v4230 = vrot.slane %v3930, 5
        %v4231 = vrot.slane %v4230, 4
        %v4232 = vrot.slane %v2390, 5
        %v4233 = vsel %vm1935, %v4231, %v4232
        %v4234 = vrot.slane %v4232, 4
        %v4235 = vrot.slane %v2391, 5
        %v4236 = vsel %vm1935, %v4234, %v4235
        %v4237 = vrot.slane %v4235, 4
        %v4238 = vrot.slane %v2392, 5
        %v4239 = vsel %vm1935, %v4237, %v4238
        %v4240 = vrot.slane %v4238, 4
        %v4241 = vrot.slane %v2490, 5
        %v4242 = vsel %vm1935, %v4240, %v4241
        %v4243 = vrot.slane %v3931, 5
        %v4244 = vrot.slane %v4243, 4
        %v4245 = vrot.slane %v2394, 5
        %v4246 = vsel %vm1935, %v4244, %v4245
        %v4247 = vrot.slane %v4245, 4
        %v4248 = vrot.slane %v2395, 5
        %v4249 = vsel %vm1935, %v4247, %v4248
        %v4250 = vrot.slane %v4248, 4
        %v4251 = vrot.slane %v2396, 5
        %v4252 = vsel %vm1935, %v4250, %v4251
        %v4253 = vrot.slane %v4251, 4
        %v4254 = vrot.slane %v2491, 5
        %v4255 = vsel %vm1935, %v4253, %v4254
        %v4256 = vrot.slane %v3932, 5
        %v4257 = vrot.slane %v4256, 4
        %v4258 = vrot.slane %v2398, 5
        %v4259 = vsel %vm1935, %v4257, %v4258
        %v4260 = vrot.slane %v4258, 4
        %v4261 = vrot.slane %v2399, 5
        %v4262 = vsel %vm1935, %v4260, %v4261
        %v4263 = vrot.slane %v4261, 4
        %v4264 = vrot.slane %v2400, 5
        %v4265 = vsel %vm1935, %v4263, %v4264
        %v4266 = vrot.slane %v4264, 4
        %v4267 = vrot.slane %v2492, 5
        %v4268 = vsel %vm1935, %v4266, %v4267
        %v4269 = vrot.slane %v3933, 5
        %v4270 = vrot.slane %v4269, 4
        %v4271 = vrot.slane %v2402, 5
        %v4272 = vsel %vm1935, %v4270, %v4271
        %v4273 = vrot.slane %v4271, 4
        %v4274 = vrot.slane %v2403, 5
        %v4275 = vsel %vm1935, %v4273, %v4274
        %v4276 = vrot.slane %v4274, 4
        %v4277 = vrot.slane %v2404, 5
        %v4278 = vsel %vm1935, %v4276, %v4277
        %v4279 = vrot.slane %v4277, 4
        %v4280 = vrot.slane %v2493, 5
        %v4281 = vsel %vm1935, %v4279, %v4280
        %v4282 = vrot.slane %v3934, 5
        %v4283 = vrot.slane %v4282, 4
        %v4284 = vrot.slane %v2406, 5
        %v4285 = vsel %vm1935, %v4283, %v4284
        %v4286 = vrot.slane %v4284, 4
        %v4287 = vrot.slane %v2407, 5
        %v4288 = vsel %vm1935, %v4286, %v4287
        %v4289 = vrot.slane %v4287, 4
        %v4290 = vrot.slane %v2408, 5
        %v4291 = vsel %vm1935, %v4289, %v4290
        %v4292 = vrot.slane %v4290, 4
        %v4293 = vrot.slane %v2494, 5
        %v4294 = vsel %vm1935, %v4292, %v4293
        %v4295 = vrot.slane %v3935, 5
        %v4296 = vrot.slane %v4295, 4
        %v4297 = vrot.slane %v2410, 5
        %v4298 = vsel %vm1935, %v4296, %v4297
        %v4299 = vrot.slane %v4297, 4
        %v4300 = vrot.slane %v2411, 5
        %v4301 = vsel %vm1935, %v4299, %v4300
        %v4302 = vrot.slane %v4300, 4
        %v4303 = vrot.slane %v2412, 5
        %v4304 = vsel %vm1935, %v4302, %v4303
        %v4305 = vrot.slane %v4303, 4
        %v4306 = vrot.slane %v2495, 5
        %v4307 = vsel %vm1935, %v4305, %v4306
        %v4308 = vrot.slane %v3936, 5
        %v4309 = vrot.slane %v4308, 4
        %v4310 = vrot.slane %v2414, 5
        %v4311 = vsel %vm1935, %v4309, %v4310
        %v4312 = vrot.slane %v4310, 4
        %v4313 = vrot.slane %v2415, 5
        %v4314 = vsel %vm1935, %v4312, %v4313
        %v4315 = vrot.slane %v4313, 4
        %v4316 = vrot.slane %v2416, 5
        %v4317 = vsel %vm1935, %v4315, %v4316
        %v4318 = vrot.slane %v4316, 4
        %v4319 = vrot.slane %v2496, 5
        %v4320 = vsel %vm1935, %v4318, %v4319
        %v4321 = vrot.slane %v3937, 5
        %v4322 = vrot.slane %v4321, 4
        %v4323 = vrot.slane %v2418, 5
        %v4324 = vsel %vm1935, %v4322, %v4323
        %v4325 = vrot.slane %v4323, 4
        %v4326 = vrot.slane %v2419, 5
        %v4327 = vsel %vm1935, %v4325, %v4326
        %v4328 = vrot.slane %v4326, 4
        %v4329 = vrot.slane %v2420, 5
        %v4330 = vsel %vm1935, %v4328, %v4329
        %v4331 = vrot.slane %v4329, 4
        %v4332 = vrot.slane %v2497, 5
        %v4333 = vsel %vm1935, %v4331, %v4332
        %v4334 = vrot.slane %v3938, 5
        %v4335 = vrot.slane %v4334, 4
        %v4336 = vrot.slane %v2422, 5
        %v4337 = vsel %vm1935, %v4335, %v4336
        %v4338 = vrot.slane %v4336, 4
        %v4339 = vrot.slane %v2423, 5
        %v4340 = vsel %vm1935, %v4338, %v4339
        %v4341 = vrot.slane %v4339, 4
        %v4342 = vrot.slane %v2424, 5
        %v4343 = vsel %vm1935, %v4341, %v4342
        %v4344 = vrot.slane %v4342, 4
        %v4345 = vrot.slane %v2498, 5
        %v4346 = vsel %vm1935, %v4344, %v4345
        %v4347 = vrot.slane %v3939, 5
        %v4348 = vrot.slane %v4347, 4
        %v4349 = vrot.slane %v2426, 5
        %v4350 = vsel %vm1935, %v4348, %v4349
        %v4351 = vrot.slane %v4349, 4
        %v4352 = vrot.slane %v2427, 5
        %v4353 = vsel %vm1935, %v4351, %v4352
        %v4354 = vrot.slane %v4352, 4
        %v4355 = vrot.slane %v2428, 5
        %v4356 = vsel %vm1935, %v4354, %v4355
        %v4357 = vrot.slane %v4355, 4
        %v4358 = vrot.slane %v2499, 5
        %v4359 = vsel %vm1935, %v4357, %v4358
        %v4360 = vrot.slane %v3940, 5
        %v4361 = vrot.slane %v4360, 4
        %v4362 = vrot.slane %v2430, 5
        %v4363 = vsel %vm1935, %v4361, %v4362
        %v4364 = vrot.slane %v4362, 4
        %v4365 = vrot.slane %v2431, 5
        %v4366 = vsel %vm1935, %v4364, %v4365
        %v4367 = vrot.slane %v4365, 4
        %v4368 = vrot.slane %v2432, 5
        %v4369 = vsel %vm1935, %v4367, %v4368
        %v4370 = vrot.slane %v4368, 4
        %v4371 = vrot.slane %v2500, 5
        %v4372 = vsel %vm1935, %v4370, %v4371
        %v4373 = vrot.slane %v3941, 5
        %v4374 = vrot.slane %v4373, 4
        %v4375 = vrot.slane %v2434, 5
        %v4376 = vsel %vm1935, %v4374, %v4375
        %v4377 = vrot.slane %v4375, 4
        %v4378 = vrot.slane %v2435, 5
        %v4379 = vsel %vm1935, %v4377, %v4378
        %v4380 = vrot.slane %v4378, 4
        %v4381 = vrot.slane %v2436, 5
        %v4382 = vsel %vm1935, %v4380, %v4381
        %v4383 = vrot.slane %v4381, 4
        %v4384 = vrot.slane %v2501, 5
        %v4385 = vsel %vm1935, %v4383, %v4384
        %v4386 = vrot.slane %v3942, 5
        %v4387 = vrot.slane %v4386, 4
        %v4388 = vrot.slane %v2438, 5
        %v4389 = vsel %vm1935, %v4387, %v4388
        %v4390 = vrot.slane %v4388, 4
        %v4391 = vrot.slane %v2439, 5
        %v4392 = vsel %vm1935, %v4390, %v4391
        %v4393 = vrot.slane %v4391, 4
        %v4394 = vrot.slane %v2440, 5
        %v4395 = vsel %vm1935, %v4393, %v4394
        %v4396 = vrot.slane %v4394, 4
        %v4397 = vrot.slane %v2502, 5
        %v4398 = vsel %vm1935, %v4396, %v4397
        %v4399 = vrot.slane %v3943, 5
        %v4400 = vrot.slane %v4399, 4
        %v4401 = vrot.slane %v2442, 5
        %v4402 = vsel %vm1935, %v4400, %v4401
        %v4403 = vrot.slane %v4401, 4
        %v4404 = vrot.slane %v2443, 5
        %v4405 = vsel %vm1935, %v4403, %v4404
        %v4406 = vrot.slane %v4404, 4
        %v4407 = vrot.slane %v2444, 5
        %v4408 = vsel %vm1935, %v4406, %v4407
        %v4409 = vrot.slane %v4407, 4
        %v4410 = vrot.slane %v2503, 5
        %v4411 = vsel %vm1935, %v4409, %v4410
        %v4412 = vrot.slane %v3944, 5
        %v4413 = vrot.slane %v4412, 4
        %v4414 = vrot.slane %v2446, 5
        %v4415 = vsel %vm1935, %v4413, %v4414
        %v4416 = vrot.slane %v4414, 4
        %v4417 = vrot.slane %v2447, 5
        %v4418 = vsel %vm1935, %v4416, %v4417
        %v4419 = vrot.slane %v4417, 4
        %v4420 = vrot.slane %v2448, 5
        %v4421 = vsel %vm1935, %v4419, %v4420
        %v4422 = vrot.slane %v4420, 4
        %v4423 = vrot.slane %v2504, 5
        %v4424 = vsel %vm1935, %v4422, %v4423
        %v4425 = vrot.slane %v3945, 5
        %v4426 = vrot.slane %v4425, 4
        %v4427 = vrot.slane %v2450, 5
        %v4428 = vsel %vm1935, %v4426, %v4427
        %v4429 = vrot.slane %v4427, 4
        %v4430 = vrot.slane %v2451, 5
        %v4431 = vsel %vm1935, %v4429, %v4430
        %v4432 = vrot.slane %v4430, 4
        %v4433 = vrot.slane %v2452, 5
        %v4434 = vsel %vm1935, %v4432, %v4433
        %v4435 = vrot.slane %v4433, 4
        %v4436 = vrot.slane %v2505, 5
        %v4437 = vsel %vm1935, %v4435, %v4436
        %v4438 = vrot.slane %v3946, 5
        %v4439 = vrot.slane %v4438, 4
        %v4440 = vrot.slane %v2454, 5
        %v4441 = vsel %vm1935, %v4439, %v4440
        %v4442 = vrot.slane %v4440, 4
        %v4443 = vrot.slane %v2455, 5
        %v4444 = vsel %vm1935, %v4442, %v4443
        %v4445 = vrot.slane %v4443, 4
        %v4446 = vrot.slane %v2456, 5
        %v4447 = vsel %vm1935, %v4445, %v4446
        %v4448 = vrot.slane %v4446, 4
        %v4449 = vrot.slane %v2506, 5
        %v4450 = vsel %vm1935, %v4448, %v4449
        %v4451 = vrot.slane %v3947, 5
        %v4452 = vrot.slane %v4451, 4
        %v4453 = vrot.slane %v2458, 5
        %v4454 = vsel %vm1935, %v4452, %v4453
        %v4455 = vrot.slane %v4453, 4
        %v4456 = vrot.slane %v2459, 5
        %v4457 = vsel %vm1935, %v4455, %v4456
        %v4458 = vrot.slane %v4456, 4
        %v4459 = vrot.slane %v2460, 5
        %v4460 = vsel %vm1935, %v4458, %v4459
        %v4461 = vrot.slane %v4459, 4
        %v4462 = vrot.slane %v2507, 5
        %v4463 = vsel %vm1935, %v4461, %v4462
        %v4464 = vrot.slane %v3948, 5
        %v4465 = vrot.slane %v4464, 4
        %v4466 = vrot.slane %v2462, 5
        %v4467 = vsel %vm1935, %v4465, %v4466
        %v4468 = vrot.slane %v4466, 4
        %v4469 = vrot.slane %v2463, 5
        %v4470 = vsel %vm1935, %v4468, %v4469
        %v4471 = vrot.slane %v4469, 4
        %v4472 = vrot.slane %v2464, 5
        %v4473 = vsel %vm1935, %v4471, %v4472
        %v4474 = vrot.slane %v4472, 4
        %v4475 = vrot.slane %v2508, 5
        %v4476 = vsel %vm1935, %v4474, %v4475
        %v4477 = vrot.slane %v3949, 5
        %v4478 = vrot.slane %v4477, 4
        %v4479 = vrot.slane %v2466, 5
        %v4480 = vsel %vm1935, %v4478, %v4479
        %v4481 = vrot.slane %v4479, 4
        %v4482 = vrot.slane %v2467, 5
        %v4483 = vsel %vm1935, %v4481, %v4482
        %v4484 = vrot.slane %v4482, 4
        %v4485 = vrot.slane %v2468, 5
        %v4486 = vsel %vm1935, %v4484, %v4485
        %v4487 = vrot.slane %v4485, 4
        %v4488 = vrot.slane %v2509, 5
        %v4489 = vsel %vm1935, %v4487, %v4488
        %v4490 = vrot.slane %v3950, 5
        %v4491 = vrot.slane %v4490, 4
        %v4492 = vrot.slane %v2470, 5
        %v4493 = vsel %vm1935, %v4491, %v4492
        %v4494 = vrot.slane %v4492, 4
        %v4495 = vrot.slane %v2471, 5
        %v4496 = vsel %vm1935, %v4494, %v4495
        %v4497 = vrot.slane %v4495, 4
        %v4498 = vrot.slane %v2472, 5
        %v4499 = vsel %vm1935, %v4497, %v4498
        %v4500 = vrot.slane %v4498, 4
        %v4501 = vrot.slane %v2510, 5
        %v4502 = vsel %vm1935, %v4500, %v4501
        %v4503 = vrot.slane %v3951, 5
        %v4504 = vrot.slane %v4503, 4
        %v4505 = vrot.slane %v2474, 5
        %v4506 = vsel %vm1935, %v4504, %v4505
        %v4507 = vrot.slane %v4505, 4
        %v4508 = vrot.slane %v2475, 5
        %v4509 = vsel %vm1935, %v4507, %v4508
        %v4510 = vrot.slane %v4508, 4
        %v4511 = vrot.slane %v2476, 5
        %v4512 = vsel %vm1935, %v4510, %v4511
        %v4513 = vrot.slane %v4511, 4
        %v4514 = vrot.slane %v2511, 5
        %v4515 = vsel %vm1935, %v4513, %v4514
        %v4516 = vrot.slane %v3952, 5
        %v4517 = vrot.slane %v4516, 4
        %v4518 = vrot.slane %v2478, 5
        %v4519 = vsel %vm1935, %v4517, %v4518
        %v4520 = vrot.slane %v4518, 4
        %v4521 = vrot.slane %v2479, 5
        %v4522 = vsel %vm1935, %v4520, %v4521
        %v4523 = vrot.slane %v4521, 4
        %v4524 = vrot.slane %v2480, 5
        %v4525 = vsel %vm1935, %v4523, %v4524
        %v4526 = vrot.slane %v4524, 4
        %v4527 = vrot.slane %v2512, 5
        %v4528 = vsel %vm1935, %v4526, %v4527
        %s4529 = scalar_lea.vmem %s168, 40
        %v4530 = vld [vmem:[%s4529] sm:$0xf]
        %v4531 = vld [vmem:[%s4529 + $0x4] sm:$0xf]
        %v4532 = vld [vmem:[%s4529 + $0x8] sm:$0xf]
        %v4533 = vld [vmem:[%s4529 + $0xc] sm:$0xf]
        %v4534 = vld [vmem:[%s4529 + $0x14] sm:$0xf]
        %v4535 = vld [vmem:[%s4529 + $0x18] sm:$0xf]
        %v4536 = vld [vmem:[%s4529 + $0x1c] sm:$0xf]
        %v4537 = vld [vmem:[%s4529 + $0x20] sm:$0xf]
        %v4538 = vld [vmem:[%s4529 + $0x28] sm:$0xf]
        %v4539 = vld [vmem:[%s4529 + $0x2c] sm:$0xf]
        %v4540 = vld [vmem:[%s4529 + $0x30] sm:$0xf]
        %v4541 = vld [vmem:[%s4529 + $0x34] sm:$0xf]
        %v4542 = vld [vmem:[%s4529 + $0x3c] sm:$0xf]
        %v4543 = vld [vmem:[%s4529 + $0x40] sm:$0xf]
        %v4544 = vld [vmem:[%s4529 + $0x44] sm:$0xf]
        %v4545 = vld [vmem:[%s4529 + $0x48] sm:$0xf]
        %v4546 = vld [vmem:[%s4529 + $0x50] sm:$0xf]
        %v4547 = vld [vmem:[%s4529 + $0x54] sm:$0xf]
        %v4548 = vld [vmem:[%s4529 + $0x58] sm:$0xf]
        %v4549 = vld [vmem:[%s4529 + $0x5c] sm:$0xf]
        %v4550 = vld [vmem:[%s4529 + $0x64] sm:$0xf]
        %v4551 = vld [vmem:[%s4529 + $0x68] sm:$0xf]
        %v4552 = vld [vmem:[%s4529 + $0x6c] sm:$0xf]
        %v4553 = vld [vmem:[%s4529 + $0x70] sm:$0xf]
        %v4554 = vld [vmem:[%s4529 + $0x78] sm:$0xf]
        %v4555 = vld [vmem:[%s4529 + $0x7c] sm:$0xf]
        %v4556 = vld [vmem:[%s4529 + $0x80] sm:$0xf]
        %v4557 = vld [vmem:[%s4529 + $0x84] sm:$0xf]
        %v4558 = vld [vmem:[%s4529 + $0x8c] sm:$0xf]
        %v4559 = vld [vmem:[%s4529 + $0x90] sm:$0xf]
        %v4560 = vld [vmem:[%s4529 + $0x94] sm:$0xf]
        %v4561 = vld [vmem:[%s4529 + $0x98] sm:$0xf]
        %v4562 = vld [vmem:[%s4529 + $0xa0] sm:$0xf]
        %v4563 = vld [vmem:[%s4529 + $0xa4] sm:$0xf]
        %v4564 = vld [vmem:[%s4529 + $0xa8] sm:$0xf]
        %v4565 = vld [vmem:[%s4529 + $0xac] sm:$0xf]
        %v4566 = vld [vmem:[%s4529 + $0xb4] sm:$0xf]
        %v4567 = vld [vmem:[%s4529 + $0xb8] sm:$0xf]
        %v4568 = vld [vmem:[%s4529 + $0xbc] sm:$0xf]
        %v4569 = vld [vmem:[%s4529 + $0xc0] sm:$0xf]
        %v4570 = vld [vmem:[%s4529 + $0xc8] sm:$0xf]
        %v4571 = vld [vmem:[%s4529 + $0xcc] sm:$0xf]
        %v4572 = vld [vmem:[%s4529 + $0xd0] sm:$0xf]
        %v4573 = vld [vmem:[%s4529 + $0xd4] sm:$0xf]
        %v4574 = vld [vmem:[%s4529 + $0xdc] sm:$0xf]
        %v4575 = vld [vmem:[%s4529 + $0xe0] sm:$0xf]
        %v4576 = vld [vmem:[%s4529 + $0xe4] sm:$0xf]
        %v4577 = vld [vmem:[%s4529 + $0xe8] sm:$0xf]
        %v4578 = vld [vmem:[%s4529 + $0xf0] sm:$0xf]
        %v4579 = vld [vmem:[%s4529 + $0xf4] sm:$0xf]
        %v4580 = vld [vmem:[%s4529 + $0xf8] sm:$0xf]
        %v4581 = vld [vmem:[%s4529 + $0xfc] sm:$0xf]
        %v4582 = vld [vmem:[%s4529 + $0x104] sm:$0xf]
        %v4583 = vld [vmem:[%s4529 + $0x108] sm:$0xf]
        %v4584 = vld [vmem:[%s4529 + $0x10c] sm:$0xf]
        %v4585 = vld [vmem:[%s4529 + $0x110] sm:$0xf]
        %v4586 = vld [vmem:[%s4529 + $0x118] sm:$0xf]
        %v4587 = vld [vmem:[%s4529 + $0x11c] sm:$0xf]
        %v4588 = vld [vmem:[%s4529 + $0x120] sm:$0xf]
        %v4589 = vld [vmem:[%s4529 + $0x124] sm:$0xf]
        %v4590 = vld [vmem:[%s4529 + $0x12c] sm:$0xf]
        %v4591 = vld [vmem:[%s4529 + $0x130] sm:$0xf]
        %v4592 = vld [vmem:[%s4529 + $0x134] sm:$0xf]
        %v4593 = vld [vmem:[%s4529 + $0x138] sm:$0xf]
        %v4594 = vld [vmem:[%s4529 + $0x140] sm:$0xf]
        %v4595 = vld [vmem:[%s4529 + $0x144] sm:$0xf]
        %v4596 = vld [vmem:[%s4529 + $0x148] sm:$0xf]
        %v4597 = vld [vmem:[%s4529 + $0x14c] sm:$0xf]
        %v4598 = vld [vmem:[%s4529 + $0x154] sm:$0xf]
        %v4599 = vld [vmem:[%s4529 + $0x158] sm:$0xf]
        %v4600 = vld [vmem:[%s4529 + $0x15c] sm:$0xf]
        %v4601 = vld [vmem:[%s4529 + $0x160] sm:$0xf]
        %v4602 = vld [vmem:[%s4529 + $0x168] sm:$0xf]
        %v4603 = vld [vmem:[%s4529 + $0x16c] sm:$0xf]
        %v4604 = vld [vmem:[%s4529 + $0x170] sm:$0xf]
        %v4605 = vld [vmem:[%s4529 + $0x174] sm:$0xf]
        %v4606 = vld [vmem:[%s4529 + $0x17c] sm:$0xf]
        %v4607 = vld [vmem:[%s4529 + $0x180] sm:$0xf]
        %v4608 = vld [vmem:[%s4529 + $0x184] sm:$0xf]
        %v4609 = vld [vmem:[%s4529 + $0x188] sm:$0xf]
        %v4610 = vld [vmem:[%s4529 + $0x190] sm:$0xf]
        %v4611 = vld [vmem:[%s4529 + $0x194] sm:$0xf]
        %v4612 = vld [vmem:[%s4529 + $0x198] sm:$0xf]
        %v4613 = vld [vmem:[%s4529 + $0x19c] sm:$0xf]
        %v4614 = vld [vmem:[%s4529 + $0x1a4] sm:$0xf]
        %v4615 = vld [vmem:[%s4529 + $0x1a8] sm:$0xf]
        %v4616 = vld [vmem:[%s4529 + $0x1ac] sm:$0xf]
        %v4617 = vld [vmem:[%s4529 + $0x1b0] sm:$0xf]
        %v4618 = vld [vmem:[%s4529 + $0x1b8] sm:$0xf]
        %v4619 = vld [vmem:[%s4529 + $0x1bc] sm:$0xf]
        %v4620 = vld [vmem:[%s4529 + $0x1c0] sm:$0xf]
        %v4621 = vld [vmem:[%s4529 + $0x1c4] sm:$0xf]
        %v4622 = vld [vmem:[%s4529 + $0x1cc] sm:$0xf]
        %v4623 = vld [vmem:[%s4529 + $0x1d0] sm:$0xf]
        %v4624 = vld [vmem:[%s4529 + $0x1d4] sm:$0xf]
        %v4625 = vld [vmem:[%s4529 + $0x1d8] sm:$0xf]
        %v4626 = vld [vmem:[%s4529 + $0x1e0] sm:$0xf]
        %v4627 = vld [vmem:[%s4529 + $0x1e4] sm:$0xf]
        %v4628 = vld [vmem:[%s4529 + $0x1e8] sm:$0xf]
        %v4629 = vld [vmem:[%s4529 + $0x1ec] sm:$0xf]
        %v4630 = vld [vmem:[%s4529 + $0x1f4] sm:$0xf]
        %v4631 = vld [vmem:[%s4529 + $0x1f8] sm:$0xf]
        %v4632 = vld [vmem:[%s4529 + $0x1fc] sm:$0xf]
        %v4633 = vld [vmem:[%s4529 + $0x200] sm:$0xf]
        %v4634 = vld [vmem:[%s4529 + $0x208] sm:$0xf]
        %v4635 = vld [vmem:[%s4529 + $0x20c] sm:$0xf]
        %v4636 = vld [vmem:[%s4529 + $0x210] sm:$0xf]
        %v4637 = vld [vmem:[%s4529 + $0x214] sm:$0xf]
        %v4638 = vld [vmem:[%s4529 + $0x21c] sm:$0xf]
        %v4639 = vld [vmem:[%s4529 + $0x220] sm:$0xf]
        %v4640 = vld [vmem:[%s4529 + $0x224] sm:$0xf]
        %v4641 = vld [vmem:[%s4529 + $0x228] sm:$0xf]
        %v4642 = vld [vmem:[%s4529 + $0x230] sm:$0xf]
        %v4643 = vld [vmem:[%s4529 + $0x234] sm:$0xf]
        %v4644 = vld [vmem:[%s4529 + $0x238] sm:$0xf]
        %v4645 = vld [vmem:[%s4529 + $0x23c] sm:$0xf]
        %v4646 = vld [vmem:[%s4529 + $0x244] sm:$0xf]
        %v4647 = vld [vmem:[%s4529 + $0x248] sm:$0xf]
        %v4648 = vld [vmem:[%s4529 + $0x24c] sm:$0xf]
        %v4649 = vld [vmem:[%s4529 + $0x250] sm:$0xf]
        %v4650 = vld [vmem:[%s4529 + $0x258] sm:$0xf]
        %v4651 = vld [vmem:[%s4529 + $0x25c] sm:$0xf]
        %v4652 = vld [vmem:[%s4529 + $0x260] sm:$0xf]
        %v4653 = vld [vmem:[%s4529 + $0x264] sm:$0xf]
        %v4654 = vld [vmem:[%s4529 + $0x26c] sm:$0xf]
        %v4655 = vld [vmem:[%s4529 + $0x270] sm:$0xf]
        %v4656 = vld [vmem:[%s4529 + $0x274] sm:$0xf]
        %v4657 = vld [vmem:[%s4529 + $0x278] sm:$0xf]
        %v4658 = vld [vmem:[%s4529 + $0x10] sm:$0x1]
        %v4659 = vld [vmem:[%s4529 + $0x24] sm:$0x1]
        %v4660 = vld [vmem:[%s4529 + $0x38] sm:$0x1]
        %v4661 = vld [vmem:[%s4529 + $0x4c] sm:$0x1]
        %v4662 = vld [vmem:[%s4529 + $0x60] sm:$0x1]
        %v4663 = vld [vmem:[%s4529 + $0x74] sm:$0x1]
        %v4664 = vld [vmem:[%s4529 + $0x88] sm:$0x1]
        %v4665 = vld [vmem:[%s4529 + $0x9c] sm:$0x1]
        %v4666 = vld [vmem:[%s4529 + $0xb0] sm:$0x1]
        %v4667 = vld [vmem:[%s4529 + $0xc4] sm:$0x1]
        %v4668 = vld [vmem:[%s4529 + $0xd8] sm:$0x1]
        %v4669 = vld [vmem:[%s4529 + $0xec] sm:$0x1]
        %v4670 = vld [vmem:[%s4529 + $0x100] sm:$0x1]
        %v4671 = vld [vmem:[%s4529 + $0x114] sm:$0x1]
        %v4672 = vld [vmem:[%s4529 + $0x128] sm:$0x1]
        %v4673 = vld [vmem:[%s4529 + $0x13c] sm:$0x1]
        %v4674 = vld [vmem:[%s4529 + $0x150] sm:$0x1]
        %v4675 = vld [vmem:[%s4529 + $0x164] sm:$0x1]
        %v4676 = vld [vmem:[%s4529 + $0x178] sm:$0x1]
        %v4677 = vld [vmem:[%s4529 + $0x18c] sm:$0x1]
        %v4678 = vld [vmem:[%s4529 + $0x1a0] sm:$0x1]
        %v4679 = vld [vmem:[%s4529 + $0x1b4] sm:$0x1]
        %v4680 = vld [vmem:[%s4529 + $0x1c8] sm:$0x1]
        %v4681 = vld [vmem:[%s4529 + $0x1dc] sm:$0x1]
        %v4682 = vld [vmem:[%s4529 + $0x1f0] sm:$0x1]
        %v4683 = vld [vmem:[%s4529 + $0x204] sm:$0x1]
        %v4684 = vld [vmem:[%s4529 + $0x218] sm:$0x1]
        %v4685 = vld [vmem:[%s4529 + $0x22c] sm:$0x1]
        %v4686 = vld [vmem:[%s4529 + $0x240] sm:$0x1]
        %v4687 = vld [vmem:[%s4529 + $0x254] sm:$0x1]
        %v4688 = vld [vmem:[%s4529 + $0x268] sm:$0x1]
        %v4689 = vld [vmem:[%s4529 + $0x27c] sm:$0x1]
        %v4691 = vshrl.u32 %v4530, 16
        %v4693 = vrot.slane %v4691, 4
        %v4694 = vshll.u32 %v4530, 16
        %v4696 = vrot.slane %v4694, 5
        %v4697 = vor.u32 %v4693, %v4696
        %v4698 = vrot.slane %v4697, 4
        %v4700 = vshll.u32 %v4531, 16
        %v4702 = vrot.slane %v4700, 5
        %v4703 = vsel %vm332, %v4698, %v4702
        %v4704 = vshrl.u32 %v4531, 16
        %v4706 = vrot.slane %v4704, 4
        %v4707 = vor.u32 %v4706, %v4702
        %v4708 = vrot.slane %v4707, 4
        %v4710 = vshll.u32 %v4532, 16
        %v4712 = vrot.slane %v4710, 5
        %v4713 = vsel %vm332, %v4708, %v4712
        %v4714 = vshrl.u32 %v4532, 16
        %v4716 = vrot.slane %v4714, 4
        %v4717 = vor.u32 %v4716, %v4712
        %v4718 = vrot.slane %v4717, 4
        %v4720 = vshll.u32 %v4533, 16
        %v4722 = vrot.slane %v4720, 5
        %v4723 = vsel %vm332, %v4718, %v4722
        %v4724 = vshrl.u32 %v4533, 16
        %v4726 = vrot.slane %v4724, 4
        %v4727 = vor.u32 %v4726, %v4722
        %v4728 = vrot.slane %v4727, 4
        %v4730 = vshll.u32 %v4658, 16
        %v4732 = vrot.slane %v4730, 5
        %v4733 = vsel %vm332, %v4728, %v4732
        %v4735 = vshrl.u32 %v4534, 16
        %v4737 = vrot.slane %v4735, 4
        %v4738 = vshll.u32 %v4534, 16
        %v4740 = vrot.slane %v4738, 5
        %v4741 = vor.u32 %v4737, %v4740
        %v4742 = vrot.slane %v4741, 4
        %v4744 = vshll.u32 %v4535, 16
        %v4746 = vrot.slane %v4744, 5
        %v4747 = vsel %vm332, %v4742, %v4746
        %v4748 = vshrl.u32 %v4535, 16
        %v4750 = vrot.slane %v4748, 4
        %v4751 = vor.u32 %v4750, %v4746
        %v4752 = vrot.slane %v4751, 4
        %v4754 = vshll.u32 %v4536, 16
        %v4756 = vrot.slane %v4754, 5
        %v4757 = vsel %vm332, %v4752, %v4756
        %v4758 = vshrl.u32 %v4536, 16
        %v4760 = vrot.slane %v4758, 4
        %v4761 = vor.u32 %v4760, %v4756
        %v4762 = vrot.slane %v4761, 4
        %v4764 = vshll.u32 %v4537, 16
        %v4766 = vrot.slane %v4764, 5
        %v4767 = vsel %vm332, %v4762, %v4766
        %v4768 = vshrl.u32 %v4537, 16
        %v4770 = vrot.slane %v4768, 4
        %v4771 = vor.u32 %v4770, %v4766
        %v4772 = vrot.slane %v4771, 4
        %v4774 = vshll.u32 %v4659, 16
        %v4776 = vrot.slane %v4774, 5
        %v4777 = vsel %vm332, %v4772, %v4776
        %v4779 = vshrl.u32 %v4538, 16
        %v4781 = vrot.slane %v4779, 4
        %v4782 = vshll.u32 %v4538, 16
        %v4784 = vrot.slane %v4782, 5
        %v4785 = vor.u32 %v4781, %v4784
        %v4786 = vrot.slane %v4785, 4
        %v4788 = vshll.u32 %v4539, 16
        %v4790 = vrot.slane %v4788, 5
        %v4791 = vsel %vm332, %v4786, %v4790
        %v4792 = vshrl.u32 %v4539, 16
        %v4794 = vrot.slane %v4792, 4
        %v4795 = vor.u32 %v4794, %v4790
        %v4796 = vrot.slane %v4795, 4
        %v4798 = vshll.u32 %v4540, 16
        %v4800 = vrot.slane %v4798, 5
        %v4801 = vsel %vm332, %v4796, %v4800
        %v4802 = vshrl.u32 %v4540, 16
        %v4804 = vrot.slane %v4802, 4
        %v4805 = vor.u32 %v4804, %v4800
        %v4806 = vrot.slane %v4805, 4
        %v4808 = vshll.u32 %v4541, 16
        %v4810 = vrot.slane %v4808, 5
        %v4811 = vsel %vm332, %v4806, %v4810
        %v4812 = vshrl.u32 %v4541, 16
        %v4814 = vrot.slane %v4812, 4
        %v4815 = vor.u32 %v4814, %v4810
        %v4816 = vrot.slane %v4815, 4
        %v4818 = vshll.u32 %v4660, 16
        %v4820 = vrot.slane %v4818, 5
        %v4821 = vsel %vm332, %v4816, %v4820
        %v4823 = vshrl.u32 %v4542, 16
        %v4825 = vrot.slane %v4823, 4
        %v4826 = vshll.u32 %v4542, 16
        %v4828 = vrot.slane %v4826, 5
        %v4829 = vor.u32 %v4825, %v4828
        %v4830 = vrot.slane %v4829, 4
        %v4832 = vshll.u32 %v4543, 16
        %v4834 = vrot.slane %v4832, 5
        %v4835 = vsel %vm332, %v4830, %v4834
        %v4836 = vshrl.u32 %v4543, 16
        %v4838 = vrot.slane %v4836, 4
        %v4839 = vor.u32 %v4838, %v4834
        %v4840 = vrot.slane %v4839, 4
        %v4842 = vshll.u32 %v4544, 16
        %v4844 = vrot.slane %v4842, 5
        %v4845 = vsel %vm332, %v4840, %v4844
        %v4846 = vshrl.u32 %v4544, 16
        %v4848 = vrot.slane %v4846, 4
        %v4849 = vor.u32 %v4848, %v4844
        %v4850 = vrot.slane %v4849, 4
        %v4852 = vshll.u32 %v4545, 16
        %v4854 = vrot.slane %v4852, 5
        %v4855 = vsel %vm332, %v4850, %v4854
        %v4856 = vshrl.u32 %v4545, 16
        %v4858 = vrot.slane %v4856, 4
        %v4859 = vor.u32 %v4858, %v4854
        %v4860 = vrot.slane %v4859, 4
        %v4862 = vshll.u32 %v4661, 16
        %v4864 = vrot.slane %v4862, 5
        %v4865 = vsel %vm332, %v4860, %v4864
        %v4867 = vshrl.u32 %v4546, 16
        %v4869 = vrot.slane %v4867, 4
        %v4870 = vshll.u32 %v4546, 16
        %v4872 = vrot.slane %v4870, 5
        %v4873 = vor.u32 %v4869, %v4872
        %v4874 = vrot.slane %v4873, 4
        %v4876 = vshll.u32 %v4547, 16
        %v4878 = vrot.slane %v4876, 5
        %v4879 = vsel %vm332, %v4874, %v4878
        %v4880 = vshrl.u32 %v4547, 16
        %v4882 = vrot.slane %v4880, 4
        %v4883 = vor.u32 %v4882, %v4878
        %v4884 = vrot.slane %v4883, 4
        %v4886 = vshll.u32 %v4548, 16
        %v4888 = vrot.slane %v4886, 5
        %v4889 = vsel %vm332, %v4884, %v4888
        %v4890 = vshrl.u32 %v4548, 16
        %v4892 = vrot.slane %v4890, 4
        %v4893 = vor.u32 %v4892, %v4888
        %v4894 = vrot.slane %v4893, 4
        %v4896 = vshll.u32 %v4549, 16
        %v4898 = vrot.slane %v4896, 5
        %v4899 = vsel %vm332, %v4894, %v4898
        %v4900 = vshrl.u32 %v4549, 16
        %v4902 = vrot.slane %v4900, 4
        %v4903 = vor.u32 %v4902, %v4898
        %v4904 = vrot.slane %v4903, 4
        %v4906 = vshll.u32 %v4662, 16
        %v4908 = vrot.slane %v4906, 5
        %v4909 = vsel %vm332, %v4904, %v4908
        %v4911 = vshrl.u32 %v4550, 16
        %v4913 = vrot.slane %v4911, 4
        %v4914 = vshll.u32 %v4550, 16
        %v4916 = vrot.slane %v4914, 5
        %v4917 = vor.u32 %v4913, %v4916
        %v4918 = vrot.slane %v4917, 4
        %v4920 = vshll.u32 %v4551, 16
        %v4922 = vrot.slane %v4920, 5
        %v4923 = vsel %vm332, %v4918, %v4922
        %v4924 = vshrl.u32 %v4551, 16
        %v4926 = vrot.slane %v4924, 4
        %v4927 = vor.u32 %v4926, %v4922
        %v4928 = vrot.slane %v4927, 4
        %v4930 = vshll.u32 %v4552, 16
        %v4932 = vrot.slane %v4930, 5
        %v4933 = vsel %vm332, %v4928, %v4932
        %v4934 = vshrl.u32 %v4552, 16
        %v4936 = vrot.slane %v4934, 4
        %v4937 = vor.u32 %v4936, %v4932
        %v4938 = vrot.slane %v4937, 4
        %v4940 = vshll.u32 %v4553, 16
        %v4942 = vrot.slane %v4940, 5
        %v4943 = vsel %vm332, %v4938, %v4942
        %v4944 = vshrl.u32 %v4553, 16
        %v4946 = vrot.slane %v4944, 4
        %v4947 = vor.u32 %v4946, %v4942
        %v4948 = vrot.slane %v4947, 4
        %v4950 = vshll.u32 %v4663, 16
        %v4952 = vrot.slane %v4950, 5
        %v4953 = vsel %vm332, %v4948, %v4952
        %v4955 = vshrl.u32 %v4554, 16
        %v4957 = vrot.slane %v4955, 4
        %v4958 = vshll.u32 %v4554, 16
        %v4960 = vrot.slane %v4958, 5
        %v4961 = vor.u32 %v4957, %v4960
        %v4962 = vrot.slane %v4961, 4
        %v4964 = vshll.u32 %v4555, 16
        %v4966 = vrot.slane %v4964, 5
        %v4967 = vsel %vm332, %v4962, %v4966
        %v4968 = vshrl.u32 %v4555, 16
        %v4970 = vrot.slane %v4968, 4
        %v4971 = vor.u32 %v4970, %v4966
        %v4972 = vrot.slane %v4971, 4
        %v4974 = vshll.u32 %v4556, 16
        %v4976 = vrot.slane %v4974, 5
        %v4977 = vsel %vm332, %v4972, %v4976
        %v4978 = vshrl.u32 %v4556, 16
        %v4980 = vrot.slane %v4978, 4
        %v4981 = vor.u32 %v4980, %v4976
        %v4982 = vrot.slane %v4981, 4
        %v4984 = vshll.u32 %v4557, 16
        %v4986 = vrot.slane %v4984, 5
        %v4987 = vsel %vm332, %v4982, %v4986
        %v4988 = vshrl.u32 %v4557, 16
        %v4990 = vrot.slane %v4988, 4
        %v4991 = vor.u32 %v4990, %v4986
        %v4992 = vrot.slane %v4991, 4
        %v4994 = vshll.u32 %v4664, 16
        %v4996 = vrot.slane %v4994, 5
        %v4997 = vsel %vm332, %v4992, %v4996
        %v4999 = vshrl.u32 %v4558, 16
        %v5001 = vrot.slane %v4999, 4
        %v5002 = vshll.u32 %v4558, 16
        %v5004 = vrot.slane %v5002, 5
        %v5005 = vor.u32 %v5001, %v5004
        %v5006 = vrot.slane %v5005, 4
        %v5008 = vshll.u32 %v4559, 16
        %v5010 = vrot.slane %v5008, 5
        %v5011 = vsel %vm332, %v5006, %v5010
        %v5012 = vshrl.u32 %v4559, 16
        %v5014 = vrot.slane %v5012, 4
        %v5015 = vor.u32 %v5014, %v5010
        %v5016 = vrot.slane %v5015, 4
        %v5018 = vshll.u32 %v4560, 16
        %v5020 = vrot.slane %v5018, 5
        %v5021 = vsel %vm332, %v5016, %v5020
        %v5022 = vshrl.u32 %v4560, 16
        %v5024 = vrot.slane %v5022, 4
        %v5025 = vor.u32 %v5024, %v5020
        %v5026 = vrot.slane %v5025, 4
        %v5028 = vshll.u32 %v4561, 16
        %v5030 = vrot.slane %v5028, 5
        %v5031 = vsel %vm332, %v5026, %v5030
        %v5032 = vshrl.u32 %v4561, 16
        %v5034 = vrot.slane %v5032, 4
        %v5035 = vor.u32 %v5034, %v5030
        %v5036 = vrot.slane %v5035, 4
        %v5038 = vshll.u32 %v4665, 16
        %v5040 = vrot.slane %v5038, 5
        %v5041 = vsel %vm332, %v5036, %v5040
        %v5043 = vshrl.u32 %v4562, 16
        %v5045 = vrot.slane %v5043, 4
        %v5046 = vshll.u32 %v4562, 16
        %v5048 = vrot.slane %v5046, 5
        %v5049 = vor.u32 %v5045, %v5048
        %v5050 = vrot.slane %v5049, 4
        %v5052 = vshll.u32 %v4563, 16
        %v5054 = vrot.slane %v5052, 5
        %v5055 = vsel %vm332, %v5050, %v5054
        %v5056 = vshrl.u32 %v4563, 16
        %v5058 = vrot.slane %v5056, 4
        %v5059 = vor.u32 %v5058, %v5054
        %v5060 = vrot.slane %v5059, 4
        %v5062 = vshll.u32 %v4564, 16
        %v5064 = vrot.slane %v5062, 5
        %v5065 = vsel %vm332, %v5060, %v5064
        %v5066 = vshrl.u32 %v4564, 16
        %v5068 = vrot.slane %v5066, 4
        %v5069 = vor.u32 %v5068, %v5064
        %v5070 = vrot.slane %v5069, 4
        %v5072 = vshll.u32 %v4565, 16
        %v5074 = vrot.slane %v5072, 5
        %v5075 = vsel %vm332, %v5070, %v5074
        %v5076 = vshrl.u32 %v4565, 16
        %v5078 = vrot.slane %v5076, 4
        %v5079 = vor.u32 %v5078, %v5074
        %v5080 = vrot.slane %v5079, 4
        %v5082 = vshll.u32 %v4666, 16
        %v5084 = vrot.slane %v5082, 5
        %v5085 = vsel %vm332, %v5080, %v5084
        %v5087 = vshrl.u32 %v4566, 16
        %v5089 = vrot.slane %v5087, 4
        %v5090 = vshll.u32 %v4566, 16
        %v5092 = vrot.slane %v5090, 5
        %v5093 = vor.u32 %v5089, %v5092
        %v5094 = vrot.slane %v5093, 4
        %v5096 = vshll.u32 %v4567, 16
        %v5098 = vrot.slane %v5096, 5
        %v5099 = vsel %vm332, %v5094, %v5098
        %v5100 = vshrl.u32 %v4567, 16
        %v5102 = vrot.slane %v5100, 4
        %v5103 = vor.u32 %v5102, %v5098
        %v5104 = vrot.slane %v5103, 4
        %v5106 = vshll.u32 %v4568, 16
        %v5108 = vrot.slane %v5106, 5
        %v5109 = vsel %vm332, %v5104, %v5108
        %v5110 = vshrl.u32 %v4568, 16
        %v5112 = vrot.slane %v5110, 4
        %v5113 = vor.u32 %v5112, %v5108
        %v5114 = vrot.slane %v5113, 4
        %v5116 = vshll.u32 %v4569, 16
        %v5118 = vrot.slane %v5116, 5
        %v5119 = vsel %vm332, %v5114, %v5118
        %v5120 = vshrl.u32 %v4569, 16
        %v5122 = vrot.slane %v5120, 4
        %v5123 = vor.u32 %v5122, %v5118
        %v5124 = vrot.slane %v5123, 4
        %v5126 = vshll.u32 %v4667, 16
        %v5128 = vrot.slane %v5126, 5
        %v5129 = vsel %vm332, %v5124, %v5128
        %v5131 = vshrl.u32 %v4570, 16
        %v5133 = vrot.slane %v5131, 4
        %v5134 = vshll.u32 %v4570, 16
        %v5136 = vrot.slane %v5134, 5
        %v5137 = vor.u32 %v5133, %v5136
        %v5138 = vrot.slane %v5137, 4
        %v5140 = vshll.u32 %v4571, 16
        %v5142 = vrot.slane %v5140, 5
        %v5143 = vsel %vm332, %v5138, %v5142
        %v5144 = vshrl.u32 %v4571, 16
        %v5146 = vrot.slane %v5144, 4
        %v5147 = vor.u32 %v5146, %v5142
        %v5148 = vrot.slane %v5147, 4
        %v5150 = vshll.u32 %v4572, 16
        %v5152 = vrot.slane %v5150, 5
        %v5153 = vsel %vm332, %v5148, %v5152
        %v5154 = vshrl.u32 %v4572, 16
        %v5156 = vrot.slane %v5154, 4
        %v5157 = vor.u32 %v5156, %v5152
        %v5158 = vrot.slane %v5157, 4
        %v5160 = vshll.u32 %v4573, 16
        %v5162 = vrot.slane %v5160, 5
        %v5163 = vsel %vm332, %v5158, %v5162
        %v5164 = vshrl.u32 %v4573, 16
        %v5166 = vrot.slane %v5164, 4
        %v5167 = vor.u32 %v5166, %v5162
        %v5168 = vrot.slane %v5167, 4
        %v5170 = vshll.u32 %v4668, 16
        %v5172 = vrot.slane %v5170, 5
        %v5173 = vsel %vm332, %v5168, %v5172
        %v5175 = vshrl.u32 %v4574, 16
        %v5177 = vrot.slane %v5175, 4
        %v5178 = vshll.u32 %v4574, 16
        %v5180 = vrot.slane %v5178, 5
        %v5181 = vor.u32 %v5177, %v5180
        %v5182 = vrot.slane %v5181, 4
        %v5184 = vshll.u32 %v4575, 16
        %v5186 = vrot.slane %v5184, 5
        %v5187 = vsel %vm332, %v5182, %v5186
        %v5188 = vshrl.u32 %v4575, 16
        %v5190 = vrot.slane %v5188, 4
        %v5191 = vor.u32 %v5190, %v5186
        %v5192 = vrot.slane %v5191, 4
        %v5194 = vshll.u32 %v4576, 16
        %v5196 = vrot.slane %v5194, 5
        %v5197 = vsel %vm332, %v5192, %v5196
        %v5198 = vshrl.u32 %v4576, 16
        %v5200 = vrot.slane %v5198, 4
        %v5201 = vor.u32 %v5200, %v5196
        %v5202 = vrot.slane %v5201, 4
        %v5204 = vshll.u32 %v4577, 16
        %v5206 = vrot.slane %v5204, 5
        %v5207 = vsel %vm332, %v5202, %v5206
        %v5208 = vshrl.u32 %v4577, 16
        %v5210 = vrot.slane %v5208, 4
        %v5211 = vor.u32 %v5210, %v5206
        %v5212 = vrot.slane %v5211, 4
        %v5214 = vshll.u32 %v4669, 16
        %v5216 = vrot.slane %v5214, 5
        %v5217 = vsel %vm332, %v5212, %v5216
        %v5219 = vshrl.u32 %v4578, 16
        %v5221 = vrot.slane %v5219, 4
        %v5222 = vshll.u32 %v4578, 16
        %v5224 = vrot.slane %v5222, 5
        %v5225 = vor.u32 %v5221, %v5224
        %v5226 = vrot.slane %v5225, 4
        %v5228 = vshll.u32 %v4579, 16
        %v5230 = vrot.slane %v5228, 5
        %v5231 = vsel %vm332, %v5226, %v5230
        %v5232 = vshrl.u32 %v4579, 16
        %v5234 = vrot.slane %v5232, 4
        %v5235 = vor.u32 %v5234, %v5230
        %v5236 = vrot.slane %v5235, 4
        %v5238 = vshll.u32 %v4580, 16
        %v5240 = vrot.slane %v5238, 5
        %v5241 = vsel %vm332, %v5236, %v5240
        %v5242 = vshrl.u32 %v4580, 16
        %v5244 = vrot.slane %v5242, 4
        %v5245 = vor.u32 %v5244, %v5240
        %v5246 = vrot.slane %v5245, 4
        %v5248 = vshll.u32 %v4581, 16
        %v5250 = vrot.slane %v5248, 5
        %v5251 = vsel %vm332, %v5246, %v5250
        %v5252 = vshrl.u32 %v4581, 16
        %v5254 = vrot.slane %v5252, 4
        %v5255 = vor.u32 %v5254, %v5250
        %v5256 = vrot.slane %v5255, 4
        %v5258 = vshll.u32 %v4670, 16
        %v5260 = vrot.slane %v5258, 5
        %v5261 = vsel %vm332, %v5256, %v5260
        %v5263 = vshrl.u32 %v4582, 16
        %v5265 = vrot.slane %v5263, 4
        %v5266 = vshll.u32 %v4582, 16
        %v5268 = vrot.slane %v5266, 5
        %v5269 = vor.u32 %v5265, %v5268
        %v5270 = vrot.slane %v5269, 4
        %v5272 = vshll.u32 %v4583, 16
        %v5274 = vrot.slane %v5272, 5
        %v5275 = vsel %vm332, %v5270, %v5274
        %v5276 = vshrl.u32 %v4583, 16
        %v5278 = vrot.slane %v5276, 4
        %v5279 = vor.u32 %v5278, %v5274
        %v5280 = vrot.slane %v5279, 4
        %v5282 = vshll.u32 %v4584, 16
        %v5284 = vrot.slane %v5282, 5
        %v5285 = vsel %vm332, %v5280, %v5284
        %v5286 = vshrl.u32 %v4584, 16
        %v5288 = vrot.slane %v5286, 4
        %v5289 = vor.u32 %v5288, %v5284
        %v5290 = vrot.slane %v5289, 4
        %v5292 = vshll.u32 %v4585, 16
        %v5294 = vrot.slane %v5292, 5
        %v5295 = vsel %vm332, %v5290, %v5294
        %v5296 = vshrl.u32 %v4585, 16
        %v5298 = vrot.slane %v5296, 4
        %v5299 = vor.u32 %v5298, %v5294
        %v5300 = vrot.slane %v5299, 4
        %v5302 = vshll.u32 %v4671, 16
        %v5304 = vrot.slane %v5302, 5
        %v5305 = vsel %vm332, %v5300, %v5304
        %v5307 = vshrl.u32 %v4586, 16
        %v5309 = vrot.slane %v5307, 4
        %v5310 = vshll.u32 %v4586, 16
        %v5312 = vrot.slane %v5310, 5
        %v5313 = vor.u32 %v5309, %v5312
        %v5314 = vrot.slane %v5313, 4
        %v5316 = vshll.u32 %v4587, 16
        %v5318 = vrot.slane %v5316, 5
        %v5319 = vsel %vm332, %v5314, %v5318
        %v5320 = vshrl.u32 %v4587, 16
        %v5322 = vrot.slane %v5320, 4
        %v5323 = vor.u32 %v5322, %v5318
        %v5324 = vrot.slane %v5323, 4
        %v5326 = vshll.u32 %v4588, 16
        %v5328 = vrot.slane %v5326, 5
        %v5329 = vsel %vm332, %v5324, %v5328
        %v5330 = vshrl.u32 %v4588, 16
        %v5332 = vrot.slane %v5330, 4
        %v5333 = vor.u32 %v5332, %v5328
        %v5334 = vrot.slane %v5333, 4
        %v5336 = vshll.u32 %v4589, 16
        %v5338 = vrot.slane %v5336, 5
        %v5339 = vsel %vm332, %v5334, %v5338
        %v5340 = vshrl.u32 %v4589, 16
        %v5342 = vrot.slane %v5340, 4
        %v5343 = vor.u32 %v5342, %v5338
        %v5344 = vrot.slane %v5343, 4
        %v5346 = vshll.u32 %v4672, 16
        %v5348 = vrot.slane %v5346, 5
        %v5349 = vsel %vm332, %v5344, %v5348
        %v5351 = vshrl.u32 %v4590, 16
        %v5353 = vrot.slane %v5351, 4
        %v5354 = vshll.u32 %v4590, 16
        %v5356 = vrot.slane %v5354, 5
        %v5357 = vor.u32 %v5353, %v5356
        %v5358 = vrot.slane %v5357, 4
        %v5360 = vshll.u32 %v4591, 16
        %v5362 = vrot.slane %v5360, 5
        %v5363 = vsel %vm332, %v5358, %v5362
        %v5364 = vshrl.u32 %v4591, 16
        %v5366 = vrot.slane %v5364, 4
        %v5367 = vor.u32 %v5366, %v5362
        %v5368 = vrot.slane %v5367, 4
        %v5370 = vshll.u32 %v4592, 16
        %v5372 = vrot.slane %v5370, 5
        %v5373 = vsel %vm332, %v5368, %v5372
        %v5374 = vshrl.u32 %v4592, 16
        %v5376 = vrot.slane %v5374, 4
        %v5377 = vor.u32 %v5376, %v5372
        %v5378 = vrot.slane %v5377, 4
        %v5380 = vshll.u32 %v4593, 16
        %v5382 = vrot.slane %v5380, 5
        %v5383 = vsel %vm332, %v5378, %v5382
        %v5384 = vshrl.u32 %v4593, 16
        %v5386 = vrot.slane %v5384, 4
        %v5387 = vor.u32 %v5386, %v5382
        %v5388 = vrot.slane %v5387, 4
        %v5390 = vshll.u32 %v4673, 16
        %v5392 = vrot.slane %v5390, 5
        %v5393 = vsel %vm332, %v5388, %v5392
        %v5395 = vshrl.u32 %v4594, 16
        %v5397 = vrot.slane %v5395, 4
        %v5398 = vshll.u32 %v4594, 16
        %v5400 = vrot.slane %v5398, 5
        %v5401 = vor.u32 %v5397, %v5400
        %v5402 = vrot.slane %v5401, 4
        %v5404 = vshll.u32 %v4595, 16
        %v5406 = vrot.slane %v5404, 5
        %v5407 = vsel %vm332, %v5402, %v5406
        %v5408 = vshrl.u32 %v4595, 16
        %v5410 = vrot.slane %v5408, 4
        %v5411 = vor.u32 %v5410, %v5406
        %v5412 = vrot.slane %v5411, 4
        %v5414 = vshll.u32 %v4596, 16
        %v5416 = vrot.slane %v5414, 5
        %v5417 = vsel %vm332, %v5412, %v5416
        %v5418 = vshrl.u32 %v4596, 16
        %v5420 = vrot.slane %v5418, 4
        %v5421 = vor.u32 %v5420, %v5416
        %v5422 = vrot.slane %v5421, 4
        %v5424 = vshll.u32 %v4597, 16
        %v5426 = vrot.slane %v5424, 5
        %v5427 = vsel %vm332, %v5422, %v5426
        %v5428 = vshrl.u32 %v4597, 16
        %v5430 = vrot.slane %v5428, 4
        %v5431 = vor.u32 %v5430, %v5426
        %v5432 = vrot.slane %v5431, 4
        %v5434 = vshll.u32 %v4674, 16
        %v5436 = vrot.slane %v5434, 5
        %v5437 = vsel %vm332, %v5432, %v5436
        %v5439 = vshrl.u32 %v4598, 16
        %v5441 = vrot.slane %v5439, 4
        %v5442 = vshll.u32 %v4598, 16
        %v5444 = vrot.slane %v5442, 5
        %v5445 = vor.u32 %v5441, %v5444
        %v5446 = vrot.slane %v5445, 4
        %v5448 = vshll.u32 %v4599, 16
        %v5450 = vrot.slane %v5448, 5
        %v5451 = vsel %vm332, %v5446, %v5450
        %v5452 = vshrl.u32 %v4599, 16
        %v5454 = vrot.slane %v5452, 4
        %v5455 = vor.u32 %v5454, %v5450
        %v5456 = vrot.slane %v5455, 4
        %v5458 = vshll.u32 %v4600, 16
        %v5460 = vrot.slane %v5458, 5
        %v5461 = vsel %vm332, %v5456, %v5460
        %v5462 = vshrl.u32 %v4600, 16
        %v5464 = vrot.slane %v5462, 4
        %v5465 = vor.u32 %v5464, %v5460
        %v5466 = vrot.slane %v5465, 4
        %v5468 = vshll.u32 %v4601, 16
        %v5470 = vrot.slane %v5468, 5
        %v5471 = vsel %vm332, %v5466, %v5470
        %v5472 = vshrl.u32 %v4601, 16
        %v5474 = vrot.slane %v5472, 4
        %v5475 = vor.u32 %v5474, %v5470
        %v5476 = vrot.slane %v5475, 4
        %v5478 = vshll.u32 %v4675, 16
        %v5480 = vrot.slane %v5478, 5
        %v5481 = vsel %vm332, %v5476, %v5480
        %v5483 = vshrl.u32 %v4602, 16
        %v5485 = vrot.slane %v5483, 4
        %v5486 = vshll.u32 %v4602, 16
        %v5488 = vrot.slane %v5486, 5
        %v5489 = vor.u32 %v5485, %v5488
        %v5490 = vrot.slane %v5489, 4
        %v5492 = vshll.u32 %v4603, 16
        %v5494 = vrot.slane %v5492, 5
        %v5495 = vsel %vm332, %v5490, %v5494
        %v5496 = vshrl.u32 %v4603, 16
        %v5498 = vrot.slane %v5496, 4
        %v5499 = vor.u32 %v5498, %v5494
        %v5500 = vrot.slane %v5499, 4
        %v5502 = vshll.u32 %v4604, 16
        %v5504 = vrot.slane %v5502, 5
        %v5505 = vsel %vm332, %v5500, %v5504
        %v5506 = vshrl.u32 %v4604, 16
        %v5508 = vrot.slane %v5506, 4
        %v5509 = vor.u32 %v5508, %v5504
        %v5510 = vrot.slane %v5509, 4
        %v5512 = vshll.u32 %v4605, 16
        %v5514 = vrot.slane %v5512, 5
        %v5515 = vsel %vm332, %v5510, %v5514
        %v5516 = vshrl.u32 %v4605, 16
        %v5518 = vrot.slane %v5516, 4
        %v5519 = vor.u32 %v5518, %v5514
        %v5520 = vrot.slane %v5519, 4
        %v5522 = vshll.u32 %v4676, 16
        %v5524 = vrot.slane %v5522, 5
        %v5525 = vsel %vm332, %v5520, %v5524
        %v5527 = vshrl.u32 %v4606, 16
        %v5529 = vrot.slane %v5527, 4
        %v5530 = vshll.u32 %v4606, 16
        %v5532 = vrot.slane %v5530, 5
        %v5533 = vor.u32 %v5529, %v5532
        %v5534 = vrot.slane %v5533, 4
        %v5536 = vshll.u32 %v4607, 16
        %v5538 = vrot.slane %v5536, 5
        %v5539 = vsel %vm332, %v5534, %v5538
        %v5540 = vshrl.u32 %v4607, 16
        %v5542 = vrot.slane %v5540, 4
        %v5543 = vor.u32 %v5542, %v5538
        %v5544 = vrot.slane %v5543, 4
        %v5546 = vshll.u32 %v4608, 16
        %v5548 = vrot.slane %v5546, 5
        %v5549 = vsel %vm332, %v5544, %v5548
        %v5550 = vshrl.u32 %v4608, 16
        %v5552 = vrot.slane %v5550, 4
        %v5553 = vor.u32 %v5552, %v5548
        %v5554 = vrot.slane %v5553, 4
        %v5556 = vshll.u32 %v4609, 16
        %v5558 = vrot.slane %v5556, 5
        %v5559 = vsel %vm332, %v5554, %v5558
        %v5560 = vshrl.u32 %v4609, 16
        %v5562 = vrot.slane %v5560, 4
        %v5563 = vor.u32 %v5562, %v5558
        %v5564 = vrot.slane %v5563, 4
        %v5566 = vshll.u32 %v4677, 16
        %v5568 = vrot.slane %v5566, 5
        %v5569 = vsel %vm332, %v5564, %v5568
        %v5571 = vshrl.u32 %v4610, 16
        %v5573 = vrot.slane %v5571, 4
        %v5574 = vshll.u32 %v4610, 16
        %v5576 = vrot.slane %v5574, 5
        %v5577 = vor.u32 %v5573, %v5576
        %v5578 = vrot.slane %v5577, 4
        %v5580 = vshll.u32 %v4611, 16
        %v5582 = vrot.slane %v5580, 5
        %v5583 = vsel %vm332, %v5578, %v5582
        %v5584 = vshrl.u32 %v4611, 16
        %v5586 = vrot.slane %v5584, 4
        %v5587 = vor.u32 %v5586, %v5582
        %v5588 = vrot.slane %v5587, 4
        %v5590 = vshll.u32 %v4612, 16
        %v5592 = vrot.slane %v5590, 5
        %v5593 = vsel %vm332, %v5588, %v5592
        %v5594 = vshrl.u32 %v4612, 16
        %v5596 = vrot.slane %v5594, 4
        %v5597 = vor.u32 %v5596, %v5592
        %v5598 = vrot.slane %v5597, 4
        %v5600 = vshll.u32 %v4613, 16
        %v5602 = vrot.slane %v5600, 5
        %v5603 = vsel %vm332, %v5598, %v5602
        %v5604 = vshrl.u32 %v4613, 16
        %v5606 = vrot.slane %v5604, 4
        %v5607 = vor.u32 %v5606, %v5602
        %v5608 = vrot.slane %v5607, 4
        %v5610 = vshll.u32 %v4678, 16
        %v5612 = vrot.slane %v5610, 5
        %v5613 = vsel %vm332, %v5608, %v5612
        %v5615 = vshrl.u32 %v4614, 16
        %v5617 = vrot.slane %v5615, 4
        %v5618 = vshll.u32 %v4614, 16
        %v5620 = vrot.slane %v5618, 5
        %v5621 = vor.u32 %v5617, %v5620
        %v5622 = vrot.slane %v5621, 4
        %v5624 = vshll.u32 %v4615, 16
        %v5626 = vrot.slane %v5624, 5
        %v5627 = vsel %vm332, %v5622, %v5626
        %v5628 = vshrl.u32 %v4615, 16
        %v5630 = vrot.slane %v5628, 4
        %v5631 = vor.u32 %v5630, %v5626
        %v5632 = vrot.slane %v5631, 4
        %v5634 = vshll.u32 %v4616, 16
        %v5636 = vrot.slane %v5634, 5
        %v5637 = vsel %vm332, %v5632, %v5636
        %v5638 = vshrl.u32 %v4616, 16
        %v5640 = vrot.slane %v5638, 4
        %v5641 = vor.u32 %v5640, %v5636
        %v5642 = vrot.slane %v5641, 4
        %v5644 = vshll.u32 %v4617, 16
        %v5646 = vrot.slane %v5644, 5
        %v5647 = vsel %vm332, %v5642, %v5646
        %v5648 = vshrl.u32 %v4617, 16
        %v5650 = vrot.slane %v5648, 4
        %v5651 = vor.u32 %v5650, %v5646
        %v5652 = vrot.slane %v5651, 4
        %v5654 = vshll.u32 %v4679, 16
        %v5656 = vrot.slane %v5654, 5
        %v5657 = vsel %vm332, %v5652, %v5656
        %v5659 = vshrl.u32 %v4618, 16
        %v5661 = vrot.slane %v5659, 4
        %v5662 = vshll.u32 %v4618, 16
        %v5664 = vrot.slane %v5662, 5
        %v5665 = vor.u32 %v5661, %v5664
        %v5666 = vrot.slane %v5665, 4
        %v5668 = vshll.u32 %v4619, 16
        %v5670 = vrot.slane %v5668, 5
        %v5671 = vsel %vm332, %v5666, %v5670
        %v5672 = vshrl.u32 %v4619, 16
        %v5674 = vrot.slane %v5672, 4
        %v5675 = vor.u32 %v5674, %v5670
        %v5676 = vrot.slane %v5675, 4
        %v5678 = vshll.u32 %v4620, 16
        %v5680 = vrot.slane %v5678, 5
        %v5681 = vsel %vm332, %v5676, %v5680
        %v5682 = vshrl.u32 %v4620, 16
        %v5684 = vrot.slane %v5682, 4
        %v5685 = vor.u32 %v5684, %v5680
        %v5686 = vrot.slane %v5685, 4
        %v5688 = vshll.u32 %v4621, 16
        %v5690 = vrot.slane %v5688, 5
        %v5691 = vsel %vm332, %v5686, %v5690
        %v5692 = vshrl.u32 %v4621, 16
        %v5694 = vrot.slane %v5692, 4
        %v5695 = vor.u32 %v5694, %v5690
        %v5696 = vrot.slane %v5695, 4
        %v5698 = vshll.u32 %v4680, 16
        %v5700 = vrot.slane %v5698, 5
        %v5701 = vsel %vm332, %v5696, %v5700
        %v5703 = vshrl.u32 %v4622, 16
        %v5705 = vrot.slane %v5703, 4
        %v5706 = vshll.u32 %v4622, 16
        %v5708 = vrot.slane %v5706, 5
        %v5709 = vor.u32 %v5705, %v5708
        %v5710 = vrot.slane %v5709, 4
        %v5712 = vshll.u32 %v4623, 16
        %v5714 = vrot.slane %v5712, 5
        %v5715 = vsel %vm332, %v5710, %v5714
        %v5716 = vshrl.u32 %v4623, 16
        %v5718 = vrot.slane %v5716, 4
        %v5719 = vor.u32 %v5718, %v5714
        %v5720 = vrot.slane %v5719, 4
        %v5722 = vshll.u32 %v4624, 16
        %v5724 = vrot.slane %v5722, 5
        %v5725 = vsel %vm332, %v5720, %v5724
        %v5726 = vshrl.u32 %v4624, 16
        %v5728 = vrot.slane %v5726, 4
        %v5729 = vor.u32 %v5728, %v5724
        %v5730 = vrot.slane %v5729, 4
        %v5732 = vshll.u32 %v4625, 16
        %v5734 = vrot.slane %v5732, 5
        %v5735 = vsel %vm332, %v5730, %v5734
        %v5736 = vshrl.u32 %v4625, 16
        %v5738 = vrot.slane %v5736, 4
        %v5739 = vor.u32 %v5738, %v5734
        %v5740 = vrot.slane %v5739, 4
        %v5742 = vshll.u32 %v4681, 16
        %v5744 = vrot.slane %v5742, 5
        %v5745 = vsel %vm332, %v5740, %v5744
        %v5747 = vshrl.u32 %v4626, 16
        %v5749 = vrot.slane %v5747, 4
        %v5750 = vshll.u32 %v4626, 16
        %v5752 = vrot.slane %v5750, 5
        %v5753 = vor.u32 %v5749, %v5752
        %v5754 = vrot.slane %v5753, 4
        %v5756 = vshll.u32 %v4627, 16
        %v5758 = vrot.slane %v5756, 5
        %v5759 = vsel %vm332, %v5754, %v5758
        %v5760 = vshrl.u32 %v4627, 16
        %v5762 = vrot.slane %v5760, 4
        %v5763 = vor.u32 %v5762, %v5758
        %v5764 = vrot.slane %v5763, 4
        %v5766 = vshll.u32 %v4628, 16
        %v5768 = vrot.slane %v5766, 5
        %v5769 = vsel %vm332, %v5764, %v5768
        %v5770 = vshrl.u32 %v4628, 16
        %v5772 = vrot.slane %v5770, 4
        %v5773 = vor.u32 %v5772, %v5768
        %v5774 = vrot.slane %v5773, 4
        %v5776 = vshll.u32 %v4629, 16
        %v5778 = vrot.slane %v5776, 5
        %v5779 = vsel %vm332, %v5774, %v5778
        %v5780 = vshrl.u32 %v4629, 16
        %v5782 = vrot.slane %v5780, 4
        %v5783 = vor.u32 %v5782, %v5778
        %v5784 = vrot.slane %v5783, 4
        %v5786 = vshll.u32 %v4682, 16
        %v5788 = vrot.slane %v5786, 5
        %v5789 = vsel %vm332, %v5784, %v5788
        %v5791 = vshrl.u32 %v4630, 16
        %v5793 = vrot.slane %v5791, 4
        %v5794 = vshll.u32 %v4630, 16
        %v5796 = vrot.slane %v5794, 5
        %v5797 = vor.u32 %v5793, %v5796
        %v5798 = vrot.slane %v5797, 4
        %v5800 = vshll.u32 %v4631, 16
        %v5802 = vrot.slane %v5800, 5
        %v5803 = vsel %vm332, %v5798, %v5802
        %v5804 = vshrl.u32 %v4631, 16
        %v5806 = vrot.slane %v5804, 4
        %v5807 = vor.u32 %v5806, %v5802
        %v5808 = vrot.slane %v5807, 4
        %v5810 = vshll.u32 %v4632, 16
        %v5812 = vrot.slane %v5810, 5
        %v5813 = vsel %vm332, %v5808, %v5812
        %v5814 = vshrl.u32 %v4632, 16
        %v5816 = vrot.slane %v5814, 4
        %v5817 = vor.u32 %v5816, %v5812
        %v5818 = vrot.slane %v5817, 4
        %v5820 = vshll.u32 %v4633, 16
        %v5822 = vrot.slane %v5820, 5
        %v5823 = vsel %vm332, %v5818, %v5822
        %v5824 = vshrl.u32 %v4633, 16
        %v5826 = vrot.slane %v5824, 4
        %v5827 = vor.u32 %v5826, %v5822
        %v5828 = vrot.slane %v5827, 4
        %v5830 = vshll.u32 %v4683, 16
        %v5832 = vrot.slane %v5830, 5
        %v5833 = vsel %vm332, %v5828, %v5832
        %v5835 = vshrl.u32 %v4634, 16
        %v5837 = vrot.slane %v5835, 4
        %v5838 = vshll.u32 %v4634, 16
        %v5840 = vrot.slane %v5838, 5
        %v5841 = vor.u32 %v5837, %v5840
        %v5842 = vrot.slane %v5841, 4
        %v5844 = vshll.u32 %v4635, 16
        %v5846 = vrot.slane %v5844, 5
        %v5847 = vsel %vm332, %v5842, %v5846
        %v5848 = vshrl.u32 %v4635, 16
        %v5850 = vrot.slane %v5848, 4
        %v5851 = vor.u32 %v5850, %v5846
        %v5852 = vrot.slane %v5851, 4
        %v5854 = vshll.u32 %v4636, 16
        %v5856 = vrot.slane %v5854, 5
        %v5857 = vsel %vm332, %v5852, %v5856
        %v5858 = vshrl.u32 %v4636, 16
        %v5860 = vrot.slane %v5858, 4
        %v5861 = vor.u32 %v5860, %v5856
        %v5862 = vrot.slane %v5861, 4
        %v5864 = vshll.u32 %v4637, 16
        %v5866 = vrot.slane %v5864, 5
        %v5867 = vsel %vm332, %v5862, %v5866
        %v5868 = vshrl.u32 %v4637, 16
        %v5870 = vrot.slane %v5868, 4
        %v5871 = vor.u32 %v5870, %v5866
        %v5872 = vrot.slane %v5871, 4
        %v5874 = vshll.u32 %v4684, 16
        %v5876 = vrot.slane %v5874, 5
        %v5877 = vsel %vm332, %v5872, %v5876
        %v5879 = vshrl.u32 %v4638, 16
        %v5881 = vrot.slane %v5879, 4
        %v5882 = vshll.u32 %v4638, 16
        %v5884 = vrot.slane %v5882, 5
        %v5885 = vor.u32 %v5881, %v5884
        %v5886 = vrot.slane %v5885, 4
        %v5888 = vshll.u32 %v4639, 16
        %v5890 = vrot.slane %v5888, 5
        %v5891 = vsel %vm332, %v5886, %v5890
        %v5892 = vshrl.u32 %v4639, 16
        %v5894 = vrot.slane %v5892, 4
        %v5895 = vor.u32 %v5894, %v5890
        %v5896 = vrot.slane %v5895, 4
        %v5898 = vshll.u32 %v4640, 16
        %v5900 = vrot.slane %v5898, 5
        %v5901 = vsel %vm332, %v5896, %v5900
        %v5902 = vshrl.u32 %v4640, 16
        %v5904 = vrot.slane %v5902, 4
        %v5905 = vor.u32 %v5904, %v5900
        %v5906 = vrot.slane %v5905, 4
        %v5908 = vshll.u32 %v4641, 16
        %v5910 = vrot.slane %v5908, 5
        %v5911 = vsel %vm332, %v5906, %v5910
        %v5912 = vshrl.u32 %v4641, 16
        %v5914 = vrot.slane %v5912, 4
        %v5915 = vor.u32 %v5914, %v5910
        %v5916 = vrot.slane %v5915, 4
        %v5918 = vshll.u32 %v4685, 16
        %v5920 = vrot.slane %v5918, 5
        %v5921 = vsel %vm332, %v5916, %v5920
        %v5923 = vshrl.u32 %v4642, 16
        %v5925 = vrot.slane %v5923, 4
        %v5926 = vshll.u32 %v4642, 16
        %v5928 = vrot.slane %v5926, 5
        %v5929 = vor.u32 %v5925, %v5928
        %v5930 = vrot.slane %v5929, 4
        %v5932 = vshll.u32 %v4643, 16
        %v5934 = vrot.slane %v5932, 5
        %v5935 = vsel %vm332, %v5930, %v5934
        %v5936 = vshrl.u32 %v4643, 16
        %v5938 = vrot.slane %v5936, 4
        %v5939 = vor.u32 %v5938, %v5934
        %v5940 = vrot.slane %v5939, 4
        %v5942 = vshll.u32 %v4644, 16
        %v5944 = vrot.slane %v5942, 5
        %v5945 = vsel %vm332, %v5940, %v5944
        %v5946 = vshrl.u32 %v4644, 16
        %v5948 = vrot.slane %v5946, 4
        %v5949 = vor.u32 %v5948, %v5944
        %v5950 = vrot.slane %v5949, 4
        %v5952 = vshll.u32 %v4645, 16
        %v5954 = vrot.slane %v5952, 5
        %v5955 = vsel %vm332, %v5950, %v5954
        %v5956 = vshrl.u32 %v4645, 16
        %v5958 = vrot.slane %v5956, 4
        %v5959 = vor.u32 %v5958, %v5954
        %v5960 = vrot.slane %v5959, 4
        %v5962 = vshll.u32 %v4686, 16
        %v5964 = vrot.slane %v5962, 5
        %v5965 = vsel %vm332, %v5960, %v5964
        %v5967 = vshrl.u32 %v4646, 16
        %v5969 = vrot.slane %v5967, 4
        %v5970 = vshll.u32 %v4646, 16
        %v5972 = vrot.slane %v5970, 5
        %v5973 = vor.u32 %v5969, %v5972
        %v5974 = vrot.slane %v5973, 4
        %v5976 = vshll.u32 %v4647, 16
        %v5978 = vrot.slane %v5976, 5
        %v5979 = vsel %vm332, %v5974, %v5978
        %v5980 = vshrl.u32 %v4647, 16
        %v5982 = vrot.slane %v5980, 4
        %v5983 = vor.u32 %v5982, %v5978
        %v5984 = vrot.slane %v5983, 4
        %v5986 = vshll.u32 %v4648, 16
        %v5988 = vrot.slane %v5986, 5
        %v5989 = vsel %vm332, %v5984, %v5988
        %v5990 = vshrl.u32 %v4648, 16
        %v5992 = vrot.slane %v5990, 4
        %v5993 = vor.u32 %v5992, %v5988
        %v5994 = vrot.slane %v5993, 4
        %v5996 = vshll.u32 %v4649, 16
        %v5998 = vrot.slane %v5996, 5
        %v5999 = vsel %vm332, %v5994, %v5998
        %v6000 = vshrl.u32 %v4649, 16
        %v6002 = vrot.slane %v6000, 4
        %v6003 = vor.u32 %v6002, %v5998
        %v6004 = vrot.slane %v6003, 4
        %v6006 = vshll.u32 %v4687, 16
        %v6008 = vrot.slane %v6006, 5
        %v6009 = vsel %vm332, %v6004, %v6008
        %v6011 = vshrl.u32 %v4650, 16
        %v6013 = vrot.slane %v6011, 4
        %v6014 = vshll.u32 %v4650, 16
        %v6016 = vrot.slane %v6014, 5
        %v6017 = vor.u32 %v6013, %v6016
        %v6018 = vrot.slane %v6017, 4
        %v6020 = vshll.u32 %v4651, 16
        %v6022 = vrot.slane %v6020, 5
        %v6023 = vsel %vm332, %v6018, %v6022
        %v6024 = vshrl.u32 %v4651, 16
        %v6026 = vrot.slane %v6024, 4
        %v6027 = vor.u32 %v6026, %v6022
        %v6028 = vrot.slane %v6027, 4
        %v6030 = vshll.u32 %v4652, 16
        %v6032 = vrot.slane %v6030, 5
        %v6033 = vsel %vm332, %v6028, %v6032
        %v6034 = vshrl.u32 %v4652, 16
        %v6036 = vrot.slane %v6034, 4
        %v6037 = vor.u32 %v6036, %v6032
        %v6038 = vrot.slane %v6037, 4
        %v6040 = vshll.u32 %v4653, 16
        %v6042 = vrot.slane %v6040, 5
        %v6043 = vsel %vm332, %v6038, %v6042
        %v6044 = vshrl.u32 %v4653, 16
        %v6046 = vrot.slane %v6044, 4
        %v6047 = vor.u32 %v6046, %v6042
        %v6048 = vrot.slane %v6047, 4
        %v6050 = vshll.u32 %v4688, 16
        %v6052 = vrot.slane %v6050, 5
        %v6053 = vsel %vm332, %v6048, %v6052
        %v6055 = vshrl.u32 %v4654, 16
        %v6057 = vrot.slane %v6055, 4
        %v6058 = vshll.u32 %v4654, 16
        %v6060 = vrot.slane %v6058, 5
        %v6061 = vor.u32 %v6057, %v6060
        %v6062 = vrot.slane %v6061, 4
        %v6064 = vshll.u32 %v4655, 16
        %v6066 = vrot.slane %v6064, 5
        %v6067 = vsel %vm332, %v6062, %v6066
        %v6068 = vshrl.u32 %v4655, 16
        %v6070 = vrot.slane %v6068, 4
        %v6071 = vor.u32 %v6070, %v6066
        %v6072 = vrot.slane %v6071, 4
        %v6074 = vshll.u32 %v4656, 16
        %v6076 = vrot.slane %v6074, 5
        %v6077 = vsel %vm332, %v6072, %v6076
        %v6078 = vshrl.u32 %v4656, 16
        %v6080 = vrot.slane %v6078, 4
        %v6081 = vor.u32 %v6080, %v6076
        %v6082 = vrot.slane %v6081, 4
        %v6084 = vshll.u32 %v4657, 16
        %v6086 = vrot.slane %v6084, 5
        %v6087 = vsel %vm332, %v6082, %v6086
        %v6088 = vshrl.u32 %v4657, 16
        %v6090 = vrot.slane %v6088, 4
        %v6091 = vor.u32 %v6090, %v6086
        %v6092 = vrot.slane %v6091, 4
        %v6094 = vshll.u32 %v4689, 16
        %v6096 = vrot.slane %v6094, 5
        %v6097 = vsel %vm332, %v6092, %v6096
        %v6098 = vld [vmem:[%s4529] sm:$0xe]
        %v6099 = vld [vmem:[%s4529 + $0x14] sm:$0xe]
        %v6100 = vld [vmem:[%s4529 + $0x28] sm:$0xe]
        %v6101 = vld [vmem:[%s4529 + $0x3c] sm:$0xe]
        %v6102 = vld [vmem:[%s4529 + $0x50] sm:$0xe]
        %v6103 = vld [vmem:[%s4529 + $0x64] sm:$0xe]
        %v6104 = vld [vmem:[%s4529 + $0x78] sm:$0xe]
        %v6105 = vld [vmem:[%s4529 + $0x8c] sm:$0xe]
        %v6106 = vld [vmem:[%s4529 + $0xa0] sm:$0xe]
        %v6107 = vld [vmem:[%s4529 + $0xb4] sm:$0xe]
        %v6108 = vld [vmem:[%s4529 + $0xc8] sm:$0xe]
        %v6109 = vld [vmem:[%s4529 + $0xdc] sm:$0xe]
        %v6110 = vld [vmem:[%s4529 + $0xf0] sm:$0xe]
        %v6111 = vld [vmem:[%s4529 + $0x104] sm:$0xe]
        %v6112 = vld [vmem:[%s4529 + $0x118] sm:$0xe]
        %v6113 = vld [vmem:[%s4529 + $0x12c] sm:$0xe]
        %v6114 = vld [vmem:[%s4529 + $0x140] sm:$0xe]
        %v6115 = vld [vmem:[%s4529 + $0x154] sm:$0xe]
        %v6116 = vld [vmem:[%s4529 + $0x168] sm:$0xe]
        %v6117 = vld [vmem:[%s4529 + $0x17c] sm:$0xe]
        %v6118 = vld [vmem:[%s4529 + $0x190] sm:$0xe]
        %v6119 = vld [vmem:[%s4529 + $0x1a4] sm:$0xe]
        %v6120 = vld [vmem:[%s4529 + $0x1b8] sm:$0xe]
        %v6121 = vld [vmem:[%s4529 + $0x1cc] sm:$0xe]
        %v6122 = vld [vmem:[%s4529 + $0x1e0] sm:$0xe]
        %v6123 = vld [vmem:[%s4529 + $0x1f4] sm:$0xe]
        %v6124 = vld [vmem:[%s4529 + $0x208] sm:$0xe]
        %v6125 = vld [vmem:[%s4529 + $0x21c] sm:$0xe]
        %v6126 = vld [vmem:[%s4529 + $0x230] sm:$0xe]
        %v6127 = vld [vmem:[%s4529 + $0x244] sm:$0xe]
        %v6128 = vld [vmem:[%s4529 + $0x258] sm:$0xe]
        %v6129 = vld [vmem:[%s4529 + $0x26c] sm:$0xe]
        %v6290 = vrot.slane %v6098, 5
        %v6291 = vrot.slane %v6290, 4
        %v6292 = vrot.slane %v4531, 5
        %v6293 = vsel %vm1935, %v6291, %v6292
        %v6294 = vrot.slane %v6292, 4
        %v6295 = vrot.slane %v4532, 5
        %v6296 = vsel %vm1935, %v6294, %v6295
        %v6297 = vrot.slane %v6295, 4
        %v6298 = vrot.slane %v4533, 5
        %v6299 = vsel %vm1935, %v6297, %v6298
        %v6300 = vrot.slane %v6298, 4
        %v6301 = vrot.slane %v4658, 5
        %v6302 = vsel %vm1935, %v6300, %v6301
        %v6303 = vrot.slane %v6099, 5
        %v6304 = vrot.slane %v6303, 4
        %v6305 = vrot.slane %v4535, 5
        %v6306 = vsel %vm1935, %v6304, %v6305
        %v6307 = vrot.slane %v6305, 4
        %v6308 = vrot.slane %v4536, 5
        %v6309 = vsel %vm1935, %v6307, %v6308
        %v6310 = vrot.slane %v6308, 4
        %v6311 = vrot.slane %v4537, 5
        %v6312 = vsel %vm1935, %v6310, %v6311
        %v6313 = vrot.slane %v6311, 4
        %v6314 = vrot.slane %v4659, 5
        %v6315 = vsel %vm1935, %v6313, %v6314
        %v6316 = vrot.slane %v6100, 5
        %v6317 = vrot.slane %v6316, 4
        %v6318 = vrot.slane %v4539, 5
        %v6319 = vsel %vm1935, %v6317, %v6318
        %v6320 = vrot.slane %v6318, 4
        %v6321 = vrot.slane %v4540, 5
        %v6322 = vsel %vm1935, %v6320, %v6321
        %v6323 = vrot.slane %v6321, 4
        %v6324 = vrot.slane %v4541, 5
        %v6325 = vsel %vm1935, %v6323, %v6324
        %v6326 = vrot.slane %v6324, 4
        %v6327 = vrot.slane %v4660, 5
        %v6328 = vsel %vm1935, %v6326, %v6327
        %v6329 = vrot.slane %v6101, 5
        %v6330 = vrot.slane %v6329, 4
        %v6331 = vrot.slane %v4543, 5
        %v6332 = vsel %vm1935, %v6330, %v6331
        %v6333 = vrot.slane %v6331, 4
        %v6334 = vrot.slane %v4544, 5
        %v6335 = vsel %vm1935, %v6333, %v6334
        %v6336 = vrot.slane %v6334, 4
        %v6337 = vrot.slane %v4545, 5
        %v6338 = vsel %vm1935, %v6336, %v6337
        %v6339 = vrot.slane %v6337, 4
        %v6340 = vrot.slane %v4661, 5
        %v6341 = vsel %vm1935, %v6339, %v6340
        %v6342 = vrot.slane %v6102, 5
        %v6343 = vrot.slane %v6342, 4
        %v6344 = vrot.slane %v4547, 5
        %v6345 = vsel %vm1935, %v6343, %v6344
        %v6346 = vrot.slane %v6344, 4
        %v6347 = vrot.slane %v4548, 5
        %v6348 = vsel %vm1935, %v6346, %v6347
        %v6349 = vrot.slane %v6347, 4
        %v6350 = vrot.slane %v4549, 5
        %v6351 = vsel %vm1935, %v6349, %v6350
        %v6352 = vrot.slane %v6350, 4
        %v6353 = vrot.slane %v4662, 5
        %v6354 = vsel %vm1935, %v6352, %v6353
        %v6355 = vrot.slane %v6103, 5
        %v6356 = vrot.slane %v6355, 4
        %v6357 = vrot.slane %v4551, 5
        %v6358 = vsel %vm1935, %v6356, %v6357
        %v6359 = vrot.slane %v6357, 4
        %v6360 = vrot.slane %v4552, 5
        %v6361 = vsel %vm1935, %v6359, %v6360
        %v6362 = vrot.slane %v6360, 4
        %v6363 = vrot.slane %v4553, 5
        %v6364 = vsel %vm1935, %v6362, %v6363
        %v6365 = vrot.slane %v6363, 4
        %v6366 = vrot.slane %v4663, 5
        %v6367 = vsel %vm1935, %v6365, %v6366
        %v6368 = vrot.slane %v6104, 5
        %v6369 = vrot.slane %v6368, 4
        %v6370 = vrot.slane %v4555, 5
        %v6371 = vsel %vm1935, %v6369, %v6370
        %v6372 = vrot.slane %v6370, 4
        %v6373 = vrot.slane %v4556, 5
        %v6374 = vsel %vm1935, %v6372, %v6373
        %v6375 = vrot.slane %v6373, 4
        %v6376 = vrot.slane %v4557, 5
        %v6377 = vsel %vm1935, %v6375, %v6376
        %v6378 = vrot.slane %v6376, 4
        %v6379 = vrot.slane %v4664, 5
        %v6380 = vsel %vm1935, %v6378, %v6379
        %v6381 = vrot.slane %v6105, 5
        %v6382 = vrot.slane %v6381, 4
        %v6383 = vrot.slane %v4559, 5
        %v6384 = vsel %vm1935, %v6382, %v6383
        %v6385 = vrot.slane %v6383, 4
        %v6386 = vrot.slane %v4560, 5
        %v6387 = vsel %vm1935, %v6385, %v6386
        %v6388 = vrot.slane %v6386, 4
        %v6389 = vrot.slane %v4561, 5
        %v6390 = vsel %vm1935, %v6388, %v6389
        %v6391 = vrot.slane %v6389, 4
        %v6392 = vrot.slane %v4665, 5
        %v6393 = vsel %vm1935, %v6391, %v6392
        %v6394 = vrot.slane %v6106, 5
        %v6395 = vrot.slane %v6394, 4
        %v6396 = vrot.slane %v4563, 5
        %v6397 = vsel %vm1935, %v6395, %v6396
        %v6398 = vrot.slane %v6396, 4
        %v6399 = vrot.slane %v4564, 5
        %v6400 = vsel %vm1935, %v6398, %v6399
        %v6401 = vrot.slane %v6399, 4
        %v6402 = vrot.slane %v4565, 5
        %v6403 = vsel %vm1935, %v6401, %v6402
        %v6404 = vrot.slane %v6402, 4
        %v6405 = vrot.slane %v4666, 5
        %v6406 = vsel %vm1935, %v6404, %v6405
        %v6407 = vrot.slane %v6107, 5
        %v6408 = vrot.slane %v6407, 4
        %v6409 = vrot.slane %v4567, 5
        %v6410 = vsel %vm1935, %v6408, %v6409
        %v6411 = vrot.slane %v6409, 4
        %v6412 = vrot.slane %v4568, 5
        %v6413 = vsel %vm1935, %v6411, %v6412
        %v6414 = vrot.slane %v6412, 4
        %v6415 = vrot.slane %v4569, 5
        %v6416 = vsel %vm1935, %v6414, %v6415
        %v6417 = vrot.slane %v6415, 4
        %v6418 = vrot.slane %v4667, 5
        %v6419 = vsel %vm1935, %v6417, %v6418
        %v6420 = vrot.slane %v6108, 5
        %v6421 = vrot.slane %v6420, 4
        %v6422 = vrot.slane %v4571, 5
        %v6423 = vsel %vm1935, %v6421, %v6422
        %v6424 = vrot.slane %v6422, 4
        %v6425 = vrot.slane %v4572, 5
        %v6426 = vsel %vm1935, %v6424, %v6425
        %v6427 = vrot.slane %v6425, 4
        %v6428 = vrot.slane %v4573, 5
        %v6429 = vsel %vm1935, %v6427, %v6428
        %v6430 = vrot.slane %v6428, 4
        %v6431 = vrot.slane %v4668, 5
        %v6432 = vsel %vm1935, %v6430, %v6431
        %v6433 = vrot.slane %v6109, 5
        %v6434 = vrot.slane %v6433, 4
        %v6435 = vrot.slane %v4575, 5
        %v6436 = vsel %vm1935, %v6434, %v6435
        %v6437 = vrot.slane %v6435, 4
        %v6438 = vrot.slane %v4576, 5
        %v6439 = vsel %vm1935, %v6437, %v6438
        %v6440 = vrot.slane %v6438, 4
        %v6441 = vrot.slane %v4577, 5
        %v6442 = vsel %vm1935, %v6440, %v6441
        %v6443 = vrot.slane %v6441, 4
        %v6444 = vrot.slane %v4669, 5
        %v6445 = vsel %vm1935, %v6443, %v6444
        %v6446 = vrot.slane %v6110, 5
        %v6447 = vrot.slane %v6446, 4
        %v6448 = vrot.slane %v4579, 5
        %v6449 = vsel %vm1935, %v6447, %v6448
        %v6450 = vrot.slane %v6448, 4
        %v6451 = vrot.slane %v4580, 5
        %v6452 = vsel %vm1935, %v6450, %v6451
        %v6453 = vrot.slane %v6451, 4
        %v6454 = vrot.slane %v4581, 5
        %v6455 = vsel %vm1935, %v6453, %v6454
        %v6456 = vrot.slane %v6454, 4
        %v6457 = vrot.slane %v4670, 5
        %v6458 = vsel %vm1935, %v6456, %v6457
        %v6459 = vrot.slane %v6111, 5
        %v6460 = vrot.slane %v6459, 4
        %v6461 = vrot.slane %v4583, 5
        %v6462 = vsel %vm1935, %v6460, %v6461
        %v6463 = vrot.slane %v6461, 4
        %v6464 = vrot.slane %v4584, 5
        %v6465 = vsel %vm1935, %v6463, %v6464
        %v6466 = vrot.slane %v6464, 4
        %v6467 = vrot.slane %v4585, 5
        %v6468 = vsel %vm1935, %v6466, %v6467
        %v6469 = vrot.slane %v6467, 4
        %v6470 = vrot.slane %v4671, 5
        %v6471 = vsel %vm1935, %v6469, %v6470
        %v6472 = vrot.slane %v6112, 5
        %v6473 = vrot.slane %v6472, 4
        %v6474 = vrot.slane %v4587, 5
        %v6475 = vsel %vm1935, %v6473, %v6474
        %v6476 = vrot.slane %v6474, 4
        %v6477 = vrot.slane %v4588, 5
        %v6478 = vsel %vm1935, %v6476, %v6477
        %v6479 = vrot.slane %v6477, 4
        %v6480 = vrot.slane %v4589, 5
        %v6481 = vsel %vm1935, %v6479, %v6480
        %v6482 = vrot.slane %v6480, 4
        %v6483 = vrot.slane %v4672, 5
        %v6484 = vsel %vm1935, %v6482, %v6483
        %v6485 = vrot.slane %v6113, 5
        %v6486 = vrot.slane %v6485, 4
        %v6487 = vrot.slane %v4591, 5
        %v6488 = vsel %vm1935, %v6486, %v6487
        %v6489 = vrot.slane %v6487, 4
        %v6490 = vrot.slane %v4592, 5
        %v6491 = vsel %vm1935, %v6489, %v6490
        %v6492 = vrot.slane %v6490, 4
        %v6493 = vrot.slane %v4593, 5
        %v6494 = vsel %vm1935, %v6492, %v6493
        %v6495 = vrot.slane %v6493, 4
        %v6496 = vrot.slane %v4673, 5
        %v6497 = vsel %vm1935, %v6495, %v6496
        %v6498 = vrot.slane %v6114, 5
        %v6499 = vrot.slane %v6498, 4
        %v6500 = vrot.slane %v4595, 5
        %v6501 = vsel %vm1935, %v6499, %v6500
        %v6502 = vrot.slane %v6500, 4
        %v6503 = vrot.slane %v4596, 5
        %v6504 = vsel %vm1935, %v6502, %v6503
        %v6505 = vrot.slane %v6503, 4
        %v6506 = vrot.slane %v4597, 5
        %v6507 = vsel %vm1935, %v6505, %v6506
        %v6508 = vrot.slane %v6506, 4
        %v6509 = vrot.slane %v4674, 5
        %v6510 = vsel %vm1935, %v6508, %v6509
        %v6511 = vrot.slane %v6115, 5
        %v6512 = vrot.slane %v6511, 4
        %v6513 = vrot.slane %v4599, 5
        %v6514 = vsel %vm1935, %v6512, %v6513
        %v6515 = vrot.slane %v6513, 4
        %v6516 = vrot.slane %v4600, 5
        %v6517 = vsel %vm1935, %v6515, %v6516
        %v6518 = vrot.slane %v6516, 4
        %v6519 = vrot.slane %v4601, 5
        %v6520 = vsel %vm1935, %v6518, %v6519
        %v6521 = vrot.slane %v6519, 4
        %v6522 = vrot.slane %v4675, 5
        %v6523 = vsel %vm1935, %v6521, %v6522
        %v6524 = vrot.slane %v6116, 5
        %v6525 = vrot.slane %v6524, 4
        %v6526 = vrot.slane %v4603, 5
        %v6527 = vsel %vm1935, %v6525, %v6526
        %v6528 = vrot.slane %v6526, 4
        %v6529 = vrot.slane %v4604, 5
        %v6530 = vsel %vm1935, %v6528, %v6529
        %v6531 = vrot.slane %v6529, 4
        %v6532 = vrot.slane %v4605, 5
        %v6533 = vsel %vm1935, %v6531, %v6532
        %v6534 = vrot.slane %v6532, 4
        %v6535 = vrot.slane %v4676, 5
        %v6536 = vsel %vm1935, %v6534, %v6535
        %v6537 = vrot.slane %v6117, 5
        %v6538 = vrot.slane %v6537, 4
        %v6539 = vrot.slane %v4607, 5
        %v6540 = vsel %vm1935, %v6538, %v6539
        %v6541 = vrot.slane %v6539, 4
        %v6542 = vrot.slane %v4608, 5
        %v6543 = vsel %vm1935, %v6541, %v6542
        %v6544 = vrot.slane %v6542, 4
        %v6545 = vrot.slane %v4609, 5
        %v6546 = vsel %vm1935, %v6544, %v6545
        %v6547 = vrot.slane %v6545, 4
        %v6548 = vrot.slane %v4677, 5
        %v6549 = vsel %vm1935, %v6547, %v6548
        %v6550 = vrot.slane %v6118, 5
        %v6551 = vrot.slane %v6550, 4
        %v6552 = vrot.slane %v4611, 5
        %v6553 = vsel %vm1935, %v6551, %v6552
        %v6554 = vrot.slane %v6552, 4
        %v6555 = vrot.slane %v4612, 5
        %v6556 = vsel %vm1935, %v6554, %v6555
        %v6557 = vrot.slane %v6555, 4
        %v6558 = vrot.slane %v4613, 5
        %v6559 = vsel %vm1935, %v6557, %v6558
        %v6560 = vrot.slane %v6558, 4
        %v6561 = vrot.slane %v4678, 5
        %v6562 = vsel %vm1935, %v6560, %v6561
        %v6563 = vrot.slane %v6119, 5
        %v6564 = vrot.slane %v6563, 4
        %v6565 = vrot.slane %v4615, 5
        %v6566 = vsel %vm1935, %v6564, %v6565
        %v6567 = vrot.slane %v6565, 4
        %v6568 = vrot.slane %v4616, 5
        %v6569 = vsel %vm1935, %v6567, %v6568
        %v6570 = vrot.slane %v6568, 4
        %v6571 = vrot.slane %v4617, 5
        %v6572 = vsel %vm1935, %v6570, %v6571
        %v6573 = vrot.slane %v6571, 4
        %v6574 = vrot.slane %v4679, 5
        %v6575 = vsel %vm1935, %v6573, %v6574
        %v6576 = vrot.slane %v6120, 5
        %v6577 = vrot.slane %v6576, 4
        %v6578 = vrot.slane %v4619, 5
        %v6579 = vsel %vm1935, %v6577, %v6578
        %v6580 = vrot.slane %v6578, 4
        %v6581 = vrot.slane %v4620, 5
        %v6582 = vsel %vm1935, %v6580, %v6581
        %v6583 = vrot.slane %v6581, 4
        %v6584 = vrot.slane %v4621, 5
        %v6585 = vsel %vm1935, %v6583, %v6584
        %v6586 = vrot.slane %v6584, 4
        %v6587 = vrot.slane %v4680, 5
        %v6588 = vsel %vm1935, %v6586, %v6587
        %v6589 = vrot.slane %v6121, 5
        %v6590 = vrot.slane %v6589, 4
        %v6591 = vrot.slane %v4623, 5
        %v6592 = vsel %vm1935, %v6590, %v6591
        %v6593 = vrot.slane %v6591, 4
        %v6594 = vrot.slane %v4624, 5
        %v6595 = vsel %vm1935, %v6593, %v6594
        %v6596 = vrot.slane %v6594, 4
        %v6597 = vrot.slane %v4625, 5
        %v6598 = vsel %vm1935, %v6596, %v6597
        %v6599 = vrot.slane %v6597, 4
        %v6600 = vrot.slane %v4681, 5
        %v6601 = vsel %vm1935, %v6599, %v6600
        %v6602 = vrot.slane %v6122, 5
        %v6603 = vrot.slane %v6602, 4
        %v6604 = vrot.slane %v4627, 5
        %v6605 = vsel %vm1935, %v6603, %v6604
        %v6606 = vrot.slane %v6604, 4
        %v6607 = vrot.slane %v4628, 5
        %v6608 = vsel %vm1935, %v6606, %v6607
        %v6609 = vrot.slane %v6607, 4
        %v6610 = vrot.slane %v4629, 5
        %v6611 = vsel %vm1935, %v6609, %v6610
        %v6612 = vrot.slane %v6610, 4
        %v6613 = vrot.slane %v4682, 5
        %v6614 = vsel %vm1935, %v6612, %v6613
        %v6615 = vrot.slane %v6123, 5
        %v6616 = vrot.slane %v6615, 4
        %v6617 = vrot.slane %v4631, 5
        %v6618 = vsel %vm1935, %v6616, %v6617
        %v6619 = vrot.slane %v6617, 4
        %v6620 = vrot.slane %v4632, 5
        %v6621 = vsel %vm1935, %v6619, %v6620
        %v6622 = vrot.slane %v6620, 4
        %v6623 = vrot.slane %v4633, 5
        %v6624 = vsel %vm1935, %v6622, %v6623
        %v6625 = vrot.slane %v6623, 4
        %v6626 = vrot.slane %v4683, 5
        %v6627 = vsel %vm1935, %v6625, %v6626
        %v6628 = vrot.slane %v6124, 5
        %v6629 = vrot.slane %v6628, 4
        %v6630 = vrot.slane %v4635, 5
        %v6631 = vsel %vm1935, %v6629, %v6630
        %v6632 = vrot.slane %v6630, 4
        %v6633 = vrot.slane %v4636, 5
        %v6634 = vsel %vm1935, %v6632, %v6633
        %v6635 = vrot.slane %v6633, 4
        %v6636 = vrot.slane %v4637, 5
        %v6637 = vsel %vm1935, %v6635, %v6636
        %v6638 = vrot.slane %v6636, 4
        %v6639 = vrot.slane %v4684, 5
        %v6640 = vsel %vm1935, %v6638, %v6639
        %v6641 = vrot.slane %v6125, 5
        %v6642 = vrot.slane %v6641, 4
        %v6643 = vrot.slane %v4639, 5
        %v6644 = vsel %vm1935, %v6642, %v6643
        %v6645 = vrot.slane %v6643, 4
        %v6646 = vrot.slane %v4640, 5
        %v6647 = vsel %vm1935, %v6645, %v6646
        %v6648 = vrot.slane %v6646, 4
        %v6649 = vrot.slane %v4641, 5
        %v6650 = vsel %vm1935, %v6648, %v6649
        %v6651 = vrot.slane %v6649, 4
        %v6652 = vrot.slane %v4685, 5
        %v6653 = vsel %vm1935, %v6651, %v6652
        %v6654 = vrot.slane %v6126, 5
        %v6655 = vrot.slane %v6654, 4
        %v6656 = vrot.slane %v4643, 5
        %v6657 = vsel %vm1935, %v6655, %v6656
        %v6658 = vrot.slane %v6656, 4
        %v6659 = vrot.slane %v4644, 5
        %v6660 = vsel %vm1935, %v6658, %v6659
        %v6661 = vrot.slane %v6659, 4
        %v6662 = vrot.slane %v4645, 5
        %v6663 = vsel %vm1935, %v6661, %v6662
        %v6664 = vrot.slane %v6662, 4
        %v6665 = vrot.slane %v4686, 5
        %v6666 = vsel %vm1935, %v6664, %v6665
        %v6667 = vrot.slane %v6127, 5
        %v6668 = vrot.slane %v6667, 4
        %v6669 = vrot.slane %v4647, 5
        %v6670 = vsel %vm1935, %v6668, %v6669
        %v6671 = vrot.slane %v6669, 4
        %v6672 = vrot.slane %v4648, 5
        %v6673 = vsel %vm1935, %v6671, %v6672
        %v6674 = vrot.slane %v6672, 4
        %v6675 = vrot.slane %v4649, 5
        %v6676 = vsel %vm1935, %v6674, %v6675
        %v6677 = vrot.slane %v6675, 4
        %v6678 = vrot.slane %v4687, 5
        %v6679 = vsel %vm1935, %v6677, %v6678
        %v6680 = vrot.slane %v6128, 5
        %v6681 = vrot.slane %v6680, 4
        %v6682 = vrot.slane %v4651, 5
        %v6683 = vsel %vm1935, %v6681, %v6682
        %v6684 = vrot.slane %v6682, 4
        %v6685 = vrot.slane %v4652, 5
        %v6686 = vsel %vm1935, %v6684, %v6685
        %v6687 = vrot.slane %v6685, 4
        %v6688 = vrot.slane %v4653, 5
        %v6689 = vsel %vm1935, %v6687, %v6688
        %v6690 = vrot.slane %v6688, 4
        %v6691 = vrot.slane %v4688, 5
        %v6692 = vsel %vm1935, %v6690, %v6691
        %v6693 = vrot.slane %v6129, 5
        %v6694 = vrot.slane %v6693, 4
        %v6695 = vrot.slane %v4655, 5
        %v6696 = vsel %vm1935, %v6694, %v6695
        %v6697 = vrot.slane %v6695, 4
        %v6698 = vrot.slane %v4656, 5
        %v6699 = vsel %vm1935, %v6697, %v6698
        %v6700 = vrot.slane %v6698, 4
        %v6701 = vrot.slane %v4657, 5
        %v6702 = vsel %vm1935, %v6700, %v6701
        %v6703 = vrot.slane %v6701, 4
        %v6704 = vrot.slane %v4689, 5
        %v6705 = vsel %vm1935, %v6703, %v6704
        %v6738 = vunpack.c.l.b16 %v170
        %v6739 = vunpack.c.l.b16 %v171
        %v6740 = vunpack.c.l.b16 %v172
        %v6741 = vunpack.c.l.b16 %v173
        %v6742 = vunpack.c.l.b16 %v174
        %v6743 = vunpack.c.l.b16 %v175
        %v6744 = vunpack.c.l.b16 %v176
        %v6745 = vunpack.c.l.b16 %v177
        %v6746 = vunpack.c.l.b16 %v178
        %v6747 = vunpack.c.l.b16 %v179
        %v6748 = vunpack.c.l.b16 %v180
        %v6749 = vunpack.c.l.b16 %v181
        %v6750 = vunpack.c.l.b16 %v182
        %v6751 = vunpack.c.l.b16 %v183
        %v6752 = vunpack.c.l.b16 %v184
        %v6753 = vunpack.c.l.b16 %v185
        %v6754 = vunpack.c.l.b16 %v186
        %v6755 = vunpack.c.l.b16 %v187
        %v6756 = vunpack.c.l.b16 %v188
        %v6757 = vunpack.c.l.b16 %v189
        %v6758 = vunpack.c.l.b16 %v190
        %v6759 = vunpack.c.l.b16 %v191
        %v6760 = vunpack.c.l.b16 %v192
        %v6761 = vunpack.c.l.b16 %v193
        %v6762 = vunpack.c.l.b16 %v194
        %v6763 = vunpack.c.l.b16 %v195
        %v6764 = vunpack.c.l.b16 %v196
        %v6765 = vunpack.c.l.b16 %v197
        %v6766 = vunpack.c.l.b16 %v198
        %v6767 = vunpack.c.l.b16 %v199
        %v6768 = vunpack.c.l.b16 %v200
        %v6769 = vunpack.c.l.b16 %v201
        %v6770 = vunpack.c.l.b16 %v202
        %v6771 = vunpack.c.l.b16 %v203
        %v6772 = vunpack.c.l.b16 %v204
        %v6773 = vunpack.c.l.b16 %v205
        %v6774 = vunpack.c.l.b16 %v206
        %v6775 = vunpack.c.l.b16 %v207
        %v6776 = vunpack.c.l.b16 %v208
        %v6777 = vunpack.c.l.b16 %v209
        %v6778 = vunpack.c.l.b16 %v210
        %v6779 = vunpack.c.l.b16 %v211
        %v6780 = vunpack.c.l.b16 %v212
        %v6781 = vunpack.c.l.b16 %v213
        %v6782 = vunpack.c.l.b16 %v214
        %v6783 = vunpack.c.l.b16 %v215
        %v6784 = vunpack.c.l.b16 %v216
        %v6785 = vunpack.c.l.b16 %v217
        %v6786 = vunpack.c.l.b16 %v218
        %v6787 = vunpack.c.l.b16 %v219
        %v6788 = vunpack.c.l.b16 %v220
        %v6789 = vunpack.c.l.b16 %v221
        %v6790 = vunpack.c.l.b16 %v222
        %v6791 = vunpack.c.l.b16 %v223
        %v6792 = vunpack.c.l.b16 %v224
        %v6793 = vunpack.c.l.b16 %v225
        %v6794 = vunpack.c.l.b16 %v226
        %v6795 = vunpack.c.l.b16 %v227
        %v6796 = vunpack.c.l.b16 %v228
        %v6797 = vunpack.c.l.b16 %v229
        %v6798 = vunpack.c.l.b16 %v230
        %v6799 = vunpack.c.l.b16 %v231
        %v6800 = vunpack.c.l.b16 %v232
        %v6801 = vunpack.c.l.b16 %v233
        %v6802 = vunpack.c.l.b16 %v234
        %v6803 = vunpack.c.l.b16 %v235
        %v6804 = vunpack.c.l.b16 %v236
        %v6805 = vunpack.c.l.b16 %v237
        %v6806 = vunpack.c.l.b16 %v238
        %v6807 = vunpack.c.l.b16 %v239
        %v6808 = vunpack.c.l.b16 %v240
        %v6809 = vunpack.c.l.b16 %v241
        %v6810 = vunpack.c.l.b16 %v242
        %v6811 = vunpack.c.l.b16 %v243
        %v6812 = vunpack.c.l.b16 %v244
        %v6813 = vunpack.c.l.b16 %v245
        %v6814 = vunpack.c.l.b16 %v246
        %v6815 = vunpack.c.l.b16 %v247
        %v6816 = vunpack.c.l.b16 %v248
        %v6817 = vunpack.c.l.b16 %v249
        %v6818 = vunpack.c.l.b16 %v250
        %v6819 = vunpack.c.l.b16 %v251
        %v6820 = vunpack.c.l.b16 %v252
        %v6821 = vunpack.c.l.b16 %v253
        %v6822 = vunpack.c.l.b16 %v254
        %v6823 = vunpack.c.l.b16 %v255
        %v6824 = vunpack.c.l.b16 %v256
        %v6825 = vunpack.c.l.b16 %v257
        %v6826 = vunpack.c.l.b16 %v258
        %v6827 = vunpack.c.l.b16 %v259
        %v6828 = vunpack.c.l.b16 %v260
        %v6829 = vunpack.c.l.b16 %v261
        %v6830 = vunpack.c.l.b16 %v262
        %v6831 = vunpack.c.l.b16 %v263
        %v6832 = vunpack.c.l.b16 %v264
        %v6833 = vunpack.c.l.b16 %v265
        %v6834 = vunpack.c.l.b16 %v266
        %v6835 = vunpack.c.l.b16 %v267
        %v6836 = vunpack.c.l.b16 %v268
        %v6837 = vunpack.c.l.b16 %v269
        %v6838 = vunpack.c.l.b16 %v270
        %v6839 = vunpack.c.l.b16 %v271
        %v6840 = vunpack.c.l.b16 %v272
        %v6841 = vunpack.c.l.b16 %v273
        %v6842 = vunpack.c.l.b16 %v274
        %v6843 = vunpack.c.l.b16 %v275
        %v6844 = vunpack.c.l.b16 %v276
        %v6845 = vunpack.c.l.b16 %v277
        %v6846 = vunpack.c.l.b16 %v278
        %v6847 = vunpack.c.l.b16 %v279
        %v6848 = vunpack.c.l.b16 %v280
        %v6849 = vunpack.c.l.b16 %v281
        %v6850 = vunpack.c.l.b16 %v282
        %v6851 = vunpack.c.l.b16 %v283
        %v6852 = vunpack.c.l.b16 %v284
        %v6853 = vunpack.c.l.b16 %v285
        %v6854 = vunpack.c.l.b16 %v286
        %v6855 = vunpack.c.l.b16 %v287
        %v6856 = vunpack.c.l.b16 %v288
        %v6857 = vunpack.c.l.b16 %v289
        %v6858 = vunpack.c.l.b16 %v290
        %v6859 = vunpack.c.l.b16 %v291
        %v6860 = vunpack.c.l.b16 %v292
        %v6861 = vunpack.c.l.b16 %v293
        %v6862 = vunpack.c.l.b16 %v294
        %v6863 = vunpack.c.l.b16 %v295
        %v6864 = vunpack.c.l.b16 %v296
        %v6865 = vunpack.c.l.b16 %v297
        %v6866 = vpack.c.b16 %v6739, %v6738
        %v6867 = vpack.c.b16 %v6741, %v6740
        %v6868 = vpack.c.b16 %v6743, %v6742
        %v6869 = vpack.c.b16 %v6745, %v6744
        %v6870 = vpack.c.b16 %v6747, %v6746
        %v6871 = vpack.c.b16 %v6749, %v6748
        %v6872 = vpack.c.b16 %v6751, %v6750
        %v6873 = vpack.c.b16 %v6753, %v6752
        %v6874 = vpack.c.b16 %v6755, %v6754
        %v6875 = vpack.c.b16 %v6757, %v6756
        %v6876 = vpack.c.b16 %v6759, %v6758
        %v6877 = vpack.c.b16 %v6761, %v6760
        %v6878 = vpack.c.b16 %v6763, %v6762
        %v6879 = vpack.c.b16 %v6765, %v6764
        %v6880 = vpack.c.b16 %v6767, %v6766
        %v6881 = vpack.c.b16 %v6769, %v6768
        %v6882 = vpack.c.b16 %v6771, %v6770
        %v6883 = vpack.c.b16 %v6773, %v6772
        %v6884 = vpack.c.b16 %v6775, %v6774
        %v6885 = vpack.c.b16 %v6777, %v6776
        %v6886 = vpack.c.b16 %v6779, %v6778
        %v6887 = vpack.c.b16 %v6781, %v6780
        %v6888 = vpack.c.b16 %v6783, %v6782
        %v6889 = vpack.c.b16 %v6785, %v6784
        %v6890 = vpack.c.b16 %v6787, %v6786
        %v6891 = vpack.c.b16 %v6789, %v6788
        %v6892 = vpack.c.b16 %v6791, %v6790
        %v6893 = vpack.c.b16 %v6793, %v6792
        %v6894 = vpack.c.b16 %v6795, %v6794
        %v6895 = vpack.c.b16 %v6797, %v6796
        %v6896 = vpack.c.b16 %v6799, %v6798
        %v6897 = vpack.c.b16 %v6801, %v6800
        %v6898 = vpack.c.b16 %v6803, %v6802
        %v6899 = vpack.c.b16 %v6805, %v6804
        %v6900 = vpack.c.b16 %v6807, %v6806
        %v6901 = vpack.c.b16 %v6809, %v6808
        %v6902 = vpack.c.b16 %v6811, %v6810
        %v6903 = vpack.c.b16 %v6813, %v6812
        %v6904 = vpack.c.b16 %v6815, %v6814
        %v6905 = vpack.c.b16 %v6817, %v6816
        %v6906 = vpack.c.b16 %v6819, %v6818
        %v6907 = vpack.c.b16 %v6821, %v6820
        %v6908 = vpack.c.b16 %v6823, %v6822
        %v6909 = vpack.c.b16 %v6825, %v6824
        %v6910 = vpack.c.b16 %v6827, %v6826
        %v6911 = vpack.c.b16 %v6829, %v6828
        %v6912 = vpack.c.b16 %v6831, %v6830
        %v6913 = vpack.c.b16 %v6833, %v6832
        %v6914 = vpack.c.b16 %v6835, %v6834
        %v6915 = vpack.c.b16 %v6837, %v6836
        %v6916 = vpack.c.b16 %v6839, %v6838
        %v6917 = vpack.c.b16 %v6841, %v6840
        %v6918 = vpack.c.b16 %v6843, %v6842
        %v6919 = vpack.c.b16 %v6845, %v6844
        %v6920 = vpack.c.b16 %v6847, %v6846
        %v6921 = vpack.c.b16 %v6849, %v6848
        %v6922 = vpack.c.b16 %v6851, %v6850
        %v6923 = vpack.c.b16 %v6853, %v6852
        %v6924 = vpack.c.b16 %v6855, %v6854
        %v6925 = vpack.c.b16 %v6857, %v6856
        %v6926 = vpack.c.b16 %v6859, %v6858
        %v6927 = vpack.c.b16 %v6861, %v6860
        %v6928 = vpack.c.b16 %v6863, %v6862
        %v6929 = vpack.c.b16 %v6865, %v6864
        %v6994 = vunpack.c.l.b16 %v346
        %v6995 = vunpack.c.l.b16 %v356
        %v6996 = vunpack.c.l.b16 %v366
        %v6997 = vunpack.c.l.b16 %v376
        %v6998 = vunpack.c.l.b16 %v390
        %v6999 = vunpack.c.l.b16 %v400
        %v7000 = vunpack.c.l.b16 %v410
        %v7001 = vunpack.c.l.b16 %v420
        %v7002 = vunpack.c.l.b16 %v434
        %v7003 = vunpack.c.l.b16 %v444
        %v7004 = vunpack.c.l.b16 %v454
        %v7005 = vunpack.c.l.b16 %v464
        %v7006 = vunpack.c.l.b16 %v478
        %v7007 = vunpack.c.l.b16 %v488
        %v7008 = vunpack.c.l.b16 %v498
        %v7009 = vunpack.c.l.b16 %v508
        %v7010 = vunpack.c.l.b16 %v522
        %v7011 = vunpack.c.l.b16 %v532
        %v7012 = vunpack.c.l.b16 %v542
        %v7013 = vunpack.c.l.b16 %v552
        %v7014 = vunpack.c.l.b16 %v566
        %v7015 = vunpack.c.l.b16 %v576
        %v7016 = vunpack.c.l.b16 %v586
        %v7017 = vunpack.c.l.b16 %v596
        %v7018 = vunpack.c.l.b16 %v610
        %v7019 = vunpack.c.l.b16 %v620
        %v7020 = vunpack.c.l.b16 %v630
        %v7021 = vunpack.c.l.b16 %v640
        %v7022 = vunpack.c.l.b16 %v654
        %v7023 = vunpack.c.l.b16 %v664
        %v7024 = vunpack.c.l.b16 %v674
        %v7025 = vunpack.c.l.b16 %v684
        %v7026 = vunpack.c.l.b16 %v698
        %v7027 = vunpack.c.l.b16 %v708
        %v7028 = vunpack.c.l.b16 %v718
        %v7029 = vunpack.c.l.b16 %v728
        %v7030 = vunpack.c.l.b16 %v742
        %v7031 = vunpack.c.l.b16 %v752
        %v7032 = vunpack.c.l.b16 %v762
        %v7033 = vunpack.c.l.b16 %v772
        %v7034 = vunpack.c.l.b16 %v786
        %v7035 = vunpack.c.l.b16 %v796
        %v7036 = vunpack.c.l.b16 %v806
        %v7037 = vunpack.c.l.b16 %v816
        %v7038 = vunpack.c.l.b16 %v830
        %v7039 = vunpack.c.l.b16 %v840
        %v7040 = vunpack.c.l.b16 %v850
        %v7041 = vunpack.c.l.b16 %v860
        %v7042 = vunpack.c.l.b16 %v874
        %v7043 = vunpack.c.l.b16 %v884
        %v7044 = vunpack.c.l.b16 %v894
        %v7045 = vunpack.c.l.b16 %v904
        %v7046 = vunpack.c.l.b16 %v918
        %v7047 = vunpack.c.l.b16 %v928
        %v7048 = vunpack.c.l.b16 %v938
        %v7049 = vunpack.c.l.b16 %v948
        %v7050 = vunpack.c.l.b16 %v962
        %v7051 = vunpack.c.l.b16 %v972
        %v7052 = vunpack.c.l.b16 %v982
        %v7053 = vunpack.c.l.b16 %v992
        %v7054 = vunpack.c.l.b16 %v1006
        %v7055 = vunpack.c.l.b16 %v1016
        %v7056 = vunpack.c.l.b16 %v1026
        %v7057 = vunpack.c.l.b16 %v1036
        %v7058 = vunpack.c.l.b16 %v1050
        %v7059 = vunpack.c.l.b16 %v1060
        %v7060 = vunpack.c.l.b16 %v1070
        %v7061 = vunpack.c.l.b16 %v1080
        %v7062 = vunpack.c.l.b16 %v1094
        %v7063 = vunpack.c.l.b16 %v1104
        %v7064 = vunpack.c.l.b16 %v1114
        %v7065 = vunpack.c.l.b16 %v1124
        %v7066 = vunpack.c.l.b16 %v1138
        %v7067 = vunpack.c.l.b16 %v1148
        %v7068 = vunpack.c.l.b16 %v1158
        %v7069 = vunpack.c.l.b16 %v1168
        %v7070 = vunpack.c.l.b16 %v1182
        %v7071 = vunpack.c.l.b16 %v1192
        %v7072 = vunpack.c.l.b16 %v1202
        %v7073 = vunpack.c.l.b16 %v1212
        %v7074 = vunpack.c.l.b16 %v1226
        %v7075 = vunpack.c.l.b16 %v1236
        %v7076 = vunpack.c.l.b16 %v1246
        %v7077 = vunpack.c.l.b16 %v1256
        %v7078 = vunpack.c.l.b16 %v1270
        %v7079 = vunpack.c.l.b16 %v1280
        %v7080 = vunpack.c.l.b16 %v1290
        %v7081 = vunpack.c.l.b16 %v1300
        %v7082 = vunpack.c.l.b16 %v1314
        %v7083 = vunpack.c.l.b16 %v1324
        %v7084 = vunpack.c.l.b16 %v1334
        %v7085 = vunpack.c.l.b16 %v1344
        %v7086 = vunpack.c.l.b16 %v1358
        %v7087 = vunpack.c.l.b16 %v1368
        %v7088 = vunpack.c.l.b16 %v1378
        %v7089 = vunpack.c.l.b16 %v1388
        %v7090 = vunpack.c.l.b16 %v1402
        %v7091 = vunpack.c.l.b16 %v1412
        %v7092 = vunpack.c.l.b16 %v1422
        %v7093 = vunpack.c.l.b16 %v1432
        %v7094 = vunpack.c.l.b16 %v1446
        %v7095 = vunpack.c.l.b16 %v1456
        %v7096 = vunpack.c.l.b16 %v1466
        %v7097 = vunpack.c.l.b16 %v1476
        %v7098 = vunpack.c.l.b16 %v1490
        %v7099 = vunpack.c.l.b16 %v1500
        %v7100 = vunpack.c.l.b16 %v1510
        %v7101 = vunpack.c.l.b16 %v1520
        %v7102 = vunpack.c.l.b16 %v1534
        %v7103 = vunpack.c.l.b16 %v1544
        %v7104 = vunpack.c.l.b16 %v1554
        %v7105 = vunpack.c.l.b16 %v1564
        %v7106 = vunpack.c.l.b16 %v1578
        %v7107 = vunpack.c.l.b16 %v1588
        %v7108 = vunpack.c.l.b16 %v1598
        %v7109 = vunpack.c.l.b16 %v1608
        %v7110 = vunpack.c.l.b16 %v1622
        %v7111 = vunpack.c.l.b16 %v1632
        %v7112 = vunpack.c.l.b16 %v1642
        %v7113 = vunpack.c.l.b16 %v1652
        %v7114 = vunpack.c.l.b16 %v1666
        %v7115 = vunpack.c.l.b16 %v1676
        %v7116 = vunpack.c.l.b16 %v1686
        %v7117 = vunpack.c.l.b16 %v1696
        %v7118 = vunpack.c.l.b16 %v1710
        %v7119 = vunpack.c.l.b16 %v1720
        %v7120 = vunpack.c.l.b16 %v1730
        %v7121 = vunpack.c.l.b16 %v1740
        %v7122 = vpack.c.b16 %v6995, %v6994
        %v7123 = vpack.c.b16 %v6997, %v6996
        %v7124 = vpack.c.b16 %v6999, %v6998
        %v7125 = vpack.c.b16 %v7001, %v7000
        %v7126 = vpack.c.b16 %v7003, %v7002
        %v7127 = vpack.c.b16 %v7005, %v7004
        %v7128 = vpack.c.b16 %v7007, %v7006
        %v7129 = vpack.c.b16 %v7009, %v7008
        %v7130 = vpack.c.b16 %v7011, %v7010
        %v7131 = vpack.c.b16 %v7013, %v7012
        %v7132 = vpack.c.b16 %v7015, %v7014
        %v7133 = vpack.c.b16 %v7017, %v7016
        %v7134 = vpack.c.b16 %v7019, %v7018
        %v7135 = vpack.c.b16 %v7021, %v7020
        %v7136 = vpack.c.b16 %v7023, %v7022
        %v7137 = vpack.c.b16 %v7025, %v7024
        %v7138 = vpack.c.b16 %v7027, %v7026
        %v7139 = vpack.c.b16 %v7029, %v7028
        %v7140 = vpack.c.b16 %v7031, %v7030
        %v7141 = vpack.c.b16 %v7033, %v7032
        %v7142 = vpack.c.b16 %v7035, %v7034
        %v7143 = vpack.c.b16 %v7037, %v7036
        %v7144 = vpack.c.b16 %v7039, %v7038
        %v7145 = vpack.c.b16 %v7041, %v7040
        %v7146 = vpack.c.b16 %v7043, %v7042
        %v7147 = vpack.c.b16 %v7045, %v7044
        %v7148 = vpack.c.b16 %v7047, %v7046
        %v7149 = vpack.c.b16 %v7049, %v7048
        %v7150 = vpack.c.b16 %v7051, %v7050
        %v7151 = vpack.c.b16 %v7053, %v7052
        %v7152 = vpack.c.b16 %v7055, %v7054
        %v7153 = vpack.c.b16 %v7057, %v7056
        %v7154 = vpack.c.b16 %v7059, %v7058
        %v7155 = vpack.c.b16 %v7061, %v7060
        %v7156 = vpack.c.b16 %v7063, %v7062
        %v7157 = vpack.c.b16 %v7065, %v7064
        %v7158 = vpack.c.b16 %v7067, %v7066
        %v7159 = vpack.c.b16 %v7069, %v7068
        %v7160 = vpack.c.b16 %v7071, %v7070
        %v7161 = vpack.c.b16 %v7073, %v7072
        %v7162 = vpack.c.b16 %v7075, %v7074
        %v7163 = vpack.c.b16 %v7077, %v7076
        %v7164 = vpack.c.b16 %v7079, %v7078
        %v7165 = vpack.c.b16 %v7081, %v7080
        %v7166 = vpack.c.b16 %v7083, %v7082
        %v7167 = vpack.c.b16 %v7085, %v7084
        %v7168 = vpack.c.b16 %v7087, %v7086
        %v7169 = vpack.c.b16 %v7089, %v7088
        %v7170 = vpack.c.b16 %v7091, %v7090
        %v7171 = vpack.c.b16 %v7093, %v7092
        %v7172 = vpack.c.b16 %v7095, %v7094
        %v7173 = vpack.c.b16 %v7097, %v7096
        %v7174 = vpack.c.b16 %v7099, %v7098
        %v7175 = vpack.c.b16 %v7101, %v7100
        %v7176 = vpack.c.b16 %v7103, %v7102
        %v7177 = vpack.c.b16 %v7105, %v7104
        %v7178 = vpack.c.b16 %v7107, %v7106
        %v7179 = vpack.c.b16 %v7109, %v7108
        %v7180 = vpack.c.b16 %v7111, %v7110
        %v7181 = vpack.c.b16 %v7113, %v7112
        %v7182 = vpack.c.b16 %v7115, %v7114
        %v7183 = vpack.c.b16 %v7117, %v7116
        %v7184 = vpack.c.b16 %v7119, %v7118
        %v7185 = vpack.c.b16 %v7121, %v7120
        %v7250 = vunpack.c.l.b16 %v1939
        %v7251 = vunpack.c.l.b16 %v1942
        %v7252 = vunpack.c.l.b16 %v1945
        %v7253 = vunpack.c.l.b16 %v1948
        %v7254 = vunpack.c.l.b16 %v1952
        %v7255 = vunpack.c.l.b16 %v1955
        %v7256 = vunpack.c.l.b16 %v1958
        %v7257 = vunpack.c.l.b16 %v1961
        %v7258 = vunpack.c.l.b16 %v1965
        %v7259 = vunpack.c.l.b16 %v1968
        %v7260 = vunpack.c.l.b16 %v1971
        %v7261 = vunpack.c.l.b16 %v1974
        %v7262 = vunpack.c.l.b16 %v1978
        %v7263 = vunpack.c.l.b16 %v1981
        %v7264 = vunpack.c.l.b16 %v1984
        %v7265 = vunpack.c.l.b16 %v1987
        %v7266 = vunpack.c.l.b16 %v1991
        %v7267 = vunpack.c.l.b16 %v1994
        %v7268 = vunpack.c.l.b16 %v1997
        %v7269 = vunpack.c.l.b16 %v2000
        %v7270 = vunpack.c.l.b16 %v2004
        %v7271 = vunpack.c.l.b16 %v2007
        %v7272 = vunpack.c.l.b16 %v2010
        %v7273 = vunpack.c.l.b16 %v2013
        %v7274 = vunpack.c.l.b16 %v2017
        %v7275 = vunpack.c.l.b16 %v2020
        %v7276 = vunpack.c.l.b16 %v2023
        %v7277 = vunpack.c.l.b16 %v2026
        %v7278 = vunpack.c.l.b16 %v2030
        %v7279 = vunpack.c.l.b16 %v2033
        %v7280 = vunpack.c.l.b16 %v2036
        %v7281 = vunpack.c.l.b16 %v2039
        %v7282 = vunpack.c.l.b16 %v2043
        %v7283 = vunpack.c.l.b16 %v2046
        %v7284 = vunpack.c.l.b16 %v2049
        %v7285 = vunpack.c.l.b16 %v2052
        %v7286 = vunpack.c.l.b16 %v2056
        %v7287 = vunpack.c.l.b16 %v2059
        %v7288 = vunpack.c.l.b16 %v2062
        %v7289 = vunpack.c.l.b16 %v2065
        %v7290 = vunpack.c.l.b16 %v2069
        %v7291 = vunpack.c.l.b16 %v2072
        %v7292 = vunpack.c.l.b16 %v2075
        %v7293 = vunpack.c.l.b16 %v2078
        %v7294 = vunpack.c.l.b16 %v2082
        %v7295 = vunpack.c.l.b16 %v2085
        %v7296 = vunpack.c.l.b16 %v2088
        %v7297 = vunpack.c.l.b16 %v2091
        %v7298 = vunpack.c.l.b16 %v2095
        %v7299 = vunpack.c.l.b16 %v2098
        %v7300 = vunpack.c.l.b16 %v2101
        %v7301 = vunpack.c.l.b16 %v2104
        %v7302 = vunpack.c.l.b16 %v2108
        %v7303 = vunpack.c.l.b16 %v2111
        %v7304 = vunpack.c.l.b16 %v2114
        %v7305 = vunpack.c.l.b16 %v2117
        %v7306 = vunpack.c.l.b16 %v2121
        %v7307 = vunpack.c.l.b16 %v2124
        %v7308 = vunpack.c.l.b16 %v2127
        %v7309 = vunpack.c.l.b16 %v2130
        %v7310 = vunpack.c.l.b16 %v2134
        %v7311 = vunpack.c.l.b16 %v2137
        %v7312 = vunpack.c.l.b16 %v2140
        %v7313 = vunpack.c.l.b16 %v2143
        %v7314 = vunpack.c.l.b16 %v2147
        %v7315 = vunpack.c.l.b16 %v2150
        %v7316 = vunpack.c.l.b16 %v2153
        %v7317 = vunpack.c.l.b16 %v2156
        %v7318 = vunpack.c.l.b16 %v2160
        %v7319 = vunpack.c.l.b16 %v2163
        %v7320 = vunpack.c.l.b16 %v2166
        %v7321 = vunpack.c.l.b16 %v2169
        %v7322 = vunpack.c.l.b16 %v2173
        %v7323 = vunpack.c.l.b16 %v2176
        %v7324 = vunpack.c.l.b16 %v2179
        %v7325 = vunpack.c.l.b16 %v2182
        %v7326 = vunpack.c.l.b16 %v2186
        %v7327 = vunpack.c.l.b16 %v2189
        %v7328 = vunpack.c.l.b16 %v2192
        %v7329 = vunpack.c.l.b16 %v2195
        %v7330 = vunpack.c.l.b16 %v2199
        %v7331 = vunpack.c.l.b16 %v2202
        %v7332 = vunpack.c.l.b16 %v2205
        %v7333 = vunpack.c.l.b16 %v2208
        %v7334 = vunpack.c.l.b16 %v2212
        %v7335 = vunpack.c.l.b16 %v2215
        %v7336 = vunpack.c.l.b16 %v2218
        %v7337 = vunpack.c.l.b16 %v2221
        %v7338 = vunpack.c.l.b16 %v2225
        %v7339 = vunpack.c.l.b16 %v2228
        %v7340 = vunpack.c.l.b16 %v2231
        %v7341 = vunpack.c.l.b16 %v2234
        %v7342 = vunpack.c.l.b16 %v2238
        %v7343 = vunpack.c.l.b16 %v2241
        %v7344 = vunpack.c.l.b16 %v2244
        %v7345 = vunpack.c.l.b16 %v2247
        %v7346 = vunpack.c.l.b16 %v2251
        %v7347 = vunpack.c.l.b16 %v2254
        %v7348 = vunpack.c.l.b16 %v2257
        %v7349 = vunpack.c.l.b16 %v2260
        %v7350 = vunpack.c.l.b16 %v2264
        %v7351 = vunpack.c.l.b16 %v2267
        %v7352 = vunpack.c.l.b16 %v2270
        %v7353 = vunpack.c.l.b16 %v2273
        %v7354 = vunpack.c.l.b16 %v2277
        %v7355 = vunpack.c.l.b16 %v2280
        %v7356 = vunpack.c.l.b16 %v2283
        %v7357 = vunpack.c.l.b16 %v2286
        %v7358 = vunpack.c.l.b16 %v2290
        %v7359 = vunpack.c.l.b16 %v2293
        %v7360 = vunpack.c.l.b16 %v2296
        %v7361 = vunpack.c.l.b16 %v2299
        %v7362 = vunpack.c.l.b16 %v2303
        %v7363 = vunpack.c.l.b16 %v2306
        %v7364 = vunpack.c.l.b16 %v2309
        %v7365 = vunpack.c.l.b16 %v2312
        %v7366 = vunpack.c.l.b16 %v2316
        %v7367 = vunpack.c.l.b16 %v2319
        %v7368 = vunpack.c.l.b16 %v2322
        %v7369 = vunpack.c.l.b16 %v2325
        %v7370 = vunpack.c.l.b16 %v2329
        %v7371 = vunpack.c.l.b16 %v2332
        %v7372 = vunpack.c.l.b16 %v2335
        %v7373 = vunpack.c.l.b16 %v2338
        %v7374 = vunpack.c.l.b16 %v2342
        %v7375 = vunpack.c.l.b16 %v2345
        %v7376 = vunpack.c.l.b16 %v2348
        %v7377 = vunpack.c.l.b16 %v2351
        %v7378 = vpack.c.b16 %v7251, %v7250
        %v7379 = vpack.c.b16 %v7253, %v7252
        %v7380 = vpack.c.b16 %v7255, %v7254
        %v7381 = vpack.c.b16 %v7257, %v7256
        %v7382 = vpack.c.b16 %v7259, %v7258
        %v7383 = vpack.c.b16 %v7261, %v7260
        %v7384 = vpack.c.b16 %v7263, %v7262
        %v7385 = vpack.c.b16 %v7265, %v7264
        %v7386 = vpack.c.b16 %v7267, %v7266
        %v7387 = vpack.c.b16 %v7269, %v7268
        %v7388 = vpack.c.b16 %v7271, %v7270
        %v7389 = vpack.c.b16 %v7273, %v7272
        %v7390 = vpack.c.b16 %v7275, %v7274
        %v7391 = vpack.c.b16 %v7277, %v7276
        %v7392 = vpack.c.b16 %v7279, %v7278
        %v7393 = vpack.c.b16 %v7281, %v7280
        %v7394 = vpack.c.b16 %v7283, %v7282
        %v7395 = vpack.c.b16 %v7285, %v7284
        %v7396 = vpack.c.b16 %v7287, %v7286
        %v7397 = vpack.c.b16 %v7289, %v7288
        %v7398 = vpack.c.b16 %v7291, %v7290
        %v7399 = vpack.c.b16 %v7293, %v7292
        %v7400 = vpack.c.b16 %v7295, %v7294
        %v7401 = vpack.c.b16 %v7297, %v7296
        %v7402 = vpack.c.b16 %v7299, %v7298
        %v7403 = vpack.c.b16 %v7301, %v7300
        %v7404 = vpack.c.b16 %v7303, %v7302
        %v7405 = vpack.c.b16 %v7305, %v7304
        %v7406 = vpack.c.b16 %v7307, %v7306
        %v7407 = vpack.c.b16 %v7309, %v7308
        %v7408 = vpack.c.b16 %v7311, %v7310
        %v7409 = vpack.c.b16 %v7313, %v7312
        %v7410 = vpack.c.b16 %v7315, %v7314
        %v7411 = vpack.c.b16 %v7317, %v7316
        %v7412 = vpack.c.b16 %v7319, %v7318
        %v7413 = vpack.c.b16 %v7321, %v7320
        %v7414 = vpack.c.b16 %v7323, %v7322
        %v7415 = vpack.c.b16 %v7325, %v7324
        %v7416 = vpack.c.b16 %v7327, %v7326
        %v7417 = vpack.c.b16 %v7329, %v7328
        %v7418 = vpack.c.b16 %v7331, %v7330
        %v7419 = vpack.c.b16 %v7333, %v7332
        %v7420 = vpack.c.b16 %v7335, %v7334
        %v7421 = vpack.c.b16 %v7337, %v7336
        %v7422 = vpack.c.b16 %v7339, %v7338
        %v7423 = vpack.c.b16 %v7341, %v7340
        %v7424 = vpack.c.b16 %v7343, %v7342
        %v7425 = vpack.c.b16 %v7345, %v7344
        %v7426 = vpack.c.b16 %v7347, %v7346
        %v7427 = vpack.c.b16 %v7349, %v7348
        %v7428 = vpack.c.b16 %v7351, %v7350
        %v7429 = vpack.c.b16 %v7353, %v7352
        %v7430 = vpack.c.b16 %v7355, %v7354
        %v7431 = vpack.c.b16 %v7357, %v7356
        %v7432 = vpack.c.b16 %v7359, %v7358
        %v7433 = vpack.c.b16 %v7361, %v7360
        %v7434 = vpack.c.b16 %v7363, %v7362
        %v7435 = vpack.c.b16 %v7365, %v7364
        %v7436 = vpack.c.b16 %v7367, %v7366
        %v7437 = vpack.c.b16 %v7369, %v7368
        %v7438 = vpack.c.b16 %v7371, %v7370
        %v7439 = vpack.c.b16 %v7373, %v7372
        %v7440 = vpack.c.b16 %v7375, %v7374
        %v7441 = vpack.c.b16 %v7377, %v7376
        %v7538 = vunpack.c.l.b16 %v2353
        %v7539 = vunpack.c.l.b16 %v2354
        %v7540 = vunpack.c.l.b16 %v2355
        %v7541 = vunpack.c.l.b16 %v2356
        %v7542 = vunpack.c.l.b16 %v2357
        %v7543 = vunpack.c.l.b16 %v2358
        %v7544 = vunpack.c.l.b16 %v2359
        %v7545 = vunpack.c.l.b16 %v2360
        %v7546 = vunpack.c.l.b16 %v2361
        %v7547 = vunpack.c.l.b16 %v2362
        %v7548 = vunpack.c.l.b16 %v2363
        %v7549 = vunpack.c.l.b16 %v2364
        %v7550 = vunpack.c.l.b16 %v2365
        %v7551 = vunpack.c.l.b16 %v2366
        %v7552 = vunpack.c.l.b16 %v2367
        %v7553 = vunpack.c.l.b16 %v2368
        %v7554 = vunpack.c.l.b16 %v2369
        %v7555 = vunpack.c.l.b16 %v2370
        %v7556 = vunpack.c.l.b16 %v2371
        %v7557 = vunpack.c.l.b16 %v2372
        %v7558 = vunpack.c.l.b16 %v2373
        %v7559 = vunpack.c.l.b16 %v2374
        %v7560 = vunpack.c.l.b16 %v2375
        %v7561 = vunpack.c.l.b16 %v2376
        %v7562 = vunpack.c.l.b16 %v2377
        %v7563 = vunpack.c.l.b16 %v2378
        %v7564 = vunpack.c.l.b16 %v2379
        %v7565 = vunpack.c.l.b16 %v2380
        %v7566 = vunpack.c.l.b16 %v2381
        %v7567 = vunpack.c.l.b16 %v2382
        %v7568 = vunpack.c.l.b16 %v2383
        %v7569 = vunpack.c.l.b16 %v2384
        %v7570 = vunpack.c.l.b16 %v2385
        %v7571 = vunpack.c.l.b16 %v2386
        %v7572 = vunpack.c.l.b16 %v2387
        %v7573 = vunpack.c.l.b16 %v2388
        %v7574 = vunpack.c.l.b16 %v2389
        %v7575 = vunpack.c.l.b16 %v2390
        %v7576 = vunpack.c.l.b16 %v2391
        %v7577 = vunpack.c.l.b16 %v2392
        %v7578 = vunpack.c.l.b16 %v2393
        %v7579 = vunpack.c.l.b16 %v2394
        %v7580 = vunpack.c.l.b16 %v2395
        %v7581 = vunpack.c.l.b16 %v2396
        %v7582 = vunpack.c.l.b16 %v2397
        %v7583 = vunpack.c.l.b16 %v2398
        %v7584 = vunpack.c.l.b16 %v2399
        %v7585 = vunpack.c.l.b16 %v2400
        %v7586 = vunpack.c.l.b16 %v2401
        %v7587 = vunpack.c.l.b16 %v2402
        %v7588 = vunpack.c.l.b16 %v2403
        %v7589 = vunpack.c.l.b16 %v2404
        %v7590 = vunpack.c.l.b16 %v2405
        %v7591 = vunpack.c.l.b16 %v2406
        %v7592 = vunpack.c.l.b16 %v2407
        %v7593 = vunpack.c.l.b16 %v2408
        %v7594 = vunpack.c.l.b16 %v2409
        %v7595 = vunpack.c.l.b16 %v2410
        %v7596 = vunpack.c.l.b16 %v2411
        %v7597 = vunpack.c.l.b16 %v2412
        %v7598 = vunpack.c.l.b16 %v2413
        %v7599 = vunpack.c.l.b16 %v2414
        %v7600 = vunpack.c.l.b16 %v2415
        %v7601 = vunpack.c.l.b16 %v2416
        %v7602 = vunpack.c.l.b16 %v2417
        %v7603 = vunpack.c.l.b16 %v2418
        %v7604 = vunpack.c.l.b16 %v2419
        %v7605 = vunpack.c.l.b16 %v2420
        %v7606 = vunpack.c.l.b16 %v2421
        %v7607 = vunpack.c.l.b16 %v2422
        %v7608 = vunpack.c.l.b16 %v2423
        %v7609 = vunpack.c.l.b16 %v2424
        %v7610 = vunpack.c.l.b16 %v2425
        %v7611 = vunpack.c.l.b16 %v2426
        %v7612 = vunpack.c.l.b16 %v2427
        %v7613 = vunpack.c.l.b16 %v2428
        %v7614 = vunpack.c.l.b16 %v2429
        %v7615 = vunpack.c.l.b16 %v2430
        %v7616 = vunpack.c.l.b16 %v2431
        %v7617 = vunpack.c.l.b16 %v2432
        %v7618 = vunpack.c.l.b16 %v2433
        %v7619 = vunpack.c.l.b16 %v2434
        %v7620 = vunpack.c.l.b16 %v2435
        %v7621 = vunpack.c.l.b16 %v2436
        %v7622 = vunpack.c.l.b16 %v2437
        %v7623 = vunpack.c.l.b16 %v2438
        %v7624 = vunpack.c.l.b16 %v2439
        %v7625 = vunpack.c.l.b16 %v2440
        %v7626 = vunpack.c.l.b16 %v2441
        %v7627 = vunpack.c.l.b16 %v2442
        %v7628 = vunpack.c.l.b16 %v2443
        %v7629 = vunpack.c.l.b16 %v2444
        %v7630 = vunpack.c.l.b16 %v2445
        %v7631 = vunpack.c.l.b16 %v2446
        %v7632 = vunpack.c.l.b16 %v2447
        %v7633 = vunpack.c.l.b16 %v2448
        %v7634 = vunpack.c.l.b16 %v2449
        %v7635 = vunpack.c.l.b16 %v2450
        %v7636 = vunpack.c.l.b16 %v2451
        %v7637 = vunpack.c.l.b16 %v2452
        %v7638 = vunpack.c.l.b16 %v2453
        %v7639 = vunpack.c.l.b16 %v2454
        %v7640 = vunpack.c.l.b16 %v2455
        %v7641 = vunpack.c.l.b16 %v2456
        %v7642 = vunpack.c.l.b16 %v2457
        %v7643 = vunpack.c.l.b16 %v2458
        %v7644 = vunpack.c.l.b16 %v2459
        %v7645 = vunpack.c.l.b16 %v2460
        %v7646 = vunpack.c.l.b16 %v2461
        %v7647 = vunpack.c.l.b16 %v2462
        %v7648 = vunpack.c.l.b16 %v2463
        %v7649 = vunpack.c.l.b16 %v2464
        %v7650 = vunpack.c.l.b16 %v2465
        %v7651 = vunpack.c.l.b16 %v2466
        %v7652 = vunpack.c.l.b16 %v2467
        %v7653 = vunpack.c.l.b16 %v2468
        %v7654 = vunpack.c.l.b16 %v2469
        %v7655 = vunpack.c.l.b16 %v2470
        %v7656 = vunpack.c.l.b16 %v2471
        %v7657 = vunpack.c.l.b16 %v2472
        %v7658 = vunpack.c.l.b16 %v2473
        %v7659 = vunpack.c.l.b16 %v2474
        %v7660 = vunpack.c.l.b16 %v2475
        %v7661 = vunpack.c.l.b16 %v2476
        %v7662 = vunpack.c.l.b16 %v2477
        %v7663 = vunpack.c.l.b16 %v2478
        %v7664 = vunpack.c.l.b16 %v2479
        %v7665 = vunpack.c.l.b16 %v2480
        %v7666 = vpack.c.b16 %v7539, %v7538
        %v7667 = vpack.c.b16 %v7541, %v7540
        %v7668 = vpack.c.b16 %v7543, %v7542
        %v7669 = vpack.c.b16 %v7545, %v7544
        %v7670 = vpack.c.b16 %v7547, %v7546
        %v7671 = vpack.c.b16 %v7549, %v7548
        %v7672 = vpack.c.b16 %v7551, %v7550
        %v7673 = vpack.c.b16 %v7553, %v7552
        %v7674 = vpack.c.b16 %v7555, %v7554
        %v7675 = vpack.c.b16 %v7557, %v7556
        %v7676 = vpack.c.b16 %v7559, %v7558
        %v7677 = vpack.c.b16 %v7561, %v7560
        %v7678 = vpack.c.b16 %v7563, %v7562
        %v7679 = vpack.c.b16 %v7565, %v7564
        %v7680 = vpack.c.b16 %v7567, %v7566
        %v7681 = vpack.c.b16 %v7569, %v7568
        %v7682 = vpack.c.b16 %v7571, %v7570
        %v7683 = vpack.c.b16 %v7573, %v7572
        %v7684 = vpack.c.b16 %v7575, %v7574
        %v7685 = vpack.c.b16 %v7577, %v7576
        %v7686 = vpack.c.b16 %v7579, %v7578
        %v7687 = vpack.c.b16 %v7581, %v7580
        %v7688 = vpack.c.b16 %v7583, %v7582
        %v7689 = vpack.c.b16 %v7585, %v7584
        %v7690 = vpack.c.b16 %v7587, %v7586
        %v7691 = vpack.c.b16 %v7589, %v7588
        %v7692 = vpack.c.b16 %v7591, %v7590
        %v7693 = vpack.c.b16 %v7593, %v7592
        %v7694 = vpack.c.b16 %v7595, %v7594
        %v7695 = vpack.c.b16 %v7597, %v7596
        %v7696 = vpack.c.b16 %v7599, %v7598
        %v7697 = vpack.c.b16 %v7601, %v7600
        %v7698 = vpack.c.b16 %v7603, %v7602
        %v7699 = vpack.c.b16 %v7605, %v7604
        %v7700 = vpack.c.b16 %v7607, %v7606
        %v7701 = vpack.c.b16 %v7609, %v7608
        %v7702 = vpack.c.b16 %v7611, %v7610
        %v7703 = vpack.c.b16 %v7613, %v7612
        %v7704 = vpack.c.b16 %v7615, %v7614
        %v7705 = vpack.c.b16 %v7617, %v7616
        %v7706 = vpack.c.b16 %v7619, %v7618
        %v7707 = vpack.c.b16 %v7621, %v7620
        %v7708 = vpack.c.b16 %v7623, %v7622
        %v7709 = vpack.c.b16 %v7625, %v7624
        %v7710 = vpack.c.b16 %v7627, %v7626
        %v7711 = vpack.c.b16 %v7629, %v7628
        %v7712 = vpack.c.b16 %v7631, %v7630
        %v7713 = vpack.c.b16 %v7633, %v7632
        %v7714 = vpack.c.b16 %v7635, %v7634
        %v7715 = vpack.c.b16 %v7637, %v7636
        %v7716 = vpack.c.b16 %v7639, %v7638
        %v7717 = vpack.c.b16 %v7641, %v7640
        %v7718 = vpack.c.b16 %v7643, %v7642
        %v7719 = vpack.c.b16 %v7645, %v7644
        %v7720 = vpack.c.b16 %v7647, %v7646
        %v7721 = vpack.c.b16 %v7649, %v7648
        %v7722 = vpack.c.b16 %v7651, %v7650
        %v7723 = vpack.c.b16 %v7653, %v7652
        %v7724 = vpack.c.b16 %v7655, %v7654
        %v7725 = vpack.c.b16 %v7657, %v7656
        %v7726 = vpack.c.b16 %v7659, %v7658
        %v7727 = vpack.c.b16 %v7661, %v7660
        %v7728 = vpack.c.b16 %v7663, %v7662
        %v7729 = vpack.c.b16 %v7665, %v7664
        %v7794 = vunpack.c.l.b16 %v2526
        %v7795 = vunpack.c.l.b16 %v2536
        %v7796 = vunpack.c.l.b16 %v2546
        %v7797 = vunpack.c.l.b16 %v2556
        %v7798 = vunpack.c.l.b16 %v2570
        %v7799 = vunpack.c.l.b16 %v2580
        %v7800 = vunpack.c.l.b16 %v2590
        %v7801 = vunpack.c.l.b16 %v2600
        %v7802 = vunpack.c.l.b16 %v2614
        %v7803 = vunpack.c.l.b16 %v2624
        %v7804 = vunpack.c.l.b16 %v2634
        %v7805 = vunpack.c.l.b16 %v2644
        %v7806 = vunpack.c.l.b16 %v2658
        %v7807 = vunpack.c.l.b16 %v2668
        %v7808 = vunpack.c.l.b16 %v2678
        %v7809 = vunpack.c.l.b16 %v2688
        %v7810 = vunpack.c.l.b16 %v2702
        %v7811 = vunpack.c.l.b16 %v2712
        %v7812 = vunpack.c.l.b16 %v2722
        %v7813 = vunpack.c.l.b16 %v2732
        %v7814 = vunpack.c.l.b16 %v2746
        %v7815 = vunpack.c.l.b16 %v2756
        %v7816 = vunpack.c.l.b16 %v2766
        %v7817 = vunpack.c.l.b16 %v2776
        %v7818 = vunpack.c.l.b16 %v2790
        %v7819 = vunpack.c.l.b16 %v2800
        %v7820 = vunpack.c.l.b16 %v2810
        %v7821 = vunpack.c.l.b16 %v2820
        %v7822 = vunpack.c.l.b16 %v2834
        %v7823 = vunpack.c.l.b16 %v2844
        %v7824 = vunpack.c.l.b16 %v2854
        %v7825 = vunpack.c.l.b16 %v2864
        %v7826 = vunpack.c.l.b16 %v2878
        %v7827 = vunpack.c.l.b16 %v2888
        %v7828 = vunpack.c.l.b16 %v2898
        %v7829 = vunpack.c.l.b16 %v2908
        %v7830 = vunpack.c.l.b16 %v2922
        %v7831 = vunpack.c.l.b16 %v2932
        %v7832 = vunpack.c.l.b16 %v2942
        %v7833 = vunpack.c.l.b16 %v2952
        %v7834 = vunpack.c.l.b16 %v2966
        %v7835 = vunpack.c.l.b16 %v2976
        %v7836 = vunpack.c.l.b16 %v2986
        %v7837 = vunpack.c.l.b16 %v2996
        %v7838 = vunpack.c.l.b16 %v3010
        %v7839 = vunpack.c.l.b16 %v3020
        %v7840 = vunpack.c.l.b16 %v3030
        %v7841 = vunpack.c.l.b16 %v3040
        %v7842 = vunpack.c.l.b16 %v3054
        %v7843 = vunpack.c.l.b16 %v3064
        %v7844 = vunpack.c.l.b16 %v3074
        %v7845 = vunpack.c.l.b16 %v3084
        %v7846 = vunpack.c.l.b16 %v3098
        %v7847 = vunpack.c.l.b16 %v3108
        %v7848 = vunpack.c.l.b16 %v3118
        %v7849 = vunpack.c.l.b16 %v3128
        %v7850 = vunpack.c.l.b16 %v3142
        %v7851 = vunpack.c.l.b16 %v3152
        %v7852 = vunpack.c.l.b16 %v3162
        %v7853 = vunpack.c.l.b16 %v3172
        %v7854 = vunpack.c.l.b16 %v3186
        %v7855 = vunpack.c.l.b16 %v3196
        %v7856 = vunpack.c.l.b16 %v3206
        %v7857 = vunpack.c.l.b16 %v3216
        %v7858 = vunpack.c.l.b16 %v3230
        %v7859 = vunpack.c.l.b16 %v3240
        %v7860 = vunpack.c.l.b16 %v3250
        %v7861 = vunpack.c.l.b16 %v3260
        %v7862 = vunpack.c.l.b16 %v3274
        %v7863 = vunpack.c.l.b16 %v3284
        %v7864 = vunpack.c.l.b16 %v3294
        %v7865 = vunpack.c.l.b16 %v3304
        %v7866 = vunpack.c.l.b16 %v3318
        %v7867 = vunpack.c.l.b16 %v3328
        %v7868 = vunpack.c.l.b16 %v3338
        %v7869 = vunpack.c.l.b16 %v3348
        %v7870 = vunpack.c.l.b16 %v3362
        %v7871 = vunpack.c.l.b16 %v3372
        %v7872 = vunpack.c.l.b16 %v3382
        %v7873 = vunpack.c.l.b16 %v3392
        %v7874 = vunpack.c.l.b16 %v3406
        %v7875 = vunpack.c.l.b16 %v3416
        %v7876 = vunpack.c.l.b16 %v3426
        %v7877 = vunpack.c.l.b16 %v3436
        %v7878 = vunpack.c.l.b16 %v3450
        %v7879 = vunpack.c.l.b16 %v3460
        %v7880 = vunpack.c.l.b16 %v3470
        %v7881 = vunpack.c.l.b16 %v3480
        %v7882 = vunpack.c.l.b16 %v3494
        %v7883 = vunpack.c.l.b16 %v3504
        %v7884 = vunpack.c.l.b16 %v3514
        %v7885 = vunpack.c.l.b16 %v3524
        %v7886 = vunpack.c.l.b16 %v3538
        %v7887 = vunpack.c.l.b16 %v3548
        %v7888 = vunpack.c.l.b16 %v3558
        %v7889 = vunpack.c.l.b16 %v3568
        %v7890 = vunpack.c.l.b16 %v3582
        %v7891 = vunpack.c.l.b16 %v3592
        %v7892 = vunpack.c.l.b16 %v3602
        %v7893 = vunpack.c.l.b16 %v3612
        %v7894 = vunpack.c.l.b16 %v3626
        %v7895 = vunpack.c.l.b16 %v3636
        %v7896 = vunpack.c.l.b16 %v3646
        %v7897 = vunpack.c.l.b16 %v3656
        %v7898 = vunpack.c.l.b16 %v3670
        %v7899 = vunpack.c.l.b16 %v3680
        %v7900 = vunpack.c.l.b16 %v3690
        %v7901 = vunpack.c.l.b16 %v3700
        %v7902 = vunpack.c.l.b16 %v3714
        %v7903 = vunpack.c.l.b16 %v3724
        %v7904 = vunpack.c.l.b16 %v3734
        %v7905 = vunpack.c.l.b16 %v3744
        %v7906 = vunpack.c.l.b16 %v3758
        %v7907 = vunpack.c.l.b16 %v3768
        %v7908 = vunpack.c.l.b16 %v3778
        %v7909 = vunpack.c.l.b16 %v3788
        %v7910 = vunpack.c.l.b16 %v3802
        %v7911 = vunpack.c.l.b16 %v3812
        %v7912 = vunpack.c.l.b16 %v3822
        %v7913 = vunpack.c.l.b16 %v3832
        %v7914 = vunpack.c.l.b16 %v3846
        %v7915 = vunpack.c.l.b16 %v3856
        %v7916 = vunpack.c.l.b16 %v3866
        %v7917 = vunpack.c.l.b16 %v3876
        %v7918 = vunpack.c.l.b16 %v3890
        %v7919 = vunpack.c.l.b16 %v3900
        %v7920 = vunpack.c.l.b16 %v3910
        %v7921 = vunpack.c.l.b16 %v3920
        %v7922 = vpack.c.b16 %v7795, %v7794
        %v7923 = vpack.c.b16 %v7797, %v7796
        %v7924 = vpack.c.b16 %v7799, %v7798
        %v7925 = vpack.c.b16 %v7801, %v7800
        %v7926 = vpack.c.b16 %v7803, %v7802
        %v7927 = vpack.c.b16 %v7805, %v7804
        %v7928 = vpack.c.b16 %v7807, %v7806
        %v7929 = vpack.c.b16 %v7809, %v7808
        %v7930 = vpack.c.b16 %v7811, %v7810
        %v7931 = vpack.c.b16 %v7813, %v7812
        %v7932 = vpack.c.b16 %v7815, %v7814
        %v7933 = vpack.c.b16 %v7817, %v7816
        %v7934 = vpack.c.b16 %v7819, %v7818
        %v7935 = vpack.c.b16 %v7821, %v7820
        %v7936 = vpack.c.b16 %v7823, %v7822
        %v7937 = vpack.c.b16 %v7825, %v7824
        %v7938 = vpack.c.b16 %v7827, %v7826
        %v7939 = vpack.c.b16 %v7829, %v7828
        %v7940 = vpack.c.b16 %v7831, %v7830
        %v7941 = vpack.c.b16 %v7833, %v7832
        %v7942 = vpack.c.b16 %v7835, %v7834
        %v7943 = vpack.c.b16 %v7837, %v7836
        %v7944 = vpack.c.b16 %v7839, %v7838
        %v7945 = vpack.c.b16 %v7841, %v7840
        %v7946 = vpack.c.b16 %v7843, %v7842
        %v7947 = vpack.c.b16 %v7845, %v7844
        %v7948 = vpack.c.b16 %v7847, %v7846
        %v7949 = vpack.c.b16 %v7849, %v7848
        %v7950 = vpack.c.b16 %v7851, %v7850
        %v7951 = vpack.c.b16 %v7853, %v7852
        %v7952 = vpack.c.b16 %v7855, %v7854
        %v7953 = vpack.c.b16 %v7857, %v7856
        %v7954 = vpack.c.b16 %v7859, %v7858
        %v7955 = vpack.c.b16 %v7861, %v7860
        %v7956 = vpack.c.b16 %v7863, %v7862
        %v7957 = vpack.c.b16 %v7865, %v7864
        %v7958 = vpack.c.b16 %v7867, %v7866
        %v7959 = vpack.c.b16 %v7869, %v7868
        %v7960 = vpack.c.b16 %v7871, %v7870
        %v7961 = vpack.c.b16 %v7873, %v7872
        %v7962 = vpack.c.b16 %v7875, %v7874
        %v7963 = vpack.c.b16 %v7877, %v7876
        %v7964 = vpack.c.b16 %v7879, %v7878
        %v7965 = vpack.c.b16 %v7881, %v7880
        %v7966 = vpack.c.b16 %v7883, %v7882
        %v7967 = vpack.c.b16 %v7885, %v7884
        %v7968 = vpack.c.b16 %v7887, %v7886
        %v7969 = vpack.c.b16 %v7889, %v7888
        %v7970 = vpack.c.b16 %v7891, %v7890
        %v7971 = vpack.c.b16 %v7893, %v7892
        %v7972 = vpack.c.b16 %v7895, %v7894
        %v7973 = vpack.c.b16 %v7897, %v7896
        %v7974 = vpack.c.b16 %v7899, %v7898
        %v7975 = vpack.c.b16 %v7901, %v7900
        %v7976 = vpack.c.b16 %v7903, %v7902
        %v7977 = vpack.c.b16 %v7905, %v7904
        %v7978 = vpack.c.b16 %v7907, %v7906
        %v7979 = vpack.c.b16 %v7909, %v7908
        %v7980 = vpack.c.b16 %v7911, %v7910
        %v7981 = vpack.c.b16 %v7913, %v7912
        %v7982 = vpack.c.b16 %v7915, %v7914
        %v7983 = vpack.c.b16 %v7917, %v7916
        %v7984 = vpack.c.b16 %v7919, %v7918
        %v7985 = vpack.c.b16 %v7921, %v7920
        %v8050 = vunpack.c.l.b16 %v4116
        %v8051 = vunpack.c.l.b16 %v4119
        %v8052 = vunpack.c.l.b16 %v4122
        %v8053 = vunpack.c.l.b16 %v4125
        %v8054 = vunpack.c.l.b16 %v4129
        %v8055 = vunpack.c.l.b16 %v4132
        %v8056 = vunpack.c.l.b16 %v4135
        %v8057 = vunpack.c.l.b16 %v4138
        %v8058 = vunpack.c.l.b16 %v4142
        %v8059 = vunpack.c.l.b16 %v4145
        %v8060 = vunpack.c.l.b16 %v4148
        %v8061 = vunpack.c.l.b16 %v4151
        %v8062 = vunpack.c.l.b16 %v4155
        %v8063 = vunpack.c.l.b16 %v4158
        %v8064 = vunpack.c.l.b16 %v4161
        %v8065 = vunpack.c.l.b16 %v4164
        %v8066 = vunpack.c.l.b16 %v4168
        %v8067 = vunpack.c.l.b16 %v4171
        %v8068 = vunpack.c.l.b16 %v4174
        %v8069 = vunpack.c.l.b16 %v4177
        %v8070 = vunpack.c.l.b16 %v4181
        %v8071 = vunpack.c.l.b16 %v4184
        %v8072 = vunpack.c.l.b16 %v4187
        %v8073 = vunpack.c.l.b16 %v4190
        %v8074 = vunpack.c.l.b16 %v4194
        %v8075 = vunpack.c.l.b16 %v4197
        %v8076 = vunpack.c.l.b16 %v4200
        %v8077 = vunpack.c.l.b16 %v4203
        %v8078 = vunpack.c.l.b16 %v4207
        %v8079 = vunpack.c.l.b16 %v4210
        %v8080 = vunpack.c.l.b16 %v4213
        %v8081 = vunpack.c.l.b16 %v4216
        %v8082 = vunpack.c.l.b16 %v4220
        %v8083 = vunpack.c.l.b16 %v4223
        %v8084 = vunpack.c.l.b16 %v4226
        %v8085 = vunpack.c.l.b16 %v4229
        %v8086 = vunpack.c.l.b16 %v4233
        %v8087 = vunpack.c.l.b16 %v4236
        %v8088 = vunpack.c.l.b16 %v4239
        %v8089 = vunpack.c.l.b16 %v4242
        %v8090 = vunpack.c.l.b16 %v4246
        %v8091 = vunpack.c.l.b16 %v4249
        %v8092 = vunpack.c.l.b16 %v4252
        %v8093 = vunpack.c.l.b16 %v4255
        %v8094 = vunpack.c.l.b16 %v4259
        %v8095 = vunpack.c.l.b16 %v4262
        %v8096 = vunpack.c.l.b16 %v4265
        %v8097 = vunpack.c.l.b16 %v4268
        %v8098 = vunpack.c.l.b16 %v4272
        %v8099 = vunpack.c.l.b16 %v4275
        %v8100 = vunpack.c.l.b16 %v4278
        %v8101 = vunpack.c.l.b16 %v4281
        %v8102 = vunpack.c.l.b16 %v4285
        %v8103 = vunpack.c.l.b16 %v4288
        %v8104 = vunpack.c.l.b16 %v4291
        %v8105 = vunpack.c.l.b16 %v4294
        %v8106 = vunpack.c.l.b16 %v4298
        %v8107 = vunpack.c.l.b16 %v4301
        %v8108 = vunpack.c.l.b16 %v4304
        %v8109 = vunpack.c.l.b16 %v4307
        %v8110 = vunpack.c.l.b16 %v4311
        %v8111 = vunpack.c.l.b16 %v4314
        %v8112 = vunpack.c.l.b16 %v4317
        %v8113 = vunpack.c.l.b16 %v4320
        %v8114 = vunpack.c.l.b16 %v4324
        %v8115 = vunpack.c.l.b16 %v4327
        %v8116 = vunpack.c.l.b16 %v4330
        %v8117 = vunpack.c.l.b16 %v4333
        %v8118 = vunpack.c.l.b16 %v4337
        %v8119 = vunpack.c.l.b16 %v4340
        %v8120 = vunpack.c.l.b16 %v4343
        %v8121 = vunpack.c.l.b16 %v4346
        %v8122 = vunpack.c.l.b16 %v4350
        %v8123 = vunpack.c.l.b16 %v4353
        %v8124 = vunpack.c.l.b16 %v4356
        %v8125 = vunpack.c.l.b16 %v4359
        %v8126 = vunpack.c.l.b16 %v4363
        %v8127 = vunpack.c.l.b16 %v4366
        %v8128 = vunpack.c.l.b16 %v4369
        %v8129 = vunpack.c.l.b16 %v4372
        %v8130 = vunpack.c.l.b16 %v4376
        %v8131 = vunpack.c.l.b16 %v4379
        %v8132 = vunpack.c.l.b16 %v4382
        %v8133 = vunpack.c.l.b16 %v4385
        %v8134 = vunpack.c.l.b16 %v4389
        %v8135 = vunpack.c.l.b16 %v4392
        %v8136 = vunpack.c.l.b16 %v4395
        %v8137 = vunpack.c.l.b16 %v4398
        %v8138 = vunpack.c.l.b16 %v4402
        %v8139 = vunpack.c.l.b16 %v4405
        %v8140 = vunpack.c.l.b16 %v4408
        %v8141 = vunpack.c.l.b16 %v4411
        %v8142 = vunpack.c.l.b16 %v4415
        %v8143 = vunpack.c.l.b16 %v4418
        %v8144 = vunpack.c.l.b16 %v4421
        %v8145 = vunpack.c.l.b16 %v4424
        %v8146 = vunpack.c.l.b16 %v4428
        %v8147 = vunpack.c.l.b16 %v4431
        %v8148 = vunpack.c.l.b16 %v4434
        %v8149 = vunpack.c.l.b16 %v4437
        %v8150 = vunpack.c.l.b16 %v4441
        %v8151 = vunpack.c.l.b16 %v4444
        %v8152 = vunpack.c.l.b16 %v4447
        %v8153 = vunpack.c.l.b16 %v4450
        %v8154 = vunpack.c.l.b16 %v4454
        %v8155 = vunpack.c.l.b16 %v4457
        %v8156 = vunpack.c.l.b16 %v4460
        %v8157 = vunpack.c.l.b16 %v4463
        %v8158 = vunpack.c.l.b16 %v4467
        %v8159 = vunpack.c.l.b16 %v4470
        %v8160 = vunpack.c.l.b16 %v4473
        %v8161 = vunpack.c.l.b16 %v4476
        %v8162 = vunpack.c.l.b16 %v4480
        %v8163 = vunpack.c.l.b16 %v4483
        %v8164 = vunpack.c.l.b16 %v4486
        %v8165 = vunpack.c.l.b16 %v4489
        %v8166 = vunpack.c.l.b16 %v4493
        %v8167 = vunpack.c.l.b16 %v4496
        %v8168 = vunpack.c.l.b16 %v4499
        %v8169 = vunpack.c.l.b16 %v4502
        %v8170 = vunpack.c.l.b16 %v4506
        %v8171 = vunpack.c.l.b16 %v4509
        %v8172 = vunpack.c.l.b16 %v4512
        %v8173 = vunpack.c.l.b16 %v4515
        %v8174 = vunpack.c.l.b16 %v4519
        %v8175 = vunpack.c.l.b16 %v4522
        %v8176 = vunpack.c.l.b16 %v4525
        %v8177 = vunpack.c.l.b16 %v4528
        %v8178 = vpack.c.b16 %v8051, %v8050
        %v8179 = vpack.c.b16 %v8053, %v8052
        %v8180 = vpack.c.b16 %v8055, %v8054
        %v8181 = vpack.c.b16 %v8057, %v8056
        %v8182 = vpack.c.b16 %v8059, %v8058
        %v8183 = vpack.c.b16 %v8061, %v8060
        %v8184 = vpack.c.b16 %v8063, %v8062
        %v8185 = vpack.c.b16 %v8065, %v8064
        %v8186 = vpack.c.b16 %v8067, %v8066
        %v8187 = vpack.c.b16 %v8069, %v8068
        %v8188 = vpack.c.b16 %v8071, %v8070
        %v8189 = vpack.c.b16 %v8073, %v8072
        %v8190 = vpack.c.b16 %v8075, %v8074
        %v8191 = vpack.c.b16 %v8077, %v8076
        %v8192 = vpack.c.b16 %v8079, %v8078
        %v8193 = vpack.c.b16 %v8081, %v8080
        %v8194 = vpack.c.b16 %v8083, %v8082
        %v8195 = vpack.c.b16 %v8085, %v8084
        %v8196 = vpack.c.b16 %v8087, %v8086
        %v8197 = vpack.c.b16 %v8089, %v8088
        %v8198 = vpack.c.b16 %v8091, %v8090
        %v8199 = vpack.c.b16 %v8093, %v8092
        %v8200 = vpack.c.b16 %v8095, %v8094
        %v8201 = vpack.c.b16 %v8097, %v8096
        %v8202 = vpack.c.b16 %v8099, %v8098
        %v8203 = vpack.c.b16 %v8101, %v8100
        %v8204 = vpack.c.b16 %v8103, %v8102
        %v8205 = vpack.c.b16 %v8105, %v8104
        %v8206 = vpack.c.b16 %v8107, %v8106
        %v8207 = vpack.c.b16 %v8109, %v8108
        %v8208 = vpack.c.b16 %v8111, %v8110
        %v8209 = vpack.c.b16 %v8113, %v8112
        %v8210 = vpack.c.b16 %v8115, %v8114
        %v8211 = vpack.c.b16 %v8117, %v8116
        %v8212 = vpack.c.b16 %v8119, %v8118
        %v8213 = vpack.c.b16 %v8121, %v8120
        %v8214 = vpack.c.b16 %v8123, %v8122
        %v8215 = vpack.c.b16 %v8125, %v8124
        %v8216 = vpack.c.b16 %v8127, %v8126
        %v8217 = vpack.c.b16 %v8129, %v8128
        %v8218 = vpack.c.b16 %v8131, %v8130
        %v8219 = vpack.c.b16 %v8133, %v8132
        %v8220 = vpack.c.b16 %v8135, %v8134
        %v8221 = vpack.c.b16 %v8137, %v8136
        %v8222 = vpack.c.b16 %v8139, %v8138
        %v8223 = vpack.c.b16 %v8141, %v8140
        %v8224 = vpack.c.b16 %v8143, %v8142
        %v8225 = vpack.c.b16 %v8145, %v8144
        %v8226 = vpack.c.b16 %v8147, %v8146
        %v8227 = vpack.c.b16 %v8149, %v8148
        %v8228 = vpack.c.b16 %v8151, %v8150
        %v8229 = vpack.c.b16 %v8153, %v8152
        %v8230 = vpack.c.b16 %v8155, %v8154
        %v8231 = vpack.c.b16 %v8157, %v8156
        %v8232 = vpack.c.b16 %v8159, %v8158
        %v8233 = vpack.c.b16 %v8161, %v8160
        %v8234 = vpack.c.b16 %v8163, %v8162
        %v8235 = vpack.c.b16 %v8165, %v8164
        %v8236 = vpack.c.b16 %v8167, %v8166
        %v8237 = vpack.c.b16 %v8169, %v8168
        %v8238 = vpack.c.b16 %v8171, %v8170
        %v8239 = vpack.c.b16 %v8173, %v8172
        %v8240 = vpack.c.b16 %v8175, %v8174
        %v8241 = vpack.c.b16 %v8177, %v8176
        %v8338 = vunpack.c.l.b16 %v4530
        %v8339 = vunpack.c.l.b16 %v4531
        %v8340 = vunpack.c.l.b16 %v4532
        %v8341 = vunpack.c.l.b16 %v4533
        %v8342 = vunpack.c.l.b16 %v4534
        %v8343 = vunpack.c.l.b16 %v4535
        %v8344 = vunpack.c.l.b16 %v4536
        %v8345 = vunpack.c.l.b16 %v4537
        %v8346 = vunpack.c.l.b16 %v4538
        %v8347 = vunpack.c.l.b16 %v4539
        %v8348 = vunpack.c.l.b16 %v4540
        %v8349 = vunpack.c.l.b16 %v4541
        %v8350 = vunpack.c.l.b16 %v4542
        %v8351 = vunpack.c.l.b16 %v4543
        %v8352 = vunpack.c.l.b16 %v4544
        %v8353 = vunpack.c.l.b16 %v4545
        %v8354 = vunpack.c.l.b16 %v4546
        %v8355 = vunpack.c.l.b16 %v4547
        %v8356 = vunpack.c.l.b16 %v4548
        %v8357 = vunpack.c.l.b16 %v4549
        %v8358 = vunpack.c.l.b16 %v4550
        %v8359 = vunpack.c.l.b16 %v4551
        %v8360 = vunpack.c.l.b16 %v4552
        %v8361 = vunpack.c.l.b16 %v4553
        %v8362 = vunpack.c.l.b16 %v4554
        %v8363 = vunpack.c.l.b16 %v4555
        %v8364 = vunpack.c.l.b16 %v4556
        %v8365 = vunpack.c.l.b16 %v4557
        %v8366 = vunpack.c.l.b16 %v4558
        %v8367 = vunpack.c.l.b16 %v4559
        %v8368 = vunpack.c.l.b16 %v4560
        %v8369 = vunpack.c.l.b16 %v4561
        %v8370 = vunpack.c.l.b16 %v4562
        %v8371 = vunpack.c.l.b16 %v4563
        %v8372 = vunpack.c.l.b16 %v4564
        %v8373 = vunpack.c.l.b16 %v4565
        %v8374 = vunpack.c.l.b16 %v4566
        %v8375 = vunpack.c.l.b16 %v4567
        %v8376 = vunpack.c.l.b16 %v4568
        %v8377 = vunpack.c.l.b16 %v4569
        %v8378 = vunpack.c.l.b16 %v4570
        %v8379 = vunpack.c.l.b16 %v4571
        %v8380 = vunpack.c.l.b16 %v4572
        %v8381 = vunpack.c.l.b16 %v4573
        %v8382 = vunpack.c.l.b16 %v4574
        %v8383 = vunpack.c.l.b16 %v4575
        %v8384 = vunpack.c.l.b16 %v4576
        %v8385 = vunpack.c.l.b16 %v4577
        %v8386 = vunpack.c.l.b16 %v4578
        %v8387 = vunpack.c.l.b16 %v4579
        %v8388 = vunpack.c.l.b16 %v4580
        %v8389 = vunpack.c.l.b16 %v4581
        %v8390 = vunpack.c.l.b16 %v4582
        %v8391 = vunpack.c.l.b16 %v4583
        %v8392 = vunpack.c.l.b16 %v4584
        %v8393 = vunpack.c.l.b16 %v4585
        %v8394 = vunpack.c.l.b16 %v4586
        %v8395 = vunpack.c.l.b16 %v4587
        %v8396 = vunpack.c.l.b16 %v4588
        %v8397 = vunpack.c.l.b16 %v4589
        %v8398 = vunpack.c.l.b16 %v4590
        %v8399 = vunpack.c.l.b16 %v4591
        %v8400 = vunpack.c.l.b16 %v4592
        %v8401 = vunpack.c.l.b16 %v4593
        %v8402 = vunpack.c.l.b16 %v4594
        %v8403 = vunpack.c.l.b16 %v4595
        %v8404 = vunpack.c.l.b16 %v4596
        %v8405 = vunpack.c.l.b16 %v4597
        %v8406 = vunpack.c.l.b16 %v4598
        %v8407 = vunpack.c.l.b16 %v4599
        %v8408 = vunpack.c.l.b16 %v4600
        %v8409 = vunpack.c.l.b16 %v4601
        %v8410 = vunpack.c.l.b16 %v4602
        %v8411 = vunpack.c.l.b16 %v4603
        %v8412 = vunpack.c.l.b16 %v4604
        %v8413 = vunpack.c.l.b16 %v4605
        %v8414 = vunpack.c.l.b16 %v4606
        %v8415 = vunpack.c.l.b16 %v4607
        %v8416 = vunpack.c.l.b16 %v4608
        %v8417 = vunpack.c.l.b16 %v4609
        %v8418 = vunpack.c.l.b16 %v4610
        %v8419 = vunpack.c.l.b16 %v4611
        %v8420 = vunpack.c.l.b16 %v4612
        %v8421 = vunpack.c.l.b16 %v4613
        %v8422 = vunpack.c.l.b16 %v4614
        %v8423 = vunpack.c.l.b16 %v4615
        %v8424 = vunpack.c.l.b16 %v4616
        %v8425 = vunpack.c.l.b16 %v4617
        %v8426 = vunpack.c.l.b16 %v4618
        %v8427 = vunpack.c.l.b16 %v4619
        %v8428 = vunpack.c.l.b16 %v4620
        %v8429 = vunpack.c.l.b16 %v4621
        %v8430 = vunpack.c.l.b16 %v4622
        %v8431 = vunpack.c.l.b16 %v4623
        %v8432 = vunpack.c.l.b16 %v4624
        %v8433 = vunpack.c.l.b16 %v4625
        %v8434 = vunpack.c.l.b16 %v4626
        %v8435 = vunpack.c.l.b16 %v4627
        %v8436 = vunpack.c.l.b16 %v4628
        %v8437 = vunpack.c.l.b16 %v4629
        %v8438 = vunpack.c.l.b16 %v4630
        %v8439 = vunpack.c.l.b16 %v4631
        %v8440 = vunpack.c.l.b16 %v4632
        %v8441 = vunpack.c.l.b16 %v4633
        %v8442 = vunpack.c.l.b16 %v4634
        %v8443 = vunpack.c.l.b16 %v4635
        %v8444 = vunpack.c.l.b16 %v4636
        %v8445 = vunpack.c.l.b16 %v4637
        %v8446 = vunpack.c.l.b16 %v4638
        %v8447 = vunpack.c.l.b16 %v4639
        %v8448 = vunpack.c.l.b16 %v4640
        %v8449 = vunpack.c.l.b16 %v4641
        %v8450 = vunpack.c.l.b16 %v4642
        %v8451 = vunpack.c.l.b16 %v4643
        %v8452 = vunpack.c.l.b16 %v4644
        %v8453 = vunpack.c.l.b16 %v4645
        %v8454 = vunpack.c.l.b16 %v4646
        %v8455 = vunpack.c.l.b16 %v4647
        %v8456 = vunpack.c.l.b16 %v4648
        %v8457 = vunpack.c.l.b16 %v4649
        %v8458 = vunpack.c.l.b16 %v4650
        %v8459 = vunpack.c.l.b16 %v4651
        %v8460 = vunpack.c.l.b16 %v4652
        %v8461 = vunpack.c.l.b16 %v4653
        %v8462 = vunpack.c.l.b16 %v4654
        %v8463 = vunpack.c.l.b16 %v4655
        %v8464 = vunpack.c.l.b16 %v4656
        %v8465 = vunpack.c.l.b16 %v4657
        %v8466 = vpack.c.b16 %v8339, %v8338
        %v8467 = vpack.c.b16 %v8341, %v8340
        %v8468 = vpack.c.b16 %v8343, %v8342
        %v8469 = vpack.c.b16 %v8345, %v8344
        %v8470 = vpack.c.b16 %v8347, %v8346
        %v8471 = vpack.c.b16 %v8349, %v8348
        %v8472 = vpack.c.b16 %v8351, %v8350
        %v8473 = vpack.c.b16 %v8353, %v8352
        %v8474 = vpack.c.b16 %v8355, %v8354
        %v8475 = vpack.c.b16 %v8357, %v8356
        %v8476 = vpack.c.b16 %v8359, %v8358
        %v8477 = vpack.c.b16 %v8361, %v8360
        %v8478 = vpack.c.b16 %v8363, %v8362
        %v8479 = vpack.c.b16 %v8365, %v8364
        %v8480 = vpack.c.b16 %v8367, %v8366
        %v8481 = vpack.c.b16 %v8369, %v8368
        %v8482 = vpack.c.b16 %v8371, %v8370
        %v8483 = vpack.c.b16 %v8373, %v8372
        %v8484 = vpack.c.b16 %v8375, %v8374
        %v8485 = vpack.c.b16 %v8377, %v8376
        %v8486 = vpack.c.b16 %v8379, %v8378
        %v8487 = vpack.c.b16 %v8381, %v8380
        %v8488 = vpack.c.b16 %v8383, %v8382
        %v8489 = vpack.c.b16 %v8385, %v8384
        %v8490 = vpack.c.b16 %v8387, %v8386
        %v8491 = vpack.c.b16 %v8389, %v8388
        %v8492 = vpack.c.b16 %v8391, %v8390
        %v8493 = vpack.c.b16 %v8393, %v8392
        %v8494 = vpack.c.b16 %v8395, %v8394
        %v8495 = vpack.c.b16 %v8397, %v8396
        %v8496 = vpack.c.b16 %v8399, %v8398
        %v8497 = vpack.c.b16 %v8401, %v8400
        %v8498 = vpack.c.b16 %v8403, %v8402
        %v8499 = vpack.c.b16 %v8405, %v8404
        %v8500 = vpack.c.b16 %v8407, %v8406
        %v8501 = vpack.c.b16 %v8409, %v8408
        %v8502 = vpack.c.b16 %v8411, %v8410
        %v8503 = vpack.c.b16 %v8413, %v8412
        %v8504 = vpack.c.b16 %v8415, %v8414
        %v8505 = vpack.c.b16 %v8417, %v8416
        %v8506 = vpack.c.b16 %v8419, %v8418
        %v8507 = vpack.c.b16 %v8421, %v8420
        %v8508 = vpack.c.b16 %v8423, %v8422
        %v8509 = vpack.c.b16 %v8425, %v8424
        %v8510 = vpack.c.b16 %v8427, %v8426
        %v8511 = vpack.c.b16 %v8429, %v8428
        %v8512 = vpack.c.b16 %v8431, %v8430
        %v8513 = vpack.c.b16 %v8433, %v8432
        %v8514 = vpack.c.b16 %v8435, %v8434
        %v8515 = vpack.c.b16 %v8437, %v8436
        %v8516 = vpack.c.b16 %v8439, %v8438
        %v8517 = vpack.c.b16 %v8441, %v8440
        %v8518 = vpack.c.b16 %v8443, %v8442
        %v8519 = vpack.c.b16 %v8445, %v8444
        %v8520 = vpack.c.b16 %v8447, %v8446
        %v8521 = vpack.c.b16 %v8449, %v8448
        %v8522 = vpack.c.b16 %v8451, %v8450
        %v8523 = vpack.c.b16 %v8453, %v8452
        %v8524 = vpack.c.b16 %v8455, %v8454
        %v8525 = vpack.c.b16 %v8457, %v8456
        %v8526 = vpack.c.b16 %v8459, %v8458
        %v8527 = vpack.c.b16 %v8461, %v8460
        %v8528 = vpack.c.b16 %v8463, %v8462
        %v8529 = vpack.c.b16 %v8465, %v8464
        %v8594 = vunpack.c.l.b16 %v4703
        %v8595 = vunpack.c.l.b16 %v4713
        %v8596 = vunpack.c.l.b16 %v4723
        %v8597 = vunpack.c.l.b16 %v4733
        %v8598 = vunpack.c.l.b16 %v4747
        %v8599 = vunpack.c.l.b16 %v4757
        %v8600 = vunpack.c.l.b16 %v4767
        %v8601 = vunpack.c.l.b16 %v4777
        %v8602 = vunpack.c.l.b16 %v4791
        %v8603 = vunpack.c.l.b16 %v4801
        %v8604 = vunpack.c.l.b16 %v4811
        %v8605 = vunpack.c.l.b16 %v4821
        %v8606 = vunpack.c.l.b16 %v4835
        %v8607 = vunpack.c.l.b16 %v4845
        %v8608 = vunpack.c.l.b16 %v4855
        %v8609 = vunpack.c.l.b16 %v4865
        %v8610 = vunpack.c.l.b16 %v4879
        %v8611 = vunpack.c.l.b16 %v4889
        %v8612 = vunpack.c.l.b16 %v4899
        %v8613 = vunpack.c.l.b16 %v4909
        %v8614 = vunpack.c.l.b16 %v4923
        %v8615 = vunpack.c.l.b16 %v4933
        %v8616 = vunpack.c.l.b16 %v4943
        %v8617 = vunpack.c.l.b16 %v4953
        %v8618 = vunpack.c.l.b16 %v4967
        %v8619 = vunpack.c.l.b16 %v4977
        %v8620 = vunpack.c.l.b16 %v4987
        %v8621 = vunpack.c.l.b16 %v4997
        %v8622 = vunpack.c.l.b16 %v5011
        %v8623 = vunpack.c.l.b16 %v5021
        %v8624 = vunpack.c.l.b16 %v5031
        %v8625 = vunpack.c.l.b16 %v5041
        %v8626 = vunpack.c.l.b16 %v5055
        %v8627 = vunpack.c.l.b16 %v5065
        %v8628 = vunpack.c.l.b16 %v5075
        %v8629 = vunpack.c.l.b16 %v5085
        %v8630 = vunpack.c.l.b16 %v5099
        %v8631 = vunpack.c.l.b16 %v5109
        %v8632 = vunpack.c.l.b16 %v5119
        %v8633 = vunpack.c.l.b16 %v5129
        %v8634 = vunpack.c.l.b16 %v5143
        %v8635 = vunpack.c.l.b16 %v5153
        %v8636 = vunpack.c.l.b16 %v5163
        %v8637 = vunpack.c.l.b16 %v5173
        %v8638 = vunpack.c.l.b16 %v5187
        %v8639 = vunpack.c.l.b16 %v5197
        %v8640 = vunpack.c.l.b16 %v5207
        %v8641 = vunpack.c.l.b16 %v5217
        %v8642 = vunpack.c.l.b16 %v5231
        %v8643 = vunpack.c.l.b16 %v5241
        %v8644 = vunpack.c.l.b16 %v5251
        %v8645 = vunpack.c.l.b16 %v5261
        %v8646 = vunpack.c.l.b16 %v5275
        %v8647 = vunpack.c.l.b16 %v5285
        %v8648 = vunpack.c.l.b16 %v5295
        %v8649 = vunpack.c.l.b16 %v5305
        %v8650 = vunpack.c.l.b16 %v5319
        %v8651 = vunpack.c.l.b16 %v5329
        %v8652 = vunpack.c.l.b16 %v5339
        %v8653 = vunpack.c.l.b16 %v5349
        %v8654 = vunpack.c.l.b16 %v5363
        %v8655 = vunpack.c.l.b16 %v5373
        %v8656 = vunpack.c.l.b16 %v5383
        %v8657 = vunpack.c.l.b16 %v5393
        %v8658 = vunpack.c.l.b16 %v5407
        %v8659 = vunpack.c.l.b16 %v5417
        %v8660 = vunpack.c.l.b16 %v5427
        %v8661 = vunpack.c.l.b16 %v5437
        %v8662 = vunpack.c.l.b16 %v5451
        %v8663 = vunpack.c.l.b16 %v5461
        %v8664 = vunpack.c.l.b16 %v5471
        %v8665 = vunpack.c.l.b16 %v5481
        %v8666 = vunpack.c.l.b16 %v5495
        %v8667 = vunpack.c.l.b16 %v5505
        %v8668 = vunpack.c.l.b16 %v5515
        %v8669 = vunpack.c.l.b16 %v5525
        %v8670 = vunpack.c.l.b16 %v5539
        %v8671 = vunpack.c.l.b16 %v5549
        %v8672 = vunpack.c.l.b16 %v5559
        %v8673 = vunpack.c.l.b16 %v5569
        %v8674 = vunpack.c.l.b16 %v5583
        %v8675 = vunpack.c.l.b16 %v5593
        %v8676 = vunpack.c.l.b16 %v5603
        %v8677 = vunpack.c.l.b16 %v5613
        %v8678 = vunpack.c.l.b16 %v5627
        %v8679 = vunpack.c.l.b16 %v5637
        %v8680 = vunpack.c.l.b16 %v5647
        %v8681 = vunpack.c.l.b16 %v5657
        %v8682 = vunpack.c.l.b16 %v5671
        %v8683 = vunpack.c.l.b16 %v5681
        %v8684 = vunpack.c.l.b16 %v5691
        %v8685 = vunpack.c.l.b16 %v5701
        %v8686 = vunpack.c.l.b16 %v5715
        %v8687 = vunpack.c.l.b16 %v5725
        %v8688 = vunpack.c.l.b16 %v5735
        %v8689 = vunpack.c.l.b16 %v5745
        %v8690 = vunpack.c.l.b16 %v5759
        %v8691 = vunpack.c.l.b16 %v5769
        %v8692 = vunpack.c.l.b16 %v5779
        %v8693 = vunpack.c.l.b16 %v5789
        %v8694 = vunpack.c.l.b16 %v5803
        %v8695 = vunpack.c.l.b16 %v5813
        %v8696 = vunpack.c.l.b16 %v5823
        %v8697 = vunpack.c.l.b16 %v5833
        %v8698 = vunpack.c.l.b16 %v5847
        %v8699 = vunpack.c.l.b16 %v5857
        %v8700 = vunpack.c.l.b16 %v5867
        %v8701 = vunpack.c.l.b16 %v5877
        %v8702 = vunpack.c.l.b16 %v5891
        %v8703 = vunpack.c.l.b16 %v5901
        %v8704 = vunpack.c.l.b16 %v5911
        %v8705 = vunpack.c.l.b16 %v5921
        %v8706 = vunpack.c.l.b16 %v5935
        %v8707 = vunpack.c.l.b16 %v5945
        %v8708 = vunpack.c.l.b16 %v5955
        %v8709 = vunpack.c.l.b16 %v5965
        %v8710 = vunpack.c.l.b16 %v5979
        %v8711 = vunpack.c.l.b16 %v5989
        %v8712 = vunpack.c.l.b16 %v5999
        %v8713 = vunpack.c.l.b16 %v6009
        %v8714 = vunpack.c.l.b16 %v6023
        %v8715 = vunpack.c.l.b16 %v6033
        %v8716 = vunpack.c.l.b16 %v6043
        %v8717 = vunpack.c.l.b16 %v6053
        %v8718 = vunpack.c.l.b16 %v6067
        %v8719 = vunpack.c.l.b16 %v6077
        %v8720 = vunpack.c.l.b16 %v6087
        %v8721 = vunpack.c.l.b16 %v6097
        %v8722 = vpack.c.b16 %v8595, %v8594
        %v8723 = vpack.c.b16 %v8597, %v8596
        %v8724 = vpack.c.b16 %v8599, %v8598
        %v8725 = vpack.c.b16 %v8601, %v8600
        %v8726 = vpack.c.b16 %v8603, %v8602
        %v8727 = vpack.c.b16 %v8605, %v8604
        %v8728 = vpack.c.b16 %v8607, %v8606
        %v8729 = vpack.c.b16 %v8609, %v8608
        %v8730 = vpack.c.b16 %v8611, %v8610
        %v8731 = vpack.c.b16 %v8613, %v8612
        %v8732 = vpack.c.b16 %v8615, %v8614
        %v8733 = vpack.c.b16 %v8617, %v8616
        %v8734 = vpack.c.b16 %v8619, %v8618
        %v8735 = vpack.c.b16 %v8621, %v8620
        %v8736 = vpack.c.b16 %v8623, %v8622
        %v8737 = vpack.c.b16 %v8625, %v8624
        %v8738 = vpack.c.b16 %v8627, %v8626
        %v8739 = vpack.c.b16 %v8629, %v8628
        %v8740 = vpack.c.b16 %v8631, %v8630
        %v8741 = vpack.c.b16 %v8633, %v8632
        %v8742 = vpack.c.b16 %v8635, %v8634
        %v8743 = vpack.c.b16 %v8637, %v8636
        %v8744 = vpack.c.b16 %v8639, %v8638
        %v8745 = vpack.c.b16 %v8641, %v8640
        %v8746 = vpack.c.b16 %v8643, %v8642
        %v8747 = vpack.c.b16 %v8645, %v8644
        %v8748 = vpack.c.b16 %v8647, %v8646
        %v8749 = vpack.c.b16 %v8649, %v8648
        %v8750 = vpack.c.b16 %v8651, %v8650
        %v8751 = vpack.c.b16 %v8653, %v8652
        %v8752 = vpack.c.b16 %v8655, %v8654
        %v8753 = vpack.c.b16 %v8657, %v8656
        %v8754 = vpack.c.b16 %v8659, %v8658
        %v8755 = vpack.c.b16 %v8661, %v8660
        %v8756 = vpack.c.b16 %v8663, %v8662
        %v8757 = vpack.c.b16 %v8665, %v8664
        %v8758 = vpack.c.b16 %v8667, %v8666
        %v8759 = vpack.c.b16 %v8669, %v8668
        %v8760 = vpack.c.b16 %v8671, %v8670
        %v8761 = vpack.c.b16 %v8673, %v8672
        %v8762 = vpack.c.b16 %v8675, %v8674
        %v8763 = vpack.c.b16 %v8677, %v8676
        %v8764 = vpack.c.b16 %v8679, %v8678
        %v8765 = vpack.c.b16 %v8681, %v8680
        %v8766 = vpack.c.b16 %v8683, %v8682
        %v8767 = vpack.c.b16 %v8685, %v8684
        %v8768 = vpack.c.b16 %v8687, %v8686
        %v8769 = vpack.c.b16 %v8689, %v8688
        %v8770 = vpack.c.b16 %v8691, %v8690
        %v8771 = vpack.c.b16 %v8693, %v8692
        %v8772 = vpack.c.b16 %v8695, %v8694
        %v8773 = vpack.c.b16 %v8697, %v8696
        %v8774 = vpack.c.b16 %v8699, %v8698
        %v8775 = vpack.c.b16 %v8701, %v8700
        %v8776 = vpack.c.b16 %v8703, %v8702
        %v8777 = vpack.c.b16 %v8705, %v8704
        %v8778 = vpack.c.b16 %v8707, %v8706
        %v8779 = vpack.c.b16 %v8709, %v8708
        %v8780 = vpack.c.b16 %v8711, %v8710
        %v8781 = vpack.c.b16 %v8713, %v8712
        %v8782 = vpack.c.b16 %v8715, %v8714
        %v8783 = vpack.c.b16 %v8717, %v8716
        %v8784 = vpack.c.b16 %v8719, %v8718
        %v8785 = vpack.c.b16 %v8721, %v8720
        %v8850 = vunpack.c.l.b16 %v6293
        %v8851 = vunpack.c.l.b16 %v6296
        %v8852 = vunpack.c.l.b16 %v6299
        %v8853 = vunpack.c.l.b16 %v6302
        %v8854 = vunpack.c.l.b16 %v6306
        %v8855 = vunpack.c.l.b16 %v6309
        %v8856 = vunpack.c.l.b16 %v6312
        %v8857 = vunpack.c.l.b16 %v6315
        %v8858 = vunpack.c.l.b16 %v6319
        %v8859 = vunpack.c.l.b16 %v6322
        %v8860 = vunpack.c.l.b16 %v6325
        %v8861 = vunpack.c.l.b16 %v6328
        %v8862 = vunpack.c.l.b16 %v6332
        %v8863 = vunpack.c.l.b16 %v6335
        %v8864 = vunpack.c.l.b16 %v6338
        %v8865 = vunpack.c.l.b16 %v6341
        %v8866 = vunpack.c.l.b16 %v6345
        %v8867 = vunpack.c.l.b16 %v6348
        %v8868 = vunpack.c.l.b16 %v6351
        %v8869 = vunpack.c.l.b16 %v6354
        %v8870 = vunpack.c.l.b16 %v6358
        %v8871 = vunpack.c.l.b16 %v6361
        %v8872 = vunpack.c.l.b16 %v6364
        %v8873 = vunpack.c.l.b16 %v6367
        %v8874 = vunpack.c.l.b16 %v6371
        %v8875 = vunpack.c.l.b16 %v6374
        %v8876 = vunpack.c.l.b16 %v6377
        %v8877 = vunpack.c.l.b16 %v6380
        %v8878 = vunpack.c.l.b16 %v6384
        %v8879 = vunpack.c.l.b16 %v6387
        %v8880 = vunpack.c.l.b16 %v6390
        %v8881 = vunpack.c.l.b16 %v6393
        %v8882 = vunpack.c.l.b16 %v6397
        %v8883 = vunpack.c.l.b16 %v6400
        %v8884 = vunpack.c.l.b16 %v6403
        %v8885 = vunpack.c.l.b16 %v6406
        %v8886 = vunpack.c.l.b16 %v6410
        %v8887 = vunpack.c.l.b16 %v6413
        %v8888 = vunpack.c.l.b16 %v6416
        %v8889 = vunpack.c.l.b16 %v6419
        %v8890 = vunpack.c.l.b16 %v6423
        %v8891 = vunpack.c.l.b16 %v6426
        %v8892 = vunpack.c.l.b16 %v6429
        %v8893 = vunpack.c.l.b16 %v6432
        %v8894 = vunpack.c.l.b16 %v6436
        %v8895 = vunpack.c.l.b16 %v6439
        %v8896 = vunpack.c.l.b16 %v6442
        %v8897 = vunpack.c.l.b16 %v6445
        %v8898 = vunpack.c.l.b16 %v6449
        %v8899 = vunpack.c.l.b16 %v6452
        %v8900 = vunpack.c.l.b16 %v6455
        %v8901 = vunpack.c.l.b16 %v6458
        %v8902 = vunpack.c.l.b16 %v6462
        %v8903 = vunpack.c.l.b16 %v6465
        %v8904 = vunpack.c.l.b16 %v6468
        %v8905 = vunpack.c.l.b16 %v6471
        %v8906 = vunpack.c.l.b16 %v6475
        %v8907 = vunpack.c.l.b16 %v6478
        %v8908 = vunpack.c.l.b16 %v6481
        %v8909 = vunpack.c.l.b16 %v6484
        %v8910 = vunpack.c.l.b16 %v6488
        %v8911 = vunpack.c.l.b16 %v6491
        %v8912 = vunpack.c.l.b16 %v6494
        %v8913 = vunpack.c.l.b16 %v6497
        %v8914 = vunpack.c.l.b16 %v6501
        %v8915 = vunpack.c.l.b16 %v6504
        %v8916 = vunpack.c.l.b16 %v6507
        %v8917 = vunpack.c.l.b16 %v6510
        %v8918 = vunpack.c.l.b16 %v6514
        %v8919 = vunpack.c.l.b16 %v6517
        %v8920 = vunpack.c.l.b16 %v6520
        %v8921 = vunpack.c.l.b16 %v6523
        %v8922 = vunpack.c.l.b16 %v6527
        %v8923 = vunpack.c.l.b16 %v6530
        %v8924 = vunpack.c.l.b16 %v6533
        %v8925 = vunpack.c.l.b16 %v6536
        %v8926 = vunpack.c.l.b16 %v6540
        %v8927 = vunpack.c.l.b16 %v6543
        %v8928 = vunpack.c.l.b16 %v6546
        %v8929 = vunpack.c.l.b16 %v6549
        %v8930 = vunpack.c.l.b16 %v6553
        %v8931 = vunpack.c.l.b16 %v6556
        %v8932 = vunpack.c.l.b16 %v6559
        %v8933 = vunpack.c.l.b16 %v6562
        %v8934 = vunpack.c.l.b16 %v6566
        %v8935 = vunpack.c.l.b16 %v6569
        %v8936 = vunpack.c.l.b16 %v6572
        %v8937 = vunpack.c.l.b16 %v6575
        %v8938 = vunpack.c.l.b16 %v6579
        %v8939 = vunpack.c.l.b16 %v6582
        %v8940 = vunpack.c.l.b16 %v6585
        %v8941 = vunpack.c.l.b16 %v6588
        %v8942 = vunpack.c.l.b16 %v6592
        %v8943 = vunpack.c.l.b16 %v6595
        %v8944 = vunpack.c.l.b16 %v6598
        %v8945 = vunpack.c.l.b16 %v6601
        %v8946 = vunpack.c.l.b16 %v6605
        %v8947 = vunpack.c.l.b16 %v6608
        %v8948 = vunpack.c.l.b16 %v6611
        %v8949 = vunpack.c.l.b16 %v6614
        %v8950 = vunpack.c.l.b16 %v6618
        %v8951 = vunpack.c.l.b16 %v6621
        %v8952 = vunpack.c.l.b16 %v6624
        %v8953 = vunpack.c.l.b16 %v6627
        %v8954 = vunpack.c.l.b16 %v6631
        %v8955 = vunpack.c.l.b16 %v6634
        %v8956 = vunpack.c.l.b16 %v6637
        %v8957 = vunpack.c.l.b16 %v6640
        %v8958 = vunpack.c.l.b16 %v6644
        %v8959 = vunpack.c.l.b16 %v6647
        %v8960 = vunpack.c.l.b16 %v6650
        %v8961 = vunpack.c.l.b16 %v6653
        %v8962 = vunpack.c.l.b16 %v6657
        %v8963 = vunpack.c.l.b16 %v6660
        %v8964 = vunpack.c.l.b16 %v6663
        %v8965 = vunpack.c.l.b16 %v6666
        %v8966 = vunpack.c.l.b16 %v6670
        %v8967 = vunpack.c.l.b16 %v6673
        %v8968 = vunpack.c.l.b16 %v6676
        %v8969 = vunpack.c.l.b16 %v6679
        %v8970 = vunpack.c.l.b16 %v6683
        %v8971 = vunpack.c.l.b16 %v6686
        %v8972 = vunpack.c.l.b16 %v6689
        %v8973 = vunpack.c.l.b16 %v6692
        %v8974 = vunpack.c.l.b16 %v6696
        %v8975 = vunpack.c.l.b16 %v6699
        %v8976 = vunpack.c.l.b16 %v6702
        %v8977 = vunpack.c.l.b16 %v6705
        %v8978 = vpack.c.b16 %v8851, %v8850
        %v8979 = vpack.c.b16 %v8853, %v8852
        %v8980 = vpack.c.b16 %v8855, %v8854
        %v8981 = vpack.c.b16 %v8857, %v8856
        %v8982 = vpack.c.b16 %v8859, %v8858
        %v8983 = vpack.c.b16 %v8861, %v8860
        %v8984 = vpack.c.b16 %v8863, %v8862
        %v8985 = vpack.c.b16 %v8865, %v8864
        %v8986 = vpack.c.b16 %v8867, %v8866
        %v8987 = vpack.c.b16 %v8869, %v8868
        %v8988 = vpack.c.b16 %v8871, %v8870
        %v8989 = vpack.c.b16 %v8873, %v8872
        %v8990 = vpack.c.b16 %v8875, %v8874
        %v8991 = vpack.c.b16 %v8877, %v8876
        %v8992 = vpack.c.b16 %v8879, %v8878
        %v8993 = vpack.c.b16 %v8881, %v8880
        %v8994 = vpack.c.b16 %v8883, %v8882
        %v8995 = vpack.c.b16 %v8885, %v8884
        %v8996 = vpack.c.b16 %v8887, %v8886
        %v8997 = vpack.c.b16 %v8889, %v8888
        %v8998 = vpack.c.b16 %v8891, %v8890
        %v8999 = vpack.c.b16 %v8893, %v8892
        %v9000 = vpack.c.b16 %v8895, %v8894
        %v9001 = vpack.c.b16 %v8897, %v8896
        %v9002 = vpack.c.b16 %v8899, %v8898
        %v9003 = vpack.c.b16 %v8901, %v8900
        %v9004 = vpack.c.b16 %v8903, %v8902
        %v9005 = vpack.c.b16 %v8905, %v8904
        %v9006 = vpack.c.b16 %v8907, %v8906
        %v9007 = vpack.c.b16 %v8909, %v8908
        %v9008 = vpack.c.b16 %v8911, %v8910
        %v9009 = vpack.c.b16 %v8913, %v8912
        %v9010 = vpack.c.b16 %v8915, %v8914
        %v9011 = vpack.c.b16 %v8917, %v8916
        %v9012 = vpack.c.b16 %v8919, %v8918
        %v9013 = vpack.c.b16 %v8921, %v8920
        %v9014 = vpack.c.b16 %v8923, %v8922
        %v9015 = vpack.c.b16 %v8925, %v8924
        %v9016 = vpack.c.b16 %v8927, %v8926
        %v9017 = vpack.c.b16 %v8929, %v8928
        %v9018 = vpack.c.b16 %v8931, %v8930
        %v9019 = vpack.c.b16 %v8933, %v8932
        %v9020 = vpack.c.b16 %v8935, %v8934
        %v9021 = vpack.c.b16 %v8937, %v8936
        %v9022 = vpack.c.b16 %v8939, %v8938
        %v9023 = vpack.c.b16 %v8941, %v8940
        %v9024 = vpack.c.b16 %v8943, %v8942
        %v9025 = vpack.c.b16 %v8945, %v8944
        %v9026 = vpack.c.b16 %v8947, %v8946
        %v9027 = vpack.c.b16 %v8949, %v8948
        %v9028 = vpack.c.b16 %v8951, %v8950
        %v9029 = vpack.c.b16 %v8953, %v8952
        %v9030 = vpack.c.b16 %v8955, %v8954
        %v9031 = vpack.c.b16 %v8957, %v8956
        %v9032 = vpack.c.b16 %v8959, %v8958
        %v9033 = vpack.c.b16 %v8961, %v8960
        %v9034 = vpack.c.b16 %v8963, %v8962
        %v9035 = vpack.c.b16 %v8965, %v8964
        %v9036 = vpack.c.b16 %v8967, %v8966
        %v9037 = vpack.c.b16 %v8969, %v8968
        %v9038 = vpack.c.b16 %v8971, %v8970
        %v9039 = vpack.c.b16 %v8973, %v8972
        %v9040 = vpack.c.b16 %v8975, %v8974
        %v9041 = vpack.c.b16 %v8977, %v8976
        %v9106 = vld [vmem:[%s1] sm:$0xf]
        %v9107 = vld [vmem:[%s1 + $0x4] sm:$0xf]
        %v9108 = vld [vmem:[%s1 + $0x8] sm:$0xf]
        %v9109 = vld [vmem:[%s1 + $0xc] sm:$0xf]
        %v9110 = vld [vmem:[%s1 + $0x10] sm:$0xf]
        %v9111 = vld [vmem:[%s1 + $0x14] sm:$0xf]
        %v9112 = vld [vmem:[%s1 + $0x18] sm:$0xf]
        %v9113 = vld [vmem:[%s1 + $0x1c] sm:$0xf]
        %v9114 = vld [vmem:[%s1 + $0x20] sm:$0xf]
        %v9115 = vld [vmem:[%s1 + $0x24] sm:$0xf]
        %v9116 = vld [vmem:[%s1 + $0x28] sm:$0xf]
        %v9117 = vld [vmem:[%s1 + $0x2c] sm:$0xf]
        %v9118 = vld [vmem:[%s1 + $0x30] sm:$0xf]
        %v9119 = vld [vmem:[%s1 + $0x34] sm:$0xf]
        %v9120 = vld [vmem:[%s1 + $0x38] sm:$0xf]
        %v9121 = vld [vmem:[%s1 + $0x3c] sm:$0xf]
        %v9122 = vld [vmem:[%s1 + $0x40] sm:$0xf]
        %v9123 = vld [vmem:[%s1 + $0x44] sm:$0xf]
        %v9124 = vld [vmem:[%s1 + $0x48] sm:$0xf]
        %v9125 = vld [vmem:[%s1 + $0x4c] sm:$0xf]
        %v9126 = vld [vmem:[%s1 + $0x50] sm:$0xf]
        %v9127 = vld [vmem:[%s1 + $0x54] sm:$0xf]
        %v9128 = vld [vmem:[%s1 + $0x58] sm:$0xf]
        %v9129 = vld [vmem:[%s1 + $0x5c] sm:$0xf]
        %v9130 = vld [vmem:[%s1 + $0x60] sm:$0xf]
        %v9131 = vld [vmem:[%s1 + $0x64] sm:$0xf]
        %v9132 = vld [vmem:[%s1 + $0x68] sm:$0xf]
        %v9133 = vld [vmem:[%s1 + $0x6c] sm:$0xf]
        %v9134 = vld [vmem:[%s1 + $0x70] sm:$0xf]
        %v9135 = vld [vmem:[%s1 + $0x74] sm:$0xf]
        %v9136 = vld [vmem:[%s1 + $0x78] sm:$0xf]
        %v9137 = vld [vmem:[%s1 + $0x7c] sm:$0xf]
        %v9138 = vld [vmem:[%s1 + $0x80] sm:$0xf]
        %v9139 = vld [vmem:[%s1 + $0x84] sm:$0xf]
        %v9140 = vld [vmem:[%s1 + $0x88] sm:$0xf]
        %v9141 = vld [vmem:[%s1 + $0x8c] sm:$0xf]
        %v9142 = vld [vmem:[%s1 + $0x90] sm:$0xf]
        %v9143 = vld [vmem:[%s1 + $0x94] sm:$0xf]
        %v9144 = vld [vmem:[%s1 + $0x98] sm:$0xf]
        %v9145 = vld [vmem:[%s1 + $0x9c] sm:$0xf]
        %v9146 = vld [vmem:[%s1 + $0xa0] sm:$0xf]
        %v9147 = vld [vmem:[%s1 + $0xa4] sm:$0xf]
        %v9148 = vld [vmem:[%s1 + $0xa8] sm:$0xf]
        %v9149 = vld [vmem:[%s1 + $0xac] sm:$0xf]
        %v9150 = vld [vmem:[%s1 + $0xb0] sm:$0xf]
        %v9151 = vld [vmem:[%s1 + $0xb4] sm:$0xf]
        %v9152 = vld [vmem:[%s1 + $0xb8] sm:$0xf]
        %v9153 = vld [vmem:[%s1 + $0xbc] sm:$0xf]
        %v9154 = vld [vmem:[%s1 + $0xc0] sm:$0xf]
        %v9155 = vld [vmem:[%s1 + $0xc4] sm:$0xf]
        %v9156 = vld [vmem:[%s1 + $0xc8] sm:$0xf]
        %v9157 = vld [vmem:[%s1 + $0xcc] sm:$0xf]
        %v9158 = vld [vmem:[%s1 + $0xd0] sm:$0xf]
        %v9159 = vld [vmem:[%s1 + $0xd4] sm:$0xf]
        %v9160 = vld [vmem:[%s1 + $0xd8] sm:$0xf]
        %v9161 = vld [vmem:[%s1 + $0xdc] sm:$0xf]
        %v9162 = vld [vmem:[%s1 + $0xe0] sm:$0xf]
        %v9163 = vld [vmem:[%s1 + $0xe4] sm:$0xf]
        %v9164 = vld [vmem:[%s1 + $0xe8] sm:$0xf]
        %v9165 = vld [vmem:[%s1 + $0xec] sm:$0xf]
        %v9166 = vld [vmem:[%s1 + $0xf0] sm:$0xf]
        %v9167 = vld [vmem:[%s1 + $0xf4] sm:$0xf]
        %v9168 = vld [vmem:[%s1 + $0xf8] sm:$0xf]
        %v9169 = vld [vmem:[%s1 + $0xfc] sm:$0xf]
        %v9170 = vld [vmem:[%s1 + $0x100] sm:$0xf]
        %v9171 = vld [vmem:[%s1 + $0x104] sm:$0xf]
        %v9172 = vld [vmem:[%s1 + $0x108] sm:$0xf]
        %v9173 = vld [vmem:[%s1 + $0x10c] sm:$0xf]
        %v9174 = vld [vmem:[%s1 + $0x110] sm:$0xf]
        %v9175 = vld [vmem:[%s1 + $0x114] sm:$0xf]
        %v9176 = vld [vmem:[%s1 + $0x118] sm:$0xf]
        %v9177 = vld [vmem:[%s1 + $0x11c] sm:$0xf]
        %v9178 = vld [vmem:[%s1 + $0x120] sm:$0xf]
        %v9179 = vld [vmem:[%s1 + $0x124] sm:$0xf]
        %v9180 = vld [vmem:[%s1 + $0x128] sm:$0xf]
        %v9181 = vld [vmem:[%s1 + $0x12c] sm:$0xf]
        %v9182 = vld [vmem:[%s1 + $0x130] sm:$0xf]
        %v9183 = vld [vmem:[%s1 + $0x134] sm:$0xf]
        %v9184 = vld [vmem:[%s1 + $0x138] sm:$0xf]
        %v9185 = vld [vmem:[%s1 + $0x13c] sm:$0xf]
        %v9186 = vld [vmem:[%s1 + $0x140] sm:$0xf]
        %v9187 = vld [vmem:[%s1 + $0x144] sm:$0xf]
        %v9188 = vld [vmem:[%s1 + $0x148] sm:$0xf]
        %v9189 = vld [vmem:[%s1 + $0x14c] sm:$0xf]
        %v9190 = vld [vmem:[%s1 + $0x150] sm:$0xf]
        %v9191 = vld [vmem:[%s1 + $0x154] sm:$0xf]
        %v9192 = vld [vmem:[%s1 + $0x158] sm:$0xf]
        %v9193 = vld [vmem:[%s1 + $0x15c] sm:$0xf]
        %v9194 = vld [vmem:[%s1 + $0x160] sm:$0xf]
        %v9195 = vld [vmem:[%s1 + $0x164] sm:$0xf]
        %v9196 = vld [vmem:[%s1 + $0x168] sm:$0xf]
        %v9197 = vld [vmem:[%s1 + $0x16c] sm:$0xf]
        %v9198 = vld [vmem:[%s1 + $0x170] sm:$0xf]
        %v9199 = vld [vmem:[%s1 + $0x174] sm:$0xf]
        %v9200 = vld [vmem:[%s1 + $0x178] sm:$0xf]
        %v9201 = vld [vmem:[%s1 + $0x17c] sm:$0xf]
        %v9202 = vld [vmem:[%s1 + $0x180] sm:$0xf]
        %v9203 = vld [vmem:[%s1 + $0x184] sm:$0xf]
        %v9204 = vld [vmem:[%s1 + $0x188] sm:$0xf]
        %v9205 = vld [vmem:[%s1 + $0x18c] sm:$0xf]
        %v9206 = vld [vmem:[%s1 + $0x190] sm:$0xf]
        %v9207 = vld [vmem:[%s1 + $0x194] sm:$0xf]
        %v9208 = vld [vmem:[%s1 + $0x198] sm:$0xf]
        %v9209 = vld [vmem:[%s1 + $0x19c] sm:$0xf]
        %v9210 = vld [vmem:[%s1 + $0x1a0] sm:$0xf]
        %v9211 = vld [vmem:[%s1 + $0x1a4] sm:$0xf]
        %v9212 = vld [vmem:[%s1 + $0x1a8] sm:$0xf]
        %v9213 = vld [vmem:[%s1 + $0x1ac] sm:$0xf]
        %v9214 = vld [vmem:[%s1 + $0x1b0] sm:$0xf]
        %v9215 = vld [vmem:[%s1 + $0x1b4] sm:$0xf]
        %v9216 = vld [vmem:[%s1 + $0x1b8] sm:$0xf]
        %v9217 = vld [vmem:[%s1 + $0x1bc] sm:$0xf]
        %v9218 = vld [vmem:[%s1 + $0x1c0] sm:$0xf]
        %v9219 = vld [vmem:[%s1 + $0x1c4] sm:$0xf]
        %v9220 = vld [vmem:[%s1 + $0x1c8] sm:$0xf]
        %v9221 = vld [vmem:[%s1 + $0x1cc] sm:$0xf]
        %v9222 = vld [vmem:[%s1 + $0x1d0] sm:$0xf]
        %v9223 = vld [vmem:[%s1 + $0x1d4] sm:$0xf]
        %v9224 = vld [vmem:[%s1 + $0x1d8] sm:$0xf]
        %v9225 = vld [vmem:[%s1 + $0x1dc] sm:$0xf]
        %v9226 = vld [vmem:[%s1 + $0x1e0] sm:$0xf]
        %v9227 = vld [vmem:[%s1 + $0x1e4] sm:$0xf]
        %v9228 = vld [vmem:[%s1 + $0x1e8] sm:$0xf]
        %v9229 = vld [vmem:[%s1 + $0x1ec] sm:$0xf]
        %v9230 = vld [vmem:[%s1 + $0x1f0] sm:$0xf]
        %v9231 = vld [vmem:[%s1 + $0x1f4] sm:$0xf]
        %v9232 = vld [vmem:[%s1 + $0x1f8] sm:$0xf]
        %v9233 = vld [vmem:[%s1 + $0x1fc] sm:$0xf]
        %v9234 = vld [vmem:[%s1 + $0x200] sm:$0xf]
        %v9235 = vld [vmem:[%s1 + $0x204] sm:$0xf]
        %v9236 = vld [vmem:[%s1 + $0x208] sm:$0xf]
        %v9237 = vld [vmem:[%s1 + $0x20c] sm:$0xf]
        %v9238 = vld [vmem:[%s1 + $0x210] sm:$0xf]
        %v9239 = vld [vmem:[%s1 + $0x214] sm:$0xf]
        %v9240 = vld [vmem:[%s1 + $0x218] sm:$0xf]
        %v9241 = vld [vmem:[%s1 + $0x21c] sm:$0xf]
        %v9242 = vld [vmem:[%s1 + $0x220] sm:$0xf]
        %v9243 = vld [vmem:[%s1 + $0x224] sm:$0xf]
        %v9244 = vld [vmem:[%s1 + $0x228] sm:$0xf]
        %v9245 = vld [vmem:[%s1 + $0x22c] sm:$0xf]
        %v9246 = vld [vmem:[%s1 + $0x230] sm:$0xf]
        %v9247 = vld [vmem:[%s1 + $0x234] sm:$0xf]
        %v9248 = vld [vmem:[%s1 + $0x238] sm:$0xf]
        %v9249 = vld [vmem:[%s1 + $0x23c] sm:$0xf]
        %v9250 = vld [vmem:[%s2] sm:$0x1]
        %v9252 = vlaneseq
        %v9253 = vshrl.u32 %v9252, 7
        %v9254 = vsub.s32 0, %v9253
        %v9255 = vrot.slane %v9250, %v9254
        %v9401 = vunpack.c.l.b16 %v9106
        %v9402 = vunpack.c.l.b16 %v9107
        %v9403 = vunpack.c.l.b16 %v9108
        %v9404 = vunpack.c.l.b16 %v9109
        %v9405 = vunpack.c.l.b16 %v9110
        %v9406 = vunpack.c.l.b16 %v9111
        %v9407 = vunpack.c.l.b16 %v9112
        %v9408 = vunpack.c.l.b16 %v9113
        %v9409 = vunpack.c.l.b16 %v9114
        %v9410 = vunpack.c.l.b16 %v9115
        %v9411 = vunpack.c.l.b16 %v9116
        %v9412 = vunpack.c.l.b16 %v9117
        %v9413 = vunpack.c.l.b16 %v9118
        %v9414 = vunpack.c.l.b16 %v9119
        %v9415 = vunpack.c.l.b16 %v9120
        %v9416 = vunpack.c.l.b16 %v9121
        %v9417 = vunpack.c.l.b16 %v9122
        %v9418 = vunpack.c.l.b16 %v9123
        %v9419 = vunpack.c.l.b16 %v9124
        %v9420 = vunpack.c.l.b16 %v9125
        %v9421 = vunpack.c.l.b16 %v9126
        %v9422 = vunpack.c.l.b16 %v9127
        %v9423 = vunpack.c.l.b16 %v9128
        %v9424 = vunpack.c.l.b16 %v9129
        %v9425 = vunpack.c.l.b16 %v9130
        %v9426 = vunpack.c.l.b16 %v9131
        %v9427 = vunpack.c.l.b16 %v9132
        %v9428 = vunpack.c.l.b16 %v9133
        %v9429 = vunpack.c.l.b16 %v9134
        %v9430 = vunpack.c.l.b16 %v9135
        %v9431 = vunpack.c.l.b16 %v9136
        %v9432 = vunpack.c.l.b16 %v9137
        %v9433 = vunpack.c.l.b16 %v9138
        %v9434 = vunpack.c.l.b16 %v9139
        %v9435 = vunpack.c.l.b16 %v9140
        %v9436 = vunpack.c.l.b16 %v9141
        %v9437 = vunpack.c.l.b16 %v9142
        %v9438 = vunpack.c.l.b16 %v9143
        %v9439 = vunpack.c.l.b16 %v9144
        %v9440 = vunpack.c.l.b16 %v9145
        %v9441 = vunpack.c.l.b16 %v9146
        %v9442 = vunpack.c.l.b16 %v9147
        %v9443 = vunpack.c.l.b16 %v9148
        %v9444 = vunpack.c.l.b16 %v9149
        %v9445 = vunpack.c.l.b16 %v9150
        %v9446 = vunpack.c.l.b16 %v9151
        %v9447 = vunpack.c.l.b16 %v9152
        %v9448 = vunpack.c.l.b16 %v9153
        %v9449 = vunpack.c.l.b16 %v9154
        %v9450 = vunpack.c.l.b16 %v9155
        %v9451 = vunpack.c.l.b16 %v9156
        %v9452 = vunpack.c.l.b16 %v9157
        %v9453 = vunpack.c.l.b16 %v9158
        %v9454 = vunpack.c.l.b16 %v9159
        %v9455 = vunpack.c.l.b16 %v9160
        %v9456 = vunpack.c.l.b16 %v9161
        %v9457 = vunpack.c.l.b16 %v9162
        %v9458 = vunpack.c.l.b16 %v9163
        %v9459 = vunpack.c.l.b16 %v9164
        %v9460 = vunpack.c.l.b16 %v9165
        %v9461 = vunpack.c.l.b16 %v9166
        %v9462 = vunpack.c.l.b16 %v9167
        %v9463 = vunpack.c.l.b16 %v9168
        %v9464 = vunpack.c.l.b16 %v9169
        %v9465 = vunpack.c.l.b16 %v9170
        %v9466 = vunpack.c.l.b16 %v9171
        %v9467 = vunpack.c.l.b16 %v9172
        %v9468 = vunpack.c.l.b16 %v9173
        %v9469 = vunpack.c.l.b16 %v9174
        %v9470 = vunpack.c.l.b16 %v9175
        %v9471 = vunpack.c.l.b16 %v9176
        %v9472 = vunpack.c.l.b16 %v9177
        %v9473 = vunpack.c.l.b16 %v9178
        %v9474 = vunpack.c.l.b16 %v9179
        %v9475 = vunpack.c.l.b16 %v9180
        %v9476 = vunpack.c.l.b16 %v9181
        %v9477 = vunpack.c.l.b16 %v9182
        %v9478 = vunpack.c.l.b16 %v9183
        %v9479 = vunpack.c.l.b16 %v9184
        %v9480 = vunpack.c.l.b16 %v9185
        %v9481 = vunpack.c.l.b16 %v9186
        %v9482 = vunpack.c.l.b16 %v9187
        %v9483 = vunpack.c.l.b16 %v9188
        %v9484 = vunpack.c.l.b16 %v9189
        %v9485 = vunpack.c.l.b16 %v9190
        %v9486 = vunpack.c.l.b16 %v9191
        %v9487 = vunpack.c.l.b16 %v9192
        %v9488 = vunpack.c.l.b16 %v9193
        %v9489 = vunpack.c.l.b16 %v9194
        %v9490 = vunpack.c.l.b16 %v9195
        %v9491 = vunpack.c.l.b16 %v9196
        %v9492 = vunpack.c.l.b16 %v9197
        %v9493 = vunpack.c.l.b16 %v9198
        %v9494 = vunpack.c.l.b16 %v9199
        %v9495 = vunpack.c.l.b16 %v9200
        %v9496 = vunpack.c.l.b16 %v9201
        %v9497 = vunpack.c.l.b16 %v9202
        %v9498 = vunpack.c.l.b16 %v9203
        %v9499 = vunpack.c.l.b16 %v9204
        %v9500 = vunpack.c.l.b16 %v9205
        %v9501 = vunpack.c.l.b16 %v9206
        %v9502 = vunpack.c.l.b16 %v9207
        %v9503 = vunpack.c.l.b16 %v9208
        %v9504 = vunpack.c.l.b16 %v9209
        %v9505 = vunpack.c.l.b16 %v9210
        %v9506 = vunpack.c.l.b16 %v9211
        %v9507 = vunpack.c.l.b16 %v9212
        %v9508 = vunpack.c.l.b16 %v9213
        %v9509 = vunpack.c.l.b16 %v9214
        %v9510 = vunpack.c.l.b16 %v9215
        %v9511 = vunpack.c.l.b16 %v9216
        %v9512 = vunpack.c.l.b16 %v9217
        %v9513 = vunpack.c.l.b16 %v9218
        %v9514 = vunpack.c.l.b16 %v9219
        %v9515 = vunpack.c.l.b16 %v9220
        %v9516 = vunpack.c.l.b16 %v9221
        %v9517 = vunpack.c.l.b16 %v9222
        %v9518 = vunpack.c.l.b16 %v9223
        %v9519 = vunpack.c.l.b16 %v9224
        %v9520 = vunpack.c.l.b16 %v9225
        %v9521 = vunpack.c.l.b16 %v9226
        %v9522 = vunpack.c.l.b16 %v9227
        %v9523 = vunpack.c.l.b16 %v9228
        %v9524 = vunpack.c.l.b16 %v9229
        %v9525 = vunpack.c.l.b16 %v9230
        %v9526 = vunpack.c.l.b16 %v9231
        %v9527 = vunpack.c.l.b16 %v9232
        %v9528 = vunpack.c.l.b16 %v9233
        %v9529 = vunpack.c.l.b16 %v9234
        %v9530 = vunpack.c.l.b16 %v9235
        %v9531 = vunpack.c.l.b16 %v9236
        %v9532 = vunpack.c.l.b16 %v9237
        %v9533 = vunpack.c.l.b16 %v9238
        %v9534 = vunpack.c.l.b16 %v9239
        %v9535 = vunpack.c.l.b16 %v9240
        %v9536 = vunpack.c.l.b16 %v9241
        %v9537 = vunpack.c.l.b16 %v9242
        %v9538 = vunpack.c.l.b16 %v9243
        %v9539 = vunpack.c.l.b16 %v9244
        %v9540 = vunpack.c.l.b16 %v9245
        %v9541 = vunpack.c.l.b16 %v9246
        %v9542 = vunpack.c.l.b16 %v9247
        %v9543 = vunpack.c.l.b16 %v9248
        %v9544 = vunpack.c.l.b16 %v9249
        %v9545 = vpack.c.b16 %v9402, %v9401
        %v9546 = vpack.c.b16 %v9404, %v9403
        %v9547 = vpack.c.b16 %v9406, %v9405
        %v9548 = vpack.c.b16 %v9408, %v9407
        %v9549 = vpack.c.b16 %v9410, %v9409
        %v9550 = vpack.c.b16 %v9412, %v9411
        %v9551 = vpack.c.b16 %v9414, %v9413
        %v9552 = vpack.c.b16 %v9416, %v9415
        %v9553 = vpack.c.b16 %v9418, %v9417
        %v9554 = vpack.c.b16 %v9420, %v9419
        %v9555 = vpack.c.b16 %v9422, %v9421
        %v9556 = vpack.c.b16 %v9424, %v9423
        %v9557 = vpack.c.b16 %v9426, %v9425
        %v9558 = vpack.c.b16 %v9428, %v9427
        %v9559 = vpack.c.b16 %v9430, %v9429
        %v9560 = vpack.c.b16 %v9432, %v9431
        %v9561 = vpack.c.b16 %v9434, %v9433
        %v9562 = vpack.c.b16 %v9436, %v9435
        %v9563 = vpack.c.b16 %v9438, %v9437
        %v9564 = vpack.c.b16 %v9440, %v9439
        %v9565 = vpack.c.b16 %v9442, %v9441
        %v9566 = vpack.c.b16 %v9444, %v9443
        %v9567 = vpack.c.b16 %v9446, %v9445
        %v9568 = vpack.c.b16 %v9448, %v9447
        %v9569 = vpack.c.b16 %v9450, %v9449
        %v9570 = vpack.c.b16 %v9452, %v9451
        %v9571 = vpack.c.b16 %v9454, %v9453
        %v9572 = vpack.c.b16 %v9456, %v9455
        %v9573 = vpack.c.b16 %v9458, %v9457
        %v9574 = vpack.c.b16 %v9460, %v9459
        %v9575 = vpack.c.b16 %v9462, %v9461
        %v9576 = vpack.c.b16 %v9464, %v9463
        %v9577 = vpack.c.b16 %v9466, %v9465
        %v9578 = vpack.c.b16 %v9468, %v9467
        %v9579 = vpack.c.b16 %v9470, %v9469
        %v9580 = vpack.c.b16 %v9472, %v9471
        %v9581 = vpack.c.b16 %v9474, %v9473
        %v9582 = vpack.c.b16 %v9476, %v9475
        %v9583 = vpack.c.b16 %v9478, %v9477
        %v9584 = vpack.c.b16 %v9480, %v9479
        %v9585 = vpack.c.b16 %v9482, %v9481
        %v9586 = vpack.c.b16 %v9484, %v9483
        %v9587 = vpack.c.b16 %v9486, %v9485
        %v9588 = vpack.c.b16 %v9488, %v9487
        %v9589 = vpack.c.b16 %v9490, %v9489
        %v9590 = vpack.c.b16 %v9492, %v9491
        %v9591 = vpack.c.b16 %v9494, %v9493
        %v9592 = vpack.c.b16 %v9496, %v9495
        %v9593 = vpack.c.b16 %v9498, %v9497
        %v9594 = vpack.c.b16 %v9500, %v9499
        %v9595 = vpack.c.b16 %v9502, %v9501
        %v9596 = vpack.c.b16 %v9504, %v9503
        %v9597 = vpack.c.b16 %v9506, %v9505
        %v9598 = vpack.c.b16 %v9508, %v9507
        %v9599 = vpack.c.b16 %v9510, %v9509
        %v9600 = vpack.c.b16 %v9512, %v9511
        %v9601 = vpack.c.b16 %v9514, %v9513
        %v9602 = vpack.c.b16 %v9516, %v9515
        %v9603 = vpack.c.b16 %v9518, %v9517
        %v9604 = vpack.c.b16 %v9520, %v9519
        %v9605 = vpack.c.b16 %v9522, %v9521
        %v9606 = vpack.c.b16 %v9524, %v9523
        %v9607 = vpack.c.b16 %v9526, %v9525
        %v9608 = vpack.c.b16 %v9528, %v9527
        %v9609 = vpack.c.b16 %v9530, %v9529
        %v9610 = vpack.c.b16 %v9532, %v9531
        %v9611 = vpack.c.b16 %v9534, %v9533
        %v9612 = vpack.c.b16 %v9536, %v9535
        %v9613 = vpack.c.b16 %v9538, %v9537
        %v9614 = vpack.c.b16 %v9540, %v9539
        %v9615 = vpack.c.b16 %v9542, %v9541
        %v9616 = vpack.c.b16 %v9544, %v9543
        %9689 = vmatprep.subr.bf16.mxu0 0
        %9690 = vmatpush1.bf16.msra.mxu0 %v9552
        %9691 = vmatprep.subr.bf16.mxu0 0
        %9692 = vmatpush1.bf16.msra.mxu0 %v9551
        %9693 = vmatprep.subr.bf16.mxu0 0
        %9694 = vmatpush1.bf16.msra.mxu0 %v9550
        %9695 = vmatprep.subr.bf16.mxu0 0
        %9696 = vmatpush1.bf16.msra.mxu0 %v9549
        %9697 = vmatprep.subr.bf16.mxu0 0
        %9698 = vmatpush1.bf16.msra.mxu0 %v9548
        %9699 = vmatprep.subr.bf16.mxu0 0
        %9700 = vmatpush1.bf16.msra.mxu0 %v9547
        %9701 = vmatprep.subr.bf16.mxu0 0
        %9702 = vmatpush1.bf16.msra.mxu0 %v9546
        %9703 = vmatprep.subr.bf16.mxu0 0
        %9704 = vmatpush1.bf16.msra.mxu0 %v9545
        %9705 = vmatprep.subr.bf16.mxu0 0
        %9706 = vmatpush2.bf16.msra.mxu0 %v9560
        %9707 = vmatprep.subr.bf16.mxu0 0
        %9708 = vmatpush2.bf16.msra.mxu0 %v9559
        %9709 = vmatprep.subr.bf16.mxu0 0
        %9710 = vmatpush2.bf16.msra.mxu0 %v9558
        %9711 = vmatprep.subr.bf16.mxu0 0
        %9712 = vmatpush2.bf16.msra.mxu0 %v9557
        %9713 = vmatprep.subr.bf16.mxu0 0
        %9714 = vmatpush2.bf16.msra.mxu0 %v9556
        %9715 = vmatprep.subr.bf16.mxu0 0
        %9716 = vmatpush2.bf16.msra.mxu0 %v9555
        %9717 = vmatprep.subr.bf16.mxu0 0
        %9718 = vmatpush2.bf16.msra.mxu0 %v9554
        %9719 = vmatprep.subr.bf16.mxu0 0
        %9720 = vmatpush2.bf16.msra.mxu0 %v9553
        %9721 = vmatprep.mubr.bf16.mxu0 %v7122
        %9722 = vmatmul.mubr.bf16.gmra.mxu0 %v6866
        %v9723 = vpop.f32.mrf.mxu0
        %v9724 = vadd.f32 %v9255, %v9723
        %v9725 = vpop.f32.mrf.mxu0
        %v9726 = vpop.f32.mrf.mxu0
        %v9727 = vadd.f32 %v9255, %v9726
        %v9728 = vpop.f32.mrf.mxu0
        %9729 = vmatprep.mubr.bf16.mxu0 %v7123
        %9730 = vmatmul.mubr.bf16.gmra.mxu0 %v6867
        %v9731 = vpop.f32.mrf.mxu0
        %v9732 = vadd.f32 %v9255, %v9731
        %v9733 = vpop.f32.mrf.mxu0
        %v9734 = vpop.f32.mrf.mxu0
        %v9735 = vadd.f32 %v9255, %v9734
        %v9736 = vpop.f32.mrf.mxu0
        %9737 = vmatprep.mubr.bf16.mxu0 %v7124
        %9738 = vmatmul.mubr.bf16.gmra.mxu0 %v6868
        %v9739 = vpop.f32.mrf.mxu0
        %v9740 = vadd.f32 %v9255, %v9739
        %v9741 = vpop.f32.mrf.mxu0
        %v9742 = vpop.f32.mrf.mxu0
        %v9743 = vadd.f32 %v9255, %v9742
        %v9744 = vpop.f32.mrf.mxu0
        %9745 = vmatprep.mubr.bf16.mxu0 %v7125
        %9746 = vmatmul.mubr.bf16.gmra.mxu0 %v6869
        %v9747 = vpop.f32.mrf.mxu0
        %v9748 = vadd.f32 %v9255, %v9747
        %v9749 = vpop.f32.mrf.mxu0
        %v9750 = vpop.f32.mrf.mxu0
        %v9751 = vadd.f32 %v9255, %v9750
        %v9752 = vpop.f32.mrf.mxu0
        %9753 = vmatprep.mubr.bf16.mxu0 %v7126
        %9754 = vmatmul.mubr.bf16.gmra.mxu0 %v6870
        %v9755 = vpop.f32.mrf.mxu0
        %v9756 = vadd.f32 %v9255, %v9755
        %v9757 = vpop.f32.mrf.mxu0
        %v9758 = vpop.f32.mrf.mxu0
        %v9759 = vadd.f32 %v9255, %v9758
        %v9760 = vpop.f32.mrf.mxu0
        %9761 = vmatprep.mubr.bf16.mxu0 %v7127
        %9762 = vmatmul.mubr.bf16.gmra.mxu0 %v6871
        %v9763 = vpop.f32.mrf.mxu0
        %v9764 = vadd.f32 %v9255, %v9763
        %v9765 = vpop.f32.mrf.mxu0
        %v9766 = vpop.f32.mrf.mxu0
        %v9767 = vadd.f32 %v9255, %v9766
        %v9768 = vpop.f32.mrf.mxu0
        %9769 = vmatprep.mubr.bf16.mxu0 %v7128
        %9770 = vmatmul.mubr.bf16.gmra.mxu0 %v6872
        %v9771 = vpop.f32.mrf.mxu0
        %v9772 = vadd.f32 %v9255, %v9771
        %v9773 = vpop.f32.mrf.mxu0
        %v9774 = vpop.f32.mrf.mxu0
        %v9775 = vadd.f32 %v9255, %v9774
        %v9776 = vpop.f32.mrf.mxu0
        %9777 = vmatprep.mubr.bf16.mxu0 %v7129
        %9778 = vmatmul.mubr.bf16.gmra.mxu0 %v6873
        %v9779 = vpop.f32.mrf.mxu0
        %v9780 = vadd.f32 %v9255, %v9779
        %v9781 = vpop.f32.mrf.mxu0
        %v9782 = vpop.f32.mrf.mxu0
        %v9783 = vadd.f32 %v9255, %v9782
        %v9784 = vpop.f32.mrf.mxu0
        %9785 = vmatprep.mubr.bf16.mxu0 %v7130
        %9786 = vmatmul.mubr.bf16.gmra.mxu0 %v6874
        %v9787 = vpop.f32.mrf.mxu0
        %v9788 = vadd.f32 %v9255, %v9787
        %v9789 = vpop.f32.mrf.mxu0
        %v9790 = vpop.f32.mrf.mxu0
        %v9791 = vadd.f32 %v9255, %v9790
        %v9792 = vpop.f32.mrf.mxu0
        %9793 = vmatprep.mubr.bf16.mxu0 %v7131
        %9794 = vmatmul.mubr.bf16.gmra.mxu0 %v6875
        %v9795 = vpop.f32.mrf.mxu0
        %v9796 = vadd.f32 %v9255, %v9795
        %v9797 = vpop.f32.mrf.mxu0
        %v9798 = vpop.f32.mrf.mxu0
        %v9799 = vadd.f32 %v9255, %v9798
        %v9800 = vpop.f32.mrf.mxu0
        %9801 = vmatprep.mubr.bf16.mxu0 %v7132
        %9802 = vmatmul.mubr.bf16.gmra.mxu0 %v6876
        %v9803 = vpop.f32.mrf.mxu0
        %v9804 = vadd.f32 %v9255, %v9803
        %v9805 = vpop.f32.mrf.mxu0
        %v9806 = vpop.f32.mrf.mxu0
        %v9807 = vadd.f32 %v9255, %v9806
        %v9808 = vpop.f32.mrf.mxu0
        %9809 = vmatprep.mubr.bf16.mxu0 %v7133
        %9810 = vmatmul.mubr.bf16.gmra.mxu0 %v6877
        %v9811 = vpop.f32.mrf.mxu0
        %v9812 = vadd.f32 %v9255, %v9811
        %v9813 = vpop.f32.mrf.mxu0
        %v9814 = vpop.f32.mrf.mxu0
        %v9815 = vadd.f32 %v9255, %v9814
        %v9816 = vpop.f32.mrf.mxu0
        %9817 = vmatprep.mubr.bf16.mxu0 %v7134
        %9818 = vmatmul.mubr.bf16.gmra.mxu0 %v6878
        %v9819 = vpop.f32.mrf.mxu0
        %v9820 = vadd.f32 %v9255, %v9819
        %v9821 = vpop.f32.mrf.mxu0
        %v9822 = vpop.f32.mrf.mxu0
        %v9823 = vadd.f32 %v9255, %v9822
        %v9824 = vpop.f32.mrf.mxu0
        %9825 = vmatprep.mubr.bf16.mxu0 %v7135
        %9826 = vmatmul.mubr.bf16.gmra.mxu0 %v6879
        %v9827 = vpop.f32.mrf.mxu0
        %v9828 = vadd.f32 %v9255, %v9827
        %v9829 = vpop.f32.mrf.mxu0
        %v9830 = vpop.f32.mrf.mxu0
        %v9831 = vadd.f32 %v9255, %v9830
        %v9832 = vpop.f32.mrf.mxu0
        %9833 = vmatprep.mubr.bf16.mxu0 %v7136
        %9834 = vmatmul.mubr.bf16.gmra.mxu0 %v6880
        %v9835 = vpop.f32.mrf.mxu0
        %v9836 = vadd.f32 %v9255, %v9835
        %v9837 = vpop.f32.mrf.mxu0
        %v9838 = vpop.f32.mrf.mxu0
        %v9839 = vadd.f32 %v9255, %v9838
        %v9840 = vpop.f32.mrf.mxu0
        %9841 = vmatprep.mubr.bf16.mxu0 %v7137
        %9842 = vmatmul.mubr.bf16.gmra.mxu0 %v6881
        %v9843 = vpop.f32.mrf.mxu0
        %v9844 = vadd.f32 %v9255, %v9843
        %v9845 = vpop.f32.mrf.mxu0
        %v9846 = vpop.f32.mrf.mxu0
        %v9847 = vadd.f32 %v9255, %v9846
        %v9848 = vpop.f32.mrf.mxu0
        %9849 = vmatprep.mubr.bf16.mxu0 %v7138
        %9850 = vmatmul.mubr.bf16.gmra.mxu0 %v6882
        %v9851 = vpop.f32.mrf.mxu0
        %v9852 = vadd.f32 %v9255, %v9851
        %v9853 = vpop.f32.mrf.mxu0
        %v9854 = vpop.f32.mrf.mxu0
        %v9855 = vadd.f32 %v9255, %v9854
        %v9856 = vpop.f32.mrf.mxu0
        %9857 = vmatprep.mubr.bf16.mxu0 %v7139
        %9858 = vmatmul.mubr.bf16.gmra.mxu0 %v6883
        %v9859 = vpop.f32.mrf.mxu0
        %v9860 = vadd.f32 %v9255, %v9859
        %v9861 = vpop.f32.mrf.mxu0
        %v9862 = vpop.f32.mrf.mxu0
        %v9863 = vadd.f32 %v9255, %v9862
        %v9864 = vpop.f32.mrf.mxu0
        %9865 = vmatprep.mubr.bf16.mxu0 %v7140
        %9866 = vmatmul.mubr.bf16.gmra.mxu0 %v6884
        %v9867 = vpop.f32.mrf.mxu0
        %v9868 = vadd.f32 %v9255, %v9867
        %v9869 = vpop.f32.mrf.mxu0
        %v9870 = vpop.f32.mrf.mxu0
        %v9871 = vadd.f32 %v9255, %v9870
        %v9872 = vpop.f32.mrf.mxu0
        %9873 = vmatprep.mubr.bf16.mxu0 %v7141
        %9874 = vmatmul.mubr.bf16.gmra.mxu0 %v6885
        %v9875 = vpop.f32.mrf.mxu0
        %v9876 = vadd.f32 %v9255, %v9875
        %v9877 = vpop.f32.mrf.mxu0
        %v9878 = vpop.f32.mrf.mxu0
        %v9879 = vadd.f32 %v9255, %v9878
        %v9880 = vpop.f32.mrf.mxu0
        %9881 = vmatprep.mubr.bf16.mxu0 %v7142
        %9882 = vmatmul.mubr.bf16.gmra.mxu0 %v6886
        %v9883 = vpop.f32.mrf.mxu0
        %v9884 = vadd.f32 %v9255, %v9883
        %v9885 = vpop.f32.mrf.mxu0
        %v9886 = vpop.f32.mrf.mxu0
        %v9887 = vadd.f32 %v9255, %v9886
        %v9888 = vpop.f32.mrf.mxu0
        %9889 = vmatprep.mubr.bf16.mxu0 %v7143
        %9890 = vmatmul.mubr.bf16.gmra.mxu0 %v6887
        %v9891 = vpop.f32.mrf.mxu0
        %v9892 = vadd.f32 %v9255, %v9891
        %v9893 = vpop.f32.mrf.mxu0
        %v9894 = vpop.f32.mrf.mxu0
        %v9895 = vadd.f32 %v9255, %v9894
        %v9896 = vpop.f32.mrf.mxu0
        %9897 = vmatprep.mubr.bf16.mxu0 %v7144
        %9898 = vmatmul.mubr.bf16.gmra.mxu0 %v6888
        %v9899 = vpop.f32.mrf.mxu0
        %v9900 = vadd.f32 %v9255, %v9899
        %v9901 = vpop.f32.mrf.mxu0
        %v9902 = vpop.f32.mrf.mxu0
        %v9903 = vadd.f32 %v9255, %v9902
        %v9904 = vpop.f32.mrf.mxu0
        %9905 = vmatprep.mubr.bf16.mxu0 %v7145
        %9906 = vmatmul.mubr.bf16.gmra.mxu0 %v6889
        %v9907 = vpop.f32.mrf.mxu0
        %v9908 = vadd.f32 %v9255, %v9907
        %v9909 = vpop.f32.mrf.mxu0
        %v9910 = vpop.f32.mrf.mxu0
        %v9911 = vadd.f32 %v9255, %v9910
        %v9912 = vpop.f32.mrf.mxu0
        %9913 = vmatprep.mubr.bf16.mxu0 %v7146
        %9914 = vmatmul.mubr.bf16.gmra.mxu0 %v6890
        %v9915 = vpop.f32.mrf.mxu0
        %v9916 = vadd.f32 %v9255, %v9915
        %v9917 = vpop.f32.mrf.mxu0
        %v9918 = vpop.f32.mrf.mxu0
        %v9919 = vadd.f32 %v9255, %v9918
        %v9920 = vpop.f32.mrf.mxu0
        %9921 = vmatprep.mubr.bf16.mxu0 %v7147
        %9922 = vmatmul.mubr.bf16.gmra.mxu0 %v6891
        %v9923 = vpop.f32.mrf.mxu0
        %v9924 = vadd.f32 %v9255, %v9923
        %v9925 = vpop.f32.mrf.mxu0
        %v9926 = vpop.f32.mrf.mxu0
        %v9927 = vadd.f32 %v9255, %v9926
        %v9928 = vpop.f32.mrf.mxu0
        %9929 = vmatprep.mubr.bf16.mxu0 %v7148
        %9930 = vmatmul.mubr.bf16.gmra.mxu0 %v6892
        %v9931 = vpop.f32.mrf.mxu0
        %v9932 = vadd.f32 %v9255, %v9931
        %v9933 = vpop.f32.mrf.mxu0
        %v9934 = vpop.f32.mrf.mxu0
        %v9935 = vadd.f32 %v9255, %v9934
        %v9936 = vpop.f32.mrf.mxu0
        %9937 = vmatprep.mubr.bf16.mxu0 %v7149
        %9938 = vmatmul.mubr.bf16.gmra.mxu0 %v6893
        %v9939 = vpop.f32.mrf.mxu0
        %v9940 = vadd.f32 %v9255, %v9939
        %v9941 = vpop.f32.mrf.mxu0
        %v9942 = vpop.f32.mrf.mxu0
        %v9943 = vadd.f32 %v9255, %v9942
        %v9944 = vpop.f32.mrf.mxu0
        %9945 = vmatprep.mubr.bf16.mxu0 %v7150
        %9946 = vmatmul.mubr.bf16.gmra.mxu0 %v6894
        %v9947 = vpop.f32.mrf.mxu0
        %v9948 = vadd.f32 %v9255, %v9947
        %v9949 = vpop.f32.mrf.mxu0
        %v9950 = vpop.f32.mrf.mxu0
        %v9951 = vadd.f32 %v9255, %v9950
        %v9952 = vpop.f32.mrf.mxu0
        %9953 = vmatprep.mubr.bf16.mxu0 %v7151
        %9954 = vmatmul.mubr.bf16.gmra.mxu0 %v6895
        %v9955 = vpop.f32.mrf.mxu0
        %v9956 = vadd.f32 %v9255, %v9955
        %v9957 = vpop.f32.mrf.mxu0
        %v9958 = vpop.f32.mrf.mxu0
        %v9959 = vadd.f32 %v9255, %v9958
        %v9960 = vpop.f32.mrf.mxu0
        %9961 = vmatprep.mubr.bf16.mxu0 %v7152
        %9962 = vmatmul.mubr.bf16.gmra.mxu0 %v6896
        %v9963 = vpop.f32.mrf.mxu0
        %v9964 = vadd.f32 %v9255, %v9963
        %v9965 = vpop.f32.mrf.mxu0
        %v9966 = vpop.f32.mrf.mxu0
        %v9967 = vadd.f32 %v9255, %v9966
        %v9968 = vpop.f32.mrf.mxu0
        %9969 = vmatprep.mubr.bf16.mxu0 %v7153
        %9970 = vmatmul.mubr.bf16.gmra.mxu0 %v6897
        %v9971 = vpop.f32.mrf.mxu0
        %v9972 = vadd.f32 %v9255, %v9971
        %v9973 = vpop.f32.mrf.mxu0
        %v9974 = vpop.f32.mrf.mxu0
        %v9975 = vadd.f32 %v9255, %v9974
        %v9976 = vpop.f32.mrf.mxu0
        %9977 = vmatprep.mubr.bf16.mxu0 %v7154
        %9978 = vmatmul.mubr.bf16.gmra.mxu0 %v6898
        %v9979 = vpop.f32.mrf.mxu0
        %v9980 = vadd.f32 %v9255, %v9979
        %v9981 = vpop.f32.mrf.mxu0
        %v9982 = vpop.f32.mrf.mxu0
        %v9983 = vadd.f32 %v9255, %v9982
        %v9984 = vpop.f32.mrf.mxu0
        %9985 = vmatprep.mubr.bf16.mxu0 %v7155
        %9986 = vmatmul.mubr.bf16.gmra.mxu0 %v6899
        %v9987 = vpop.f32.mrf.mxu0
        %v9988 = vadd.f32 %v9255, %v9987
        %v9989 = vpop.f32.mrf.mxu0
        %v9990 = vpop.f32.mrf.mxu0
        %v9991 = vadd.f32 %v9255, %v9990
        %v9992 = vpop.f32.mrf.mxu0
        %9993 = vmatprep.mubr.bf16.mxu0 %v7156
        %9994 = vmatmul.mubr.bf16.gmra.mxu0 %v6900
        %v9995 = vpop.f32.mrf.mxu0
        %v9996 = vadd.f32 %v9255, %v9995
        %v9997 = vpop.f32.mrf.mxu0
        %v9998 = vpop.f32.mrf.mxu0
        %v9999 = vadd.f32 %v9255, %v9998
        %v10000 = vpop.f32.mrf.mxu0
        %10001 = vmatprep.mubr.bf16.mxu0 %v7157
        %10002 = vmatmul.mubr.bf16.gmra.mxu0 %v6901
        %v10003 = vpop.f32.mrf.mxu0
        %v10004 = vadd.f32 %v9255, %v10003
        %v10005 = vpop.f32.mrf.mxu0
        %v10006 = vpop.f32.mrf.mxu0
        %v10007 = vadd.f32 %v9255, %v10006
        %v10008 = vpop.f32.mrf.mxu0
        %10009 = vmatprep.mubr.bf16.mxu0 %v7158
        %10010 = vmatmul.mubr.bf16.gmra.mxu0 %v6902
        %v10011 = vpop.f32.mrf.mxu0
        %v10012 = vadd.f32 %v9255, %v10011
        %v10013 = vpop.f32.mrf.mxu0
        %v10014 = vpop.f32.mrf.mxu0
        %v10015 = vadd.f32 %v9255, %v10014
        %v10016 = vpop.f32.mrf.mxu0
        %10017 = vmatprep.mubr.bf16.mxu0 %v7159
        %10018 = vmatmul.mubr.bf16.gmra.mxu0 %v6903
        %v10019 = vpop.f32.mrf.mxu0
        %v10020 = vadd.f32 %v9255, %v10019
        %v10021 = vpop.f32.mrf.mxu0
        %v10022 = vpop.f32.mrf.mxu0
        %v10023 = vadd.f32 %v9255, %v10022
        %v10024 = vpop.f32.mrf.mxu0
        %10025 = vmatprep.mubr.bf16.mxu0 %v7160
        %10026 = vmatmul.mubr.bf16.gmra.mxu0 %v6904
        %v10027 = vpop.f32.mrf.mxu0
        %v10028 = vadd.f32 %v9255, %v10027
        %v10029 = vpop.f32.mrf.mxu0
        %v10030 = vpop.f32.mrf.mxu0
        %v10031 = vadd.f32 %v9255, %v10030
        %v10032 = vpop.f32.mrf.mxu0
        %10033 = vmatprep.mubr.bf16.mxu0 %v7161
        %10034 = vmatmul.mubr.bf16.gmra.mxu0 %v6905
        %v10035 = vpop.f32.mrf.mxu0
        %v10036 = vadd.f32 %v9255, %v10035
        %v10037 = vpop.f32.mrf.mxu0
        %v10038 = vpop.f32.mrf.mxu0
        %v10039 = vadd.f32 %v9255, %v10038
        %v10040 = vpop.f32.mrf.mxu0
        %10041 = vmatprep.mubr.bf16.mxu0 %v7162
        %10042 = vmatmul.mubr.bf16.gmra.mxu0 %v6906
        %v10043 = vpop.f32.mrf.mxu0
        %v10044 = vadd.f32 %v9255, %v10043
        %v10045 = vpop.f32.mrf.mxu0
        %v10046 = vpop.f32.mrf.mxu0
        %v10047 = vadd.f32 %v9255, %v10046
        %v10048 = vpop.f32.mrf.mxu0
        %10049 = vmatprep.mubr.bf16.mxu0 %v7163
        %10050 = vmatmul.mubr.bf16.gmra.mxu0 %v6907
        %v10051 = vpop.f32.mrf.mxu0
        %v10052 = vadd.f32 %v9255, %v10051
        %v10053 = vpop.f32.mrf.mxu0
        %v10054 = vpop.f32.mrf.mxu0
        %v10055 = vadd.f32 %v9255, %v10054
        %v10056 = vpop.f32.mrf.mxu0
        %10057 = vmatprep.mubr.bf16.mxu0 %v7164
        %10058 = vmatmul.mubr.bf16.gmra.mxu0 %v6908
        %v10059 = vpop.f32.mrf.mxu0
        %v10060 = vadd.f32 %v9255, %v10059
        %v10061 = vpop.f32.mrf.mxu0
        %v10062 = vpop.f32.mrf.mxu0
        %v10063 = vadd.f32 %v9255, %v10062
        %v10064 = vpop.f32.mrf.mxu0
        %10065 = vmatprep.mubr.bf16.mxu0 %v7165
        %10066 = vmatmul.mubr.bf16.gmra.mxu0 %v6909
        %v10067 = vpop.f32.mrf.mxu0
        %v10068 = vadd.f32 %v9255, %v10067
        %v10069 = vpop.f32.mrf.mxu0
        %v10070 = vpop.f32.mrf.mxu0
        %v10071 = vadd.f32 %v9255, %v10070
        %v10072 = vpop.f32.mrf.mxu0
        %10073 = vmatprep.mubr.bf16.mxu0 %v7166
        %10074 = vmatmul.mubr.bf16.gmra.mxu0 %v6910
        %v10075 = vpop.f32.mrf.mxu0
        %v10076 = vadd.f32 %v9255, %v10075
        %v10077 = vpop.f32.mrf.mxu0
        %v10078 = vpop.f32.mrf.mxu0
        %v10079 = vadd.f32 %v9255, %v10078
        %v10080 = vpop.f32.mrf.mxu0
        %10081 = vmatprep.mubr.bf16.mxu0 %v7167
        %10082 = vmatmul.mubr.bf16.gmra.mxu0 %v6911
        %v10083 = vpop.f32.mrf.mxu0
        %v10084 = vadd.f32 %v9255, %v10083
        %v10085 = vpop.f32.mrf.mxu0
        %v10086 = vpop.f32.mrf.mxu0
        %v10087 = vadd.f32 %v9255, %v10086
        %v10088 = vpop.f32.mrf.mxu0
        %10089 = vmatprep.mubr.bf16.mxu0 %v7168
        %10090 = vmatmul.mubr.bf16.gmra.mxu0 %v6912
        %v10091 = vpop.f32.mrf.mxu0
        %v10092 = vadd.f32 %v9255, %v10091
        %v10093 = vpop.f32.mrf.mxu0
        %v10094 = vpop.f32.mrf.mxu0
        %v10095 = vadd.f32 %v9255, %v10094
        %v10096 = vpop.f32.mrf.mxu0
        %10097 = vmatprep.mubr.bf16.mxu0 %v7169
        %10098 = vmatmul.mubr.bf16.gmra.mxu0 %v6913
        %v10099 = vpop.f32.mrf.mxu0
        %v10100 = vadd.f32 %v9255, %v10099
        %v10101 = vpop.f32.mrf.mxu0
        %v10102 = vpop.f32.mrf.mxu0
        %v10103 = vadd.f32 %v9255, %v10102
        %v10104 = vpop.f32.mrf.mxu0
        %10105 = vmatprep.mubr.bf16.mxu0 %v7170
        %10106 = vmatmul.mubr.bf16.gmra.mxu0 %v6914
        %v10107 = vpop.f32.mrf.mxu0
        %v10108 = vadd.f32 %v9255, %v10107
        %v10109 = vpop.f32.mrf.mxu0
        %v10110 = vpop.f32.mrf.mxu0
        %v10111 = vadd.f32 %v9255, %v10110
        %v10112 = vpop.f32.mrf.mxu0
        %10113 = vmatprep.mubr.bf16.mxu0 %v7171
        %10114 = vmatmul.mubr.bf16.gmra.mxu0 %v6915
        %v10115 = vpop.f32.mrf.mxu0
        %v10116 = vadd.f32 %v9255, %v10115
        %v10117 = vpop.f32.mrf.mxu0
        %v10118 = vpop.f32.mrf.mxu0
        %v10119 = vadd.f32 %v9255, %v10118
        %v10120 = vpop.f32.mrf.mxu0
        %10121 = vmatprep.mubr.bf16.mxu0 %v7172
        %10122 = vmatmul.mubr.bf16.gmra.mxu0 %v6916
        %v10123 = vpop.f32.mrf.mxu0
        %v10124 = vadd.f32 %v9255, %v10123
        %v10125 = vpop.f32.mrf.mxu0
        %v10126 = vpop.f32.mrf.mxu0
        %v10127 = vadd.f32 %v9255, %v10126
        %v10128 = vpop.f32.mrf.mxu0
        %10129 = vmatprep.mubr.bf16.mxu0 %v7173
        %10130 = vmatmul.mubr.bf16.gmra.mxu0 %v6917
        %v10131 = vpop.f32.mrf.mxu0
        %v10132 = vadd.f32 %v9255, %v10131
        %v10133 = vpop.f32.mrf.mxu0
        %v10134 = vpop.f32.mrf.mxu0
        %v10135 = vadd.f32 %v9255, %v10134
        %v10136 = vpop.f32.mrf.mxu0
        %10137 = vmatprep.mubr.bf16.mxu0 %v7174
        %10138 = vmatmul.mubr.bf16.gmra.mxu0 %v6918
        %v10139 = vpop.f32.mrf.mxu0
        %v10140 = vadd.f32 %v9255, %v10139
        %v10141 = vpop.f32.mrf.mxu0
        %v10142 = vpop.f32.mrf.mxu0
        %v10143 = vadd.f32 %v9255, %v10142
        %v10144 = vpop.f32.mrf.mxu0
        %10145 = vmatprep.mubr.bf16.mxu0 %v7175
        %10146 = vmatmul.mubr.bf16.gmra.mxu0 %v6919
        %v10147 = vpop.f32.mrf.mxu0
        %v10148 = vadd.f32 %v9255, %v10147
        %v10149 = vpop.f32.mrf.mxu0
        %v10150 = vpop.f32.mrf.mxu0
        %v10151 = vadd.f32 %v9255, %v10150
        %v10152 = vpop.f32.mrf.mxu0
        %10153 = vmatprep.mubr.bf16.mxu0 %v7176
        %10154 = vmatmul.mubr.bf16.gmra.mxu0 %v6920
        %v10155 = vpop.f32.mrf.mxu0
        %v10156 = vadd.f32 %v9255, %v10155
        %v10157 = vpop.f32.mrf.mxu0
        %v10158 = vpop.f32.mrf.mxu0
        %v10159 = vadd.f32 %v9255, %v10158
        %v10160 = vpop.f32.mrf.mxu0
        %10161 = vmatprep.mubr.bf16.mxu0 %v7177
        %10162 = vmatmul.mubr.bf16.gmra.mxu0 %v6921
        %v10163 = vpop.f32.mrf.mxu0
        %v10164 = vadd.f32 %v9255, %v10163
        %v10165 = vpop.f32.mrf.mxu0
        %v10166 = vpop.f32.mrf.mxu0
        %v10167 = vadd.f32 %v9255, %v10166
        %v10168 = vpop.f32.mrf.mxu0
        %10169 = vmatprep.mubr.bf16.mxu0 %v7178
        %10170 = vmatmul.mubr.bf16.gmra.mxu0 %v6922
        %v10171 = vpop.f32.mrf.mxu0
        %v10172 = vadd.f32 %v9255, %v10171
        %v10173 = vpop.f32.mrf.mxu0
        %v10174 = vpop.f32.mrf.mxu0
        %v10175 = vadd.f32 %v9255, %v10174
        %v10176 = vpop.f32.mrf.mxu0
        %10177 = vmatprep.mubr.bf16.mxu0 %v7179
        %10178 = vmatmul.mubr.bf16.gmra.mxu0 %v6923
        %v10179 = vpop.f32.mrf.mxu0
        %v10180 = vadd.f32 %v9255, %v10179
        %v10181 = vpop.f32.mrf.mxu0
        %v10182 = vpop.f32.mrf.mxu0
        %v10183 = vadd.f32 %v9255, %v10182
        %v10184 = vpop.f32.mrf.mxu0
        %10185 = vmatprep.mubr.bf16.mxu0 %v7180
        %10186 = vmatmul.mubr.bf16.gmra.mxu0 %v6924
        %v10187 = vpop.f32.mrf.mxu0
        %v10188 = vadd.f32 %v9255, %v10187
        %v10189 = vpop.f32.mrf.mxu0
        %v10190 = vpop.f32.mrf.mxu0
        %v10191 = vadd.f32 %v9255, %v10190
        %v10192 = vpop.f32.mrf.mxu0
        %10193 = vmatprep.mubr.bf16.mxu0 %v7181
        %10194 = vmatmul.mubr.bf16.gmra.mxu0 %v6925
        %v10195 = vpop.f32.mrf.mxu0
        %v10196 = vadd.f32 %v9255, %v10195
        %v10197 = vpop.f32.mrf.mxu0
        %v10198 = vpop.f32.mrf.mxu0
        %v10199 = vadd.f32 %v9255, %v10198
        %v10200 = vpop.f32.mrf.mxu0
        %10201 = vmatprep.mubr.bf16.mxu0 %v7182
        %10202 = vmatmul.mubr.bf16.gmra.mxu0 %v6926
        %v10203 = vpop.f32.mrf.mxu0
        %v10204 = vadd.f32 %v9255, %v10203
        %v10205 = vpop.f32.mrf.mxu0
        %v10206 = vpop.f32.mrf.mxu0
        %v10207 = vadd.f32 %v9255, %v10206
        %v10208 = vpop.f32.mrf.mxu0
        %10209 = vmatprep.mubr.bf16.mxu0 %v7183
        %10210 = vmatmul.mubr.bf16.gmra.mxu0 %v6927
        %v10211 = vpop.f32.mrf.mxu0
        %v10212 = vadd.f32 %v9255, %v10211
        %v10213 = vpop.f32.mrf.mxu0
        %v10214 = vpop.f32.mrf.mxu0
        %v10215 = vadd.f32 %v9255, %v10214
        %v10216 = vpop.f32.mrf.mxu0
        %10217 = vmatprep.mubr.bf16.mxu0 %v7184
        %10218 = vmatmul.mubr.bf16.gmra.mxu0 %v6928
        %v10219 = vpop.f32.mrf.mxu0
        %v10220 = vadd.f32 %v9255, %v10219
        %v10221 = vpop.f32.mrf.mxu0
        %v10222 = vpop.f32.mrf.mxu0
        %v10223 = vadd.f32 %v9255, %v10222
        %v10224 = vpop.f32.mrf.mxu0
        %10225 = vmatprep.mubr.bf16.mxu0 %v7185
        %10226 = vmatmul.mubr.bf16.gmra.mxu0 %v6929
        %v10227 = vpop.f32.mrf.mxu0
        %v10228 = vadd.f32 %v9255, %v10227
        %v10229 = vpop.f32.mrf.mxu0
        %v10230 = vpop.f32.mrf.mxu0
        %v10231 = vadd.f32 %v9255, %v10230
        %v10232 = vpop.f32.mrf.mxu0
        %10233 = vdwg.mxu0
        %10234 = vmatprep.subr.bf16.mxu0 0
        %10235 = vmatpush1.bf16.msra.mxu0 %v9568
        %10236 = vmatprep.subr.bf16.mxu0 0
        %10237 = vmatpush1.bf16.msra.mxu0 %v9567
        %10238 = vmatprep.subr.bf16.mxu0 0
        %10239 = vmatpush1.bf16.msra.mxu0 %v9566
        %10240 = vmatprep.subr.bf16.mxu0 0
        %10241 = vmatpush1.bf16.msra.mxu0 %v9565
        %10242 = vmatprep.subr.bf16.mxu0 0
        %10243 = vmatpush1.bf16.msra.mxu0 %v9564
        %10244 = vmatprep.subr.bf16.mxu0 0
        %10245 = vmatpush1.bf16.msra.mxu0 %v9563
        %10246 = vmatprep.subr.bf16.mxu0 0
        %10247 = vmatpush1.bf16.msra.mxu0 %v9562
        %10248 = vmatprep.subr.bf16.mxu0 0
        %10249 = vmatpush1.bf16.msra.mxu0 %v9561
        %10250 = vmatprep.subr.bf16.mxu0 0
        %10251 = vmatpush2.bf16.msra.mxu0 %v9576
        %10252 = vmatprep.subr.bf16.mxu0 0
        %10253 = vmatpush2.bf16.msra.mxu0 %v9575
        %10254 = vmatprep.subr.bf16.mxu0 0
        %10255 = vmatpush2.bf16.msra.mxu0 %v9574
        %10256 = vmatprep.subr.bf16.mxu0 0
        %10257 = vmatpush2.bf16.msra.mxu0 %v9573
        %10258 = vmatprep.subr.bf16.mxu0 0
        %10259 = vmatpush2.bf16.msra.mxu0 %v9572
        %10260 = vmatprep.subr.bf16.mxu0 0
        %10261 = vmatpush2.bf16.msra.mxu0 %v9571
        %10262 = vmatprep.subr.bf16.mxu0 0
        %10263 = vmatpush2.bf16.msra.mxu0 %v9570
        %10264 = vmatprep.subr.bf16.mxu0 0
        %10265 = vmatpush2.bf16.msra.mxu0 %v9569
        %10266 = vmatprep.mubr.bf16.mxu0 %v7666
        %10267 = vmatmul.mubr.bf16.gmra.mxu0 %v7378
        %v10268 = vpop.f32.mrf.mxu0
        %v10269 = vadd.f32 %v9724, %v10268
        %v10270 = vpop.f32.mrf.mxu0
        %v10271 = vpop.f32.mrf.mxu0
        %v10272 = vadd.f32 %v9727, %v10271
        %v10273 = vpop.f32.mrf.mxu0
        %10274 = vmatprep.mubr.bf16.mxu0 %v7667
        %10275 = vmatmul.mubr.bf16.gmra.mxu0 %v7379
        %v10276 = vpop.f32.mrf.mxu0
        %v10277 = vadd.f32 %v9732, %v10276
        %v10278 = vpop.f32.mrf.mxu0
        %v10279 = vpop.f32.mrf.mxu0
        %v10280 = vadd.f32 %v9735, %v10279
        %v10281 = vpop.f32.mrf.mxu0
        %10282 = vmatprep.mubr.bf16.mxu0 %v7668
        %10283 = vmatmul.mubr.bf16.gmra.mxu0 %v7380
        %v10284 = vpop.f32.mrf.mxu0
        %v10285 = vadd.f32 %v9740, %v10284
        %v10286 = vpop.f32.mrf.mxu0
        %v10287 = vpop.f32.mrf.mxu0
        %v10288 = vadd.f32 %v9743, %v10287
        %v10289 = vpop.f32.mrf.mxu0
        %10290 = vmatprep.mubr.bf16.mxu0 %v7669
        %10291 = vmatmul.mubr.bf16.gmra.mxu0 %v7381
        %v10292 = vpop.f32.mrf.mxu0
        %v10293 = vadd.f32 %v9748, %v10292
        %v10294 = vpop.f32.mrf.mxu0
        %v10295 = vpop.f32.mrf.mxu0
        %v10296 = vadd.f32 %v9751, %v10295
        %v10297 = vpop.f32.mrf.mxu0
        %10298 = vmatprep.mubr.bf16.mxu0 %v7670
        %10299 = vmatmul.mubr.bf16.gmra.mxu0 %v7382
        %v10300 = vpop.f32.mrf.mxu0
        %v10301 = vadd.f32 %v9756, %v10300
        %v10302 = vpop.f32.mrf.mxu0
        %v10303 = vpop.f32.mrf.mxu0
        %v10304 = vadd.f32 %v9759, %v10303
        %v10305 = vpop.f32.mrf.mxu0
        %10306 = vmatprep.mubr.bf16.mxu0 %v7671
        %10307 = vmatmul.mubr.bf16.gmra.mxu0 %v7383
        %v10308 = vpop.f32.mrf.mxu0
        %v10309 = vadd.f32 %v9764, %v10308
        %v10310 = vpop.f32.mrf.mxu0
        %v10311 = vpop.f32.mrf.mxu0
        %v10312 = vadd.f32 %v9767, %v10311
        %v10313 = vpop.f32.mrf.mxu0
        %10314 = vmatprep.mubr.bf16.mxu0 %v7672
        %10315 = vmatmul.mubr.bf16.gmra.mxu0 %v7384
        %v10316 = vpop.f32.mrf.mxu0
        %v10317 = vadd.f32 %v9772, %v10316
        %v10318 = vpop.f32.mrf.mxu0
        %v10319 = vpop.f32.mrf.mxu0
        %v10320 = vadd.f32 %v9775, %v10319
        %v10321 = vpop.f32.mrf.mxu0
        %10322 = vmatprep.mubr.bf16.mxu0 %v7673
        %10323 = vmatmul.mubr.bf16.gmra.mxu0 %v7385
        %v10324 = vpop.f32.mrf.mxu0
        %v10325 = vadd.f32 %v9780, %v10324
        %v10326 = vpop.f32.mrf.mxu0
        %v10327 = vpop.f32.mrf.mxu0
        %v10328 = vadd.f32 %v9783, %v10327
        %v10329 = vpop.f32.mrf.mxu0
        %10330 = vmatprep.mubr.bf16.mxu0 %v7674
        %10331 = vmatmul.mubr.bf16.gmra.mxu0 %v7386
        %v10332 = vpop.f32.mrf.mxu0
        %v10333 = vadd.f32 %v9788, %v10332
        %v10334 = vpop.f32.mrf.mxu0
        %v10335 = vpop.f32.mrf.mxu0
        %v10336 = vadd.f32 %v9791, %v10335
        %v10337 = vpop.f32.mrf.mxu0
        %10338 = vmatprep.mubr.bf16.mxu0 %v7675
        %10339 = vmatmul.mubr.bf16.gmra.mxu0 %v7387
        %v10340 = vpop.f32.mrf.mxu0
        %v10341 = vadd.f32 %v9796, %v10340
        %v10342 = vpop.f32.mrf.mxu0
        %v10343 = vpop.f32.mrf.mxu0
        %v10344 = vadd.f32 %v9799, %v10343
        %v10345 = vpop.f32.mrf.mxu0
        %10346 = vmatprep.mubr.bf16.mxu0 %v7676
        %10347 = vmatmul.mubr.bf16.gmra.mxu0 %v7388
        %v10348 = vpop.f32.mrf.mxu0
        %v10349 = vadd.f32 %v9804, %v10348
        %v10350 = vpop.f32.mrf.mxu0
        %v10351 = vpop.f32.mrf.mxu0
        %v10352 = vadd.f32 %v9807, %v10351
        %v10353 = vpop.f32.mrf.mxu0
        %10354 = vmatprep.mubr.bf16.mxu0 %v7677
        %10355 = vmatmul.mubr.bf16.gmra.mxu0 %v7389
        %v10356 = vpop.f32.mrf.mxu0
        %v10357 = vadd.f32 %v9812, %v10356
        %v10358 = vpop.f32.mrf.mxu0
        %v10359 = vpop.f32.mrf.mxu0
        %v10360 = vadd.f32 %v9815, %v10359
        %v10361 = vpop.f32.mrf.mxu0
        %10362 = vmatprep.mubr.bf16.mxu0 %v7678
        %10363 = vmatmul.mubr.bf16.gmra.mxu0 %v7390
        %v10364 = vpop.f32.mrf.mxu0
        %v10365 = vadd.f32 %v9820, %v10364
        %v10366 = vpop.f32.mrf.mxu0
        %v10367 = vpop.f32.mrf.mxu0
        %v10368 = vadd.f32 %v9823, %v10367
        %v10369 = vpop.f32.mrf.mxu0
        %10370 = vmatprep.mubr.bf16.mxu0 %v7679
        %10371 = vmatmul.mubr.bf16.gmra.mxu0 %v7391
        %v10372 = vpop.f32.mrf.mxu0
        %v10373 = vadd.f32 %v9828, %v10372
        %v10374 = vpop.f32.mrf.mxu0
        %v10375 = vpop.f32.mrf.mxu0
        %v10376 = vadd.f32 %v9831, %v10375
        %v10377 = vpop.f32.mrf.mxu0
        %10378 = vmatprep.mubr.bf16.mxu0 %v7680
        %10379 = vmatmul.mubr.bf16.gmra.mxu0 %v7392
        %v10380 = vpop.f32.mrf.mxu0
        %v10381 = vadd.f32 %v9836, %v10380
        %v10382 = vpop.f32.mrf.mxu0
        %v10383 = vpop.f32.mrf.mxu0
        %v10384 = vadd.f32 %v9839, %v10383
        %v10385 = vpop.f32.mrf.mxu0
        %10386 = vmatprep.mubr.bf16.mxu0 %v7681
        %10387 = vmatmul.mubr.bf16.gmra.mxu0 %v7393
        %v10388 = vpop.f32.mrf.mxu0
        %v10389 = vadd.f32 %v9844, %v10388
        %v10390 = vpop.f32.mrf.mxu0
        %v10391 = vpop.f32.mrf.mxu0
        %v10392 = vadd.f32 %v9847, %v10391
        %v10393 = vpop.f32.mrf.mxu0
        %10394 = vmatprep.mubr.bf16.mxu0 %v7682
        %10395 = vmatmul.mubr.bf16.gmra.mxu0 %v7394
        %v10396 = vpop.f32.mrf.mxu0
        %v10397 = vadd.f32 %v9852, %v10396
        %v10398 = vpop.f32.mrf.mxu0
        %v10399 = vpop.f32.mrf.mxu0
        %v10400 = vadd.f32 %v9855, %v10399
        %v10401 = vpop.f32.mrf.mxu0
        %10402 = vmatprep.mubr.bf16.mxu0 %v7683
        %10403 = vmatmul.mubr.bf16.gmra.mxu0 %v7395
        %v10404 = vpop.f32.mrf.mxu0
        %v10405 = vadd.f32 %v9860, %v10404
        %v10406 = vpop.f32.mrf.mxu0
        %v10407 = vpop.f32.mrf.mxu0
        %v10408 = vadd.f32 %v9863, %v10407
        %v10409 = vpop.f32.mrf.mxu0
        %10410 = vmatprep.mubr.bf16.mxu0 %v7684
        %10411 = vmatmul.mubr.bf16.gmra.mxu0 %v7396
        %v10412 = vpop.f32.mrf.mxu0
        %v10413 = vadd.f32 %v9868, %v10412
        %v10414 = vpop.f32.mrf.mxu0
        %v10415 = vpop.f32.mrf.mxu0
        %v10416 = vadd.f32 %v9871, %v10415
        %v10417 = vpop.f32.mrf.mxu0
        %10418 = vmatprep.mubr.bf16.mxu0 %v7685
        %10419 = vmatmul.mubr.bf16.gmra.mxu0 %v7397
        %v10420 = vpop.f32.mrf.mxu0
        %v10421 = vadd.f32 %v9876, %v10420
        %v10422 = vpop.f32.mrf.mxu0
        %v10423 = vpop.f32.mrf.mxu0
        %v10424 = vadd.f32 %v9879, %v10423
        %v10425 = vpop.f32.mrf.mxu0
        %10426 = vmatprep.mubr.bf16.mxu0 %v7686
        %10427 = vmatmul.mubr.bf16.gmra.mxu0 %v7398
        %v10428 = vpop.f32.mrf.mxu0
        %v10429 = vadd.f32 %v9884, %v10428
        %v10430 = vpop.f32.mrf.mxu0
        %v10431 = vpop.f32.mrf.mxu0
        %v10432 = vadd.f32 %v9887, %v10431
        %v10433 = vpop.f32.mrf.mxu0
        %10434 = vmatprep.mubr.bf16.mxu0 %v7687
        %10435 = vmatmul.mubr.bf16.gmra.mxu0 %v7399
        %v10436 = vpop.f32.mrf.mxu0
        %v10437 = vadd.f32 %v9892, %v10436
        %v10438 = vpop.f32.mrf.mxu0
        %v10439 = vpop.f32.mrf.mxu0
        %v10440 = vadd.f32 %v9895, %v10439
        %v10441 = vpop.f32.mrf.mxu0
        %10442 = vmatprep.mubr.bf16.mxu0 %v7688
        %10443 = vmatmul.mubr.bf16.gmra.mxu0 %v7400
        %v10444 = vpop.f32.mrf.mxu0
        %v10445 = vadd.f32 %v9900, %v10444
        %v10446 = vpop.f32.mrf.mxu0
        %v10447 = vpop.f32.mrf.mxu0
        %v10448 = vadd.f32 %v9903, %v10447
        %v10449 = vpop.f32.mrf.mxu0
        %10450 = vmatprep.mubr.bf16.mxu0 %v7689
        %10451 = vmatmul.mubr.bf16.gmra.mxu0 %v7401
        %v10452 = vpop.f32.mrf.mxu0
        %v10453 = vadd.f32 %v9908, %v10452
        %v10454 = vpop.f32.mrf.mxu0
        %v10455 = vpop.f32.mrf.mxu0
        %v10456 = vadd.f32 %v9911, %v10455
        %v10457 = vpop.f32.mrf.mxu0
        %10458 = vmatprep.mubr.bf16.mxu0 %v7690
        %10459 = vmatmul.mubr.bf16.gmra.mxu0 %v7402
        %v10460 = vpop.f32.mrf.mxu0
        %v10461 = vadd.f32 %v9916, %v10460
        %v10462 = vpop.f32.mrf.mxu0
        %v10463 = vpop.f32.mrf.mxu0
        %v10464 = vadd.f32 %v9919, %v10463
        %v10465 = vpop.f32.mrf.mxu0
        %10466 = vmatprep.mubr.bf16.mxu0 %v7691
        %10467 = vmatmul.mubr.bf16.gmra.mxu0 %v7403
        %v10468 = vpop.f32.mrf.mxu0
        %v10469 = vadd.f32 %v9924, %v10468
        %v10470 = vpop.f32.mrf.mxu0
        %v10471 = vpop.f32.mrf.mxu0
        %v10472 = vadd.f32 %v9927, %v10471
        %v10473 = vpop.f32.mrf.mxu0
        %10474 = vmatprep.mubr.bf16.mxu0 %v7692
        %10475 = vmatmul.mubr.bf16.gmra.mxu0 %v7404
        %v10476 = vpop.f32.mrf.mxu0
        %v10477 = vadd.f32 %v9932, %v10476
        %v10478 = vpop.f32.mrf.mxu0
        %v10479 = vpop.f32.mrf.mxu0
        %v10480 = vadd.f32 %v9935, %v10479
        %v10481 = vpop.f32.mrf.mxu0
        %10482 = vmatprep.mubr.bf16.mxu0 %v7693
        %10483 = vmatmul.mubr.bf16.gmra.mxu0 %v7405
        %v10484 = vpop.f32.mrf.mxu0
        %v10485 = vadd.f32 %v9940, %v10484
        %v10486 = vpop.f32.mrf.mxu0
        %v10487 = vpop.f32.mrf.mxu0
        %v10488 = vadd.f32 %v9943, %v10487
        %v10489 = vpop.f32.mrf.mxu0
        %10490 = vmatprep.mubr.bf16.mxu0 %v7694
        %10491 = vmatmul.mubr.bf16.gmra.mxu0 %v7406
        %v10492 = vpop.f32.mrf.mxu0
        %v10493 = vadd.f32 %v9948, %v10492
        %v10494 = vpop.f32.mrf.mxu0
        %v10495 = vpop.f32.mrf.mxu0
        %v10496 = vadd.f32 %v9951, %v10495
        %v10497 = vpop.f32.mrf.mxu0
        %10498 = vmatprep.mubr.bf16.mxu0 %v7695
        %10499 = vmatmul.mubr.bf16.gmra.mxu0 %v7407
        %v10500 = vpop.f32.mrf.mxu0
        %v10501 = vadd.f32 %v9956, %v10500
        %v10502 = vpop.f32.mrf.mxu0
        %v10503 = vpop.f32.mrf.mxu0
        %v10504 = vadd.f32 %v9959, %v10503
        %v10505 = vpop.f32.mrf.mxu0
        %10506 = vmatprep.mubr.bf16.mxu0 %v7696
        %10507 = vmatmul.mubr.bf16.gmra.mxu0 %v7408
        %v10508 = vpop.f32.mrf.mxu0
        %v10509 = vadd.f32 %v9964, %v10508
        %v10510 = vpop.f32.mrf.mxu0
        %v10511 = vpop.f32.mrf.mxu0
        %v10512 = vadd.f32 %v9967, %v10511
        %v10513 = vpop.f32.mrf.mxu0
        %10514 = vmatprep.mubr.bf16.mxu0 %v7697
        %10515 = vmatmul.mubr.bf16.gmra.mxu0 %v7409
        %v10516 = vpop.f32.mrf.mxu0
        %v10517 = vadd.f32 %v9972, %v10516
        %v10518 = vpop.f32.mrf.mxu0
        %v10519 = vpop.f32.mrf.mxu0
        %v10520 = vadd.f32 %v9975, %v10519
        %v10521 = vpop.f32.mrf.mxu0
        %10522 = vmatprep.mubr.bf16.mxu0 %v7698
        %10523 = vmatmul.mubr.bf16.gmra.mxu0 %v7410
        %v10524 = vpop.f32.mrf.mxu0
        %v10525 = vadd.f32 %v9980, %v10524
        %v10526 = vpop.f32.mrf.mxu0
        %v10527 = vpop.f32.mrf.mxu0
        %v10528 = vadd.f32 %v9983, %v10527
        %v10529 = vpop.f32.mrf.mxu0
        %10530 = vmatprep.mubr.bf16.mxu0 %v7699
        %10531 = vmatmul.mubr.bf16.gmra.mxu0 %v7411
        %v10532 = vpop.f32.mrf.mxu0
        %v10533 = vadd.f32 %v9988, %v10532
        %v10534 = vpop.f32.mrf.mxu0
        %v10535 = vpop.f32.mrf.mxu0
        %v10536 = vadd.f32 %v9991, %v10535
        %v10537 = vpop.f32.mrf.mxu0
        %10538 = vmatprep.mubr.bf16.mxu0 %v7700
        %10539 = vmatmul.mubr.bf16.gmra.mxu0 %v7412
        %v10540 = vpop.f32.mrf.mxu0
        %v10541 = vadd.f32 %v9996, %v10540
        %v10542 = vpop.f32.mrf.mxu0
        %v10543 = vpop.f32.mrf.mxu0
        %v10544 = vadd.f32 %v9999, %v10543
        %v10545 = vpop.f32.mrf.mxu0
        %10546 = vmatprep.mubr.bf16.mxu0 %v7701
        %10547 = vmatmul.mubr.bf16.gmra.mxu0 %v7413
        %v10548 = vpop.f32.mrf.mxu0
        %v10549 = vadd.f32 %v10004, %v10548
        %v10550 = vpop.f32.mrf.mxu0
        %v10551 = vpop.f32.mrf.mxu0
        %v10552 = vadd.f32 %v10007, %v10551
        %v10553 = vpop.f32.mrf.mxu0
        %10554 = vmatprep.mubr.bf16.mxu0 %v7702
        %10555 = vmatmul.mubr.bf16.gmra.mxu0 %v7414
        %v10556 = vpop.f32.mrf.mxu0
        %v10557 = vadd.f32 %v10012, %v10556
        %v10558 = vpop.f32.mrf.mxu0
        %v10559 = vpop.f32.mrf.mxu0
        %v10560 = vadd.f32 %v10015, %v10559
        %v10561 = vpop.f32.mrf.mxu0
        %10562 = vmatprep.mubr.bf16.mxu0 %v7703
        %10563 = vmatmul.mubr.bf16.gmra.mxu0 %v7415
        %v10564 = vpop.f32.mrf.mxu0
        %v10565 = vadd.f32 %v10020, %v10564
        %v10566 = vpop.f32.mrf.mxu0
        %v10567 = vpop.f32.mrf.mxu0
        %v10568 = vadd.f32 %v10023, %v10567
        %v10569 = vpop.f32.mrf.mxu0
        %10570 = vmatprep.mubr.bf16.mxu0 %v7704
        %10571 = vmatmul.mubr.bf16.gmra.mxu0 %v7416
        %v10572 = vpop.f32.mrf.mxu0
        %v10573 = vadd.f32 %v10028, %v10572
        %v10574 = vpop.f32.mrf.mxu0
        %v10575 = vpop.f32.mrf.mxu0
        %v10576 = vadd.f32 %v10031, %v10575
        %v10577 = vpop.f32.mrf.mxu0
        %10578 = vmatprep.mubr.bf16.mxu0 %v7705
        %10579 = vmatmul.mubr.bf16.gmra.mxu0 %v7417
        %v10580 = vpop.f32.mrf.mxu0
        %v10581 = vadd.f32 %v10036, %v10580
        %v10582 = vpop.f32.mrf.mxu0
        %v10583 = vpop.f32.mrf.mxu0
        %v10584 = vadd.f32 %v10039, %v10583
        %v10585 = vpop.f32.mrf.mxu0
        %10586 = vmatprep.mubr.bf16.mxu0 %v7706
        %10587 = vmatmul.mubr.bf16.gmra.mxu0 %v7418
        %v10588 = vpop.f32.mrf.mxu0
        %v10589 = vadd.f32 %v10044, %v10588
        %v10590 = vpop.f32.mrf.mxu0
        %v10591 = vpop.f32.mrf.mxu0
        %v10592 = vadd.f32 %v10047, %v10591
        %v10593 = vpop.f32.mrf.mxu0
        %10594 = vmatprep.mubr.bf16.mxu0 %v7707
        %10595 = vmatmul.mubr.bf16.gmra.mxu0 %v7419
        %v10596 = vpop.f32.mrf.mxu0
        %v10597 = vadd.f32 %v10052, %v10596
        %v10598 = vpop.f32.mrf.mxu0
        %v10599 = vpop.f32.mrf.mxu0
        %v10600 = vadd.f32 %v10055, %v10599
        %v10601 = vpop.f32.mrf.mxu0
        %10602 = vmatprep.mubr.bf16.mxu0 %v7708
        %10603 = vmatmul.mubr.bf16.gmra.mxu0 %v7420
        %v10604 = vpop.f32.mrf.mxu0
        %v10605 = vadd.f32 %v10060, %v10604
        %v10606 = vpop.f32.mrf.mxu0
        %v10607 = vpop.f32.mrf.mxu0
        %v10608 = vadd.f32 %v10063, %v10607
        %v10609 = vpop.f32.mrf.mxu0
        %10610 = vmatprep.mubr.bf16.mxu0 %v7709
        %10611 = vmatmul.mubr.bf16.gmra.mxu0 %v7421
        %v10612 = vpop.f32.mrf.mxu0
        %v10613 = vadd.f32 %v10068, %v10612
        %v10614 = vpop.f32.mrf.mxu0
        %v10615 = vpop.f32.mrf.mxu0
        %v10616 = vadd.f32 %v10071, %v10615
        %v10617 = vpop.f32.mrf.mxu0
        %10618 = vmatprep.mubr.bf16.mxu0 %v7710
        %10619 = vmatmul.mubr.bf16.gmra.mxu0 %v7422
        %v10620 = vpop.f32.mrf.mxu0
        %v10621 = vadd.f32 %v10076, %v10620
        %v10622 = vpop.f32.mrf.mxu0
        %v10623 = vpop.f32.mrf.mxu0
        %v10624 = vadd.f32 %v10079, %v10623
        %v10625 = vpop.f32.mrf.mxu0
        %10626 = vmatprep.mubr.bf16.mxu0 %v7711
        %10627 = vmatmul.mubr.bf16.gmra.mxu0 %v7423
        %v10628 = vpop.f32.mrf.mxu0
        %v10629 = vadd.f32 %v10084, %v10628
        %v10630 = vpop.f32.mrf.mxu0
        %v10631 = vpop.f32.mrf.mxu0
        %v10632 = vadd.f32 %v10087, %v10631
        %v10633 = vpop.f32.mrf.mxu0
        %10634 = vmatprep.mubr.bf16.mxu0 %v7712
        %10635 = vmatmul.mubr.bf16.gmra.mxu0 %v7424
        %v10636 = vpop.f32.mrf.mxu0
        %v10637 = vadd.f32 %v10092, %v10636
        %v10638 = vpop.f32.mrf.mxu0
        %v10639 = vpop.f32.mrf.mxu0
        %v10640 = vadd.f32 %v10095, %v10639
        %v10641 = vpop.f32.mrf.mxu0
        %10642 = vmatprep.mubr.bf16.mxu0 %v7713
        %10643 = vmatmul.mubr.bf16.gmra.mxu0 %v7425
        %v10644 = vpop.f32.mrf.mxu0
        %v10645 = vadd.f32 %v10100, %v10644
        %v10646 = vpop.f32.mrf.mxu0
        %v10647 = vpop.f32.mrf.mxu0
        %v10648 = vadd.f32 %v10103, %v10647
        %v10649 = vpop.f32.mrf.mxu0
        %10650 = vmatprep.mubr.bf16.mxu0 %v7714
        %10651 = vmatmul.mubr.bf16.gmra.mxu0 %v7426
        %v10652 = vpop.f32.mrf.mxu0
        %v10653 = vadd.f32 %v10108, %v10652
        %v10654 = vpop.f32.mrf.mxu0
        %v10655 = vpop.f32.mrf.mxu0
        %v10656 = vadd.f32 %v10111, %v10655
        %v10657 = vpop.f32.mrf.mxu0
        %10658 = vmatprep.mubr.bf16.mxu0 %v7715
        %10659 = vmatmul.mubr.bf16.gmra.mxu0 %v7427
        %v10660 = vpop.f32.mrf.mxu0
        %v10661 = vadd.f32 %v10116, %v10660
        %v10662 = vpop.f32.mrf.mxu0
        %v10663 = vpop.f32.mrf.mxu0
        %v10664 = vadd.f32 %v10119, %v10663
        %v10665 = vpop.f32.mrf.mxu0
        %10666 = vmatprep.mubr.bf16.mxu0 %v7716
        %10667 = vmatmul.mubr.bf16.gmra.mxu0 %v7428
        %v10668 = vpop.f32.mrf.mxu0
        %v10669 = vadd.f32 %v10124, %v10668
        %v10670 = vpop.f32.mrf.mxu0
        %v10671 = vpop.f32.mrf.mxu0
        %v10672 = vadd.f32 %v10127, %v10671
        %v10673 = vpop.f32.mrf.mxu0
        %10674 = vmatprep.mubr.bf16.mxu0 %v7717
        %10675 = vmatmul.mubr.bf16.gmra.mxu0 %v7429
        %v10676 = vpop.f32.mrf.mxu0
        %v10677 = vadd.f32 %v10132, %v10676
        %v10678 = vpop.f32.mrf.mxu0
        %v10679 = vpop.f32.mrf.mxu0
        %v10680 = vadd.f32 %v10135, %v10679
        %v10681 = vpop.f32.mrf.mxu0
        %10682 = vmatprep.mubr.bf16.mxu0 %v7718
        %10683 = vmatmul.mubr.bf16.gmra.mxu0 %v7430
        %v10684 = vpop.f32.mrf.mxu0
        %v10685 = vadd.f32 %v10140, %v10684
        %v10686 = vpop.f32.mrf.mxu0
        %v10687 = vpop.f32.mrf.mxu0
        %v10688 = vadd.f32 %v10143, %v10687
        %v10689 = vpop.f32.mrf.mxu0
        %10690 = vmatprep.mubr.bf16.mxu0 %v7719
        %10691 = vmatmul.mubr.bf16.gmra.mxu0 %v7431
        %v10692 = vpop.f32.mrf.mxu0
        %v10693 = vadd.f32 %v10148, %v10692
        %v10694 = vpop.f32.mrf.mxu0
        %v10695 = vpop.f32.mrf.mxu0
        %v10696 = vadd.f32 %v10151, %v10695
        %v10697 = vpop.f32.mrf.mxu0
        %10698 = vmatprep.mubr.bf16.mxu0 %v7720
        %10699 = vmatmul.mubr.bf16.gmra.mxu0 %v7432
        %v10700 = vpop.f32.mrf.mxu0
        %v10701 = vadd.f32 %v10156, %v10700
        %v10702 = vpop.f32.mrf.mxu0
        %v10703 = vpop.f32.mrf.mxu0
        %v10704 = vadd.f32 %v10159, %v10703
        %v10705 = vpop.f32.mrf.mxu0
        %10706 = vmatprep.mubr.bf16.mxu0 %v7721
        %10707 = vmatmul.mubr.bf16.gmra.mxu0 %v7433
        %v10708 = vpop.f32.mrf.mxu0
        %v10709 = vadd.f32 %v10164, %v10708
        %v10710 = vpop.f32.mrf.mxu0
        %v10711 = vpop.f32.mrf.mxu0
        %v10712 = vadd.f32 %v10167, %v10711
        %v10713 = vpop.f32.mrf.mxu0
        %10714 = vmatprep.mubr.bf16.mxu0 %v7722
        %10715 = vmatmul.mubr.bf16.gmra.mxu0 %v7434
        %v10716 = vpop.f32.mrf.mxu0
        %v10717 = vadd.f32 %v10172, %v10716
        %v10718 = vpop.f32.mrf.mxu0
        %v10719 = vpop.f32.mrf.mxu0
        %v10720 = vadd.f32 %v10175, %v10719
        %v10721 = vpop.f32.mrf.mxu0
        %10722 = vmatprep.mubr.bf16.mxu0 %v7723
        %10723 = vmatmul.mubr.bf16.gmra.mxu0 %v7435
        %v10724 = vpop.f32.mrf.mxu0
        %v10725 = vadd.f32 %v10180, %v10724
        %v10726 = vpop.f32.mrf.mxu0
        %v10727 = vpop.f32.mrf.mxu0
        %v10728 = vadd.f32 %v10183, %v10727
        %v10729 = vpop.f32.mrf.mxu0
        %10730 = vmatprep.mubr.bf16.mxu0 %v7724
        %10731 = vmatmul.mubr.bf16.gmra.mxu0 %v7436
        %v10732 = vpop.f32.mrf.mxu0
        %v10733 = vadd.f32 %v10188, %v10732
        %v10734 = vpop.f32.mrf.mxu0
        %v10735 = vpop.f32.mrf.mxu0
        %v10736 = vadd.f32 %v10191, %v10735
        %v10737 = vpop.f32.mrf.mxu0
        %10738 = vmatprep.mubr.bf16.mxu0 %v7725
        %10739 = vmatmul.mubr.bf16.gmra.mxu0 %v7437
        %v10740 = vpop.f32.mrf.mxu0
        %v10741 = vadd.f32 %v10196, %v10740
        %v10742 = vpop.f32.mrf.mxu0
        %v10743 = vpop.f32.mrf.mxu0
        %v10744 = vadd.f32 %v10199, %v10743
        %v10745 = vpop.f32.mrf.mxu0
        %10746 = vmatprep.mubr.bf16.mxu0 %v7726
        %10747 = vmatmul.mubr.bf16.gmra.mxu0 %v7438
        %v10748 = vpop.f32.mrf.mxu0
        %v10749 = vadd.f32 %v10204, %v10748
        %v10750 = vpop.f32.mrf.mxu0
        %v10751 = vpop.f32.mrf.mxu0
        %v10752 = vadd.f32 %v10207, %v10751
        %v10753 = vpop.f32.mrf.mxu0
        %10754 = vmatprep.mubr.bf16.mxu0 %v7727
        %10755 = vmatmul.mubr.bf16.gmra.mxu0 %v7439
        %v10756 = vpop.f32.mrf.mxu0
        %v10757 = vadd.f32 %v10212, %v10756
        %v10758 = vpop.f32.mrf.mxu0
        %v10759 = vpop.f32.mrf.mxu0
        %v10760 = vadd.f32 %v10215, %v10759
        %v10761 = vpop.f32.mrf.mxu0
        %10762 = vmatprep.mubr.bf16.mxu0 %v7728
        %10763 = vmatmul.mubr.bf16.gmra.mxu0 %v7440
        %v10764 = vpop.f32.mrf.mxu0
        %v10765 = vadd.f32 %v10220, %v10764
        %v10766 = vpop.f32.mrf.mxu0
        %v10767 = vpop.f32.mrf.mxu0
        %v10768 = vadd.f32 %v10223, %v10767
        %v10769 = vpop.f32.mrf.mxu0
        %10770 = vmatprep.mubr.bf16.mxu0 %v7729
        %10771 = vmatmul.mubr.bf16.gmra.mxu0 %v7441
        %v10772 = vpop.f32.mrf.mxu0
        %v10773 = vadd.f32 %v10228, %v10772
        %v10774 = vpop.f32.mrf.mxu0
        %v10775 = vpop.f32.mrf.mxu0
        %v10776 = vadd.f32 %v10231, %v10775
        %v10777 = vpop.f32.mrf.mxu0
        %10778 = vdwg.mxu0
        %10779 = vmatprep.subr.bf16.mxu0 0
        %10780 = vmatpush1.bf16.msra.mxu0 %v9584
        %10781 = vmatprep.subr.bf16.mxu0 0
        %10782 = vmatpush1.bf16.msra.mxu0 %v9583
        %10783 = vmatprep.subr.bf16.mxu0 0
        %10784 = vmatpush1.bf16.msra.mxu0 %v9582
        %10785 = vmatprep.subr.bf16.mxu0 0
        %10786 = vmatpush1.bf16.msra.mxu0 %v9581
        %10787 = vmatprep.subr.bf16.mxu0 0
        %10788 = vmatpush1.bf16.msra.mxu0 %v9580
        %10789 = vmatprep.subr.bf16.mxu0 0
        %10790 = vmatpush1.bf16.msra.mxu0 %v9579
        %10791 = vmatprep.subr.bf16.mxu0 0
        %10792 = vmatpush1.bf16.msra.mxu0 %v9578
        %10793 = vmatprep.subr.bf16.mxu0 0
        %10794 = vmatpush1.bf16.msra.mxu0 %v9577
        %10795 = vmatprep.subr.bf16.mxu0 0
        %10796 = vmatpush2.bf16.msra.mxu0 %v9592
        %10797 = vmatprep.subr.bf16.mxu0 0
        %10798 = vmatpush2.bf16.msra.mxu0 %v9591
        %10799 = vmatprep.subr.bf16.mxu0 0
        %10800 = vmatpush2.bf16.msra.mxu0 %v9590
        %10801 = vmatprep.subr.bf16.mxu0 0
        %10802 = vmatpush2.bf16.msra.mxu0 %v9589
        %10803 = vmatprep.subr.bf16.mxu0 0
        %10804 = vmatpush2.bf16.msra.mxu0 %v9588
        %10805 = vmatprep.subr.bf16.mxu0 0
        %10806 = vmatpush2.bf16.msra.mxu0 %v9587
        %10807 = vmatprep.subr.bf16.mxu0 0
        %10808 = vmatpush2.bf16.msra.mxu0 %v9586
        %10809 = vmatprep.subr.bf16.mxu0 0
        %10810 = vmatpush2.bf16.msra.mxu0 %v9585
        %10811 = vmatprep.mubr.bf16.mxu0 %v8178
        %10812 = vmatmul.mubr.bf16.gmra.mxu0 %v7922
        %v10813 = vpop.f32.mrf.mxu0
        %v10814 = vadd.f32 %v10269, %v10813
        %v10815 = vpop.f32.mrf.mxu0
        %v10816 = vpop.f32.mrf.mxu0
        %v10817 = vadd.f32 %v10272, %v10816
        %v10818 = vpop.f32.mrf.mxu0
        %10819 = vmatprep.mubr.bf16.mxu0 %v8179
        %10820 = vmatmul.mubr.bf16.gmra.mxu0 %v7923
        %v10821 = vpop.f32.mrf.mxu0
        %v10822 = vadd.f32 %v10277, %v10821
        %v10823 = vpop.f32.mrf.mxu0
        %v10824 = vpop.f32.mrf.mxu0
        %v10825 = vadd.f32 %v10280, %v10824
        %v10826 = vpop.f32.mrf.mxu0
        %10827 = vmatprep.mubr.bf16.mxu0 %v8180
        %10828 = vmatmul.mubr.bf16.gmra.mxu0 %v7924
        %v10829 = vpop.f32.mrf.mxu0
        %v10830 = vadd.f32 %v10285, %v10829
        %v10831 = vpop.f32.mrf.mxu0
        %v10832 = vpop.f32.mrf.mxu0
        %v10833 = vadd.f32 %v10288, %v10832
        %v10834 = vpop.f32.mrf.mxu0
        %10835 = vmatprep.mubr.bf16.mxu0 %v8181
        %10836 = vmatmul.mubr.bf16.gmra.mxu0 %v7925
        %v10837 = vpop.f32.mrf.mxu0
        %v10838 = vadd.f32 %v10293, %v10837
        %v10839 = vpop.f32.mrf.mxu0
        %v10840 = vpop.f32.mrf.mxu0
        %v10841 = vadd.f32 %v10296, %v10840
        %v10842 = vpop.f32.mrf.mxu0
        %10843 = vmatprep.mubr.bf16.mxu0 %v8182
        %10844 = vmatmul.mubr.bf16.gmra.mxu0 %v7926
        %v10845 = vpop.f32.mrf.mxu0
        %v10846 = vadd.f32 %v10301, %v10845
        %v10847 = vpop.f32.mrf.mxu0
        %v10848 = vpop.f32.mrf.mxu0
        %v10849 = vadd.f32 %v10304, %v10848
        %v10850 = vpop.f32.mrf.mxu0
        %10851 = vmatprep.mubr.bf16.mxu0 %v8183
        %10852 = vmatmul.mubr.bf16.gmra.mxu0 %v7927
        %v10853 = vpop.f32.mrf.mxu0
        %v10854 = vadd.f32 %v10309, %v10853
        %v10855 = vpop.f32.mrf.mxu0
        %v10856 = vpop.f32.mrf.mxu0
        %v10857 = vadd.f32 %v10312, %v10856
        %v10858 = vpop.f32.mrf.mxu0
        %10859 = vmatprep.mubr.bf16.mxu0 %v8184
        %10860 = vmatmul.mubr.bf16.gmra.mxu0 %v7928
        %v10861 = vpop.f32.mrf.mxu0
        %v10862 = vadd.f32 %v10317, %v10861
        %v10863 = vpop.f32.mrf.mxu0
        %v10864 = vpop.f32.mrf.mxu0
        %v10865 = vadd.f32 %v10320, %v10864
        %v10866 = vpop.f32.mrf.mxu0
        %10867 = vmatprep.mubr.bf16.mxu0 %v8185
        %10868 = vmatmul.mubr.bf16.gmra.mxu0 %v7929
        %v10869 = vpop.f32.mrf.mxu0
        %v10870 = vadd.f32 %v10325, %v10869
        %v10871 = vpop.f32.mrf.mxu0
        %v10872 = vpop.f32.mrf.mxu0
        %v10873 = vadd.f32 %v10328, %v10872
        %v10874 = vpop.f32.mrf.mxu0
        %10875 = vmatprep.mubr.bf16.mxu0 %v8186
        %10876 = vmatmul.mubr.bf16.gmra.mxu0 %v7930
        %v10877 = vpop.f32.mrf.mxu0
        %v10878 = vadd.f32 %v10333, %v10877
        %v10879 = vpop.f32.mrf.mxu0
        %v10880 = vpop.f32.mrf.mxu0
        %v10881 = vadd.f32 %v10336, %v10880
        %v10882 = vpop.f32.mrf.mxu0
        %10883 = vmatprep.mubr.bf16.mxu0 %v8187
        %10884 = vmatmul.mubr.bf16.gmra.mxu0 %v7931
        %v10885 = vpop.f32.mrf.mxu0
        %v10886 = vadd.f32 %v10341, %v10885
        %v10887 = vpop.f32.mrf.mxu0
        %v10888 = vpop.f32.mrf.mxu0
        %v10889 = vadd.f32 %v10344, %v10888
        %v10890 = vpop.f32.mrf.mxu0
        %10891 = vmatprep.mubr.bf16.mxu0 %v8188
        %10892 = vmatmul.mubr.bf16.gmra.mxu0 %v7932
        %v10893 = vpop.f32.mrf.mxu0
        %v10894 = vadd.f32 %v10349, %v10893
        %v10895 = vpop.f32.mrf.mxu0
        %v10896 = vpop.f32.mrf.mxu0
        %v10897 = vadd.f32 %v10352, %v10896
        %v10898 = vpop.f32.mrf.mxu0
        %10899 = vmatprep.mubr.bf16.mxu0 %v8189
        %10900 = vmatmul.mubr.bf16.gmra.mxu0 %v7933
        %v10901 = vpop.f32.mrf.mxu0
        %v10902 = vadd.f32 %v10357, %v10901
        %v10903 = vpop.f32.mrf.mxu0
        %v10904 = vpop.f32.mrf.mxu0
        %v10905 = vadd.f32 %v10360, %v10904
        %v10906 = vpop.f32.mrf.mxu0
        %10907 = vmatprep.mubr.bf16.mxu0 %v8190
        %10908 = vmatmul.mubr.bf16.gmra.mxu0 %v7934
        %v10909 = vpop.f32.mrf.mxu0
        %v10910 = vadd.f32 %v10365, %v10909
        %v10911 = vpop.f32.mrf.mxu0
        %v10912 = vpop.f32.mrf.mxu0
        %v10913 = vadd.f32 %v10368, %v10912
        %v10914 = vpop.f32.mrf.mxu0
        %10915 = vmatprep.mubr.bf16.mxu0 %v8191
        %10916 = vmatmul.mubr.bf16.gmra.mxu0 %v7935
        %v10917 = vpop.f32.mrf.mxu0
        %v10918 = vadd.f32 %v10373, %v10917
        %v10919 = vpop.f32.mrf.mxu0
        %v10920 = vpop.f32.mrf.mxu0
        %v10921 = vadd.f32 %v10376, %v10920
        %v10922 = vpop.f32.mrf.mxu0
        %10923 = vmatprep.mubr.bf16.mxu0 %v8192
        %10924 = vmatmul.mubr.bf16.gmra.mxu0 %v7936
        %v10925 = vpop.f32.mrf.mxu0
        %v10926 = vadd.f32 %v10381, %v10925
        %v10927 = vpop.f32.mrf.mxu0
        %v10928 = vpop.f32.mrf.mxu0
        %v10929 = vadd.f32 %v10384, %v10928
        %v10930 = vpop.f32.mrf.mxu0
        %10931 = vmatprep.mubr.bf16.mxu0 %v8193
        %10932 = vmatmul.mubr.bf16.gmra.mxu0 %v7937
        %v10933 = vpop.f32.mrf.mxu0
        %v10934 = vadd.f32 %v10389, %v10933
        %v10935 = vpop.f32.mrf.mxu0
        %v10936 = vpop.f32.mrf.mxu0
        %v10937 = vadd.f32 %v10392, %v10936
        %v10938 = vpop.f32.mrf.mxu0
        %10939 = vmatprep.mubr.bf16.mxu0 %v8194
        %10940 = vmatmul.mubr.bf16.gmra.mxu0 %v7938
        %v10941 = vpop.f32.mrf.mxu0
        %v10942 = vadd.f32 %v10397, %v10941
        %v10943 = vpop.f32.mrf.mxu0
        %v10944 = vpop.f32.mrf.mxu0
        %v10945 = vadd.f32 %v10400, %v10944
        %v10946 = vpop.f32.mrf.mxu0
        %10947 = vmatprep.mubr.bf16.mxu0 %v8195
        %10948 = vmatmul.mubr.bf16.gmra.mxu0 %v7939
        %v10949 = vpop.f32.mrf.mxu0
        %v10950 = vadd.f32 %v10405, %v10949
        %v10951 = vpop.f32.mrf.mxu0
        %v10952 = vpop.f32.mrf.mxu0
        %v10953 = vadd.f32 %v10408, %v10952
        %v10954 = vpop.f32.mrf.mxu0
        %10955 = vmatprep.mubr.bf16.mxu0 %v8196
        %10956 = vmatmul.mubr.bf16.gmra.mxu0 %v7940
        %v10957 = vpop.f32.mrf.mxu0
        %v10958 = vadd.f32 %v10413, %v10957
        %v10959 = vpop.f32.mrf.mxu0
        %v10960 = vpop.f32.mrf.mxu0
        %v10961 = vadd.f32 %v10416, %v10960
        %v10962 = vpop.f32.mrf.mxu0
        %10963 = vmatprep.mubr.bf16.mxu0 %v8197
        %10964 = vmatmul.mubr.bf16.gmra.mxu0 %v7941
        %v10965 = vpop.f32.mrf.mxu0
        %v10966 = vadd.f32 %v10421, %v10965
        %v10967 = vpop.f32.mrf.mxu0
        %v10968 = vpop.f32.mrf.mxu0
        %v10969 = vadd.f32 %v10424, %v10968
        %v10970 = vpop.f32.mrf.mxu0
        %10971 = vmatprep.mubr.bf16.mxu0 %v8198
        %10972 = vmatmul.mubr.bf16.gmra.mxu0 %v7942
        %v10973 = vpop.f32.mrf.mxu0
        %v10974 = vadd.f32 %v10429, %v10973
        %v10975 = vpop.f32.mrf.mxu0
        %v10976 = vpop.f32.mrf.mxu0
        %v10977 = vadd.f32 %v10432, %v10976
        %v10978 = vpop.f32.mrf.mxu0
        %10979 = vmatprep.mubr.bf16.mxu0 %v8199
        %10980 = vmatmul.mubr.bf16.gmra.mxu0 %v7943
        %v10981 = vpop.f32.mrf.mxu0
        %v10982 = vadd.f32 %v10437, %v10981
        %v10983 = vpop.f32.mrf.mxu0
        %v10984 = vpop.f32.mrf.mxu0
        %v10985 = vadd.f32 %v10440, %v10984
        %v10986 = vpop.f32.mrf.mxu0
        %10987 = vmatprep.mubr.bf16.mxu0 %v8200
        %10988 = vmatmul.mubr.bf16.gmra.mxu0 %v7944
        %v10989 = vpop.f32.mrf.mxu0
        %v10990 = vadd.f32 %v10445, %v10989
        %v10991 = vpop.f32.mrf.mxu0
        %v10992 = vpop.f32.mrf.mxu0
        %v10993 = vadd.f32 %v10448, %v10992
        %v10994 = vpop.f32.mrf.mxu0
        %10995 = vmatprep.mubr.bf16.mxu0 %v8201
        %10996 = vmatmul.mubr.bf16.gmra.mxu0 %v7945
        %v10997 = vpop.f32.mrf.mxu0
        %v10998 = vadd.f32 %v10453, %v10997
        %v10999 = vpop.f32.mrf.mxu0
        %v11000 = vpop.f32.mrf.mxu0
        %v11001 = vadd.f32 %v10456, %v11000
        %v11002 = vpop.f32.mrf.mxu0
        %11003 = vmatprep.mubr.bf16.mxu0 %v8202
        %11004 = vmatmul.mubr.bf16.gmra.mxu0 %v7946
        %v11005 = vpop.f32.mrf.mxu0
        %v11006 = vadd.f32 %v10461, %v11005
        %v11007 = vpop.f32.mrf.mxu0
        %v11008 = vpop.f32.mrf.mxu0
        %v11009 = vadd.f32 %v10464, %v11008
        %v11010 = vpop.f32.mrf.mxu0
        %11011 = vmatprep.mubr.bf16.mxu0 %v8203
        %11012 = vmatmul.mubr.bf16.gmra.mxu0 %v7947
        %v11013 = vpop.f32.mrf.mxu0
        %v11014 = vadd.f32 %v10469, %v11013
        %v11015 = vpop.f32.mrf.mxu0
        %v11016 = vpop.f32.mrf.mxu0
        %v11017 = vadd.f32 %v10472, %v11016
        %v11018 = vpop.f32.mrf.mxu0
        %11019 = vmatprep.mubr.bf16.mxu0 %v8204
        %11020 = vmatmul.mubr.bf16.gmra.mxu0 %v7948
        %v11021 = vpop.f32.mrf.mxu0
        %v11022 = vadd.f32 %v10477, %v11021
        %v11023 = vpop.f32.mrf.mxu0
        %v11024 = vpop.f32.mrf.mxu0
        %v11025 = vadd.f32 %v10480, %v11024
        %v11026 = vpop.f32.mrf.mxu0
        %11027 = vmatprep.mubr.bf16.mxu0 %v8205
        %11028 = vmatmul.mubr.bf16.gmra.mxu0 %v7949
        %v11029 = vpop.f32.mrf.mxu0
        %v11030 = vadd.f32 %v10485, %v11029
        %v11031 = vpop.f32.mrf.mxu0
        %v11032 = vpop.f32.mrf.mxu0
        %v11033 = vadd.f32 %v10488, %v11032
        %v11034 = vpop.f32.mrf.mxu0
        %11035 = vmatprep.mubr.bf16.mxu0 %v8206
        %11036 = vmatmul.mubr.bf16.gmra.mxu0 %v7950
        %v11037 = vpop.f32.mrf.mxu0
        %v11038 = vadd.f32 %v10493, %v11037
        %v11039 = vpop.f32.mrf.mxu0
        %v11040 = vpop.f32.mrf.mxu0
        %v11041 = vadd.f32 %v10496, %v11040
        %v11042 = vpop.f32.mrf.mxu0
        %11043 = vmatprep.mubr.bf16.mxu0 %v8207
        %11044 = vmatmul.mubr.bf16.gmra.mxu0 %v7951
        %v11045 = vpop.f32.mrf.mxu0
        %v11046 = vadd.f32 %v10501, %v11045
        %v11047 = vpop.f32.mrf.mxu0
        %v11048 = vpop.f32.mrf.mxu0
        %v11049 = vadd.f32 %v10504, %v11048
        %v11050 = vpop.f32.mrf.mxu0
        %11051 = vmatprep.mubr.bf16.mxu0 %v8208
        %11052 = vmatmul.mubr.bf16.gmra.mxu0 %v7952
        %v11053 = vpop.f32.mrf.mxu0
        %v11054 = vadd.f32 %v10509, %v11053
        %v11055 = vpop.f32.mrf.mxu0
        %v11056 = vpop.f32.mrf.mxu0
        %v11057 = vadd.f32 %v10512, %v11056
        %v11058 = vpop.f32.mrf.mxu0
        %11059 = vmatprep.mubr.bf16.mxu0 %v8209
        %11060 = vmatmul.mubr.bf16.gmra.mxu0 %v7953
        %v11061 = vpop.f32.mrf.mxu0
        %v11062 = vadd.f32 %v10517, %v11061
        %v11063 = vpop.f32.mrf.mxu0
        %v11064 = vpop.f32.mrf.mxu0
        %v11065 = vadd.f32 %v10520, %v11064
        %v11066 = vpop.f32.mrf.mxu0
        %11067 = vmatprep.mubr.bf16.mxu0 %v8210
        %11068 = vmatmul.mubr.bf16.gmra.mxu0 %v7954
        %v11069 = vpop.f32.mrf.mxu0
        %v11070 = vadd.f32 %v10525, %v11069
        %v11071 = vpop.f32.mrf.mxu0
        %v11072 = vpop.f32.mrf.mxu0
        %v11073 = vadd.f32 %v10528, %v11072
        %v11074 = vpop.f32.mrf.mxu0
        %11075 = vmatprep.mubr.bf16.mxu0 %v8211
        %11076 = vmatmul.mubr.bf16.gmra.mxu0 %v7955
        %v11077 = vpop.f32.mrf.mxu0
        %v11078 = vadd.f32 %v10533, %v11077
        %v11079 = vpop.f32.mrf.mxu0
        %v11080 = vpop.f32.mrf.mxu0
        %v11081 = vadd.f32 %v10536, %v11080
        %v11082 = vpop.f32.mrf.mxu0
        %11083 = vmatprep.mubr.bf16.mxu0 %v8212
        %11084 = vmatmul.mubr.bf16.gmra.mxu0 %v7956
        %v11085 = vpop.f32.mrf.mxu0
        %v11086 = vadd.f32 %v10541, %v11085
        %v11087 = vpop.f32.mrf.mxu0
        %v11088 = vpop.f32.mrf.mxu0
        %v11089 = vadd.f32 %v10544, %v11088
        %v11090 = vpop.f32.mrf.mxu0
        %11091 = vmatprep.mubr.bf16.mxu0 %v8213
        %11092 = vmatmul.mubr.bf16.gmra.mxu0 %v7957
        %v11093 = vpop.f32.mrf.mxu0
        %v11094 = vadd.f32 %v10549, %v11093
        %v11095 = vpop.f32.mrf.mxu0
        %v11096 = vpop.f32.mrf.mxu0
        %v11097 = vadd.f32 %v10552, %v11096
        %v11098 = vpop.f32.mrf.mxu0
        %11099 = vmatprep.mubr.bf16.mxu0 %v8214
        %11100 = vmatmul.mubr.bf16.gmra.mxu0 %v7958
        %v11101 = vpop.f32.mrf.mxu0
        %v11102 = vadd.f32 %v10557, %v11101
        %v11103 = vpop.f32.mrf.mxu0
        %v11104 = vpop.f32.mrf.mxu0
        %v11105 = vadd.f32 %v10560, %v11104
        %v11106 = vpop.f32.mrf.mxu0
        %11107 = vmatprep.mubr.bf16.mxu0 %v8215
        %11108 = vmatmul.mubr.bf16.gmra.mxu0 %v7959
        %v11109 = vpop.f32.mrf.mxu0
        %v11110 = vadd.f32 %v10565, %v11109
        %v11111 = vpop.f32.mrf.mxu0
        %v11112 = vpop.f32.mrf.mxu0
        %v11113 = vadd.f32 %v10568, %v11112
        %v11114 = vpop.f32.mrf.mxu0
        %11115 = vmatprep.mubr.bf16.mxu0 %v8216
        %11116 = vmatmul.mubr.bf16.gmra.mxu0 %v7960
        %v11117 = vpop.f32.mrf.mxu0
        %v11118 = vadd.f32 %v10573, %v11117
        %v11119 = vpop.f32.mrf.mxu0
        %v11120 = vpop.f32.mrf.mxu0
        %v11121 = vadd.f32 %v10576, %v11120
        %v11122 = vpop.f32.mrf.mxu0
        %11123 = vmatprep.mubr.bf16.mxu0 %v8217
        %11124 = vmatmul.mubr.bf16.gmra.mxu0 %v7961
        %v11125 = vpop.f32.mrf.mxu0
        %v11126 = vadd.f32 %v10581, %v11125
        %v11127 = vpop.f32.mrf.mxu0
        %v11128 = vpop.f32.mrf.mxu0
        %v11129 = vadd.f32 %v10584, %v11128
        %v11130 = vpop.f32.mrf.mxu0
        %11131 = vmatprep.mubr.bf16.mxu0 %v8218
        %11132 = vmatmul.mubr.bf16.gmra.mxu0 %v7962
        %v11133 = vpop.f32.mrf.mxu0
        %v11134 = vadd.f32 %v10589, %v11133
        %v11135 = vpop.f32.mrf.mxu0
        %v11136 = vpop.f32.mrf.mxu0
        %v11137 = vadd.f32 %v10592, %v11136
        %v11138 = vpop.f32.mrf.mxu0
        %11139 = vmatprep.mubr.bf16.mxu0 %v8219
        %11140 = vmatmul.mubr.bf16.gmra.mxu0 %v7963
        %v11141 = vpop.f32.mrf.mxu0
        %v11142 = vadd.f32 %v10597, %v11141
        %v11143 = vpop.f32.mrf.mxu0
        %v11144 = vpop.f32.mrf.mxu0
        %v11145 = vadd.f32 %v10600, %v11144
        %v11146 = vpop.f32.mrf.mxu0
        %11147 = vmatprep.mubr.bf16.mxu0 %v8220
        %11148 = vmatmul.mubr.bf16.gmra.mxu0 %v7964
        %v11149 = vpop.f32.mrf.mxu0
        %v11150 = vadd.f32 %v10605, %v11149
        %v11151 = vpop.f32.mrf.mxu0
        %v11152 = vpop.f32.mrf.mxu0
        %v11153 = vadd.f32 %v10608, %v11152
        %v11154 = vpop.f32.mrf.mxu0
        %11155 = vmatprep.mubr.bf16.mxu0 %v8221
        %11156 = vmatmul.mubr.bf16.gmra.mxu0 %v7965
        %v11157 = vpop.f32.mrf.mxu0
        %v11158 = vadd.f32 %v10613, %v11157
        %v11159 = vpop.f32.mrf.mxu0
        %v11160 = vpop.f32.mrf.mxu0
        %v11161 = vadd.f32 %v10616, %v11160
        %v11162 = vpop.f32.mrf.mxu0
        %11163 = vmatprep.mubr.bf16.mxu0 %v8222
        %11164 = vmatmul.mubr.bf16.gmra.mxu0 %v7966
        %v11165 = vpop.f32.mrf.mxu0
        %v11166 = vadd.f32 %v10621, %v11165
        %v11167 = vpop.f32.mrf.mxu0
        %v11168 = vpop.f32.mrf.mxu0
        %v11169 = vadd.f32 %v10624, %v11168
        %v11170 = vpop.f32.mrf.mxu0
        %11171 = vmatprep.mubr.bf16.mxu0 %v8223
        %11172 = vmatmul.mubr.bf16.gmra.mxu0 %v7967
        %v11173 = vpop.f32.mrf.mxu0
        %v11174 = vadd.f32 %v10629, %v11173
        %v11175 = vpop.f32.mrf.mxu0
        %v11176 = vpop.f32.mrf.mxu0
        %v11177 = vadd.f32 %v10632, %v11176
        %v11178 = vpop.f32.mrf.mxu0
        %11179 = vmatprep.mubr.bf16.mxu0 %v8224
        %11180 = vmatmul.mubr.bf16.gmra.mxu0 %v7968
        %v11181 = vpop.f32.mrf.mxu0
        %v11182 = vadd.f32 %v10637, %v11181
        %v11183 = vpop.f32.mrf.mxu0
        %v11184 = vpop.f32.mrf.mxu0
        %v11185 = vadd.f32 %v10640, %v11184
        %v11186 = vpop.f32.mrf.mxu0
        %11187 = vmatprep.mubr.bf16.mxu0 %v8225
        %11188 = vmatmul.mubr.bf16.gmra.mxu0 %v7969
        %v11189 = vpop.f32.mrf.mxu0
        %v11190 = vadd.f32 %v10645, %v11189
        %v11191 = vpop.f32.mrf.mxu0
        %v11192 = vpop.f32.mrf.mxu0
        %v11193 = vadd.f32 %v10648, %v11192
        %v11194 = vpop.f32.mrf.mxu0
        %11195 = vmatprep.mubr.bf16.mxu0 %v8226
        %11196 = vmatmul.mubr.bf16.gmra.mxu0 %v7970
        %v11197 = vpop.f32.mrf.mxu0
        %v11198 = vadd.f32 %v10653, %v11197
        %v11199 = vpop.f32.mrf.mxu0
        %v11200 = vpop.f32.mrf.mxu0
        %v11201 = vadd.f32 %v10656, %v11200
        %v11202 = vpop.f32.mrf.mxu0
        %11203 = vmatprep.mubr.bf16.mxu0 %v8227
        %11204 = vmatmul.mubr.bf16.gmra.mxu0 %v7971
        %v11205 = vpop.f32.mrf.mxu0
        %v11206 = vadd.f32 %v10661, %v11205
        %v11207 = vpop.f32.mrf.mxu0
        %v11208 = vpop.f32.mrf.mxu0
        %v11209 = vadd.f32 %v10664, %v11208
        %v11210 = vpop.f32.mrf.mxu0
        %11211 = vmatprep.mubr.bf16.mxu0 %v8228
        %11212 = vmatmul.mubr.bf16.gmra.mxu0 %v7972
        %v11213 = vpop.f32.mrf.mxu0
        %v11214 = vadd.f32 %v10669, %v11213
        %v11215 = vpop.f32.mrf.mxu0
        %v11216 = vpop.f32.mrf.mxu0
        %v11217 = vadd.f32 %v10672, %v11216
        %v11218 = vpop.f32.mrf.mxu0
        %11219 = vmatprep.mubr.bf16.mxu0 %v8229
        %11220 = vmatmul.mubr.bf16.gmra.mxu0 %v7973
        %v11221 = vpop.f32.mrf.mxu0
        %v11222 = vadd.f32 %v10677, %v11221
        %v11223 = vpop.f32.mrf.mxu0
        %v11224 = vpop.f32.mrf.mxu0
        %v11225 = vadd.f32 %v10680, %v11224
        %v11226 = vpop.f32.mrf.mxu0
        %11227 = vmatprep.mubr.bf16.mxu0 %v8230
        %11228 = vmatmul.mubr.bf16.gmra.mxu0 %v7974
        %v11229 = vpop.f32.mrf.mxu0
        %v11230 = vadd.f32 %v10685, %v11229
        %v11231 = vpop.f32.mrf.mxu0
        %v11232 = vpop.f32.mrf.mxu0
        %v11233 = vadd.f32 %v10688, %v11232
        %v11234 = vpop.f32.mrf.mxu0
        %11235 = vmatprep.mubr.bf16.mxu0 %v8231
        %11236 = vmatmul.mubr.bf16.gmra.mxu0 %v7975
        %v11237 = vpop.f32.mrf.mxu0
        %v11238 = vadd.f32 %v10693, %v11237
        %v11239 = vpop.f32.mrf.mxu0
        %v11240 = vpop.f32.mrf.mxu0
        %v11241 = vadd.f32 %v10696, %v11240
        %v11242 = vpop.f32.mrf.mxu0
        %11243 = vmatprep.mubr.bf16.mxu0 %v8232
        %11244 = vmatmul.mubr.bf16.gmra.mxu0 %v7976
        %v11245 = vpop.f32.mrf.mxu0
        %v11246 = vadd.f32 %v10701, %v11245
        %v11247 = vpop.f32.mrf.mxu0
        %v11248 = vpop.f32.mrf.mxu0
        %v11249 = vadd.f32 %v10704, %v11248
        %v11250 = vpop.f32.mrf.mxu0
        %11251 = vmatprep.mubr.bf16.mxu0 %v8233
        %11252 = vmatmul.mubr.bf16.gmra.mxu0 %v7977
        %v11253 = vpop.f32.mrf.mxu0
        %v11254 = vadd.f32 %v10709, %v11253
        %v11255 = vpop.f32.mrf.mxu0
        %v11256 = vpop.f32.mrf.mxu0
        %v11257 = vadd.f32 %v10712, %v11256
        %v11258 = vpop.f32.mrf.mxu0
        %11259 = vmatprep.mubr.bf16.mxu0 %v8234
        %11260 = vmatmul.mubr.bf16.gmra.mxu0 %v7978
        %v11261 = vpop.f32.mrf.mxu0
        %v11262 = vadd.f32 %v10717, %v11261
        %v11263 = vpop.f32.mrf.mxu0
        %v11264 = vpop.f32.mrf.mxu0
        %v11265 = vadd.f32 %v10720, %v11264
        %v11266 = vpop.f32.mrf.mxu0
        %11267 = vmatprep.mubr.bf16.mxu0 %v8235
        %11268 = vmatmul.mubr.bf16.gmra.mxu0 %v7979
        %v11269 = vpop.f32.mrf.mxu0
        %v11270 = vadd.f32 %v10725, %v11269
        %v11271 = vpop.f32.mrf.mxu0
        %v11272 = vpop.f32.mrf.mxu0
        %v11273 = vadd.f32 %v10728, %v11272
        %v11274 = vpop.f32.mrf.mxu0
        %11275 = vmatprep.mubr.bf16.mxu0 %v8236
        %11276 = vmatmul.mubr.bf16.gmra.mxu0 %v7980
        %v11277 = vpop.f32.mrf.mxu0
        %v11278 = vadd.f32 %v10733, %v11277
        %v11279 = vpop.f32.mrf.mxu0
        %v11280 = vpop.f32.mrf.mxu0
        %v11281 = vadd.f32 %v10736, %v11280
        %v11282 = vpop.f32.mrf.mxu0
        %11283 = vmatprep.mubr.bf16.mxu0 %v8237
        %11284 = vmatmul.mubr.bf16.gmra.mxu0 %v7981
        %v11285 = vpop.f32.mrf.mxu0
        %v11286 = vadd.f32 %v10741, %v11285
        %v11287 = vpop.f32.mrf.mxu0
        %v11288 = vpop.f32.mrf.mxu0
        %v11289 = vadd.f32 %v10744, %v11288
        %v11290 = vpop.f32.mrf.mxu0
        %11291 = vmatprep.mubr.bf16.mxu0 %v8238
        %11292 = vmatmul.mubr.bf16.gmra.mxu0 %v7982
        %v11293 = vpop.f32.mrf.mxu0
        %v11294 = vadd.f32 %v10749, %v11293
        %v11295 = vpop.f32.mrf.mxu0
        %v11296 = vpop.f32.mrf.mxu0
        %v11297 = vadd.f32 %v10752, %v11296
        %v11298 = vpop.f32.mrf.mxu0
        %11299 = vmatprep.mubr.bf16.mxu0 %v8239
        %11300 = vmatmul.mubr.bf16.gmra.mxu0 %v7983
        %v11301 = vpop.f32.mrf.mxu0
        %v11302 = vadd.f32 %v10757, %v11301
        %v11303 = vpop.f32.mrf.mxu0
        %v11304 = vpop.f32.mrf.mxu0
        %v11305 = vadd.f32 %v10760, %v11304
        %v11306 = vpop.f32.mrf.mxu0
        %11307 = vmatprep.mubr.bf16.mxu0 %v8240
        %11308 = vmatmul.mubr.bf16.gmra.mxu0 %v7984
        %v11309 = vpop.f32.mrf.mxu0
        %v11310 = vadd.f32 %v10765, %v11309
        %v11311 = vpop.f32.mrf.mxu0
        %v11312 = vpop.f32.mrf.mxu0
        %v11313 = vadd.f32 %v10768, %v11312
        %v11314 = vpop.f32.mrf.mxu0
        %11315 = vmatprep.mubr.bf16.mxu0 %v8241
        %11316 = vmatmul.mubr.bf16.gmra.mxu0 %v7985
        %v11317 = vpop.f32.mrf.mxu0
        %v11318 = vadd.f32 %v10773, %v11317
        %v11319 = vpop.f32.mrf.mxu0
        %v11320 = vpop.f32.mrf.mxu0
        %v11321 = vadd.f32 %v10776, %v11320
        %v11322 = vpop.f32.mrf.mxu0
        %11323 = vdwg.mxu0
        %11324 = vmatprep.subr.bf16.mxu0 0
        %11325 = vmatpush1.bf16.msra.mxu0 %v9600
        %11326 = vmatprep.subr.bf16.mxu0 0
        %11327 = vmatpush1.bf16.msra.mxu0 %v9599
        %11328 = vmatprep.subr.bf16.mxu0 0
        %11329 = vmatpush1.bf16.msra.mxu0 %v9598
        %11330 = vmatprep.subr.bf16.mxu0 0
        %11331 = vmatpush1.bf16.msra.mxu0 %v9597
        %11332 = vmatprep.subr.bf16.mxu0 0
        %11333 = vmatpush1.bf16.msra.mxu0 %v9596
        %11334 = vmatprep.subr.bf16.mxu0 0
        %11335 = vmatpush1.bf16.msra.mxu0 %v9595
        %11336 = vmatprep.subr.bf16.mxu0 0
        %11337 = vmatpush1.bf16.msra.mxu0 %v9594
        %11338 = vmatprep.subr.bf16.mxu0 0
        %11339 = vmatpush1.bf16.msra.mxu0 %v9593
        %11340 = vmatprep.subr.bf16.mxu0 0
        %11341 = vmatpush2.bf16.msra.mxu0 %v9608
        %11342 = vmatprep.subr.bf16.mxu0 0
        %11343 = vmatpush2.bf16.msra.mxu0 %v9607
        %11344 = vmatprep.subr.bf16.mxu0 0
        %11345 = vmatpush2.bf16.msra.mxu0 %v9606
        %11346 = vmatprep.subr.bf16.mxu0 0
        %11347 = vmatpush2.bf16.msra.mxu0 %v9605
        %11348 = vmatprep.subr.bf16.mxu0 0
        %11349 = vmatpush2.bf16.msra.mxu0 %v9604
        %11350 = vmatprep.subr.bf16.mxu0 0
        %11351 = vmatpush2.bf16.msra.mxu0 %v9603
        %11352 = vmatprep.subr.bf16.mxu0 0
        %11353 = vmatpush2.bf16.msra.mxu0 %v9602
        %11354 = vmatprep.subr.bf16.mxu0 0
        %11355 = vmatpush2.bf16.msra.mxu0 %v9601
        %11356 = vmatprep.mubr.bf16.mxu0 %v8722
        %11357 = vmatmul.mubr.bf16.gmra.mxu0 %v8466
        %v11358 = vpop.f32.mrf.mxu0
        %v11359 = vadd.f32 %v10814, %v11358
        %v11360 = vpop.f32.mrf.mxu0
        %v11361 = vpop.f32.mrf.mxu0
        %v11362 = vadd.f32 %v10817, %v11361
        %v11363 = vpop.f32.mrf.mxu0
        %11364 = vmatprep.mubr.bf16.mxu0 %v8723
        %11365 = vmatmul.mubr.bf16.gmra.mxu0 %v8467
        %v11366 = vpop.f32.mrf.mxu0
        %v11367 = vadd.f32 %v10822, %v11366
        %v11368 = vpop.f32.mrf.mxu0
        %v11369 = vpop.f32.mrf.mxu0
        %v11370 = vadd.f32 %v10825, %v11369
        %v11371 = vpop.f32.mrf.mxu0
        %11372 = vmatprep.mubr.bf16.mxu0 %v8724
        %11373 = vmatmul.mubr.bf16.gmra.mxu0 %v8468
        %v11374 = vpop.f32.mrf.mxu0
        %v11375 = vadd.f32 %v10830, %v11374
        %v11376 = vpop.f32.mrf.mxu0
        %v11377 = vpop.f32.mrf.mxu0
        %v11378 = vadd.f32 %v10833, %v11377
        %v11379 = vpop.f32.mrf.mxu0
        %11380 = vmatprep.mubr.bf16.mxu0 %v8725
        %11381 = vmatmul.mubr.bf16.gmra.mxu0 %v8469
        %v11382 = vpop.f32.mrf.mxu0
        %v11383 = vadd.f32 %v10838, %v11382
        %v11384 = vpop.f32.mrf.mxu0
        %v11385 = vpop.f32.mrf.mxu0
        %v11386 = vadd.f32 %v10841, %v11385
        %v11387 = vpop.f32.mrf.mxu0
        %11388 = vmatprep.mubr.bf16.mxu0 %v8726
        %11389 = vmatmul.mubr.bf16.gmra.mxu0 %v8470
        %v11390 = vpop.f32.mrf.mxu0
        %v11391 = vadd.f32 %v10846, %v11390
        %v11392 = vpop.f32.mrf.mxu0
        %v11393 = vpop.f32.mrf.mxu0
        %v11394 = vadd.f32 %v10849, %v11393
        %v11395 = vpop.f32.mrf.mxu0
        %11396 = vmatprep.mubr.bf16.mxu0 %v8727
        %11397 = vmatmul.mubr.bf16.gmra.mxu0 %v8471
        %v11398 = vpop.f32.mrf.mxu0
        %v11399 = vadd.f32 %v10854, %v11398
        %v11400 = vpop.f32.mrf.mxu0
        %v11401 = vpop.f32.mrf.mxu0
        %v11402 = vadd.f32 %v10857, %v11401
        %v11403 = vpop.f32.mrf.mxu0
        %11404 = vmatprep.mubr.bf16.mxu0 %v8728
        %11405 = vmatmul.mubr.bf16.gmra.mxu0 %v8472
        %v11406 = vpop.f32.mrf.mxu0
        %v11407 = vadd.f32 %v10862, %v11406
        %v11408 = vpop.f32.mrf.mxu0
        %v11409 = vpop.f32.mrf.mxu0
        %v11410 = vadd.f32 %v10865, %v11409
        %v11411 = vpop.f32.mrf.mxu0
        %11412 = vmatprep.mubr.bf16.mxu0 %v8729
        %11413 = vmatmul.mubr.bf16.gmra.mxu0 %v8473
        %v11414 = vpop.f32.mrf.mxu0
        %v11415 = vadd.f32 %v10870, %v11414
        %v11416 = vpop.f32.mrf.mxu0
        %v11417 = vpop.f32.mrf.mxu0
        %v11418 = vadd.f32 %v10873, %v11417
        %v11419 = vpop.f32.mrf.mxu0
        %11420 = vmatprep.mubr.bf16.mxu0 %v8730
        %11421 = vmatmul.mubr.bf16.gmra.mxu0 %v8474
        %v11422 = vpop.f32.mrf.mxu0
        %v11423 = vadd.f32 %v10878, %v11422
        %v11424 = vpop.f32.mrf.mxu0
        %v11425 = vpop.f32.mrf.mxu0
        %v11426 = vadd.f32 %v10881, %v11425
        %v11427 = vpop.f32.mrf.mxu0
        %11428 = vmatprep.mubr.bf16.mxu0 %v8731
        %11429 = vmatmul.mubr.bf16.gmra.mxu0 %v8475
        %v11430 = vpop.f32.mrf.mxu0
        %v11431 = vadd.f32 %v10886, %v11430
        %v11432 = vpop.f32.mrf.mxu0
        %v11433 = vpop.f32.mrf.mxu0
        %v11434 = vadd.f32 %v10889, %v11433
        %v11435 = vpop.f32.mrf.mxu0
        %11436 = vmatprep.mubr.bf16.mxu0 %v8732
        %11437 = vmatmul.mubr.bf16.gmra.mxu0 %v8476
        %v11438 = vpop.f32.mrf.mxu0
        %v11439 = vadd.f32 %v10894, %v11438
        %v11440 = vpop.f32.mrf.mxu0
        %v11441 = vpop.f32.mrf.mxu0
        %v11442 = vadd.f32 %v10897, %v11441
        %v11443 = vpop.f32.mrf.mxu0
        %11444 = vmatprep.mubr.bf16.mxu0 %v8733
        %11445 = vmatmul.mubr.bf16.gmra.mxu0 %v8477
        %v11446 = vpop.f32.mrf.mxu0
        %v11447 = vadd.f32 %v10902, %v11446
        %v11448 = vpop.f32.mrf.mxu0
        %v11449 = vpop.f32.mrf.mxu0
        %v11450 = vadd.f32 %v10905, %v11449
        %v11451 = vpop.f32.mrf.mxu0
        %11452 = vmatprep.mubr.bf16.mxu0 %v8734
        %11453 = vmatmul.mubr.bf16.gmra.mxu0 %v8478
        %v11454 = vpop.f32.mrf.mxu0
        %v11455 = vadd.f32 %v10910, %v11454
        %v11456 = vpop.f32.mrf.mxu0
        %v11457 = vpop.f32.mrf.mxu0
        %v11458 = vadd.f32 %v10913, %v11457
        %v11459 = vpop.f32.mrf.mxu0
        %11460 = vmatprep.mubr.bf16.mxu0 %v8735
        %11461 = vmatmul.mubr.bf16.gmra.mxu0 %v8479
        %v11462 = vpop.f32.mrf.mxu0
        %v11463 = vadd.f32 %v10918, %v11462
        %v11464 = vpop.f32.mrf.mxu0
        %v11465 = vpop.f32.mrf.mxu0
        %v11466 = vadd.f32 %v10921, %v11465
        %v11467 = vpop.f32.mrf.mxu0
        %11468 = vmatprep.mubr.bf16.mxu0 %v8736
        %11469 = vmatmul.mubr.bf16.gmra.mxu0 %v8480
        %v11470 = vpop.f32.mrf.mxu0
        %v11471 = vadd.f32 %v10926, %v11470
        %v11472 = vpop.f32.mrf.mxu0
        %v11473 = vpop.f32.mrf.mxu0
        %v11474 = vadd.f32 %v10929, %v11473
        %v11475 = vpop.f32.mrf.mxu0
        %11476 = vmatprep.mubr.bf16.mxu0 %v8737
        %11477 = vmatmul.mubr.bf16.gmra.mxu0 %v8481
        %v11478 = vpop.f32.mrf.mxu0
        %v11479 = vadd.f32 %v10934, %v11478
        %v11480 = vpop.f32.mrf.mxu0
        %v11481 = vpop.f32.mrf.mxu0
        %v11482 = vadd.f32 %v10937, %v11481
        %v11483 = vpop.f32.mrf.mxu0
        %11484 = vmatprep.mubr.bf16.mxu0 %v8738
        %11485 = vmatmul.mubr.bf16.gmra.mxu0 %v8482
        %v11486 = vpop.f32.mrf.mxu0
        %v11487 = vadd.f32 %v10942, %v11486
        %v11488 = vpop.f32.mrf.mxu0
        %v11489 = vpop.f32.mrf.mxu0
        %v11490 = vadd.f32 %v10945, %v11489
        %v11491 = vpop.f32.mrf.mxu0
        %11492 = vmatprep.mubr.bf16.mxu0 %v8739
        %11493 = vmatmul.mubr.bf16.gmra.mxu0 %v8483
        %v11494 = vpop.f32.mrf.mxu0
        %v11495 = vadd.f32 %v10950, %v11494
        %v11496 = vpop.f32.mrf.mxu0
        %v11497 = vpop.f32.mrf.mxu0
        %v11498 = vadd.f32 %v10953, %v11497
        %v11499 = vpop.f32.mrf.mxu0
        %11500 = vmatprep.mubr.bf16.mxu0 %v8740
        %11501 = vmatmul.mubr.bf16.gmra.mxu0 %v8484
        %v11502 = vpop.f32.mrf.mxu0
        %v11503 = vadd.f32 %v10958, %v11502
        %v11504 = vpop.f32.mrf.mxu0
        %v11505 = vpop.f32.mrf.mxu0
        %v11506 = vadd.f32 %v10961, %v11505
        %v11507 = vpop.f32.mrf.mxu0
        %11508 = vmatprep.mubr.bf16.mxu0 %v8741
        %11509 = vmatmul.mubr.bf16.gmra.mxu0 %v8485
        %v11510 = vpop.f32.mrf.mxu0
        %v11511 = vadd.f32 %v10966, %v11510
        %v11512 = vpop.f32.mrf.mxu0
        %v11513 = vpop.f32.mrf.mxu0
        %v11514 = vadd.f32 %v10969, %v11513
        %v11515 = vpop.f32.mrf.mxu0
        %11516 = vmatprep.mubr.bf16.mxu0 %v8742
        %11517 = vmatmul.mubr.bf16.gmra.mxu0 %v8486
        %v11518 = vpop.f32.mrf.mxu0
        %v11519 = vadd.f32 %v10974, %v11518
        %v11520 = vpop.f32.mrf.mxu0
        %v11521 = vpop.f32.mrf.mxu0
        %v11522 = vadd.f32 %v10977, %v11521
        %v11523 = vpop.f32.mrf.mxu0
        %11524 = vmatprep.mubr.bf16.mxu0 %v8743
        %11525 = vmatmul.mubr.bf16.gmra.mxu0 %v8487
        %v11526 = vpop.f32.mrf.mxu0
        %v11527 = vadd.f32 %v10982, %v11526
        %v11528 = vpop.f32.mrf.mxu0
        %v11529 = vpop.f32.mrf.mxu0
        %v11530 = vadd.f32 %v10985, %v11529
        %v11531 = vpop.f32.mrf.mxu0
        %11532 = vmatprep.mubr.bf16.mxu0 %v8744
        %11533 = vmatmul.mubr.bf16.gmra.mxu0 %v8488
        %v11534 = vpop.f32.mrf.mxu0
        %v11535 = vadd.f32 %v10990, %v11534
        %v11536 = vpop.f32.mrf.mxu0
        %v11537 = vpop.f32.mrf.mxu0
        %v11538 = vadd.f32 %v10993, %v11537
        %v11539 = vpop.f32.mrf.mxu0
        %11540 = vmatprep.mubr.bf16.mxu0 %v8745
        %11541 = vmatmul.mubr.bf16.gmra.mxu0 %v8489
        %v11542 = vpop.f32.mrf.mxu0
        %v11543 = vadd.f32 %v10998, %v11542
        %v11544 = vpop.f32.mrf.mxu0
        %v11545 = vpop.f32.mrf.mxu0
        %v11546 = vadd.f32 %v11001, %v11545
        %v11547 = vpop.f32.mrf.mxu0
        %11548 = vmatprep.mubr.bf16.mxu0 %v8746
        %11549 = vmatmul.mubr.bf16.gmra.mxu0 %v8490
        %v11550 = vpop.f32.mrf.mxu0
        %v11551 = vadd.f32 %v11006, %v11550
        %v11552 = vpop.f32.mrf.mxu0
        %v11553 = vpop.f32.mrf.mxu0
        %v11554 = vadd.f32 %v11009, %v11553
        %v11555 = vpop.f32.mrf.mxu0
        %11556 = vmatprep.mubr.bf16.mxu0 %v8747
        %11557 = vmatmul.mubr.bf16.gmra.mxu0 %v8491
        %v11558 = vpop.f32.mrf.mxu0
        %v11559 = vadd.f32 %v11014, %v11558
        %v11560 = vpop.f32.mrf.mxu0
        %v11561 = vpop.f32.mrf.mxu0
        %v11562 = vadd.f32 %v11017, %v11561
        %v11563 = vpop.f32.mrf.mxu0
        %11564 = vmatprep.mubr.bf16.mxu0 %v8748
        %11565 = vmatmul.mubr.bf16.gmra.mxu0 %v8492
        %v11566 = vpop.f32.mrf.mxu0
        %v11567 = vadd.f32 %v11022, %v11566
        %v11568 = vpop.f32.mrf.mxu0
        %v11569 = vpop.f32.mrf.mxu0
        %v11570 = vadd.f32 %v11025, %v11569
        %v11571 = vpop.f32.mrf.mxu0
        %11572 = vmatprep.mubr.bf16.mxu0 %v8749
        %11573 = vmatmul.mubr.bf16.gmra.mxu0 %v8493
        %v11574 = vpop.f32.mrf.mxu0
        %v11575 = vadd.f32 %v11030, %v11574
        %v11576 = vpop.f32.mrf.mxu0
        %v11577 = vpop.f32.mrf.mxu0
        %v11578 = vadd.f32 %v11033, %v11577
        %v11579 = vpop.f32.mrf.mxu0
        %11580 = vmatprep.mubr.bf16.mxu0 %v8750
        %11581 = vmatmul.mubr.bf16.gmra.mxu0 %v8494
        %v11582 = vpop.f32.mrf.mxu0
        %v11583 = vadd.f32 %v11038, %v11582
        %v11584 = vpop.f32.mrf.mxu0
        %v11585 = vpop.f32.mrf.mxu0
        %v11586 = vadd.f32 %v11041, %v11585
        %v11587 = vpop.f32.mrf.mxu0
        %11588 = vmatprep.mubr.bf16.mxu0 %v8751
        %11589 = vmatmul.mubr.bf16.gmra.mxu0 %v8495
        %v11590 = vpop.f32.mrf.mxu0
        %v11591 = vadd.f32 %v11046, %v11590
        %v11592 = vpop.f32.mrf.mxu0
        %v11593 = vpop.f32.mrf.mxu0
        %v11594 = vadd.f32 %v11049, %v11593
        %v11595 = vpop.f32.mrf.mxu0
        %11596 = vmatprep.mubr.bf16.mxu0 %v8752
        %11597 = vmatmul.mubr.bf16.gmra.mxu0 %v8496
        %v11598 = vpop.f32.mrf.mxu0
        %v11599 = vadd.f32 %v11054, %v11598
        %v11600 = vpop.f32.mrf.mxu0
        %v11601 = vpop.f32.mrf.mxu0
        %v11602 = vadd.f32 %v11057, %v11601
        %v11603 = vpop.f32.mrf.mxu0
        %11604 = vmatprep.mubr.bf16.mxu0 %v8753
        %11605 = vmatmul.mubr.bf16.gmra.mxu0 %v8497
        %v11606 = vpop.f32.mrf.mxu0
        %v11607 = vadd.f32 %v11062, %v11606
        %v11608 = vpop.f32.mrf.mxu0
        %v11609 = vpop.f32.mrf.mxu0
        %v11610 = vadd.f32 %v11065, %v11609
        %v11611 = vpop.f32.mrf.mxu0
        %11612 = vmatprep.mubr.bf16.mxu0 %v8754
        %11613 = vmatmul.mubr.bf16.gmra.mxu0 %v8498
        %v11614 = vpop.f32.mrf.mxu0
        %v11615 = vadd.f32 %v11070, %v11614
        %v11616 = vpop.f32.mrf.mxu0
        %v11617 = vpop.f32.mrf.mxu0
        %v11618 = vadd.f32 %v11073, %v11617
        %v11619 = vpop.f32.mrf.mxu0
        %11620 = vmatprep.mubr.bf16.mxu0 %v8755
        %11621 = vmatmul.mubr.bf16.gmra.mxu0 %v8499
        %v11622 = vpop.f32.mrf.mxu0
        %v11623 = vadd.f32 %v11078, %v11622
        %v11624 = vpop.f32.mrf.mxu0
        %v11625 = vpop.f32.mrf.mxu0
        %v11626 = vadd.f32 %v11081, %v11625
        %v11627 = vpop.f32.mrf.mxu0
        %11628 = vmatprep.mubr.bf16.mxu0 %v8756
        %11629 = vmatmul.mubr.bf16.gmra.mxu0 %v8500
        %v11630 = vpop.f32.mrf.mxu0
        %v11631 = vadd.f32 %v11086, %v11630
        %v11632 = vpop.f32.mrf.mxu0
        %v11633 = vpop.f32.mrf.mxu0
        %v11634 = vadd.f32 %v11089, %v11633
        %v11635 = vpop.f32.mrf.mxu0
        %11636 = vmatprep.mubr.bf16.mxu0 %v8757
        %11637 = vmatmul.mubr.bf16.gmra.mxu0 %v8501
        %v11638 = vpop.f32.mrf.mxu0
        %v11639 = vadd.f32 %v11094, %v11638
        %v11640 = vpop.f32.mrf.mxu0
        %v11641 = vpop.f32.mrf.mxu0
        %v11642 = vadd.f32 %v11097, %v11641
        %v11643 = vpop.f32.mrf.mxu0
        %11644 = vmatprep.mubr.bf16.mxu0 %v8758
        %11645 = vmatmul.mubr.bf16.gmra.mxu0 %v8502
        %v11646 = vpop.f32.mrf.mxu0
        %v11647 = vadd.f32 %v11102, %v11646
        %v11648 = vpop.f32.mrf.mxu0
        %v11649 = vpop.f32.mrf.mxu0
        %v11650 = vadd.f32 %v11105, %v11649
        %v11651 = vpop.f32.mrf.mxu0
        %11652 = vmatprep.mubr.bf16.mxu0 %v8759
        %11653 = vmatmul.mubr.bf16.gmra.mxu0 %v8503
        %v11654 = vpop.f32.mrf.mxu0
        %v11655 = vadd.f32 %v11110, %v11654
        %v11656 = vpop.f32.mrf.mxu0
        %v11657 = vpop.f32.mrf.mxu0
        %v11658 = vadd.f32 %v11113, %v11657
        %v11659 = vpop.f32.mrf.mxu0
        %11660 = vmatprep.mubr.bf16.mxu0 %v8760
        %11661 = vmatmul.mubr.bf16.gmra.mxu0 %v8504
        %v11662 = vpop.f32.mrf.mxu0
        %v11663 = vadd.f32 %v11118, %v11662
        %v11664 = vpop.f32.mrf.mxu0
        %v11665 = vpop.f32.mrf.mxu0
        %v11666 = vadd.f32 %v11121, %v11665
        %v11667 = vpop.f32.mrf.mxu0
        %11668 = vmatprep.mubr.bf16.mxu0 %v8761
        %11669 = vmatmul.mubr.bf16.gmra.mxu0 %v8505
        %v11670 = vpop.f32.mrf.mxu0
        %v11671 = vadd.f32 %v11126, %v11670
        %v11672 = vpop.f32.mrf.mxu0
        %v11673 = vpop.f32.mrf.mxu0
        %v11674 = vadd.f32 %v11129, %v11673
        %v11675 = vpop.f32.mrf.mxu0
        %11676 = vmatprep.mubr.bf16.mxu0 %v8762
        %11677 = vmatmul.mubr.bf16.gmra.mxu0 %v8506
        %v11678 = vpop.f32.mrf.mxu0
        %v11679 = vadd.f32 %v11134, %v11678
        %v11680 = vpop.f32.mrf.mxu0
        %v11681 = vpop.f32.mrf.mxu0
        %v11682 = vadd.f32 %v11137, %v11681
        %v11683 = vpop.f32.mrf.mxu0
        %11684 = vmatprep.mubr.bf16.mxu0 %v8763
        %11685 = vmatmul.mubr.bf16.gmra.mxu0 %v8507
        %v11686 = vpop.f32.mrf.mxu0
        %v11687 = vadd.f32 %v11142, %v11686
        %v11688 = vpop.f32.mrf.mxu0
        %v11689 = vpop.f32.mrf.mxu0
        %v11690 = vadd.f32 %v11145, %v11689
        %v11691 = vpop.f32.mrf.mxu0
        %11692 = vmatprep.mubr.bf16.mxu0 %v8764
        %11693 = vmatmul.mubr.bf16.gmra.mxu0 %v8508
        %v11694 = vpop.f32.mrf.mxu0
        %v11695 = vadd.f32 %v11150, %v11694
        %v11696 = vpop.f32.mrf.mxu0
        %v11697 = vpop.f32.mrf.mxu0
        %v11698 = vadd.f32 %v11153, %v11697
        %v11699 = vpop.f32.mrf.mxu0
        %11700 = vmatprep.mubr.bf16.mxu0 %v8765
        %11701 = vmatmul.mubr.bf16.gmra.mxu0 %v8509
        %v11702 = vpop.f32.mrf.mxu0
        %v11703 = vadd.f32 %v11158, %v11702
        %v11704 = vpop.f32.mrf.mxu0
        %v11705 = vpop.f32.mrf.mxu0
        %v11706 = vadd.f32 %v11161, %v11705
        %v11707 = vpop.f32.mrf.mxu0
        %11708 = vmatprep.mubr.bf16.mxu0 %v8766
        %11709 = vmatmul.mubr.bf16.gmra.mxu0 %v8510
        %v11710 = vpop.f32.mrf.mxu0
        %v11711 = vadd.f32 %v11166, %v11710
        %v11712 = vpop.f32.mrf.mxu0
        %v11713 = vpop.f32.mrf.mxu0
        %v11714 = vadd.f32 %v11169, %v11713
        %v11715 = vpop.f32.mrf.mxu0
        %11716 = vmatprep.mubr.bf16.mxu0 %v8767
        %11717 = vmatmul.mubr.bf16.gmra.mxu0 %v8511
        %v11718 = vpop.f32.mrf.mxu0
        %v11719 = vadd.f32 %v11174, %v11718
        %v11720 = vpop.f32.mrf.mxu0
        %v11721 = vpop.f32.mrf.mxu0
        %v11722 = vadd.f32 %v11177, %v11721
        %v11723 = vpop.f32.mrf.mxu0
        %11724 = vmatprep.mubr.bf16.mxu0 %v8768
        %11725 = vmatmul.mubr.bf16.gmra.mxu0 %v8512
        %v11726 = vpop.f32.mrf.mxu0
        %v11727 = vadd.f32 %v11182, %v11726
        %v11728 = vpop.f32.mrf.mxu0
        %v11729 = vpop.f32.mrf.mxu0
        %v11730 = vadd.f32 %v11185, %v11729
        %v11731 = vpop.f32.mrf.mxu0
        %11732 = vmatprep.mubr.bf16.mxu0 %v8769
        %11733 = vmatmul.mubr.bf16.gmra.mxu0 %v8513
        %v11734 = vpop.f32.mrf.mxu0
        %v11735 = vadd.f32 %v11190, %v11734
        %v11736 = vpop.f32.mrf.mxu0
        %v11737 = vpop.f32.mrf.mxu0
        %v11738 = vadd.f32 %v11193, %v11737
        %v11739 = vpop.f32.mrf.mxu0
        %11740 = vmatprep.mubr.bf16.mxu0 %v8770
        %11741 = vmatmul.mubr.bf16.gmra.mxu0 %v8514
        %v11742 = vpop.f32.mrf.mxu0
        %v11743 = vadd.f32 %v11198, %v11742
        %v11744 = vpop.f32.mrf.mxu0
        %v11745 = vpop.f32.mrf.mxu0
        %v11746 = vadd.f32 %v11201, %v11745
        %v11747 = vpop.f32.mrf.mxu0
        %11748 = vmatprep.mubr.bf16.mxu0 %v8771
        %11749 = vmatmul.mubr.bf16.gmra.mxu0 %v8515
        %v11750 = vpop.f32.mrf.mxu0
        %v11751 = vadd.f32 %v11206, %v11750
        %v11752 = vpop.f32.mrf.mxu0
        %v11753 = vpop.f32.mrf.mxu0
        %v11754 = vadd.f32 %v11209, %v11753
        %v11755 = vpop.f32.mrf.mxu0
        %11756 = vmatprep.mubr.bf16.mxu0 %v8772
        %11757 = vmatmul.mubr.bf16.gmra.mxu0 %v8516
        %v11758 = vpop.f32.mrf.mxu0
        %v11759 = vadd.f32 %v11214, %v11758
        %v11760 = vpop.f32.mrf.mxu0
        %v11761 = vpop.f32.mrf.mxu0
        %v11762 = vadd.f32 %v11217, %v11761
        %v11763 = vpop.f32.mrf.mxu0
        %11764 = vmatprep.mubr.bf16.mxu0 %v8773
        %11765 = vmatmul.mubr.bf16.gmra.mxu0 %v8517
        %v11766 = vpop.f32.mrf.mxu0
        %v11767 = vadd.f32 %v11222, %v11766
        %v11768 = vpop.f32.mrf.mxu0
        %v11769 = vpop.f32.mrf.mxu0
        %v11770 = vadd.f32 %v11225, %v11769
        %v11771 = vpop.f32.mrf.mxu0
        %11772 = vmatprep.mubr.bf16.mxu0 %v8774
        %11773 = vmatmul.mubr.bf16.gmra.mxu0 %v8518
        %v11774 = vpop.f32.mrf.mxu0
        %v11775 = vadd.f32 %v11230, %v11774
        %v11776 = vpop.f32.mrf.mxu0
        %v11777 = vpop.f32.mrf.mxu0
        %v11778 = vadd.f32 %v11233, %v11777
        %v11779 = vpop.f32.mrf.mxu0
        %11780 = vmatprep.mubr.bf16.mxu0 %v8775
        %11781 = vmatmul.mubr.bf16.gmra.mxu0 %v8519
        %v11782 = vpop.f32.mrf.mxu0
        %v11783 = vadd.f32 %v11238, %v11782
        %v11784 = vpop.f32.mrf.mxu0
        %v11785 = vpop.f32.mrf.mxu0
        %v11786 = vadd.f32 %v11241, %v11785
        %v11787 = vpop.f32.mrf.mxu0
        %11788 = vmatprep.mubr.bf16.mxu0 %v8776
        %11789 = vmatmul.mubr.bf16.gmra.mxu0 %v8520
        %v11790 = vpop.f32.mrf.mxu0
        %v11791 = vadd.f32 %v11246, %v11790
        %v11792 = vpop.f32.mrf.mxu0
        %v11793 = vpop.f32.mrf.mxu0
        %v11794 = vadd.f32 %v11249, %v11793
        %v11795 = vpop.f32.mrf.mxu0
        %11796 = vmatprep.mubr.bf16.mxu0 %v8777
        %11797 = vmatmul.mubr.bf16.gmra.mxu0 %v8521
        %v11798 = vpop.f32.mrf.mxu0
        %v11799 = vadd.f32 %v11254, %v11798
        %v11800 = vpop.f32.mrf.mxu0
        %v11801 = vpop.f32.mrf.mxu0
        %v11802 = vadd.f32 %v11257, %v11801
        %v11803 = vpop.f32.mrf.mxu0
        %11804 = vmatprep.mubr.bf16.mxu0 %v8778
        %11805 = vmatmul.mubr.bf16.gmra.mxu0 %v8522
        %v11806 = vpop.f32.mrf.mxu0
        %v11807 = vadd.f32 %v11262, %v11806
        %v11808 = vpop.f32.mrf.mxu0
        %v11809 = vpop.f32.mrf.mxu0
        %v11810 = vadd.f32 %v11265, %v11809
        %v11811 = vpop.f32.mrf.mxu0
        %11812 = vmatprep.mubr.bf16.mxu0 %v8779
        %11813 = vmatmul.mubr.bf16.gmra.mxu0 %v8523
        %v11814 = vpop.f32.mrf.mxu0
        %v11815 = vadd.f32 %v11270, %v11814
        %v11816 = vpop.f32.mrf.mxu0
        %v11817 = vpop.f32.mrf.mxu0
        %v11818 = vadd.f32 %v11273, %v11817
        %v11819 = vpop.f32.mrf.mxu0
        %11820 = vmatprep.mubr.bf16.mxu0 %v8780
        %11821 = vmatmul.mubr.bf16.gmra.mxu0 %v8524
        %v11822 = vpop.f32.mrf.mxu0
        %v11823 = vadd.f32 %v11278, %v11822
        %v11824 = vpop.f32.mrf.mxu0
        %v11825 = vpop.f32.mrf.mxu0
        %v11826 = vadd.f32 %v11281, %v11825
        %v11827 = vpop.f32.mrf.mxu0
        %11828 = vmatprep.mubr.bf16.mxu0 %v8781
        %11829 = vmatmul.mubr.bf16.gmra.mxu0 %v8525
        %v11830 = vpop.f32.mrf.mxu0
        %v11831 = vadd.f32 %v11286, %v11830
        %v11832 = vpop.f32.mrf.mxu0
        %v11833 = vpop.f32.mrf.mxu0
        %v11834 = vadd.f32 %v11289, %v11833
        %v11835 = vpop.f32.mrf.mxu0
        %11836 = vmatprep.mubr.bf16.mxu0 %v8782
        %11837 = vmatmul.mubr.bf16.gmra.mxu0 %v8526
        %v11838 = vpop.f32.mrf.mxu0
        %v11839 = vadd.f32 %v11294, %v11838
        %v11840 = vpop.f32.mrf.mxu0
        %v11841 = vpop.f32.mrf.mxu0
        %v11842 = vadd.f32 %v11297, %v11841
        %v11843 = vpop.f32.mrf.mxu0
        %11844 = vmatprep.mubr.bf16.mxu0 %v8783
        %11845 = vmatmul.mubr.bf16.gmra.mxu0 %v8527
        %v11846 = vpop.f32.mrf.mxu0
        %v11847 = vadd.f32 %v11302, %v11846
        %v11848 = vpop.f32.mrf.mxu0
        %v11849 = vpop.f32.mrf.mxu0
        %v11850 = vadd.f32 %v11305, %v11849
        %v11851 = vpop.f32.mrf.mxu0
        %11852 = vmatprep.mubr.bf16.mxu0 %v8784
        %11853 = vmatmul.mubr.bf16.gmra.mxu0 %v8528
        %v11854 = vpop.f32.mrf.mxu0
        %v11855 = vadd.f32 %v11310, %v11854
        %v11856 = vpop.f32.mrf.mxu0
        %v11857 = vpop.f32.mrf.mxu0
        %v11858 = vadd.f32 %v11313, %v11857
        %v11859 = vpop.f32.mrf.mxu0
        %11860 = vmatprep.mubr.bf16.mxu0 %v8785
        %11861 = vmatmul.mubr.bf16.gmra.mxu0 %v8529
        %v11862 = vpop.f32.mrf.mxu0
        %v11863 = vadd.f32 %v11318, %v11862
        %v11864 = vpop.f32.mrf.mxu0
        %v11865 = vpop.f32.mrf.mxu0
        %v11866 = vadd.f32 %v11321, %v11865
        %v11867 = vpop.f32.mrf.mxu0
        %11868 = vdwg.mxu0
        %11869 = vmatprep.subr.bf16.mxu0 0
        %11870 = vmatpush1.bf16.msra.mxu0 %v9616
        %11871 = vmatprep.subr.bf16.mxu0 0
        %11872 = vmatpush1.bf16.msra.mxu0 %v9615
        %11873 = vmatprep.subr.bf16.mxu0 0
        %11874 = vmatpush1.bf16.msra.mxu0 %v9614
        %11875 = vmatprep.subr.bf16.mxu0 0
        %11876 = vmatpush1.bf16.msra.mxu0 %v9613
        %11877 = vmatprep.subr.bf16.mxu0 0
        %11878 = vmatpush1.bf16.msra.mxu0 %v9612
        %11879 = vmatprep.subr.bf16.mxu0 0
        %11880 = vmatpush1.bf16.msra.mxu0 %v9611
        %11881 = vmatprep.subr.bf16.mxu0 0
        %11882 = vmatpush1.bf16.msra.mxu0 %v9610
        %11883 = vmatprep.subr.bf16.mxu0 0
        %11884 = vmatpush1.bf16.msra.mxu0 %v9609
        %11885 = vmatprep.subr.bf16.mxu0 0
        %11886 = vmatpush2.bf16.msra.mxu0 0
        %11887 = vmatprep.subr.bf16.mxu0 0
        %11888 = vmatpush2.bf16.msra.mxu0 0
        %11889 = vmatprep.subr.bf16.mxu0 0
        %11890 = vmatpush2.bf16.msra.mxu0 0
        %11891 = vmatprep.subr.bf16.mxu0 0
        %11892 = vmatpush2.bf16.msra.mxu0 0
        %11893 = vmatprep.subr.bf16.mxu0 0
        %11894 = vmatpush2.bf16.msra.mxu0 0
        %11895 = vmatprep.subr.bf16.mxu0 0
        %11896 = vmatpush2.bf16.msra.mxu0 0
        %11897 = vmatprep.subr.bf16.mxu0 0
        %11898 = vmatpush2.bf16.msra.mxu0 0
        %11899 = vmatprep.subr.bf16.mxu0 0
        %11900 = vmatpush2.bf16.msra.mxu0 0
        %11901 = vmatprep.mubr.bf16.mxu0 0
        %11902 = vmatmul.mubr.bf16.gmra.mxu0 %v8978
        %v11903 = vpop.f32.mrf.mxu0
        %v11904 = vadd.f32 %v11359, %v11903
        %v11905 = vpop.f32.mrf.mxu0
        %v11906 = vpop.f32.mrf.mxu0
        %v11907 = vadd.f32 %v11362, %v11906
        %v11908 = vpop.f32.mrf.mxu0
        %11909 = vmatprep.mubr.bf16.mxu0 0
        %11910 = vmatmul.mubr.bf16.gmra.mxu0 %v8979
        %v11911 = vpop.f32.mrf.mxu0
        %v11912 = vadd.f32 %v11367, %v11911
        %v11913 = vpop.f32.mrf.mxu0
        %v11914 = vpop.f32.mrf.mxu0
        %v11915 = vadd.f32 %v11370, %v11914
        %v11916 = vpop.f32.mrf.mxu0
        %11917 = vmatprep.mubr.bf16.mxu0 0
        %11918 = vmatmul.mubr.bf16.gmra.mxu0 %v8980
        %v11919 = vpop.f32.mrf.mxu0
        %v11920 = vadd.f32 %v11375, %v11919
        %v11921 = vpop.f32.mrf.mxu0
        %v11922 = vpop.f32.mrf.mxu0
        %v11923 = vadd.f32 %v11378, %v11922
        %v11924 = vpop.f32.mrf.mxu0
        %11925 = vmatprep.mubr.bf16.mxu0 0
        %11926 = vmatmul.mubr.bf16.gmra.mxu0 %v8981
        %v11927 = vpop.f32.mrf.mxu0
        %v11928 = vadd.f32 %v11383, %v11927
        %v11929 = vpop.f32.mrf.mxu0
        %v11930 = vpop.f32.mrf.mxu0
        %v11931 = vadd.f32 %v11386, %v11930
        %v11932 = vpop.f32.mrf.mxu0
        %11933 = vmatprep.mubr.bf16.mxu0 0
        %11934 = vmatmul.mubr.bf16.gmra.mxu0 %v8982
        %v11935 = vpop.f32.mrf.mxu0
        %v11936 = vadd.f32 %v11391, %v11935
        %v11937 = vpop.f32.mrf.mxu0
        %v11938 = vpop.f32.mrf.mxu0
        %v11939 = vadd.f32 %v11394, %v11938
        %v11940 = vpop.f32.mrf.mxu0
        %11941 = vmatprep.mubr.bf16.mxu0 0
        %11942 = vmatmul.mubr.bf16.gmra.mxu0 %v8983
        %v11943 = vpop.f32.mrf.mxu0
        %v11944 = vadd.f32 %v11399, %v11943
        %v11945 = vpop.f32.mrf.mxu0
        %v11946 = vpop.f32.mrf.mxu0
        %v11947 = vadd.f32 %v11402, %v11946
        %v11948 = vpop.f32.mrf.mxu0
        %11949 = vmatprep.mubr.bf16.mxu0 0
        %11950 = vmatmul.mubr.bf16.gmra.mxu0 %v8984
        %v11951 = vpop.f32.mrf.mxu0
        %v11952 = vadd.f32 %v11407, %v11951
        %v11953 = vpop.f32.mrf.mxu0
        %v11954 = vpop.f32.mrf.mxu0
        %v11955 = vadd.f32 %v11410, %v11954
        %v11956 = vpop.f32.mrf.mxu0
        %11957 = vmatprep.mubr.bf16.mxu0 0
        %11958 = vmatmul.mubr.bf16.gmra.mxu0 %v8985
        %v11959 = vpop.f32.mrf.mxu0
        %v11960 = vadd.f32 %v11415, %v11959
        %v11961 = vpop.f32.mrf.mxu0
        %v11962 = vpop.f32.mrf.mxu0
        %v11963 = vadd.f32 %v11418, %v11962
        %v11964 = vpop.f32.mrf.mxu0
        %11965 = vmatprep.mubr.bf16.mxu0 0
        %11966 = vmatmul.mubr.bf16.gmra.mxu0 %v8986
        %v11967 = vpop.f32.mrf.mxu0
        %v11968 = vadd.f32 %v11423, %v11967
        %v11969 = vpop.f32.mrf.mxu0
        %v11970 = vpop.f32.mrf.mxu0
        %v11971 = vadd.f32 %v11426, %v11970
        %v11972 = vpop.f32.mrf.mxu0
        %11973 = vmatprep.mubr.bf16.mxu0 0
        %11974 = vmatmul.mubr.bf16.gmra.mxu0 %v8987
        %v11975 = vpop.f32.mrf.mxu0
        %v11976 = vadd.f32 %v11431, %v11975
        %v11977 = vpop.f32.mrf.mxu0
        %v11978 = vpop.f32.mrf.mxu0
        %v11979 = vadd.f32 %v11434, %v11978
        %v11980 = vpop.f32.mrf.mxu0
        %11981 = vmatprep.mubr.bf16.mxu0 0
        %11982 = vmatmul.mubr.bf16.gmra.mxu0 %v8988
        %v11983 = vpop.f32.mrf.mxu0
        %v11984 = vadd.f32 %v11439, %v11983
        %v11985 = vpop.f32.mrf.mxu0
        %v11986 = vpop.f32.mrf.mxu0
        %v11987 = vadd.f32 %v11442, %v11986
        %v11988 = vpop.f32.mrf.mxu0
        %11989 = vmatprep.mubr.bf16.mxu0 0
        %11990 = vmatmul.mubr.bf16.gmra.mxu0 %v8989
        %v11991 = vpop.f32.mrf.mxu0
        %v11992 = vadd.f32 %v11447, %v11991
        %v11993 = vpop.f32.mrf.mxu0
        %v11994 = vpop.f32.mrf.mxu0
        %v11995 = vadd.f32 %v11450, %v11994
        %v11996 = vpop.f32.mrf.mxu0
        %11997 = vmatprep.mubr.bf16.mxu0 0
        %11998 = vmatmul.mubr.bf16.gmra.mxu0 %v8990
        %v11999 = vpop.f32.mrf.mxu0
        %v12000 = vadd.f32 %v11455, %v11999
        %v12001 = vpop.f32.mrf.mxu0
        %v12002 = vpop.f32.mrf.mxu0
        %v12003 = vadd.f32 %v11458, %v12002
        %v12004 = vpop.f32.mrf.mxu0
        %12005 = vmatprep.mubr.bf16.mxu0 0
        %12006 = vmatmul.mubr.bf16.gmra.mxu0 %v8991
        %v12007 = vpop.f32.mrf.mxu0
        %v12008 = vadd.f32 %v11463, %v12007
        %v12009 = vpop.f32.mrf.mxu0
        %v12010 = vpop.f32.mrf.mxu0
        %v12011 = vadd.f32 %v11466, %v12010
        %v12012 = vpop.f32.mrf.mxu0
        %12013 = vmatprep.mubr.bf16.mxu0 0
        %12014 = vmatmul.mubr.bf16.gmra.mxu0 %v8992
        %v12015 = vpop.f32.mrf.mxu0
        %v12016 = vadd.f32 %v11471, %v12015
        %v12017 = vpop.f32.mrf.mxu0
        %v12018 = vpop.f32.mrf.mxu0
        %v12019 = vadd.f32 %v11474, %v12018
        %v12020 = vpop.f32.mrf.mxu0
        %12021 = vmatprep.mubr.bf16.mxu0 0
        %12022 = vmatmul.mubr.bf16.gmra.mxu0 %v8993
        %v12023 = vpop.f32.mrf.mxu0
        %v12024 = vadd.f32 %v11479, %v12023
        %v12025 = vpop.f32.mrf.mxu0
        %v12026 = vpop.f32.mrf.mxu0
        %v12027 = vadd.f32 %v11482, %v12026
        %v12028 = vpop.f32.mrf.mxu0
        %12029 = vmatprep.mubr.bf16.mxu0 0
        %12030 = vmatmul.mubr.bf16.gmra.mxu0 %v8994
        %v12031 = vpop.f32.mrf.mxu0
        %v12032 = vadd.f32 %v11487, %v12031
        %v12033 = vpop.f32.mrf.mxu0
        %v12034 = vpop.f32.mrf.mxu0
        %v12035 = vadd.f32 %v11490, %v12034
        %v12036 = vpop.f32.mrf.mxu0
        %12037 = vmatprep.mubr.bf16.mxu0 0
        %12038 = vmatmul.mubr.bf16.gmra.mxu0 %v8995
        %v12039 = vpop.f32.mrf.mxu0
        %v12040 = vadd.f32 %v11495, %v12039
        %v12041 = vpop.f32.mrf.mxu0
        %v12042 = vpop.f32.mrf.mxu0
        %v12043 = vadd.f32 %v11498, %v12042
        %v12044 = vpop.f32.mrf.mxu0
        %12045 = vmatprep.mubr.bf16.mxu0 0
        %12046 = vmatmul.mubr.bf16.gmra.mxu0 %v8996
        %v12047 = vpop.f32.mrf.mxu0
        %v12048 = vadd.f32 %v11503, %v12047
        %v12049 = vpop.f32.mrf.mxu0
        %v12050 = vpop.f32.mrf.mxu0
        %v12051 = vadd.f32 %v11506, %v12050
        %v12052 = vpop.f32.mrf.mxu0
        %12053 = vmatprep.mubr.bf16.mxu0 0
        %12054 = vmatmul.mubr.bf16.gmra.mxu0 %v8997
        %v12055 = vpop.f32.mrf.mxu0
        %v12056 = vadd.f32 %v11511, %v12055
        %v12057 = vpop.f32.mrf.mxu0
        %v12058 = vpop.f32.mrf.mxu0
        %v12059 = vadd.f32 %v11514, %v12058
        %v12060 = vpop.f32.mrf.mxu0
        %12061 = vmatprep.mubr.bf16.mxu0 0
        %12062 = vmatmul.mubr.bf16.gmra.mxu0 %v8998
        %v12063 = vpop.f32.mrf.mxu0
        %v12064 = vadd.f32 %v11519, %v12063
        %v12065 = vpop.f32.mrf.mxu0
        %v12066 = vpop.f32.mrf.mxu0
        %v12067 = vadd.f32 %v11522, %v12066
        %v12068 = vpop.f32.mrf.mxu0
        %12069 = vmatprep.mubr.bf16.mxu0 0
        %12070 = vmatmul.mubr.bf16.gmra.mxu0 %v8999
        %v12071 = vpop.f32.mrf.mxu0
        %v12072 = vadd.f32 %v11527, %v12071
        %v12073 = vpop.f32.mrf.mxu0
        %v12074 = vpop.f32.mrf.mxu0
        %v12075 = vadd.f32 %v11530, %v12074
        %v12076 = vpop.f32.mrf.mxu0
        %12077 = vmatprep.mubr.bf16.mxu0 0
        %12078 = vmatmul.mubr.bf16.gmra.mxu0 %v9000
        %v12079 = vpop.f32.mrf.mxu0
        %v12080 = vadd.f32 %v11535, %v12079
        %v12081 = vpop.f32.mrf.mxu0
        %v12082 = vpop.f32.mrf.mxu0
        %v12083 = vadd.f32 %v11538, %v12082
        %v12084 = vpop.f32.mrf.mxu0
        %12085 = vmatprep.mubr.bf16.mxu0 0
        %12086 = vmatmul.mubr.bf16.gmra.mxu0 %v9001
        %v12087 = vpop.f32.mrf.mxu0
        %v12088 = vadd.f32 %v11543, %v12087
        %v12089 = vpop.f32.mrf.mxu0
        %v12090 = vpop.f32.mrf.mxu0
        %v12091 = vadd.f32 %v11546, %v12090
        %v12092 = vpop.f32.mrf.mxu0
        %12093 = vmatprep.mubr.bf16.mxu0 0
        %12094 = vmatmul.mubr.bf16.gmra.mxu0 %v9002
        %v12095 = vpop.f32.mrf.mxu0
        %v12096 = vadd.f32 %v11551, %v12095
        %v12097 = vpop.f32.mrf.mxu0
        %v12098 = vpop.f32.mrf.mxu0
        %v12099 = vadd.f32 %v11554, %v12098
        %v12100 = vpop.f32.mrf.mxu0
        %12101 = vmatprep.mubr.bf16.mxu0 0
        %12102 = vmatmul.mubr.bf16.gmra.mxu0 %v9003
        %v12103 = vpop.f32.mrf.mxu0
        %v12104 = vadd.f32 %v11559, %v12103
        %v12105 = vpop.f32.mrf.mxu0
        %v12106 = vpop.f32.mrf.mxu0
        %v12107 = vadd.f32 %v11562, %v12106
        %v12108 = vpop.f32.mrf.mxu0
        %12109 = vmatprep.mubr.bf16.mxu0 0
        %12110 = vmatmul.mubr.bf16.gmra.mxu0 %v9004
        %v12111 = vpop.f32.mrf.mxu0
        %v12112 = vadd.f32 %v11567, %v12111
        %v12113 = vpop.f32.mrf.mxu0
        %v12114 = vpop.f32.mrf.mxu0
        %v12115 = vadd.f32 %v11570, %v12114
        %v12116 = vpop.f32.mrf.mxu0
        %12117 = vmatprep.mubr.bf16.mxu0 0
        %12118 = vmatmul.mubr.bf16.gmra.mxu0 %v9005
        %v12119 = vpop.f32.mrf.mxu0
        %v12120 = vadd.f32 %v11575, %v12119
        %v12121 = vpop.f32.mrf.mxu0
        %v12122 = vpop.f32.mrf.mxu0
        %v12123 = vadd.f32 %v11578, %v12122
        %v12124 = vpop.f32.mrf.mxu0
        %12125 = vmatprep.mubr.bf16.mxu0 0
        %12126 = vmatmul.mubr.bf16.gmra.mxu0 %v9006
        %v12127 = vpop.f32.mrf.mxu0
        %v12128 = vadd.f32 %v11583, %v12127
        %v12129 = vpop.f32.mrf.mxu0
        %v12130 = vpop.f32.mrf.mxu0
        %v12131 = vadd.f32 %v11586, %v12130
        %v12132 = vpop.f32.mrf.mxu0
        %12133 = vmatprep.mubr.bf16.mxu0 0
        %12134 = vmatmul.mubr.bf16.gmra.mxu0 %v9007
        %v12135 = vpop.f32.mrf.mxu0
        %v12136 = vadd.f32 %v11591, %v12135
        %v12137 = vpop.f32.mrf.mxu0
        %v12138 = vpop.f32.mrf.mxu0
        %v12139 = vadd.f32 %v11594, %v12138
        %v12140 = vpop.f32.mrf.mxu0
        %12141 = vmatprep.mubr.bf16.mxu0 0
        %12142 = vmatmul.mubr.bf16.gmra.mxu0 %v9008
        %v12143 = vpop.f32.mrf.mxu0
        %v12144 = vadd.f32 %v11599, %v12143
        %v12145 = vpop.f32.mrf.mxu0
        %v12146 = vpop.f32.mrf.mxu0
        %v12147 = vadd.f32 %v11602, %v12146
        %v12148 = vpop.f32.mrf.mxu0
        %12149 = vmatprep.mubr.bf16.mxu0 0
        %12150 = vmatmul.mubr.bf16.gmra.mxu0 %v9009
        %v12151 = vpop.f32.mrf.mxu0
        %v12152 = vadd.f32 %v11607, %v12151
        %v12153 = vpop.f32.mrf.mxu0
        %v12154 = vpop.f32.mrf.mxu0
        %v12155 = vadd.f32 %v11610, %v12154
        %v12156 = vpop.f32.mrf.mxu0
        %12157 = vmatprep.mubr.bf16.mxu0 0
        %12158 = vmatmul.mubr.bf16.gmra.mxu0 %v9010
        %v12159 = vpop.f32.mrf.mxu0
        %v12160 = vadd.f32 %v11615, %v12159
        %v12161 = vpop.f32.mrf.mxu0
        %v12162 = vpop.f32.mrf.mxu0
        %v12163 = vadd.f32 %v11618, %v12162
        %v12164 = vpop.f32.mrf.mxu0
        %12165 = vmatprep.mubr.bf16.mxu0 0
        %12166 = vmatmul.mubr.bf16.gmra.mxu0 %v9011
        %v12167 = vpop.f32.mrf.mxu0
        %v12168 = vadd.f32 %v11623, %v12167
        %v12169 = vpop.f32.mrf.mxu0
        %v12170 = vpop.f32.mrf.mxu0
        %v12171 = vadd.f32 %v11626, %v12170
        %v12172 = vpop.f32.mrf.mxu0
        %12173 = vmatprep.mubr.bf16.mxu0 0
        %12174 = vmatmul.mubr.bf16.gmra.mxu0 %v9012
        %v12175 = vpop.f32.mrf.mxu0
        %v12176 = vadd.f32 %v11631, %v12175
        %v12177 = vpop.f32.mrf.mxu0
        %v12178 = vpop.f32.mrf.mxu0
        %v12179 = vadd.f32 %v11634, %v12178
        %v12180 = vpop.f32.mrf.mxu0
        %12181 = vmatprep.mubr.bf16.mxu0 0
        %12182 = vmatmul.mubr.bf16.gmra.mxu0 %v9013
        %v12183 = vpop.f32.mrf.mxu0
        %v12184 = vadd.f32 %v11639, %v12183
        %v12185 = vpop.f32.mrf.mxu0
        %v12186 = vpop.f32.mrf.mxu0
        %v12187 = vadd.f32 %v11642, %v12186
        %v12188 = vpop.f32.mrf.mxu0
        %12189 = vmatprep.mubr.bf16.mxu0 0
        %12190 = vmatmul.mubr.bf16.gmra.mxu0 %v9014
        %v12191 = vpop.f32.mrf.mxu0
        %v12192 = vadd.f32 %v11647, %v12191
        %v12193 = vpop.f32.mrf.mxu0
        %v12194 = vpop.f32.mrf.mxu0
        %v12195 = vadd.f32 %v11650, %v12194
        %v12196 = vpop.f32.mrf.mxu0
        %12197 = vmatprep.mubr.bf16.mxu0 0
        %12198 = vmatmul.mubr.bf16.gmra.mxu0 %v9015
        %v12199 = vpop.f32.mrf.mxu0
        %v12200 = vadd.f32 %v11655, %v12199
        %v12201 = vpop.f32.mrf.mxu0
        %v12202 = vpop.f32.mrf.mxu0
        %v12203 = vadd.f32 %v11658, %v12202
        %v12204 = vpop.f32.mrf.mxu0
        %12205 = vmatprep.mubr.bf16.mxu0 0
        %12206 = vmatmul.mubr.bf16.gmra.mxu0 %v9016
        %v12207 = vpop.f32.mrf.mxu0
        %v12208 = vadd.f32 %v11663, %v12207
        %v12209 = vpop.f32.mrf.mxu0
        %v12210 = vpop.f32.mrf.mxu0
        %v12211 = vadd.f32 %v11666, %v12210
        %v12212 = vpop.f32.mrf.mxu0
        %12213 = vmatprep.mubr.bf16.mxu0 0
        %12214 = vmatmul.mubr.bf16.gmra.mxu0 %v9017
        %v12215 = vpop.f32.mrf.mxu0
        %v12216 = vadd.f32 %v11671, %v12215
        %v12217 = vpop.f32.mrf.mxu0
        %v12218 = vpop.f32.mrf.mxu0
        %v12219 = vadd.f32 %v11674, %v12218
        %v12220 = vpop.f32.mrf.mxu0
        %12221 = vmatprep.mubr.bf16.mxu0 0
        %12222 = vmatmul.mubr.bf16.gmra.mxu0 %v9018
        %v12223 = vpop.f32.mrf.mxu0
        %v12224 = vadd.f32 %v11679, %v12223
        %v12225 = vpop.f32.mrf.mxu0
        %v12226 = vpop.f32.mrf.mxu0
        %v12227 = vadd.f32 %v11682, %v12226
        %v12228 = vpop.f32.mrf.mxu0
        %12229 = vmatprep.mubr.bf16.mxu0 0
        %12230 = vmatmul.mubr.bf16.gmra.mxu0 %v9019
        %v12231 = vpop.f32.mrf.mxu0
        %v12232 = vadd.f32 %v11687, %v12231
        %v12233 = vpop.f32.mrf.mxu0
        %v12234 = vpop.f32.mrf.mxu0
        %v12235 = vadd.f32 %v11690, %v12234
        %v12236 = vpop.f32.mrf.mxu0
        %12237 = vmatprep.mubr.bf16.mxu0 0
        %12238 = vmatmul.mubr.bf16.gmra.mxu0 %v9020
        %v12239 = vpop.f32.mrf.mxu0
        %v12240 = vadd.f32 %v11695, %v12239
        %v12241 = vpop.f32.mrf.mxu0
        %v12242 = vpop.f32.mrf.mxu0
        %v12243 = vadd.f32 %v11698, %v12242
        %v12244 = vpop.f32.mrf.mxu0
        %12245 = vmatprep.mubr.bf16.mxu0 0
        %12246 = vmatmul.mubr.bf16.gmra.mxu0 %v9021
        %v12247 = vpop.f32.mrf.mxu0
        %v12248 = vadd.f32 %v11703, %v12247
        %v12249 = vpop.f32.mrf.mxu0
        %v12250 = vpop.f32.mrf.mxu0
        %v12251 = vadd.f32 %v11706, %v12250
        %v12252 = vpop.f32.mrf.mxu0
        %12253 = vmatprep.mubr.bf16.mxu0 0
        %12254 = vmatmul.mubr.bf16.gmra.mxu0 %v9022
        %v12255 = vpop.f32.mrf.mxu0
        %v12256 = vadd.f32 %v11711, %v12255
        %v12257 = vpop.f32.mrf.mxu0
        %v12258 = vpop.f32.mrf.mxu0
        %v12259 = vadd.f32 %v11714, %v12258
        %v12260 = vpop.f32.mrf.mxu0
        %12261 = vmatprep.mubr.bf16.mxu0 0
        %12262 = vmatmul.mubr.bf16.gmra.mxu0 %v9023
        %v12263 = vpop.f32.mrf.mxu0
        %v12264 = vadd.f32 %v11719, %v12263
        %v12265 = vpop.f32.mrf.mxu0
        %v12266 = vpop.f32.mrf.mxu0
        %v12267 = vadd.f32 %v11722, %v12266
        %v12268 = vpop.f32.mrf.mxu0
        %12269 = vmatprep.mubr.bf16.mxu0 0
        %12270 = vmatmul.mubr.bf16.gmra.mxu0 %v9024
        %v12271 = vpop.f32.mrf.mxu0
        %v12272 = vadd.f32 %v11727, %v12271
        %v12273 = vpop.f32.mrf.mxu0
        %v12274 = vpop.f32.mrf.mxu0
        %v12275 = vadd.f32 %v11730, %v12274
        %v12276 = vpop.f32.mrf.mxu0
        %12277 = vmatprep.mubr.bf16.mxu0 0
        %12278 = vmatmul.mubr.bf16.gmra.mxu0 %v9025
        %v12279 = vpop.f32.mrf.mxu0
        %v12280 = vadd.f32 %v11735, %v12279
        %v12281 = vpop.f32.mrf.mxu0
        %v12282 = vpop.f32.mrf.mxu0
        %v12283 = vadd.f32 %v11738, %v12282
        %v12284 = vpop.f32.mrf.mxu0
        %12285 = vmatprep.mubr.bf16.mxu0 0
        %12286 = vmatmul.mubr.bf16.gmra.mxu0 %v9026
        %v12287 = vpop.f32.mrf.mxu0
        %v12288 = vadd.f32 %v11743, %v12287
        %v12289 = vpop.f32.mrf.mxu0
        %v12290 = vpop.f32.mrf.mxu0
        %v12291 = vadd.f32 %v11746, %v12290
        %v12292 = vpop.f32.mrf.mxu0
        %12293 = vmatprep.mubr.bf16.mxu0 0
        %12294 = vmatmul.mubr.bf16.gmra.mxu0 %v9027
        %v12295 = vpop.f32.mrf.mxu0
        %v12296 = vadd.f32 %v11751, %v12295
        %v12297 = vpop.f32.mrf.mxu0
        %v12298 = vpop.f32.mrf.mxu0
        %v12299 = vadd.f32 %v11754, %v12298
        %v12300 = vpop.f32.mrf.mxu0
        %12301 = vmatprep.mubr.bf16.mxu0 0
        %12302 = vmatmul.mubr.bf16.gmra.mxu0 %v9028
        %v12303 = vpop.f32.mrf.mxu0
        %v12304 = vadd.f32 %v11759, %v12303
        %v12305 = vpop.f32.mrf.mxu0
        %v12306 = vpop.f32.mrf.mxu0
        %v12307 = vadd.f32 %v11762, %v12306
        %v12308 = vpop.f32.mrf.mxu0
        %12309 = vmatprep.mubr.bf16.mxu0 0
        %12310 = vmatmul.mubr.bf16.gmra.mxu0 %v9029
        %v12311 = vpop.f32.mrf.mxu0
        %v12312 = vadd.f32 %v11767, %v12311
        %v12313 = vpop.f32.mrf.mxu0
        %v12314 = vpop.f32.mrf.mxu0
        %v12315 = vadd.f32 %v11770, %v12314
        %v12316 = vpop.f32.mrf.mxu0
        %12317 = vmatprep.mubr.bf16.mxu0 0
        %12318 = vmatmul.mubr.bf16.gmra.mxu0 %v9030
        %v12319 = vpop.f32.mrf.mxu0
        %v12320 = vadd.f32 %v11775, %v12319
        %v12321 = vpop.f32.mrf.mxu0
        %v12322 = vpop.f32.mrf.mxu0
        %v12323 = vadd.f32 %v11778, %v12322
        %v12324 = vpop.f32.mrf.mxu0
        %12325 = vmatprep.mubr.bf16.mxu0 0
        %12326 = vmatmul.mubr.bf16.gmra.mxu0 %v9031
        %v12327 = vpop.f32.mrf.mxu0
        %v12328 = vadd.f32 %v11783, %v12327
        %v12329 = vpop.f32.mrf.mxu0
        %v12330 = vpop.f32.mrf.mxu0
        %v12331 = vadd.f32 %v11786, %v12330
        %v12332 = vpop.f32.mrf.mxu0
        %12333 = vmatprep.mubr.bf16.mxu0 0
        %12334 = vmatmul.mubr.bf16.gmra.mxu0 %v9032
        %v12335 = vpop.f32.mrf.mxu0
        %v12336 = vadd.f32 %v11791, %v12335
        %v12337 = vpop.f32.mrf.mxu0
        %v12338 = vpop.f32.mrf.mxu0
        %v12339 = vadd.f32 %v11794, %v12338
        %v12340 = vpop.f32.mrf.mxu0
        %12341 = vmatprep.mubr.bf16.mxu0 0
        %12342 = vmatmul.mubr.bf16.gmra.mxu0 %v9033
        %v12343 = vpop.f32.mrf.mxu0
        %v12344 = vadd.f32 %v11799, %v12343
        %v12345 = vpop.f32.mrf.mxu0
        %v12346 = vpop.f32.mrf.mxu0
        %v12347 = vadd.f32 %v11802, %v12346
        %v12348 = vpop.f32.mrf.mxu0
        %12349 = vmatprep.mubr.bf16.mxu0 0
        %12350 = vmatmul.mubr.bf16.gmra.mxu0 %v9034
        %v12351 = vpop.f32.mrf.mxu0
        %v12352 = vadd.f32 %v11807, %v12351
        %v12353 = vpop.f32.mrf.mxu0
        %v12354 = vpop.f32.mrf.mxu0
        %v12355 = vadd.f32 %v11810, %v12354
        %v12356 = vpop.f32.mrf.mxu0
        %12357 = vmatprep.mubr.bf16.mxu0 0
        %12358 = vmatmul.mubr.bf16.gmra.mxu0 %v9035
        %v12359 = vpop.f32.mrf.mxu0
        %v12360 = vadd.f32 %v11815, %v12359
        %v12361 = vpop.f32.mrf.mxu0
        %v12362 = vpop.f32.mrf.mxu0
        %v12363 = vadd.f32 %v11818, %v12362
        %v12364 = vpop.f32.mrf.mxu0
        %12365 = vmatprep.mubr.bf16.mxu0 0
        %12366 = vmatmul.mubr.bf16.gmra.mxu0 %v9036
        %v12367 = vpop.f32.mrf.mxu0
        %v12368 = vadd.f32 %v11823, %v12367
        %v12369 = vpop.f32.mrf.mxu0
        %v12370 = vpop.f32.mrf.mxu0
        %v12371 = vadd.f32 %v11826, %v12370
        %v12372 = vpop.f32.mrf.mxu0
        %12373 = vmatprep.mubr.bf16.mxu0 0
        %12374 = vmatmul.mubr.bf16.gmra.mxu0 %v9037
        %v12375 = vpop.f32.mrf.mxu0
        %v12376 = vadd.f32 %v11831, %v12375
        %v12377 = vpop.f32.mrf.mxu0
        %v12378 = vpop.f32.mrf.mxu0
        %v12379 = vadd.f32 %v11834, %v12378
        %v12380 = vpop.f32.mrf.mxu0
        %12381 = vmatprep.mubr.bf16.mxu0 0
        %12382 = vmatmul.mubr.bf16.gmra.mxu0 %v9038
        %v12383 = vpop.f32.mrf.mxu0
        %v12384 = vadd.f32 %v11839, %v12383
        %v12385 = vpop.f32.mrf.mxu0
        %v12386 = vpop.f32.mrf.mxu0
        %v12387 = vadd.f32 %v11842, %v12386
        %v12388 = vpop.f32.mrf.mxu0
        %12389 = vmatprep.mubr.bf16.mxu0 0
        %12390 = vmatmul.mubr.bf16.gmra.mxu0 %v9039
        %v12391 = vpop.f32.mrf.mxu0
        %v12392 = vadd.f32 %v11847, %v12391
        %v12393 = vpop.f32.mrf.mxu0
        %v12394 = vpop.f32.mrf.mxu0
        %v12395 = vadd.f32 %v11850, %v12394
        %v12396 = vpop.f32.mrf.mxu0
        %12397 = vmatprep.mubr.bf16.mxu0 0
        %12398 = vmatmul.mubr.bf16.gmra.mxu0 %v9040
        %v12399 = vpop.f32.mrf.mxu0
        %v12400 = vadd.f32 %v11855, %v12399
        %v12401 = vpop.f32.mrf.mxu0
        %v12402 = vpop.f32.mrf.mxu0
        %v12403 = vadd.f32 %v11858, %v12402
        %v12404 = vpop.f32.mrf.mxu0
        %12405 = vmatprep.mubr.bf16.mxu0 0
        %12406 = vmatmul.mubr.bf16.gmra.mxu0 %v9041
        %v12407 = vpop.f32.mrf.mxu0
        %v12408 = vadd.f32 %v11863, %v12407
        %v12409 = vpop.f32.mrf.mxu0
        %v12410 = vpop.f32.mrf.mxu0
        %v12411 = vadd.f32 %v11866, %v12410
        %v12412 = vpop.f32.mrf.mxu0
        %12413 = vdwg.mxu0
        %v12414 = vmax.f32 %v11904, 0.0
        %v12415 = vmax.f32 %v11907, 0.0
        %v12416 = vmax.f32 %v11912, 0.0
        %v12417 = vmax.f32 %v11915, 0.0
        %v12418 = vmax.f32 %v11920, 0.0
        %v12419 = vmax.f32 %v11923, 0.0
        %v12420 = vmax.f32 %v11928, 0.0
        %v12421 = vmax.f32 %v11931, 0.0
        %v12422 = vmax.f32 %v11936, 0.0
        %v12423 = vmax.f32 %v11939, 0.0
        %v12424 = vmax.f32 %v11944, 0.0
        %v12425 = vmax.f32 %v11947, 0.0
        %v12426 = vmax.f32 %v11952, 0.0
        %v12427 = vmax.f32 %v11955, 0.0
        %v12428 = vmax.f32 %v11960, 0.0
        %v12429 = vmax.f32 %v11963, 0.0
        %v12430 = vmax.f32 %v11968, 0.0
        %v12431 = vmax.f32 %v11971, 0.0
        %v12432 = vmax.f32 %v11976, 0.0
        %v12433 = vmax.f32 %v11979, 0.0
        %v12434 = vmax.f32 %v11984, 0.0
        %v12435 = vmax.f32 %v11987, 0.0
        %v12436 = vmax.f32 %v11992, 0.0
        %v12437 = vmax.f32 %v11995, 0.0
        %v12438 = vmax.f32 %v12000, 0.0
        %v12439 = vmax.f32 %v12003, 0.0
        %v12440 = vmax.f32 %v12008, 0.0
        %v12441 = vmax.f32 %v12011, 0.0
        %v12442 = vmax.f32 %v12016, 0.0
        %v12443 = vmax.f32 %v12019, 0.0
        %v12444 = vmax.f32 %v12024, 0.0
        %v12445 = vmax.f32 %v12027, 0.0
        %v12446 = vmax.f32 %v12032, 0.0
        %v12447 = vmax.f32 %v12035, 0.0
        %v12448 = vmax.f32 %v12040, 0.0
        %v12449 = vmax.f32 %v12043, 0.0
        %v12450 = vmax.f32 %v12048, 0.0
        %v12451 = vmax.f32 %v12051, 0.0
        %v12452 = vmax.f32 %v12056, 0.0
        %v12453 = vmax.f32 %v12059, 0.0
        %v12454 = vmax.f32 %v12064, 0.0
        %v12455 = vmax.f32 %v12067, 0.0
        %v12456 = vmax.f32 %v12072, 0.0
        %v12457 = vmax.f32 %v12075, 0.0
        %v12458 = vmax.f32 %v12080, 0.0
        %v12459 = vmax.f32 %v12083, 0.0
        %v12460 = vmax.f32 %v12088, 0.0
        %v12461 = vmax.f32 %v12091, 0.0
        %v12462 = vmax.f32 %v12096, 0.0
        %v12463 = vmax.f32 %v12099, 0.0
        %v12464 = vmax.f32 %v12104, 0.0
        %v12465 = vmax.f32 %v12107, 0.0
        %v12466 = vmax.f32 %v12112, 0.0
        %v12467 = vmax.f32 %v12115, 0.0
        %v12468 = vmax.f32 %v12120, 0.0
        %v12469 = vmax.f32 %v12123, 0.0
        %v12470 = vmax.f32 %v12128, 0.0
        %v12471 = vmax.f32 %v12131, 0.0
        %v12472 = vmax.f32 %v12136, 0.0
        %v12473 = vmax.f32 %v12139, 0.0
        %v12474 = vmax.f32 %v12144, 0.0
        %v12475 = vmax.f32 %v12147, 0.0
        %v12476 = vmax.f32 %v12152, 0.0
        %v12477 = vmax.f32 %v12155, 0.0
        %v12478 = vmax.f32 %v12160, 0.0
        %v12479 = vmax.f32 %v12163, 0.0
        %v12480 = vmax.f32 %v12168, 0.0
        %v12481 = vmax.f32 %v12171, 0.0
        %v12482 = vmax.f32 %v12176, 0.0
        %v12483 = vmax.f32 %v12179, 0.0
        %v12484 = vmax.f32 %v12184, 0.0
        %v12485 = vmax.f32 %v12187, 0.0
        %v12486 = vmax.f32 %v12192, 0.0
        %v12487 = vmax.f32 %v12195, 0.0
        %v12488 = vmax.f32 %v12200, 0.0
        %v12489 = vmax.f32 %v12203, 0.0
        %v12490 = vmax.f32 %v12208, 0.0
        %v12491 = vmax.f32 %v12211, 0.0
        %v12492 = vmax.f32 %v12216, 0.0
        %v12493 = vmax.f32 %v12219, 0.0
        %v12494 = vmax.f32 %v12224, 0.0
        %v12495 = vmax.f32 %v12227, 0.0
        %v12496 = vmax.f32 %v12232, 0.0
        %v12497 = vmax.f32 %v12235, 0.0
        %v12498 = vmax.f32 %v12240, 0.0
        %v12499 = vmax.f32 %v12243, 0.0
        %v12500 = vmax.f32 %v12248, 0.0
        %v12501 = vmax.f32 %v12251, 0.0
        %v12502 = vmax.f32 %v12256, 0.0
        %v12503 = vmax.f32 %v12259, 0.0
        %v12504 = vmax.f32 %v12264, 0.0
        %v12505 = vmax.f32 %v12267, 0.0
        %v12506 = vmax.f32 %v12272, 0.0
        %v12507 = vmax.f32 %v12275, 0.0
        %v12508 = vmax.f32 %v12280, 0.0
        %v12509 = vmax.f32 %v12283, 0.0
        %v12510 = vmax.f32 %v12288, 0.0
        %v12511 = vmax.f32 %v12291, 0.0
        %v12512 = vmax.f32 %v12296, 0.0
        %v12513 = vmax.f32 %v12299, 0.0
        %v12514 = vmax.f32 %v12304, 0.0
        %v12515 = vmax.f32 %v12307, 0.0
        %v12516 = vmax.f32 %v12312, 0.0
        %v12517 = vmax.f32 %v12315, 0.0
        %v12518 = vmax.f32 %v12320, 0.0
        %v12519 = vmax.f32 %v12323, 0.0
        %v12520 = vmax.f32 %v12328, 0.0
        %v12521 = vmax.f32 %v12331, 0.0
        %v12522 = vmax.f32 %v12336, 0.0
        %v12523 = vmax.f32 %v12339, 0.0
        %v12524 = vmax.f32 %v12344, 0.0
        %v12525 = vmax.f32 %v12347, 0.0
        %v12526 = vmax.f32 %v12352, 0.0
        %v12527 = vmax.f32 %v12355, 0.0
        %v12528 = vmax.f32 %v12360, 0.0
        %v12529 = vmax.f32 %v12363, 0.0
        %v12530 = vmax.f32 %v12368, 0.0
        %v12531 = vmax.f32 %v12371, 0.0
        %v12532 = vmax.f32 %v12376, 0.0
        %v12533 = vmax.f32 %v12379, 0.0
        %v12534 = vmax.f32 %v12384, 0.0
        %v12535 = vmax.f32 %v12387, 0.0
        %v12536 = vmax.f32 %v12392, 0.0
        %v12537 = vmax.f32 %v12395, 0.0
        %v12538 = vmax.f32 %v12400, 0.0
        %v12539 = vmax.f32 %v12403, 0.0
        %v12540 = vmax.f32 %v12408, 0.0
        %v12541 = vmax.f32 %v12411, 0.0
        %12542 = vst [vmem:[#allocation2] sm:$0xff] %v12414
        %12543 = vst [vmem:[#allocation2 + $0x8] sm:$0xff] %v12415
        %12544 = vst [vmem:[#allocation2 + $0x10] sm:$0xff] %v12416
        %12545 = vst [vmem:[#allocation2 + $0x18] sm:$0xff] %v12417
        %12546 = vst [vmem:[#allocation2 + $0x20] sm:$0xff] %v12418
        %12547 = vst [vmem:[#allocation2 + $0x28] sm:$0xff] %v12419
        %12548 = vst [vmem:[#allocation2 + $0x30] sm:$0xff] %v12420
        %12549 = vst [vmem:[#allocation2 + $0x38] sm:$0xff] %v12421
        %12550 = vst [vmem:[#allocation2 + $0x40] sm:$0xff] %v12422
        %12551 = vst [vmem:[#allocation2 + $0x48] sm:$0xff] %v12423
        %12552 = vst [vmem:[#allocation2 + $0x50] sm:$0xff] %v12424
        %12553 = vst [vmem:[#allocation2 + $0x58] sm:$0xff] %v12425
        %12554 = vst [vmem:[#allocation2 + $0x60] sm:$0xff] %v12426
        %12555 = vst [vmem:[#allocation2 + $0x68] sm:$0xff] %v12427
        %12556 = vst [vmem:[#allocation2 + $0x70] sm:$0xff] %v12428
        %12557 = vst [vmem:[#allocation2 + $0x78] sm:$0xff] %v12429
        %12558 = vst [vmem:[#allocation2 + $0x80] sm:$0xff] %v12430
        %12559 = vst [vmem:[#allocation2 + $0x88] sm:$0xff] %v12431
        %12560 = vst [vmem:[#allocation2 + $0x90] sm:$0xff] %v12432
        %12561 = vst [vmem:[#allocation2 + $0x98] sm:$0xff] %v12433
        %12562 = vst [vmem:[#allocation2 + $0xa0] sm:$0xff] %v12434
        %12563 = vst [vmem:[#allocation2 + $0xa8] sm:$0xff] %v12435
        %12564 = vst [vmem:[#allocation2 + $0xb0] sm:$0xff] %v12436
        %12565 = vst [vmem:[#allocation2 + $0xb8] sm:$0xff] %v12437
        %12566 = vst [vmem:[#allocation2 + $0xc0] sm:$0xff] %v12438
        %12567 = vst [vmem:[#allocation2 + $0xc8] sm:$0xff] %v12439
        %12568 = vst [vmem:[#allocation2 + $0xd0] sm:$0xff] %v12440
        %12569 = vst [vmem:[#allocation2 + $0xd8] sm:$0xff] %v12441
        %12570 = vst [vmem:[#allocation2 + $0xe0] sm:$0xff] %v12442
        %12571 = vst [vmem:[#allocation2 + $0xe8] sm:$0xff] %v12443
        %12572 = vst [vmem:[#allocation2 + $0xf0] sm:$0xff] %v12444
        %12573 = vst [vmem:[#allocation2 + $0xf8] sm:$0xff] %v12445
        %12574 = vst [vmem:[#allocation2 + $0x100] sm:$0xff] %v12446
        %12575 = vst [vmem:[#allocation2 + $0x108] sm:$0xff] %v12447
        %12576 = vst [vmem:[#allocation2 + $0x110] sm:$0xff] %v12448
        %12577 = vst [vmem:[#allocation2 + $0x118] sm:$0xff] %v12449
        %12578 = vst [vmem:[#allocation2 + $0x120] sm:$0xff] %v12450
        %12579 = vst [vmem:[#allocation2 + $0x128] sm:$0xff] %v12451
        %12580 = vst [vmem:[#allocation2 + $0x130] sm:$0xff] %v12452
        %12581 = vst [vmem:[#allocation2 + $0x138] sm:$0xff] %v12453
        %12582 = vst [vmem:[#allocation2 + $0x140] sm:$0xff] %v12454
        %12583 = vst [vmem:[#allocation2 + $0x148] sm:$0xff] %v12455
        %12584 = vst [vmem:[#allocation2 + $0x150] sm:$0xff] %v12456
        %12585 = vst [vmem:[#allocation2 + $0x158] sm:$0xff] %v12457
        %12586 = vst [vmem:[#allocation2 + $0x160] sm:$0xff] %v12458
        %12587 = vst [vmem:[#allocation2 + $0x168] sm:$0xff] %v12459
        %12588 = vst [vmem:[#allocation2 + $0x170] sm:$0xff] %v12460
        %12589 = vst [vmem:[#allocation2 + $0x178] sm:$0xff] %v12461
        %12590 = vst [vmem:[#allocation2 + $0x180] sm:$0xff] %v12462
        %12591 = vst [vmem:[#allocation2 + $0x188] sm:$0xff] %v12463
        %12592 = vst [vmem:[#allocation2 + $0x190] sm:$0xff] %v12464
        %12593 = vst [vmem:[#allocation2 + $0x198] sm:$0xff] %v12465
        %12594 = vst [vmem:[#allocation2 + $0x1a0] sm:$0xff] %v12466
        %12595 = vst [vmem:[#allocation2 + $0x1a8] sm:$0xff] %v12467
        %12596 = vst [vmem:[#allocation2 + $0x1b0] sm:$0xff] %v12468
        %12597 = vst [vmem:[#allocation2 + $0x1b8] sm:$0xff] %v12469
        %12598 = vst [vmem:[#allocation2 + $0x1c0] sm:$0xff] %v12470
        %12599 = vst [vmem:[#allocation2 + $0x1c8] sm:$0xff] %v12471
        %12600 = vst [vmem:[#allocation2 + $0x1d0] sm:$0xff] %v12472
        %12601 = vst [vmem:[#allocation2 + $0x1d8] sm:$0xff] %v12473
        %12602 = vst [vmem:[#allocation2 + $0x1e0] sm:$0xff] %v12474
        %12603 = vst [vmem:[#allocation2 + $0x1e8] sm:$0xff] %v12475
        %12604 = vst [vmem:[#allocation2 + $0x1f0] sm:$0xff] %v12476
        %12605 = vst [vmem:[#allocation2 + $0x1f8] sm:$0xff] %v12477
        %12606 = vst [vmem:[#allocation2 + $0x200] sm:$0xff] %v12478
        %12607 = vst [vmem:[#allocation2 + $0x208] sm:$0xff] %v12479
        %12608 = vst [vmem:[#allocation2 + $0x210] sm:$0xff] %v12480
        %12609 = vst [vmem:[#allocation2 + $0x218] sm:$0xff] %v12481
        %12610 = vst [vmem:[#allocation2 + $0x220] sm:$0xff] %v12482
        %12611 = vst [vmem:[#allocation2 + $0x228] sm:$0xff] %v12483
        %12612 = vst [vmem:[#allocation2 + $0x230] sm:$0xff] %v12484
        %12613 = vst [vmem:[#allocation2 + $0x238] sm:$0xff] %v12485
        %12614 = vst [vmem:[#allocation2 + $0x240] sm:$0xff] %v12486
        %12615 = vst [vmem:[#allocation2 + $0x248] sm:$0xff] %v12487
        %12616 = vst [vmem:[#allocation2 + $0x250] sm:$0xff] %v12488
        %12617 = vst [vmem:[#allocation2 + $0x258] sm:$0xff] %v12489
        %12618 = vst [vmem:[#allocation2 + $0x260] sm:$0xff] %v12490
        %12619 = vst [vmem:[#allocation2 + $0x268] sm:$0xff] %v12491
        %12620 = vst [vmem:[#allocation2 + $0x270] sm:$0xff] %v12492
        %12621 = vst [vmem:[#allocation2 + $0x278] sm:$0xff] %v12493
        %12622 = vst [vmem:[#allocation2 + $0x280] sm:$0xff] %v12494
        %12623 = vst [vmem:[#allocation2 + $0x288] sm:$0xff] %v12495
        %12624 = vst [vmem:[#allocation2 + $0x290] sm:$0xff] %v12496
        %12625 = vst [vmem:[#allocation2 + $0x298] sm:$0xff] %v12497
        %12626 = vst [vmem:[#allocation2 + $0x2a0] sm:$0xff] %v12498
        %12627 = vst [vmem:[#allocation2 + $0x2a8] sm:$0xff] %v12499
        %12628 = vst [vmem:[#allocation2 + $0x2b0] sm:$0xff] %v12500
        %12629 = vst [vmem:[#allocation2 + $0x2b8] sm:$0xff] %v12501
        %12630 = vst [vmem:[#allocation2 + $0x2c0] sm:$0xff] %v12502
        %12631 = vst [vmem:[#allocation2 + $0x2c8] sm:$0xff] %v12503
        %12632 = vst [vmem:[#allocation2 + $0x2d0] sm:$0xff] %v12504
        %12633 = vst [vmem:[#allocation2 + $0x2d8] sm:$0xff] %v12505
        %12634 = vst [vmem:[#allocation2 + $0x2e0] sm:$0xff] %v12506
        %12635 = vst [vmem:[#allocation2 + $0x2e8] sm:$0xff] %v12507
        %12636 = vst [vmem:[#allocation2 + $0x2f0] sm:$0xff] %v12508
        %12637 = vst [vmem:[#allocation2 + $0x2f8] sm:$0xff] %v12509
        %12638 = vst [vmem:[#allocation2 + $0x300] sm:$0xff] %v12510
        %12639 = vst [vmem:[#allocation2 + $0x308] sm:$0xff] %v12511
        %12640 = vst [vmem:[#allocation2 + $0x310] sm:$0xff] %v12512
        %12641 = vst [vmem:[#allocation2 + $0x318] sm:$0xff] %v12513
        %12642 = vst [vmem:[#allocation2 + $0x320] sm:$0xff] %v12514
        %12643 = vst [vmem:[#allocation2 + $0x328] sm:$0xff] %v12515
        %12644 = vst [vmem:[#allocation2 + $0x330] sm:$0xff] %v12516
        %12645 = vst [vmem:[#allocation2 + $0x338] sm:$0xff] %v12517
        %12646 = vst [vmem:[#allocation2 + $0x340] sm:$0xff] %v12518
        %12647 = vst [vmem:[#allocation2 + $0x348] sm:$0xff] %v12519
        %12648 = vst [vmem:[#allocation2 + $0x350] sm:$0xff] %v12520
        %12649 = vst [vmem:[#allocation2 + $0x358] sm:$0xff] %v12521
        %12650 = vst [vmem:[#allocation2 + $0x360] sm:$0xff] %v12522
        %12651 = vst [vmem:[#allocation2 + $0x368] sm:$0xff] %v12523
        %12652 = vst [vmem:[#allocation2 + $0x370] sm:$0xff] %v12524
        %12653 = vst [vmem:[#allocation2 + $0x378] sm:$0xff] %v12525
        %12654 = vst [vmem:[#allocation2 + $0x380] sm:$0xff] %v12526
        %12655 = vst [vmem:[#allocation2 + $0x388] sm:$0xff] %v12527
        %12656 = vst [vmem:[#allocation2 + $0x390] sm:$0xff] %v12528
        %12657 = vst [vmem:[#allocation2 + $0x398] sm:$0xff] %v12529
        %12658 = vst [vmem:[#allocation2 + $0x3a0] sm:$0xff] %v12530
        %12659 = vst [vmem:[#allocation2 + $0x3a8] sm:$0xff] %v12531
        %12660 = vst [vmem:[#allocation2 + $0x3b0] sm:$0xff] %v12532
        %12661 = vst [vmem:[#allocation2 + $0x3b8] sm:$0xff] %v12533
        %12662 = vst [vmem:[#allocation2 + $0x3c0] sm:$0xff] %v12534
        %12663 = vst [vmem:[#allocation2 + $0x3c8] sm:$0xff] %v12535
        %12664 = vst [vmem:[#allocation2 + $0x3d0] sm:$0xff] %v12536
        %12665 = vst [vmem:[#allocation2 + $0x3d8] sm:$0xff] %v12537
        %12666 = vst [vmem:[#allocation2 + $0x3e0] sm:$0xff] %v12538
        %12667 = vst [vmem:[#allocation2 + $0x3e8] sm:$0xff] %v12539
        %12668 = vst [vmem:[#allocation2 + $0x3f0] sm:$0xff] %v12540
        %12669 = vst [vmem:[#allocation2 + $0x3f8] sm:$0xff] %v12541
        %v12670 = vld [vmem:[#allocation2] ss:$2 sm:$0xff]
        %s12671 = scalar_lea.vmem [#allocation2], 16
        %v12672 = vld [vmem:[%s12671] ss:$2 sm:$0xff]
        %s12673 = scalar_lea.vmem [#allocation2], 32
        %v12674 = vld [vmem:[%s12673] ss:$2 sm:$0xff]
        %s12675 = scalar_lea.vmem [#allocation2], 48
        %v12676 = vld [vmem:[%s12675] ss:$2 sm:$0xff]
        %s12677 = scalar_lea.vmem [#allocation2], 64
        %v12678 = vld [vmem:[%s12677] ss:$2 sm:$0xff]
        %s12679 = scalar_lea.vmem [#allocation2], 80
        %v12680 = vld [vmem:[%s12679] ss:$2 sm:$0xff]
        %s12681 = scalar_lea.vmem [#allocation2], 96
        %v12682 = vld [vmem:[%s12681] ss:$2 sm:$0xff]
        %s12683 = scalar_lea.vmem [#allocation2], 112
        %v12684 = vld [vmem:[%s12683] ss:$2 sm:$0xff]
        %s12685 = scalar_lea.vmem [#allocation2], 128
        %v12686 = vld [vmem:[%s12685] ss:$2 sm:$0xff]
        %s12687 = scalar_lea.vmem [#allocation2], 144
        %v12688 = vld [vmem:[%s12687] ss:$2 sm:$0xff]
        %s12689 = scalar_lea.vmem [#allocation2], 160
        %v12690 = vld [vmem:[%s12689] ss:$2 sm:$0xff]
        %s12691 = scalar_lea.vmem [#allocation2], 176
        %v12692 = vld [vmem:[%s12691] ss:$2 sm:$0xff]
        %s12693 = scalar_lea.vmem [#allocation2], 192
        %v12694 = vld [vmem:[%s12693] ss:$2 sm:$0xff]
        %s12695 = scalar_lea.vmem [#allocation2], 208
        %v12696 = vld [vmem:[%s12695] ss:$2 sm:$0xff]
        %s12697 = scalar_lea.vmem [#allocation2], 224
        %v12698 = vld [vmem:[%s12697] ss:$2 sm:$0xff]
        %s12699 = scalar_lea.vmem [#allocation2], 240
        %v12700 = vld [vmem:[%s12699] ss:$2 sm:$0xff]
        %s12701 = scalar_lea.vmem [#allocation2], 256
        %v12702 = vld [vmem:[%s12701] ss:$2 sm:$0xff]
        %s12703 = scalar_lea.vmem [#allocation2], 272
        %v12704 = vld [vmem:[%s12703] ss:$2 sm:$0xff]
        %s12705 = scalar_lea.vmem [#allocation2], 288
        %v12706 = vld [vmem:[%s12705] ss:$2 sm:$0xff]
        %s12707 = scalar_lea.vmem [#allocation2], 304
        %v12708 = vld [vmem:[%s12707] ss:$2 sm:$0xff]
        %s12709 = scalar_lea.vmem [#allocation2], 320
        %v12710 = vld [vmem:[%s12709] ss:$2 sm:$0xff]
        %s12711 = scalar_lea.vmem [#allocation2], 336
        %v12712 = vld [vmem:[%s12711] ss:$2 sm:$0xff]
        %s12713 = scalar_lea.vmem [#allocation2], 352
        %v12714 = vld [vmem:[%s12713] ss:$2 sm:$0xff]
        %s12715 = scalar_lea.vmem [#allocation2], 368
        %v12716 = vld [vmem:[%s12715] ss:$2 sm:$0xff]
        %s12717 = scalar_lea.vmem [#allocation2], 384
        %v12718 = vld [vmem:[%s12717] ss:$2 sm:$0xff]
        %s12719 = scalar_lea.vmem [#allocation2], 400
        %v12720 = vld [vmem:[%s12719] ss:$2 sm:$0xff]
        %s12721 = scalar_lea.vmem [#allocation2], 416
        %v12722 = vld [vmem:[%s12721] ss:$2 sm:$0xff]
        %s12723 = scalar_lea.vmem [#allocation2], 432
        %v12724 = vld [vmem:[%s12723] ss:$2 sm:$0xff]
        %s12725 = scalar_lea.vmem [#allocation2], 448
        %v12726 = vld [vmem:[%s12725] ss:$2 sm:$0xff]
        %s12727 = scalar_lea.vmem [#allocation2], 464
        %v12728 = vld [vmem:[%s12727] ss:$2 sm:$0xff]
        %s12729 = scalar_lea.vmem [#allocation2], 480
        %v12730 = vld [vmem:[%s12729] ss:$2 sm:$0xff]
        %s12731 = scalar_lea.vmem [#allocation2], 496
        %v12732 = vld [vmem:[%s12731] ss:$2 sm:$0xff]
        %s12733 = scalar_lea.vmem [#allocation2], 512
        %v12734 = vld [vmem:[%s12733] ss:$2 sm:$0xff]
        %s12735 = scalar_lea.vmem [#allocation2], 528
        %v12736 = vld [vmem:[%s12735] ss:$2 sm:$0xff]
        %s12737 = scalar_lea.vmem [#allocation2], 544
        %v12738 = vld [vmem:[%s12737] ss:$2 sm:$0xff]
        %s12739 = scalar_lea.vmem [#allocation2], 560
        %v12740 = vld [vmem:[%s12739] ss:$2 sm:$0xff]
        %s12741 = scalar_lea.vmem [#allocation2], 576
        %v12742 = vld [vmem:[%s12741] ss:$2 sm:$0xff]
        %s12743 = scalar_lea.vmem [#allocation2], 592
        %v12744 = vld [vmem:[%s12743] ss:$2 sm:$0xff]
        %s12745 = scalar_lea.vmem [#allocation2], 608
        %v12746 = vld [vmem:[%s12745] ss:$2 sm:$0xff]
        %s12747 = scalar_lea.vmem [#allocation2], 624
        %v12748 = vld [vmem:[%s12747] ss:$2 sm:$0xff]
        %s12749 = scalar_lea.vmem [#allocation2], 640
        %v12750 = vld [vmem:[%s12749] ss:$2 sm:$0xff]
        %s12751 = scalar_lea.vmem [#allocation2], 656
        %v12752 = vld [vmem:[%s12751] ss:$2 sm:$0xff]
        %s12753 = scalar_lea.vmem [#allocation2], 672
        %v12754 = vld [vmem:[%s12753] ss:$2 sm:$0xff]
        %s12755 = scalar_lea.vmem [#allocation2], 688
        %v12756 = vld [vmem:[%s12755] ss:$2 sm:$0xff]
        %s12757 = scalar_lea.vmem [#allocation2], 704
        %v12758 = vld [vmem:[%s12757] ss:$2 sm:$0xff]
        %s12759 = scalar_lea.vmem [#allocation2], 720
        %v12760 = vld [vmem:[%s12759] ss:$2 sm:$0xff]
        %s12761 = scalar_lea.vmem [#allocation2], 736
        %v12762 = vld [vmem:[%s12761] ss:$2 sm:$0xff]
        %s12763 = scalar_lea.vmem [#allocation2], 752
        %v12764 = vld [vmem:[%s12763] ss:$2 sm:$0xff]
        %s12765 = scalar_lea.vmem [#allocation2], 768
        %v12766 = vld [vmem:[%s12765] ss:$2 sm:$0xff]
        %s12767 = scalar_lea.vmem [#allocation2], 784
        %v12768 = vld [vmem:[%s12767] ss:$2 sm:$0xff]
        %s12769 = scalar_lea.vmem [#allocation2], 800
        %v12770 = vld [vmem:[%s12769] ss:$2 sm:$0xff]
        %s12771 = scalar_lea.vmem [#allocation2], 816
        %v12772 = vld [vmem:[%s12771] ss:$2 sm:$0xff]
        %s12773 = scalar_lea.vmem [#allocation2], 832
        %v12774 = vld [vmem:[%s12773] ss:$2 sm:$0xff]
        %s12775 = scalar_lea.vmem [#allocation2], 848
        %v12776 = vld [vmem:[%s12775] ss:$2 sm:$0xff]
        %s12777 = scalar_lea.vmem [#allocation2], 864
        %v12778 = vld [vmem:[%s12777] ss:$2 sm:$0xff]
        %s12779 = scalar_lea.vmem [#allocation2], 880
        %v12780 = vld [vmem:[%s12779] ss:$2 sm:$0xff]
        %s12781 = scalar_lea.vmem [#allocation2], 896
        %v12782 = vld [vmem:[%s12781] ss:$2 sm:$0xff]
        %s12783 = scalar_lea.vmem [#allocation2], 912
        %v12784 = vld [vmem:[%s12783] ss:$2 sm:$0xff]
        %s12785 = scalar_lea.vmem [#allocation2], 928
        %v12786 = vld [vmem:[%s12785] ss:$2 sm:$0xff]
        %s12787 = scalar_lea.vmem [#allocation2], 944
        %v12788 = vld [vmem:[%s12787] ss:$2 sm:$0xff]
        %s12789 = scalar_lea.vmem [#allocation2], 960
        %v12790 = vld [vmem:[%s12789] ss:$2 sm:$0xff]
        %s12791 = scalar_lea.vmem [#allocation2], 976
        %v12792 = vld [vmem:[%s12791] ss:$2 sm:$0xff]
        %s12793 = scalar_lea.vmem [#allocation2], 992
        %v12794 = vld [vmem:[%s12793] ss:$2 sm:$0xff]
        %s12795 = scalar_lea.vmem [#allocation2], 1008
        %v12796 = vld [vmem:[%s12795] ss:$2 sm:$0xff]
        %s12797 = scalar_lea.vmem [#allocation2], 1
        %v12798 = vld [vmem:[%s12797] ss:$2 sm:$0xff]
        %s12799 = scalar_lea.vmem [#allocation2], 17
        %v12800 = vld [vmem:[%s12799] ss:$2 sm:$0xff]
        %s12801 = scalar_lea.vmem [#allocation2], 33
        %v12802 = vld [vmem:[%s12801] ss:$2 sm:$0xff]
        %s12803 = scalar_lea.vmem [#allocation2], 49
        %v12804 = vld [vmem:[%s12803] ss:$2 sm:$0xff]
        %s12805 = scalar_lea.vmem [#allocation2], 65
        %v12806 = vld [vmem:[%s12805] ss:$2 sm:$0xff]
        %s12807 = scalar_lea.vmem [#allocation2], 81
        %v12808 = vld [vmem:[%s12807] ss:$2 sm:$0xff]
        %s12809 = scalar_lea.vmem [#allocation2], 97
        %v12810 = vld [vmem:[%s12809] ss:$2 sm:$0xff]
        %s12811 = scalar_lea.vmem [#allocation2], 113
        %v12812 = vld [vmem:[%s12811] ss:$2 sm:$0xff]
        %s12813 = scalar_lea.vmem [#allocation2], 129
        %v12814 = vld [vmem:[%s12813] ss:$2 sm:$0xff]
        %s12815 = scalar_lea.vmem [#allocation2], 145
        %v12816 = vld [vmem:[%s12815] ss:$2 sm:$0xff]
        %s12817 = scalar_lea.vmem [#allocation2], 161
        %v12818 = vld [vmem:[%s12817] ss:$2 sm:$0xff]
        %s12819 = scalar_lea.vmem [#allocation2], 177
        %v12820 = vld [vmem:[%s12819] ss:$2 sm:$0xff]
        %s12821 = scalar_lea.vmem [#allocation2], 193
        %v12822 = vld [vmem:[%s12821] ss:$2 sm:$0xff]
        %s12823 = scalar_lea.vmem [#allocation2], 209
        %v12824 = vld [vmem:[%s12823] ss:$2 sm:$0xff]
        %s12825 = scalar_lea.vmem [#allocation2], 225
        %v12826 = vld [vmem:[%s12825] ss:$2 sm:$0xff]
        %s12827 = scalar_lea.vmem [#allocation2], 241
        %v12828 = vld [vmem:[%s12827] ss:$2 sm:$0xff]
        %s12829 = scalar_lea.vmem [#allocation2], 257
        %v12830 = vld [vmem:[%s12829] ss:$2 sm:$0xff]
        %s12831 = scalar_lea.vmem [#allocation2], 273
        %v12832 = vld [vmem:[%s12831] ss:$2 sm:$0xff]
        %s12833 = scalar_lea.vmem [#allocation2], 289
        %v12834 = vld [vmem:[%s12833] ss:$2 sm:$0xff]
        %s12835 = scalar_lea.vmem [#allocation2], 305
        %v12836 = vld [vmem:[%s12835] ss:$2 sm:$0xff]
        %s12837 = scalar_lea.vmem [#allocation2], 321
        %v12838 = vld [vmem:[%s12837] ss:$2 sm:$0xff]
        %s12839 = scalar_lea.vmem [#allocation2], 337
        %v12840 = vld [vmem:[%s12839] ss:$2 sm:$0xff]
        %s12841 = scalar_lea.vmem [#allocation2], 353
        %v12842 = vld [vmem:[%s12841] ss:$2 sm:$0xff]
        %s12843 = scalar_lea.vmem [#allocation2], 369
        %v12844 = vld [vmem:[%s12843] ss:$2 sm:$0xff]
        %s12845 = scalar_lea.vmem [#allocation2], 385
        %v12846 = vld [vmem:[%s12845] ss:$2 sm:$0xff]
        %s12847 = scalar_lea.vmem [#allocation2], 401
        %v12848 = vld [vmem:[%s12847] ss:$2 sm:$0xff]
        %s12849 = scalar_lea.vmem [#allocation2], 417
        %v12850 = vld [vmem:[%s12849] ss:$2 sm:$0xff]
        %s12851 = scalar_lea.vmem [#allocation2], 433
        %v12852 = vld [vmem:[%s12851] ss:$2 sm:$0xff]
        %s12853 = scalar_lea.vmem [#allocation2], 449
        %v12854 = vld [vmem:[%s12853] ss:$2 sm:$0xff]
        %s12855 = scalar_lea.vmem [#allocation2], 465
        %v12856 = vld [vmem:[%s12855] ss:$2 sm:$0xff]
        %s12857 = scalar_lea.vmem [#allocation2], 481
        %v12858 = vld [vmem:[%s12857] ss:$2 sm:$0xff]
        %s12859 = scalar_lea.vmem [#allocation2], 497
        %v12860 = vld [vmem:[%s12859] ss:$2 sm:$0xff]
        %s12861 = scalar_lea.vmem [#allocation2], 513
        %v12862 = vld [vmem:[%s12861] ss:$2 sm:$0xff]
        %s12863 = scalar_lea.vmem [#allocation2], 529
        %v12864 = vld [vmem:[%s12863] ss:$2 sm:$0xff]
        %s12865 = scalar_lea.vmem [#allocation2], 545
        %v12866 = vld [vmem:[%s12865] ss:$2 sm:$0xff]
        %s12867 = scalar_lea.vmem [#allocation2], 561
        %v12868 = vld [vmem:[%s12867] ss:$2 sm:$0xff]
        %s12869 = scalar_lea.vmem [#allocation2], 577
        %v12870 = vld [vmem:[%s12869] ss:$2 sm:$0xff]
        %s12871 = scalar_lea.vmem [#allocation2], 593
        %v12872 = vld [vmem:[%s12871] ss:$2 sm:$0xff]
        %s12873 = scalar_lea.vmem [#allocation2], 609
        %v12874 = vld [vmem:[%s12873] ss:$2 sm:$0xff]
        %s12875 = scalar_lea.vmem [#allocation2], 625
        %v12876 = vld [vmem:[%s12875] ss:$2 sm:$0xff]
        %s12877 = scalar_lea.vmem [#allocation2], 641
        %v12878 = vld [vmem:[%s12877] ss:$2 sm:$0xff]
        %s12879 = scalar_lea.vmem [#allocation2], 657
        %v12880 = vld [vmem:[%s12879] ss:$2 sm:$0xff]
        %s12881 = scalar_lea.vmem [#allocation2], 673
        %v12882 = vld [vmem:[%s12881] ss:$2 sm:$0xff]
        %s12883 = scalar_lea.vmem [#allocation2], 689
        %v12884 = vld [vmem:[%s12883] ss:$2 sm:$0xff]
        %s12885 = scalar_lea.vmem [#allocation2], 705
        %v12886 = vld [vmem:[%s12885] ss:$2 sm:$0xff]
        %s12887 = scalar_lea.vmem [#allocation2], 721
        %v12888 = vld [vmem:[%s12887] ss:$2 sm:$0xff]
        %s12889 = scalar_lea.vmem [#allocation2], 737
        %v12890 = vld [vmem:[%s12889] ss:$2 sm:$0xff]
        %s12891 = scalar_lea.vmem [#allocation2], 753
        %v12892 = vld [vmem:[%s12891] ss:$2 sm:$0xff]
        %s12893 = scalar_lea.vmem [#allocation2], 769
        %v12894 = vld [vmem:[%s12893] ss:$2 sm:$0xff]
        %s12895 = scalar_lea.vmem [#allocation2], 785
        %v12896 = vld [vmem:[%s12895] ss:$2 sm:$0xff]
        %s12897 = scalar_lea.vmem [#allocation2], 801
        %v12898 = vld [vmem:[%s12897] ss:$2 sm:$0xff]
        %s12899 = scalar_lea.vmem [#allocation2], 817
        %v12900 = vld [vmem:[%s12899] ss:$2 sm:$0xff]
        %s12901 = scalar_lea.vmem [#allocation2], 833
        %v12902 = vld [vmem:[%s12901] ss:$2 sm:$0xff]
        %s12903 = scalar_lea.vmem [#allocation2], 849
        %v12904 = vld [vmem:[%s12903] ss:$2 sm:$0xff]
        %s12905 = scalar_lea.vmem [#allocation2], 865
        %v12906 = vld [vmem:[%s12905] ss:$2 sm:$0xff]
        %s12907 = scalar_lea.vmem [#allocation2], 881
        %v12908 = vld [vmem:[%s12907] ss:$2 sm:$0xff]
        %s12909 = scalar_lea.vmem [#allocation2], 897
        %v12910 = vld [vmem:[%s12909] ss:$2 sm:$0xff]
        %s12911 = scalar_lea.vmem [#allocation2], 913
        %v12912 = vld [vmem:[%s12911] ss:$2 sm:$0xff]
        %s12913 = scalar_lea.vmem [#allocation2], 929
        %v12914 = vld [vmem:[%s12913] ss:$2 sm:$0xff]
        %s12915 = scalar_lea.vmem [#allocation2], 945
        %v12916 = vld [vmem:[%s12915] ss:$2 sm:$0xff]
        %s12917 = scalar_lea.vmem [#allocation2], 961
        %v12918 = vld [vmem:[%s12917] ss:$2 sm:$0xff]
        %s12919 = scalar_lea.vmem [#allocation2], 977
        %v12920 = vld [vmem:[%s12919] ss:$2 sm:$0xff]
        %s12921 = scalar_lea.vmem [#allocation2], 993
        %v12922 = vld [vmem:[%s12921] ss:$2 sm:$0xff]
        %s12923 = scalar_lea.vmem [#allocation2], 1009
        %v12924 = vld [vmem:[%s12923] ss:$2 sm:$0xff]
        %v12925 = vmax.f32 %v12670, %v12798
        %v12926 = vmax.f32 %v12672, %v12800
        %v12927 = vmax.f32 %v12674, %v12802
        %v12928 = vmax.f32 %v12676, %v12804
        %v12929 = vmax.f32 %v12678, %v12806
        %v12930 = vmax.f32 %v12680, %v12808
        %v12931 = vmax.f32 %v12682, %v12810
        %v12932 = vmax.f32 %v12684, %v12812
        %v12933 = vmax.f32 %v12686, %v12814
        %v12934 = vmax.f32 %v12688, %v12816
        %v12935 = vmax.f32 %v12690, %v12818
        %v12936 = vmax.f32 %v12692, %v12820
        %v12937 = vmax.f32 %v12694, %v12822
        %v12938 = vmax.f32 %v12696, %v12824
        %v12939 = vmax.f32 %v12698, %v12826
        %v12940 = vmax.f32 %v12700, %v12828
        %v12941 = vmax.f32 %v12702, %v12830
        %v12942 = vmax.f32 %v12704, %v12832
        %v12943 = vmax.f32 %v12706, %v12834
        %v12944 = vmax.f32 %v12708, %v12836
        %v12945 = vmax.f32 %v12710, %v12838
        %v12946 = vmax.f32 %v12712, %v12840
        %v12947 = vmax.f32 %v12714, %v12842
        %v12948 = vmax.f32 %v12716, %v12844
        %v12949 = vmax.f32 %v12718, %v12846
        %v12950 = vmax.f32 %v12720, %v12848
        %v12951 = vmax.f32 %v12722, %v12850
        %v12952 = vmax.f32 %v12724, %v12852
        %v12953 = vmax.f32 %v12726, %v12854
        %v12954 = vmax.f32 %v12728, %v12856
        %v12955 = vmax.f32 %v12730, %v12858
        %v12956 = vmax.f32 %v12732, %v12860
        %v12957 = vmax.f32 %v12734, %v12862
        %v12958 = vmax.f32 %v12736, %v12864
        %v12959 = vmax.f32 %v12738, %v12866
        %v12960 = vmax.f32 %v12740, %v12868
        %v12961 = vmax.f32 %v12742, %v12870
        %v12962 = vmax.f32 %v12744, %v12872
        %v12963 = vmax.f32 %v12746, %v12874
        %v12964 = vmax.f32 %v12748, %v12876
        %v12965 = vmax.f32 %v12750, %v12878
        %v12966 = vmax.f32 %v12752, %v12880
        %v12967 = vmax.f32 %v12754, %v12882
        %v12968 = vmax.f32 %v12756, %v12884
        %v12969 = vmax.f32 %v12758, %v12886
        %v12970 = vmax.f32 %v12760, %v12888
        %v12971 = vmax.f32 %v12762, %v12890
        %v12972 = vmax.f32 %v12764, %v12892
        %v12973 = vmax.f32 %v12766, %v12894
        %v12974 = vmax.f32 %v12768, %v12896
        %v12975 = vmax.f32 %v12770, %v12898
        %v12976 = vmax.f32 %v12772, %v12900
        %v12977 = vmax.f32 %v12774, %v12902
        %v12978 = vmax.f32 %v12776, %v12904
        %v12979 = vmax.f32 %v12778, %v12906
        %v12980 = vmax.f32 %v12780, %v12908
        %v12981 = vmax.f32 %v12782, %v12910
        %v12982 = vmax.f32 %v12784, %v12912
        %v12983 = vmax.f32 %v12786, %v12914
        %v12984 = vmax.f32 %v12788, %v12916
        %v12985 = vmax.f32 %v12790, %v12918
        %v12986 = vmax.f32 %v12792, %v12920
        %v12987 = vmax.f32 %v12794, %v12922
        %v12988 = vmax.f32 %v12796, %v12924
        %v12989 = vmax.f32 %v12925, %v12927
        %v12990 = vmax.f32 %v12926, %v12928
        %v12991 = vmax.f32 %v12929, %v12931
        %v12992 = vmax.f32 %v12930, %v12932
        %v12993 = vmax.f32 %v12933, %v12935
        %v12994 = vmax.f32 %v12934, %v12936
        %v12995 = vmax.f32 %v12937, %v12939
        %v12996 = vmax.f32 %v12938, %v12940
        %v12997 = vmax.f32 %v12941, %v12943
        %v12998 = vmax.f32 %v12942, %v12944
        %v12999 = vmax.f32 %v12945, %v12947
        %v13000 = vmax.f32 %v12946, %v12948
        %v13001 = vmax.f32 %v12949, %v12951
        %v13002 = vmax.f32 %v12950, %v12952
        %v13003 = vmax.f32 %v12953, %v12955
        %v13004 = vmax.f32 %v12954, %v12956
        %v13005 = vmax.f32 %v12957, %v12959
        %v13006 = vmax.f32 %v12958, %v12960
        %v13007 = vmax.f32 %v12961, %v12963
        %v13008 = vmax.f32 %v12962, %v12964
        %v13009 = vmax.f32 %v12965, %v12967
        %v13010 = vmax.f32 %v12966, %v12968
        %v13011 = vmax.f32 %v12969, %v12971
        %v13012 = vmax.f32 %v12970, %v12972
        %v13013 = vmax.f32 %v12973, %v12975
        %v13014 = vmax.f32 %v12974, %v12976
        %v13015 = vmax.f32 %v12977, %v12979
        %v13016 = vmax.f32 %v12978, %v12980
        %v13017 = vmax.f32 %v12981, %v12983
        %v13018 = vmax.f32 %v12982, %v12984
        %v13019 = vmax.f32 %v12985, %v12987
        %v13020 = vmax.f32 %v12986, %v12988
        %v13021 = vpack.c.bf16 %v12990, %v12989
        %v13022 = vpack.c.bf16 %v12992, %v12991
        %v13023 = vpack.c.bf16 %v12994, %v12993
        %v13024 = vpack.c.bf16 %v12996, %v12995
        %v13025 = vpack.c.bf16 %v12998, %v12997
        %v13026 = vpack.c.bf16 %v13000, %v12999
        %v13027 = vpack.c.bf16 %v13002, %v13001
        %v13028 = vpack.c.bf16 %v13004, %v13003
        %v13029 = vpack.c.bf16 %v13006, %v13005
        %v13030 = vpack.c.bf16 %v13008, %v13007
        %v13031 = vpack.c.bf16 %v13010, %v13009
        %v13032 = vpack.c.bf16 %v13012, %v13011
        %v13033 = vpack.c.bf16 %v13014, %v13013
        %v13034 = vpack.c.bf16 %v13016, %v13015
        %v13035 = vpack.c.bf16 %v13018, %v13017
        %v13036 = vpack.c.bf16 %v13020, %v13019
        %v13053 = vunpack.c.l.b16 %v13021
        %v13054 = vunpack.c.h.b16 %v13021
        %v13055 = vunpack.c.l.b16 %v13022
        %v13056 = vunpack.c.h.b16 %v13022
        %v13057 = vunpack.c.l.b16 %v13023
        %v13058 = vunpack.c.h.b16 %v13023
        %v13059 = vunpack.c.l.b16 %v13024
        %v13060 = vunpack.c.h.b16 %v13024
        %v13061 = vunpack.c.l.b16 %v13025
        %v13062 = vunpack.c.h.b16 %v13025
        %v13063 = vunpack.c.l.b16 %v13026
        %v13064 = vunpack.c.h.b16 %v13026
        %v13065 = vunpack.c.l.b16 %v13027
        %v13066 = vunpack.c.h.b16 %v13027
        %v13067 = vunpack.c.l.b16 %v13028
        %v13068 = vunpack.c.h.b16 %v13028
        %v13069 = vunpack.c.l.b16 %v13029
        %v13070 = vunpack.c.h.b16 %v13029
        %v13071 = vunpack.c.l.b16 %v13030
        %v13072 = vunpack.c.h.b16 %v13030
        %v13073 = vunpack.c.l.b16 %v13031
        %v13074 = vunpack.c.h.b16 %v13031
        %v13075 = vunpack.c.l.b16 %v13032
        %v13076 = vunpack.c.h.b16 %v13032
        %v13077 = vunpack.c.l.b16 %v13033
        %v13078 = vunpack.c.h.b16 %v13033
        %v13079 = vunpack.c.l.b16 %v13034
        %v13080 = vunpack.c.h.b16 %v13034
        %v13081 = vunpack.c.l.b16 %v13035
        %v13082 = vunpack.c.h.b16 %v13035
        %v13083 = vunpack.c.l.b16 %v13036
        %v13084 = vunpack.c.h.b16 %v13036
        %v13085 = vpack.c.b16 %v13053, %v13053
        %v13086 = vpack.c.b16 %v13054, %v13054
        %v13087 = vpack.c.b16 %v13055, %v13055
        %v13088 = vpack.c.b16 %v13056, %v13056
        %v13089 = vpack.c.b16 %v13057, %v13057
        %v13090 = vpack.c.b16 %v13058, %v13058
        %v13091 = vpack.c.b16 %v13059, %v13059
        %v13092 = vpack.c.b16 %v13060, %v13060
        %v13093 = vpack.c.b16 %v13061, %v13061
        %v13094 = vpack.c.b16 %v13062, %v13062
        %v13095 = vpack.c.b16 %v13063, %v13063
        %v13096 = vpack.c.b16 %v13064, %v13064
        %v13097 = vpack.c.b16 %v13065, %v13065
        %v13098 = vpack.c.b16 %v13066, %v13066
        %v13099 = vpack.c.b16 %v13067, %v13067
        %v13100 = vpack.c.b16 %v13068, %v13068
        %v13101 = vpack.c.b16 %v13069, %v13069
        %v13102 = vpack.c.b16 %v13070, %v13070
        %v13103 = vpack.c.b16 %v13071, %v13071
        %v13104 = vpack.c.b16 %v13072, %v13072
        %v13105 = vpack.c.b16 %v13073, %v13073
        %v13106 = vpack.c.b16 %v13074, %v13074
        %v13107 = vpack.c.b16 %v13075, %v13075
        %v13108 = vpack.c.b16 %v13076, %v13076
        %v13109 = vpack.c.b16 %v13077, %v13077
        %v13110 = vpack.c.b16 %v13078, %v13078
        %v13111 = vpack.c.b16 %v13079, %v13079
        %v13112 = vpack.c.b16 %v13080, %v13080
        %v13113 = vpack.c.b16 %v13081, %v13081
        %v13114 = vpack.c.b16 %v13082, %v13082
        %v13115 = vpack.c.b16 %v13083, %v13083
        %v13116 = vpack.c.b16 %v13084, %v13084
        %13149 = vst [vmem:[%s163] sm:$0xf] %v13085
        %13150 = vst [vmem:[%s163 + $0x4] sm:$0xf] %v13086
        %13151 = vst [vmem:[%s163 + $0x8] sm:$0xf] %v13087
        %13152 = vst [vmem:[%s163 + $0xc] sm:$0xf] %v13088
        %13153 = vst [vmem:[%s163 + $0x10] sm:$0xf] %v13089
        %13154 = vst [vmem:[%s163 + $0x14] sm:$0xf] %v13090
        %13155 = vst [vmem:[%s163 + $0x18] sm:$0xf] %v13091
        %13156 = vst [vmem:[%s163 + $0x1c] sm:$0xf] %v13092
        %13157 = vst [vmem:[%s163 + $0x20] sm:$0xf] %v13093
        %13158 = vst [vmem:[%s163 + $0x24] sm:$0xf] %v13094
        %13159 = vst [vmem:[%s163 + $0x28] sm:$0xf] %v13095
        %13160 = vst [vmem:[%s163 + $0x2c] sm:$0xf] %v13096
        %13161 = vst [vmem:[%s163 + $0x30] sm:$0xf] %v13097
        %13162 = vst [vmem:[%s163 + $0x34] sm:$0xf] %v13098
        %13163 = vst [vmem:[%s163 + $0x38] sm:$0xf] %v13099
        %13164 = vst [vmem:[%s163 + $0x3c] sm:$0xf] %v13100
        %13165 = vst [vmem:[%s163 + $0x40] sm:$0xf] %v13101
        %13166 = vst [vmem:[%s163 + $0x44] sm:$0xf] %v13102
        %13167 = vst [vmem:[%s163 + $0x48] sm:$0xf] %v13103
        %13168 = vst [vmem:[%s163 + $0x4c] sm:$0xf] %v13104
        %13169 = vst [vmem:[%s163 + $0x50] sm:$0xf] %v13105
        %13170 = vst [vmem:[%s163 + $0x54] sm:$0xf] %v13106
        %13171 = vst [vmem:[%s163 + $0x58] sm:$0xf] %v13107
        %13172 = vst [vmem:[%s163 + $0x5c] sm:$0xf] %v13108
        %13173 = vst [vmem:[%s163 + $0x60] sm:$0xf] %v13109
        %13174 = vst [vmem:[%s163 + $0x64] sm:$0xf] %v13110
        %13175 = vst [vmem:[%s163 + $0x68] sm:$0xf] %v13111
        %13176 = vst [vmem:[%s163 + $0x6c] sm:$0xf] %v13112
        %13177 = vst [vmem:[%s163 + $0x70] sm:$0xf] %v13113
        %13178 = vst [vmem:[%s163 + $0x74] sm:$0xf] %v13114
        %13179 = vst [vmem:[%s163 + $0x78] sm:$0xf] %v13115
        %13180 = vst [vmem:[%s163 + $0x7c] sm:$0xf] %v13116
        %s13181 = sand.u32 %s93, 1
        %s13182 = scalar_lea.sflag [#allocation4], %s13181
        %s13183 = sand.u32 %s93, 1
        %s13184 = smul.addr %s13183, 128
        %s13185 = scalar_lea.vmem [#allocation3], %s13184
        // Predicated region
        $region33: #{tpu_custom_call.1} parent=31 // pred_check
          %p13186 = pneg %p103
        $region34: #{tpu_custom_call.1} parent=31 // pred_check_branch
          %13188 = sbr.rel (%p13186) target = $region36
        $region35: #{tpu_custom_call.1} parent=31 // pred_region
          %s13190 = ssub.s32 2048, 2048
          %13191 = vsyncadd %s13182, %s13190
          %s13192 = smul.addr %s17, 32
          %s13193 = smul.addr %s13192, 64
          %s13194 = scalar_lea.hbm %s3, %s13193
          %s13195 = sshll.u32 %s13185, 4
          %s13196 = int_to_ptr.vmem [resolvable:$true] %s13195
          %13201 = dma.vmem_to_hbm [thread:$0]  %s13196, 2048, %s13194, %s13182, 64, 64, 4
        $region36: #{tpu_custom_call.1} parent=31 // pred_fallthru
          _
      $region32: #{tpu_custom_call.1} parent=5 // pred_fallthru
        _
      %p13202 = scmp.le.s32.totalorder 2, %s12
      // Predicated region
      $region37: #{tpu_custom_call.1} parent=5 // pred_check
        %p13203 = pneg %p13202
      $region38: #{tpu_custom_call.1} parent=5 // pred_check_branch
        %13205 = sbr.rel (%p13203) target = $region40
      $region39: #{tpu_custom_call.1} parent=5 // pred_region
        %s13206 = ssub.s32 %s12, 2
        // Predicated region
        $region41: #{tpu_custom_call.1} parent=39 // pred_check
          %p13207 = pneg %p109
        $region42: #{tpu_custom_call.1} parent=39 // pred_check_branch
          %13209 = sbr.rel (%p13207) target = $region44
        $region43: #{tpu_custom_call.1} parent=39 // pred_region
          %s13210 = sand.u32 %s94, 1
          %s13211 = scalar_lea.sflag [#allocation4], %s13210
          %s13212 = sand.u32 %s94, 1
          %s13213 = smul.addr %s13212, 128
          %s13214 = scalar_lea.vmem [#allocation3], %s13213
          %13215 = dma.done %s13211, 2048
        $region44: #{tpu_custom_call.1} parent=39 // pred_fallthru
          _
      $region40: #{tpu_custom_call.1} parent=5 // pred_fallthru
        _
    $region6: #{tpu_custom_call.1} parent=1 // loop_footer
      %s16 = sadd.s32 1, %s12
    $region7: #{tpu_custom_call.1} parent=1 // loop_footer_branch
      %11 = sbr.rel target = $region3
    $region8: #{tpu_custom_call.1} parent=1 // loop_exit
      _
    %13216 = vsyncpa [#allocation4], 1
    %s13217 = scalar_lea.sflag [#allocation4], 1
    %13218 = vsyncpa %s13217, 1

</llo_original>
